<compile_context>
chip_gen: v7x
topology: tpu7x:2x2x1
jax: 0.10.0
libtpu: 0.0.40
codegen_flags: <defaults>
</compile_context>

<pallas_src>
import functools

import jax
import jax.numpy as jnp
from jax.experimental import pallas as pl
from jax.experimental.pallas import tpu as pltpu


def _round_up(x, m):
    return (x + m - 1) // m * m


# ----------------------------------------------------------------------------
# Pallas kernel 1: direct 3x3 conv on the reflect-padded, spatially-flattened
# image.  Tap (kh, kw) is a flat row offset kh*Wp + kw, so each tap contribution
# is a plain (L_out, Cin) @ (Cin, Cout) matmul accumulated in f32.  Bias add and
# PReLU are fused into the epilogue.  Grid = (batch,), weights stay resident.
# ----------------------------------------------------------------------------
def _conv3x3_kernel(x_ref, w_ref, b_ref, alpha_ref, o_ref, *, Wp):
    # x_ref: (1, L_in, Cin)   w_ref: (9, Cin, Cout)   b_ref: (1, Cout)
    # alpha_ref: (1,) in SMEM o_ref: (1, L_out, Cout)
    L_out = o_ref.shape[1]
    C_out = o_ref.shape[2]
    acc = jnp.zeros((L_out, C_out), jnp.float32)
    for kh in range(3):
        for kw in range(3):
            off = kh * Wp + kw                      # static flat offset
            a = x_ref[0, pl.ds(off, L_out), :]      # (L_out, Cin), no copy in HBM
            acc = acc + jnp.dot(a, w_ref[kh * 3 + kw],
                                preferred_element_type=jnp.float32)
    y = acc + b_ref[...]
    alpha = alpha_ref[0]
    y = jnp.where(y >= 0, y, alpha * y)             # PReLU (single learnable slope)
    o_ref[0] = y.astype(o_ref.dtype)


def conv3x3_prelu(x, w_hwio, bias, alpha):
    """ReflectPad(1) -> Conv3x3 -> PReLU. x: (B,H,W,Cin); w_hwio: (3,3,Cin,Cout)."""
    B, H, W, Cin = x.shape
    Cout = w_hwio.shape[-1]
    Hp, Wp = H + 2, W + 2
    L = Hp * Wp
    L_out = _round_up(L, 8)
    L_in = _round_up(L_out + 2 * Wp + 2, 8)         # small zero tail for edge taps

    xp = jnp.pad(x, ((0, 0), (1, 1), (1, 1), (0, 0)), mode="reflect")
    xflat = jnp.pad(xp.reshape(B, L, Cin), ((0, 0), (0, L_in - L), (0, 0)))
    w9 = w_hwio.reshape(9, Cin, Cout).astype(jnp.float32)
    bias2 = bias.reshape(1, Cout).astype(jnp.float32)
    alpha_arr = jnp.asarray(alpha, jnp.float32).reshape((1,))

    z = pl.pallas_call(
        functools.partial(_conv3x3_kernel, Wp=Wp),
        out_shape=jax.ShapeDtypeStruct((B, L_out, Cout), jnp.float32),
        grid_spec=pltpu.PrefetchScalarGridSpec(
            num_scalar_prefetch=0,
            grid=(B,),
            in_specs=[
                pl.BlockSpec((1, L_in, Cin), lambda b: (b, 0, 0)),
                pl.BlockSpec((9, Cin, Cout), lambda b: (0, 0, 0)),   # weight resident
                pl.BlockSpec((1, Cout), lambda b: (0, 0)),           # bias resident
                pl.BlockSpec(memory_space=pltpu.MemorySpace.SMEM),   # PReLU slope
            ],
            out_specs=pl.BlockSpec((1, L_out, Cout), lambda b: (b, 0, 0)),
        ),
        compiler_params=pltpu.CompilerParams(
            dimension_semantics=("parallel",)),
    )(xflat, w9, bias2, alpha_arr)

    # Valid outputs live at flat index h*Wp + w for h<H, w<W.
    return z[:, :L, :].reshape(B, Hp, Wp, Cout)[:, :H, :W, :]


# ----------------------------------------------------------------------------
# Pallas kernel 2: 1x1 conv = row-tiled matmul with fused bias.  No K grid, no
# padding of K/N, full weight + bias resident in VMEM, no accumulator scratch.
# ----------------------------------------------------------------------------
def _matmul_bias_kernel(a_ref, b_ref, bias_ref, o_ref):
    y = jnp.dot(a_ref[...], b_ref[...], preferred_element_type=jnp.float32)
    o_ref[...] = (y + bias_ref[...]).astype(o_ref.dtype)


def conv1x1(x, w_io, bias, tm_max=512):
    """Pointwise conv: (B,H,W,Cin) x (Cin,Cout) + bias."""
    B, H, W, Cin = x.shape
    Cout = w_io.shape[-1]
    a = x.reshape(B * H * W, Cin)
    M = a.shape[0]
    Mp = _round_up(M, 8)
    if Mp > tm_max:
        tm = tm_max
        Mp = _round_up(Mp, tm)
    elif Mp >= 16 and Mp % 16 == 0:
        tm = Mp // 2          # keep >=2 grid steps so both v7x TensorCores get work
    else:
        tm = Mp
    a_p = a if Mp == M else jnp.pad(a, ((0, Mp - M), (0, 0)))
    bias2 = bias.reshape(1, Cout).astype(jnp.float32)

    out = pl.pallas_call(
        _matmul_bias_kernel,
        out_shape=jax.ShapeDtypeStruct((Mp, Cout), jnp.float32),
        grid_spec=pltpu.PrefetchScalarGridSpec(
            num_scalar_prefetch=0,
            grid=(Mp // tm,),
            in_specs=[
                pl.BlockSpec((tm, Cin), lambda i: (i, 0)),
                pl.BlockSpec((Cin, Cout), lambda i: (0, 0)),   # full weight resident
                pl.BlockSpec((1, Cout), lambda i: (0, 0)),
            ],
            out_specs=pl.BlockSpec((tm, Cout), lambda i: (i, 0)),
        ),
        compiler_params=pltpu.CompilerParams(
            dimension_semantics=("parallel",)),
    )(a_p, w_io.astype(jnp.float32), bias2)
    if Mp != M:
        out = out[:M]
    return out.reshape(B, H, W, Cout)


# ----------------------------------------------------------------------------
# Plain-JAX glue: fixed-weight 2x bilinear upsample (align_corners=False) and a
# general bilinear fallback used only when the skip resize is not an identity.
# ----------------------------------------------------------------------------
def _upsample2x_along(x, axis):
    n = x.shape[axis]
    sl = lambda s, e: jax.lax.slice_in_dim(x, s, e, axis=axis)
    xl, xr = sl(0, n - 1), sl(1, n)
    even = jnp.concatenate([sl(0, 1), 0.25 * xl + 0.75 * xr], axis=axis)
    odd = jnp.concatenate([0.75 * xl + 0.25 * xr, sl(n - 1, n)], axis=axis)
    out = jnp.stack([even, odd], axis=axis + 1)
    shape = list(x.shape)
    shape[axis] = 2 * n
    return out.reshape(shape)


def upsample2x_bilinear(x):
    """PyTorch Upsample(scale_factor=2, mode='bilinear', align_corners=False)."""
    return _upsample2x_along(_upsample2x_along(x, 1), 2)


def _resize_coords(out_size, in_size):
    scale = in_size / out_size
    src = (jnp.arange(out_size, dtype=jnp.float32) + 0.5) * scale - 0.5
    src = jnp.clip(src, 0.0, in_size - 1)
    lo = jnp.floor(src).astype(jnp.int32)
    hi = jnp.minimum(lo + 1, in_size - 1)
    w = src - lo.astype(jnp.float32)
    return lo, hi, w


def bilinear_resize(x, out_h, out_w):
    """PyTorch bilinear, align_corners=False; exact identity skipped."""
    B, H, W, C = x.shape
    if out_h == H and out_w == W:
        return x
    h0, h1, wh = _resize_coords(out_h, H)
    w0, w1, ww = _resize_coords(out_w, W)
    x_h0, x_h1 = x[:, h0], x[:, h1]
    x00, x01 = x_h0[:, :, w0], x_h0[:, :, w1]
    x10, x11 = x_h1[:, :, w0], x_h1[:, :, w1]
    wh = wh[None, :, None, None]
    ww = ww[None, None, :, None]
    return (x00 * (1 - wh) * (1 - ww) + x01 * (1 - wh) * ww
            + x10 * wh * (1 - ww) + x11 * wh * ww)


# ----------------------------------------------------------------------------
# Parameter init (deterministic, synthetic) and module application.
# ----------------------------------------------------------------------------
def _init_conv3x3(key, c_in, c_out):
    k1, k2 = jax.random.split(key)
    w = jax.random.normal(k1, (3, 3, c_in, c_out), jnp.float32) / jnp.sqrt(9.0 * c_in)
    b = 0.01 * jax.random.normal(k2, (c_out,), jnp.float32)
    return w, b


def _init_conv1x1(key, c_in, c_out):
    k1, k2 = jax.random.split(key)
    w = jax.random.normal(k1, (c_in, c_out), jnp.float32) / jnp.sqrt(1.0 * c_in)
    b = 0.01 * jax.random.normal(k2, (c_out,), jnp.float32)
    return w, b


def init_encoding_block(key, c_in, c_out):
    k1, k2 = jax.random.split(key)
    w1, b1 = _init_conv3x3(k1, c_in, c_out)
    w2, b2 = _init_conv3x3(k2, c_out, c_out)
    return dict(w1=w1, b1=b1, a1=jnp.float32(0.25),
                w2=w2, b2=b2, a2=jnp.float32(0.25))


def init_decoding_block(key, in_size, out_size):
    k1, k2 = jax.random.split(key)
    up_w, up_b = _init_conv1x1(k1, in_size, out_size)
    return dict(up_w=up_w, up_b=up_b,
                conv=init_encoding_block(k2, in_size, out_size))


def encoding_block_apply(x, p):  # batch_norm=False variant (as used by decoding_block)
    x = conv3x3_prelu(x, p["w1"], p["b1"], p["a1"])
    x = conv3x3_prelu(x, p["w2"], p["b2"], p["a2"])
    return x


def decoding_block_apply(input1, input2, p):
    # self.up = Upsample(x2, bilinear) -> Conv2d(1x1).  Both are linear and the
    # bilinear weights sum to 1, so conv-then-upsample gives the same result
    # with 4x fewer matmul rows.
    low = conv1x1(input2, p["up_w"], p["up_b"])
    output2 = upsample2x_bilinear(low)
    th, tw = output2.shape[1], output2.shape[2]
    output1 = bilinear_resize(input1, th, tw)      # identity skip when sizes match
    cat = jnp.concatenate([output1, output2], axis=-1)
    return encoding_block_apply(cat, p["conv"])


@jax.jit
def decoding_block_forward(params, input1_nchw, input2_nchw):
    x1 = jnp.transpose(input1_nchw, (0, 2, 3, 1)).astype(jnp.float32)  # NHWC
    x2 = jnp.transpose(input2_nchw, (0, 2, 3, 1)).astype(jnp.float32)
    out = decoding_block_apply(x1, x2, params)
    return jnp.transpose(out, (0, 3, 1, 2))                            # back to NCHW


if __name__ == "__main__":
    key = jax.random.PRNGKey(0)
    pkey, k1, k2 = jax.random.split(key, 3)

    in_size, out_size = 64, 32
    B, H2, W2 = 2, 8, 8

    params = init_decoding_block(pkey, in_size, out_size)
    # Skip connection (input1) already at the upsampled resolution, deep feature
    # map (input2) at half resolution — matching how decoding_block is used.
    input1 = jax.random.normal(k1, (B, out_size, 2 * H2, 2 * W2), jnp.float32)
    input2 = jax.random.normal(k2, (B, in_size, H2, W2), jnp.float32)

    out = decoding_block_forward(params, input1, input2)
    out = jax.block_until_ready(out)

    assert out.shape == (B, out_size, 2 * H2, 2 * W2), out.shape
    assert bool(jnp.all(jnp.isfinite(out)))
    print("KERNEL_OK")
</pallas_src>

<mosaic_0001>
module attributes {stable_mosaic.version = 11 : i64} {
  func.func @_matmul_bias_kernel(%arg0: i32, %arg1: memref<64x64xf32, #tpu.memory_space<vmem>>, %arg2: memref<64x32xf32, #tpu.memory_space<vmem>>, %arg3: memref<1x32xf32, #tpu.memory_space<vmem>>, %arg4: memref<64x32xf32, #tpu.memory_space<vmem>>) attributes {dimension_semantics = [#tpu.dimension_semantics<parallel>], iteration_bounds = array<i64: 2>, scalar_prefetch = 0 : i64, scratch_operands = 0 : i64, tpu.core_type = #tpu.core_type<tc>, window_params = [{transform_indices = @transform_0, window_bounds = array<i64: 64, 64>}, {pipeline_mode = #tpu.pipeline_mode<synchronous>, transform_indices = @transform_1, window_bounds = array<i64: 64, 32>}, {pipeline_mode = #tpu.pipeline_mode<synchronous>, transform_indices = @transform_2, window_bounds = array<i64: 1, 32>}, {transform_indices = @transform_3, window_bounds = array<i64: 64, 32>}]} {
    %c0 = arith.constant 0 : index
    %c0_0 = arith.constant 0 : index
    %0 = vector.load %arg1[%c0, %c0_0] : memref<64x64xf32, #tpu.memory_space<vmem>>, vector<64x64xf32>
    %c0_1 = arith.constant 0 : index
    %c0_2 = arith.constant 0 : index
    %1 = vector.load %arg2[%c0_1, %c0_2] : memref<64x32xf32, #tpu.memory_space<vmem>>, vector<64x32xf32>
    %cst = arith.constant dense<0.000000e+00> : vector<64x32xf32>
    %2 = tpu.matmul %0, %1, %cst {dimension_numbers = #tpu.dot_dimension_numbers<[1], [0], [0], [1], [0, 0, 1, 1], [], []>} : vector<64x64xf32>, vector<64x32xf32>, vector<64x32xf32> -> vector<64x32xf32>
    %c0_3 = arith.constant 0 : index
    %c0_4 = arith.constant 0 : index
    %3 = vector.load %arg3[%c0_3, %c0_4] : memref<1x32xf32, #tpu.memory_space<vmem>>, vector<1x32xf32>
    %4 = vector.broadcast %3 : vector<1x32xf32> to vector<64x32xf32>
    %5 = arith.addf %2, %4 : vector<64x32xf32>
    %c0_5 = arith.constant 0 : index
    %c0_6 = arith.constant 0 : index
    %6 = vector.load %arg4[%c0_5, %c0_6] : memref<64x32xf32, #tpu.memory_space<vmem>>, vector<64x32xf32>
    tpu.vector_store %arg4[%c0_5, %c0_6], %5 {strides = array<i32>} : memref<64x32xf32, #tpu.memory_space<vmem>>, vector<64x32xf32>,
    return
  }
  func.func @transform_0(%arg0: i32) -> (i32, i32) {
    %c0_i32 = arith.constant 0 : i32
    %c0_i32_0 = arith.constant 0 : i32
    return %arg0, %c0_i32 : i32, i32
  }
  func.func @transform_1(%arg0: i32) -> (i32, i32) {
    %c0_i32 = arith.constant 0 : i32
    %c0_i32_0 = arith.constant 0 : i32
    %c0_i32_1 = arith.constant 0 : i32
    return %c0_i32, %c0_i32_0 : i32, i32
  }
  func.func @transform_2(%arg0: i32) -> (i32, i32) {
    %c0_i32 = arith.constant 0 : i32
    %c0_i32_0 = arith.constant 0 : i32
    %c0_i32_1 = arith.constant 0 : i32
    return %c0_i32, %c0_i32_0 : i32, i32
  }
  func.func @transform_3(%arg0: i32) -> (i32, i32) {
    %c0_i32 = arith.constant 0 : i32
    %c0_i32_0 = arith.constant 0 : i32
    return %arg0, %c0_i32 : i32, i32
  }
}

module attributes {stable_mosaic.version = 11 : i64} {
  func.func @_conv3x3_kernel(%arg0: i32, %arg1: memref<1x368x64xf32, #tpu.memory_space<vmem>>, %arg2: memref<9x64x32xf32, #tpu.memory_space<vmem>>, %arg3: memref<1x32xf32, #tpu.memory_space<vmem>>, %arg4: memref<1xf32, #tpu.memory_space<smem>>, %arg5: memref<1x328x32xf32, #tpu.memory_space<vmem>>) attributes {dimension_semantics = [#tpu.dimension_semantics<parallel>], iteration_bounds = array<i64: 2>, scalar_prefetch = 0 : i64, scratch_operands = 0 : i64, tpu.core_type = #tpu.core_type<tc>, window_params = [{transform_indices = @transform_0, window_bounds = array<i64: 1, 368, 64>}, {pipeline_mode = #tpu.pipeline_mode<synchronous>, transform_indices = @transform_1, window_bounds = array<i64: 9, 64, 32>}, {pipeline_mode = #tpu.pipeline_mode<synchronous>, transform_indices = @transform_2, window_bounds = array<i64: 1, 32>}, {transform_indices = @transform_3, window_bounds = array<i64: 1>}, {transform_indices = @transform_4, window_bounds = array<i64: 1, 328, 32>}]} {
    %cst = arith.constant 0.000000e+00 : f32
    %0 = vector.broadcast %cst : f32 to vector<328x32xf32>
    %c0 = arith.constant 0 : index
    %c0_0 = arith.constant 0 : index
    %c0_1 = arith.constant 0 : index
    %1 = vector.load %arg1[%c0, %c0_0, %c0_1] : memref<1x368x64xf32, #tpu.memory_space<vmem>>, vector<1x328x64xf32>
    %2 = vector.shape_cast %1 : vector<1x328x64xf32> to vector<328x64xf32>
    %c0_2 = arith.constant 0 : index
    %c0_3 = arith.constant 0 : index
    %c0_4 = arith.constant 0 : index
    %3 = vector.load %arg2[%c0_2, %c0_3, %c0_4] : memref<9x64x32xf32, #tpu.memory_space<vmem>>, vector<1x64x32xf32>
    %4 = vector.shape_cast %3 : vector<1x64x32xf32> to vector<64x32xf32>
    %cst_5 = arith.constant dense<0.000000e+00> : vector<328x32xf32>
    %5 = tpu.matmul %2, %4, %cst_5 {dimension_numbers = #tpu.dot_dimension_numbers<[1], [0], [0], [1], [0, 0, 1, 1], [], []>} : vector<328x64xf32>, vector<64x32xf32>, vector<328x32xf32> -> vector<328x32xf32>
    %6 = arith.addf %0, %5 : vector<328x32xf32>
    %c0_6 = arith.constant 0 : index
    %c1 = arith.constant 1 : index
    %c0_7 = arith.constant 0 : index
    %7 = vector.load %arg1[%c0_6, %c1, %c0_7] : memref<1x368x64xf32, #tpu.memory_space<vmem>>, vector<1x328x64xf32>
    %8 = vector.shape_cast %7 : vector<1x328x64xf32> to vector<328x64xf32>
    %c1_8 = arith.constant 1 : index
    %c0_9 = arith.constant 0 : index
    %c0_10 = arith.constant 0 : index
    %9 = vector.load %arg2[%c1_8, %c0_9, %c0_10] : memref<9x64x32xf32, #tpu.memory_space<vmem>>, vector<1x64x32xf32>
    %10 = vector.shape_cast %9 : vector<1x64x32xf32> to vector<64x32xf32>
    %cst_11 = arith.constant dense<0.000000e+00> : vector<328x32xf32>
    %11 = tpu.matmul %8, %10, %cst_11 {dimension_numbers = #tpu.dot_dimension_numbers<[1], [0], [0], [1], [0, 0, 1, 1], [], []>} : vector<328x64xf32>, vector<64x32xf32>, vector<328x32xf32> -> vector<328x32xf32>
    %12 = arith.addf %6, %11 : vector<328x32xf32>
    %c0_12 = arith.constant 0 : index
    %c2 = arith.constant 2 : index
    %c0_13 = arith.constant 0 : index
    %13 = vector.load %arg1[%c0_12, %c2, %c0_13] : memref<1x368x64xf32, #tpu.memory_space<vmem>>, vector<1x328x64xf32>
    %14 = vector.shape_cast %13 : vector<1x328x64xf32> to vector<328x64xf32>
    %c2_14 = arith.constant 2 : index
    %c0_15 = arith.constant 0 : index
    %c0_16 = arith.constant 0 : index
    %15 = vector.load %arg2[%c2_14, %c0_15, %c0_16] : memref<9x64x32xf32, #tpu.memory_space<vmem>>, vector<1x64x32xf32>
    %16 = vector.shape_cast %15 : vector<1x64x32xf32> to vector<64x32xf32>
    %cst_17 = arith.constant dense<0.000000e+00> : vector<328x32xf32>
    %17 = tpu.matmul %14, %16, %cst_17 {dimension_numbers = #tpu.dot_dimension_numbers<[1], [0], [0], [1], [0, 0, 1, 1], [], []>} : vector<328x64xf32>, vector<64x32xf32>, vector<328x32xf32> -> vector<328x32xf32>
    %18 = arith.addf %12, %17 : vector<328x32xf32>
    %c0_18 = arith.constant 0 : index
    %c18 = arith.constant 18 : index
    %c0_19 = arith.constant 0 : index
    %19 = vector.load %arg1[%c0_18, %c18, %c0_19] : memref<1x368x64xf32, #tpu.memory_space<vmem>>, vector<1x328x64xf32>
    %20 = vector.shape_cast %19 : vector<1x328x64xf32> to vector<328x64xf32>
    %c3 = arith.constant 3 : index
    %c0_20 = arith.constant 0 : index
    %c0_21 = arith.constant 0 : index
    %21 = vector.load %arg2[%c3, %c0_20, %c0_21] : memref<9x64x32xf32, #tpu.memory_space<vmem>>, vector<1x64x32xf32>
    %22 = vector.shape_cast %21 : vector<1x64x32xf32> to vector<64x32xf32>
    %cst_22 = arith.constant dense<0.000000e+00> : vector<328x32xf32>
    %23 = tpu.matmul %20, %22, %cst_22 {dimension_numbers = #tpu.dot_dimension_numbers<[1], [0], [0], [1], [0, 0, 1, 1], [], []>} : vector<328x64xf32>, vector<64x32xf32>, vector<328x32xf32> -> vector<328x32xf32>
    %24 = arith.addf %18, %23 : vector<328x32xf32>
    %c0_23 = arith.constant 0 : index
    %c19 = arith.constant 19 : index
    %c0_24 = arith.constant 0 : index
    %25 = vector.load %arg1[%c0_23, %c19, %c0_24] : memref<1x368x64xf32, #tpu.memory_space<vmem>>, vector<1x328x64xf32>
    %26 = vector.shape_cast %25 : vector<1x328x64xf32> to vector<328x64xf32>
    %c4 = arith.constant 4 : index
    %c0_25 = arith.constant 0 : index
    %c0_26 = arith.constant 0 : index
    %27 = vector.load %arg2[%c4, %c0_25, %c0_26] : memref<9x64x32xf32, #tpu.memory_space<vmem>>, vector<1x64x32xf32>
    %28 = vector.shape_cast %27 : vector<1x64x32xf32> to vector<64x32xf32>
    %cst_27 = arith.constant dense<0.000000e+00> : vector<328x32xf32>
    %29 = tpu.matmul %26, %28, %cst_27 {dimension_numbers = #tpu.dot_dimension_numbers<[1], [0], [0], [1], [0, 0, 1, 1], [], []>} : vector<328x64xf32>, vector<64x32xf32>, vector<328x32xf32> -> vector<328x32xf32>
    %30 = arith.addf %24, %29 : vector<328x32xf32>
    %c0_28 = arith.constant 0 : index
    %c20 = arith.constant 20 : index
    %c0_29 = arith.constant 0 : index
    %31 = vector.load %arg1[%c0_28, %c20, %c0_29] : memref<1x368x64xf32, #tpu.memory_space<vmem>>, vector<1x328x64xf32>
    %32 = vector.shape_cast %31 : vector<1x328x64xf32> to vector<328x64xf32>
    %c5 = arith.constant 5 : index
    %c0_30 = arith.constant 0 : index
    %c0_31 = arith.constant 0 : index
    %33 = vector.load %arg2[%c5, %c0_30, %c0_31] : memref<9x64x32xf32, #tpu.memory_space<vmem>>, vector<1x64x32xf32>
    %34 = vector.shape_cast %33 : vector<1x64x32xf32> to vector<64x32xf32>
    %cst_32 = arith.constant dense<0.000000e+00> : vector<328x32xf32>
    %35 = tpu.matmul %32, %34, %cst_32 {dimension_numbers = #tpu.dot_dimension_numbers<[1], [0], [0], [1], [0, 0, 1, 1], [], []>} : vector<328x64xf32>, vector<64x32xf32>, vector<328x32xf32> -> vector<328x32xf32>
    %36 = arith.addf %30, %35 : vector<328x32xf32>
    %c0_33 = arith.constant 0 : index
    %c36 = arith.constant 36 : index
    %c0_34 = arith.constant 0 : index
    %37 = vector.load %arg1[%c0_33, %c36, %c0_34] : memref<1x368x64xf32, #tpu.memory_space<vmem>>, vector<1x328x64xf32>
    %38 = vector.shape_cast %37 : vector<1x328x64xf32> to vector<328x64xf32>
    %c6 = arith.constant 6 : index
    %c0_35 = arith.constant 0 : index
    %c0_36 = arith.constant 0 : index
    %39 = vector.load %arg2[%c6, %c0_35, %c0_36] : memref<9x64x32xf32, #tpu.memory_space<vmem>>, vector<1x64x32xf32>
    %40 = vector.shape_cast %39 : vector<1x64x32xf32> to vector<64x32xf32>
    %cst_37 = arith.constant dense<0.000000e+00> : vector<328x32xf32>
    %41 = tpu.matmul %38, %40, %cst_37 {dimension_numbers = #tpu.dot_dimension_numbers<[1], [0], [0], [1], [0, 0, 1, 1], [], []>} : vector<328x64xf32>, vector<64x32xf32>, vector<328x32xf32> -> vector<328x32xf32>
    %42 = arith.addf %36, %41 : vector<328x32xf32>
    %c0_38 = arith.constant 0 : index
    %c37 = arith.constant 37 : index
    %c0_39 = arith.constant 0 : index
    %43 = vector.load %arg1[%c0_38, %c37, %c0_39] : memref<1x368x64xf32, #tpu.memory_space<vmem>>, vector<1x328x64xf32>
    %44 = vector.shape_cast %43 : vector<1x328x64xf32> to vector<328x64xf32>
    %c7 = arith.constant 7 : index
    %c0_40 = arith.constant 0 : index
    %c0_41 = arith.constant 0 : index
    %45 = vector.load %arg2[%c7, %c0_40, %c0_41] : memref<9x64x32xf32, #tpu.memory_space<vmem>>, vector<1x64x32xf32>
    %46 = vector.shape_cast %45 : vector<1x64x32xf32> to vector<64x32xf32>
    %cst_42 = arith.constant dense<0.000000e+00> : vector<328x32xf32>
    %47 = tpu.matmul %44, %46, %cst_42 {dimension_numbers = #tpu.dot_dimension_numbers<[1], [0], [0], [1], [0, 0, 1, 1], [], []>} : vector<328x64xf32>, vector<64x32xf32>, vector<328x32xf32> -> vector<328x32xf32>
    %48 = arith.addf %42, %47 : vector<328x32xf32>
    %c0_43 = arith.constant 0 : index
    %c38 = arith.constant 38 : index
    %c0_44 = arith.constant 0 : index
    %49 = vector.load %arg1[%c0_43, %c38, %c0_44] : memref<1x368x64xf32, #tpu.memory_space<vmem>>, vector<1x328x64xf32>
    %50 = vector.shape_cast %49 : vector<1x328x64xf32> to vector<328x64xf32>
    %c8 = arith.constant 8 : index
    %c0_45 = arith.constant 0 : index
    %c0_46 = arith.constant 0 : index
    %51 = vector.load %arg2[%c8, %c0_45, %c0_46] : memref<9x64x32xf32, #tpu.memory_space<vmem>>, vector<1x64x32xf32>
    %52 = vector.shape_cast %51 : vector<1x64x32xf32> to vector<64x32xf32>
    %cst_47 = arith.constant dense<0.000000e+00> : vector<328x32xf32>
    %53 = tpu.matmul %50, %52, %cst_47 {dimension_numbers = #tpu.dot_dimension_numbers<[1], [0], [0], [1], [0, 0, 1, 1], [], []>} : vector<328x64xf32>, vector<64x32xf32>, vector<328x32xf32> -> vector<328x32xf32>
    %54 = arith.addf %48, %53 : vector<328x32xf32>
    %c0_48 = arith.constant 0 : index
    %c0_49 = arith.constant 0 : index
    %55 = vector.load %arg3[%c0_48, %c0_49] : memref<1x32xf32, #tpu.memory_space<vmem>>, vector<1x32xf32>
    %56 = vector.broadcast %55 : vector<1x32xf32> to vector<328x32xf32>
    %57 = arith.addf %54, %56 : vector<328x32xf32>
    %c0_50 = arith.constant 0 : index
    %58 = memref.load %arg4[%c0_50] : memref<1xf32, #tpu.memory_space<smem>>
    %cst_51 = arith.constant 0.000000e+00 : f32
    %59 = vector.broadcast %cst_51 : f32 to vector<328x32xf32>
    %60 = arith.cmpf oge, %57, %59 : vector<328x32xf32>
    %61 = vector.broadcast %58 : f32 to vector<328x32xf32>
    %62 = arith.mulf %61, %57 : vector<328x32xf32>
    %63 = arith.select %60, %57, %62 : vector<328x32xi1>, vector<328x32xf32>
    %c0_52 = arith.constant 0 : index
    %c0_53 = arith.constant 0 : index
    %c0_54 = arith.constant 0 : index
    %64 = vector.load %arg5[%c0_52, %c0_53, %c0_54] : memref<1x328x32xf32, #tpu.memory_space<vmem>>, vector<1x328x32xf32>
    %65 = vector.shape_cast %64 : vector<1x328x32xf32> to vector<328x32xf32>
    %66 = vector.shape_cast %63 : vector<328x32xf32> to vector<1x328x32xf32>
    tpu.vector_store %arg5[%c0_52, %c0_53, %c0_54], %66 {strides = array<i32>} : memref<1x328x32xf32, #tpu.memory_space<vmem>>, vector<1x328x32xf32>,
    return
  }
  func.func @transform_0(%arg0: i32) -> (i32, i32, i32) {
    %c0_i32 = arith.constant 0 : i32
    %c0_i32_0 = arith.constant 0 : i32
    %c0_i32_1 = arith.constant 0 : i32
    return %arg0, %c0_i32, %c0_i32_0 : i32, i32, i32
  }
  func.func @transform_1(%arg0: i32) -> (i32, i32, i32) {
    %c0_i32 = arith.constant 0 : i32
    %c0_i32_0 = arith.constant 0 : i32
    %c0_i32_1 = arith.constant 0 : i32
    %c0_i32_2 = arith.constant 0 : i32
    return %c0_i32, %c0_i32_0, %c0_i32_1 : i32, i32, i32
  }
  func.func @transform_2(%arg0: i32) -> (i32, i32) {
    %c0_i32 = arith.constant 0 : i32
    %c0_i32_0 = arith.constant 0 : i32
    %c0_i32_1 = arith.constant 0 : i32
    return %c0_i32, %c0_i32_0 : i32, i32
  }
  func.func @transform_3(%arg0: i32) -> i32 {
    %c0_i32 = arith.constant 0 : i32
    %c0_i32_0 = arith.constant 0 : i32
    return %c0_i32 : i32
  }
  func.func @transform_4(%arg0: i32) -> (i32, i32, i32) {
    %c0_i32 = arith.constant 0 : i32
    %c0_i32_0 = arith.constant 0 : i32
    %c0_i32_1 = arith.constant 0 : i32
    return %arg0, %c0_i32, %c0_i32_0 : i32, i32, i32
  }
}

module attributes {stable_mosaic.version = 11 : i64} {
  func.func @_conv3x3_kernel(%arg0: i32, %arg1: memref<1x368x32xf32, #tpu.memory_space<vmem>>, %arg2: memref<9x32x32xf32, #tpu.memory_space<vmem>>, %arg3: memref<1x32xf32, #tpu.memory_space<vmem>>, %arg4: memref<1xf32, #tpu.memory_space<smem>>, %arg5: memref<1x328x32xf32, #tpu.memory_space<vmem>>) attributes {dimension_semantics = [#tpu.dimension_semantics<parallel>], iteration_bounds = array<i64: 2>, scalar_prefetch = 0 : i64, scratch_operands = 0 : i64, tpu.core_type = #tpu.core_type<tc>, window_params = [{transform_indices = @transform_0, window_bounds = array<i64: 1, 368, 32>}, {pipeline_mode = #tpu.pipeline_mode<synchronous>, transform_indices = @transform_1, window_bounds = array<i64: 9, 32, 32>}, {pipeline_mode = #tpu.pipeline_mode<synchronous>, transform_indices = @transform_2, window_bounds = array<i64: 1, 32>}, {transform_indices = @transform_3, window_bounds = array<i64: 1>}, {transform_indices = @transform_4, window_bounds = array<i64: 1, 328, 32>}]} {
    %cst = arith.constant 0.000000e+00 : f32
    %0 = vector.broadcast %cst : f32 to vector<328x32xf32>
    %c0 = arith.constant 0 : index
    %c0_0 = arith.constant 0 : index
    %c0_1 = arith.constant 0 : index
    %1 = vector.load %arg1[%c0, %c0_0, %c0_1] : memref<1x368x32xf32, #tpu.memory_space<vmem>>, vector<1x328x32xf32>
    %2 = vector.shape_cast %1 : vector<1x328x32xf32> to vector<328x32xf32>
    %c0_2 = arith.constant 0 : index
    %c0_3 = arith.constant 0 : index
    %c0_4 = arith.constant 0 : index
    %3 = vector.load %arg2[%c0_2, %c0_3, %c0_4] : memref<9x32x32xf32, #tpu.memory_space<vmem>>, vector<1x32x32xf32>
    %4 = vector.shape_cast %3 : vector<1x32x32xf32> to vector<32x32xf32>
    %cst_5 = arith.constant dense<0.000000e+00> : vector<328x32xf32>
    %5 = tpu.matmul %2, %4, %cst_5 {dimension_numbers = #tpu.dot_dimension_numbers<[1], [0], [0], [1], [0, 0, 1, 1], [], []>} : vector<328x32xf32>, vector<32x32xf32>, vector<328x32xf32> -> vector<328x32xf32>
    %6 = arith.addf %0, %5 : vector<328x32xf32>
    %c0_6 = arith.constant 0 : index
    %c1 = arith.constant 1 : index
    %c0_7 = arith.constant 0 : index
    %7 = vector.load %arg1[%c0_6, %c1, %c0_7] : memref<1x368x32xf32, #tpu.memory_space<vmem>>, vector<1x328x32xf32>
    %8 = vector.shape_cast %7 : vector<1x328x32xf32> to vector<328x32xf32>
    %c1_8 = arith.constant 1 : index
    %c0_9 = arith.constant 0 : index
    %c0_10 = arith.constant 0 : index
    %9 = vector.load %arg2[%c1_8, %c0_9, %c0_10] : memref<9x32x32xf32, #tpu.memory_space<vmem>>, vector<1x32x32xf32>
    %10 = vector.shape_cast %9 : vector<1x32x32xf32> to vector<32x32xf32>
    %cst_11 = arith.constant dense<0.000000e+00> : vector<328x32xf32>
    %11 = tpu.matmul %8, %10, %cst_11 {dimension_numbers = #tpu.dot_dimension_numbers<[1], [0], [0], [1], [0, 0, 1, 1], [], []>} : vector<328x32xf32>, vector<32x32xf32>, vector<328x32xf32> -> vector<328x32xf32>
    %12 = arith.addf %6, %11 : vector<328x32xf32>
    %c0_12 = arith.constant 0 : index
    %c2 = arith.constant 2 : index
    %c0_13 = arith.constant 0 : index
    %13 = vector.load %arg1[%c0_12, %c2, %c0_13] : memref<1x368x32xf32, #tpu.memory_space<vmem>>, vector<1x328x32xf32>
    %14 = vector.shape_cast %13 : vector<1x328x32xf32> to vector<328x32xf32>
    %c2_14 = arith.constant 2 : index
    %c0_15 = arith.constant 0 : index
    %c0_16 = arith.constant 0 : index
    %15 = vector.load %arg2[%c2_14, %c0_15, %c0_16] : memref<9x32x32xf32, #tpu.memory_space<vmem>>, vector<1x32x32xf32>
    %16 = vector.shape_cast %15 : vector<1x32x32xf32> to vector<32x32xf32>
    %cst_17 = arith.constant dense<0.000000e+00> : vector<328x32xf32>
    %17 = tpu.matmul %14, %16, %cst_17 {dimension_numbers = #tpu.dot_dimension_numbers<[1], [0], [0], [1], [0, 0, 1, 1], [], []>} : vector<328x32xf32>, vector<32x32xf32>, vector<328x32xf32> -> vector<328x32xf32>
    %18 = arith.addf %12, %17 : vector<328x32xf32>
    %c0_18 = arith.constant 0 : index
    %c18 = arith.constant 18 : index
    %c0_19 = arith.constant 0 : index
    %19 = vector.load %arg1[%c0_18, %c18, %c0_19] : memref<1x368x32xf32, #tpu.memory_space<vmem>>, vector<1x328x32xf32>
    %20 = vector.shape_cast %19 : vector<1x328x32xf32> to vector<328x32xf32>
    %c3 = arith.constant 3 : index
    %c0_20 = arith.constant 0 : index
    %c0_21 = arith.constant 0 : index
    %21 = vector.load %arg2[%c3, %c0_20, %c0_21] : memref<9x32x32xf32, #tpu.memory_space<vmem>>, vector<1x32x32xf32>
    %22 = vector.shape_cast %21 : vector<1x32x32xf32> to vector<32x32xf32>
    %cst_22 = arith.constant dense<0.000000e+00> : vector<328x32xf32>
    %23 = tpu.matmul %20, %22, %cst_22 {dimension_numbers = #tpu.dot_dimension_numbers<[1], [0], [0], [1], [0, 0, 1, 1], [], []>} : vector<328x32xf32>, vector<32x32xf32>, vector<328x32xf32> -> vector<328x32xf32>
    %24 = arith.addf %18, %23 : vector<328x32xf32>
    %c0_23 = arith.constant 0 : index
    %c19 = arith.constant 19 : index
    %c0_24 = arith.constant 0 : index
    %25 = vector.load %arg1[%c0_23, %c19, %c0_24] : memref<1x368x32xf32, #tpu.memory_space<vmem>>, vector<1x328x32xf32>
    %26 = vector.shape_cast %25 : vector<1x328x32xf32> to vector<328x32xf32>
    %c4 = arith.constant 4 : index
    %c0_25 = arith.constant 0 : index
    %c0_26 = arith.constant 0 : index
    %27 = vector.load %arg2[%c4, %c0_25, %c0_26] : memref<9x32x32xf32, #tpu.memory_space<vmem>>, vector<1x32x32xf32>
    %28 = vector.shape_cast %27 : vector<1x32x32xf32> to vector<32x32xf32>
    %cst_27 = arith.constant dense<0.000000e+00> : vector<328x32xf32>
    %29 = tpu.matmul %26, %28, %cst_27 {dimension_numbers = #tpu.dot_dimension_numbers<[1], [0], [0], [1], [0, 0, 1, 1], [], []>} : vector<328x32xf32>, vector<32x32xf32>, vector<328x32xf32> -> vector<328x32xf32>
    %30 = arith.addf %24, %29 : vector<328x32xf32>
    %c0_28 = arith.constant 0 : index
    %c20 = arith.constant 20 : index
    %c0_29 = arith.constant 0 : index
    %31 = vector.load %arg1[%c0_28, %c20, %c0_29] : memref<1x368x32xf32, #tpu.memory_space<vmem>>, vector<1x328x32xf32>
    %32 = vector.shape_cast %31 : vector<1x328x32xf32> to vector<328x32xf32>
    %c5 = arith.constant 5 : index
    %c0_30 = arith.constant 0 : index
    %c0_31 = arith.constant 0 : index
    %33 = vector.load %arg2[%c5, %c0_30, %c0_31] : memref<9x32x32xf32, #tpu.memory_space<vmem>>, vector<1x32x32xf32>
    %34 = vector.shape_cast %33 : vector<1x32x32xf32> to vector<32x32xf32>
    %cst_32 = arith.constant dense<0.000000e+00> : vector<328x32xf32>
    %35 = tpu.matmul %32, %34, %cst_32 {dimension_numbers = #tpu.dot_dimension_numbers<[1], [0], [0], [1], [0, 0, 1, 1], [], []>} : vector<328x32xf32>, vector<32x32xf32>, vector<328x32xf32> -> vector<328x32xf32>
    %36 = arith.addf %30, %35 : vector<328x32xf32>
    %c0_33 = arith.constant 0 : index
    %c36 = arith.constant 36 : index
    %c0_34 = arith.constant 0 : index
    %37 = vector.load %arg1[%c0_33, %c36, %c0_34] : memref<1x368x32xf32, #tpu.memory_space<vmem>>, vector<1x328x32xf32>
    %38 = vector.shape_cast %37 : vector<1x328x32xf32> to vector<328x32xf32>
    %c6 = arith.constant 6 : index
    %c0_35 = arith.constant 0 : index
    %c0_36 = arith.constant 0 : index
    %39 = vector.load %arg2[%c6, %c0_35, %c0_36] : memref<9x32x32xf32, #tpu.memory_space<vmem>>, vector<1x32x32xf32>
    %40 = vector.shape_cast %39 : vector<1x32x32xf32> to vector<32x32xf32>
    %cst_37 = arith.constant dense<0.000000e+00> : vector<328x32xf32>
    %41 = tpu.matmul %38, %40, %cst_37 {dimension_numbers = #tpu.dot_dimension_numbers<[1], [0], [0], [1], [0, 0, 1, 1], [], []>} : vector<328x32xf32>, vector<32x32xf32>, vector<328x32xf32> -> vector<328x32xf32>
    %42 = arith.addf %36, %41 : vector<328x32xf32>
    %c0_38 = arith.constant 0 : index
    %c37 = arith.constant 37 : index
    %c0_39 = arith.constant 0 : index
    %43 = vector.load %arg1[%c0_38, %c37, %c0_39] : memref<1x368x32xf32, #tpu.memory_space<vmem>>, vector<1x328x32xf32>
    %44 = vector.shape_cast %43 : vector<1x328x32xf32> to vector<328x32xf32>
    %c7 = arith.constant 7 : index
    %c0_40 = arith.constant 0 : index
    %c0_41 = arith.constant 0 : index
    %45 = vector.load %arg2[%c7, %c0_40, %c0_41] : memref<9x32x32xf32, #tpu.memory_space<vmem>>, vector<1x32x32xf32>
    %46 = vector.shape_cast %45 : vector<1x32x32xf32> to vector<32x32xf32>
    %cst_42 = arith.constant dense<0.000000e+00> : vector<328x32xf32>
    %47 = tpu.matmul %44, %46, %cst_42 {dimension_numbers = #tpu.dot_dimension_numbers<[1], [0], [0], [1], [0, 0, 1, 1], [], []>} : vector<328x32xf32>, vector<32x32xf32>, vector<328x32xf32> -> vector<328x32xf32>
    %48 = arith.addf %42, %47 : vector<328x32xf32>
    %c0_43 = arith.constant 0 : index
    %c38 = arith.constant 38 : index
    %c0_44 = arith.constant 0 : index
    %49 = vector.load %arg1[%c0_43, %c38, %c0_44] : memref<1x368x32xf32, #tpu.memory_space<vmem>>, vector<1x328x32xf32>
    %50 = vector.shape_cast %49 : vector<1x328x32xf32> to vector<328x32xf32>
    %c8 = arith.constant 8 : index
    %c0_45 = arith.constant 0 : index
    %c0_46 = arith.constant 0 : index
    %51 = vector.load %arg2[%c8, %c0_45, %c0_46] : memref<9x32x32xf32, #tpu.memory_space<vmem>>, vector<1x32x32xf32>
    %52 = vector.shape_cast %51 : vector<1x32x32xf32> to vector<32x32xf32>
    %cst_47 = arith.constant dense<0.000000e+00> : vector<328x32xf32>
    %53 = tpu.matmul %50, %52, %cst_47 {dimension_numbers = #tpu.dot_dimension_numbers<[1], [0], [0], [1], [0, 0, 1, 1], [], []>} : vector<328x32xf32>, vector<32x32xf32>, vector<328x32xf32> -> vector<328x32xf32>
    %54 = arith.addf %48, %53 : vector<328x32xf32>
    %c0_48 = arith.constant 0 : index
    %c0_49 = arith.constant 0 : index
    %55 = vector.load %arg3[%c0_48, %c0_49] : memref<1x32xf32, #tpu.memory_space<vmem>>, vector<1x32xf32>
    %56 = vector.broadcast %55 : vector<1x32xf32> to vector<328x32xf32>
    %57 = arith.addf %54, %56 : vector<328x32xf32>
    %c0_50 = arith.constant 0 : index
    %58 = memref.load %arg4[%c0_50] : memref<1xf32, #tpu.memory_space<smem>>
    %cst_51 = arith.constant 0.000000e+00 : f32
    %59 = vector.broadcast %cst_51 : f32 to vector<328x32xf32>
    %60 = arith.cmpf oge, %57, %59 : vector<328x32xf32>
    %61 = vector.broadcast %58 : f32 to vector<328x32xf32>
    %62 = arith.mulf %61, %57 : vector<328x32xf32>
    %63 = arith.select %60, %57, %62 : vector<328x32xi1>, vector<328x32xf32>
    %c0_52 = arith.constant 0 : index
    %c0_53 = arith.constant 0 : index
    %c0_54 = arith.constant 0 : index
    %64 = vector.load %arg5[%c0_52, %c0_53, %c0_54] : memref<1x328x32xf32, #tpu.memory_space<vmem>>, vector<1x328x32xf32>
    %65 = vector.shape_cast %64 : vector<1x328x32xf32> to vector<328x32xf32>
    %66 = vector.shape_cast %63 : vector<328x32xf32> to vector<1x328x32xf32>
    tpu.vector_store %arg5[%c0_52, %c0_53, %c0_54], %66 {strides = array<i32>} : memref<1x328x32xf32, #tpu.memory_space<vmem>>, vector<1x328x32xf32>,
    return
  }
  func.func @transform_0(%arg0: i32) -> (i32, i32, i32) {
    %c0_i32 = arith.constant 0 : i32
    %c0_i32_0 = arith.constant 0 : i32
    %c0_i32_1 = arith.constant 0 : i32
    return %arg0, %c0_i32, %c0_i32_0 : i32, i32, i32
  }
  func.func @transform_1(%arg0: i32) -> (i32, i32, i32) {
    %c0_i32 = arith.constant 0 : i32
    %c0_i32_0 = arith.constant 0 : i32
    %c0_i32_1 = arith.constant 0 : i32
    %c0_i32_2 = arith.constant 0 : i32
    return %c0_i32, %c0_i32_0, %c0_i32_1 : i32, i32, i32
  }
  func.func @transform_2(%arg0: i32) -> (i32, i32) {
    %c0_i32 = arith.constant 0 : i32
    %c0_i32_0 = arith.constant 0 : i32
    %c0_i32_1 = arith.constant 0 : i32
    return %c0_i32, %c0_i32_0 : i32, i32
  }
  func.func @transform_3(%arg0: i32) -> i32 {
    %c0_i32 = arith.constant 0 : i32
    %c0_i32_0 = arith.constant 0 : i32
    return %c0_i32 : i32
  }
  func.func @transform_4(%arg0: i32) -> (i32, i32, i32) {
    %c0_i32 = arith.constant 0 : i32
    %c0_i32_0 = arith.constant 0 : i32
    %c0_i32_1 = arith.constant 0 : i32
    return %arg0, %c0_i32, %c0_i32_0 : i32, i32, i32
  }
}

</mosaic_0001>

<llo_original>
// kernel: decoding_block_forward.3
$region0: #{decoding_block_forward.3}
  #allocation0 [shape = 'u32[]', space=smem, size = 0x4, offset = 0x4, fixed_abs, tag = 'smem constant byte address 0x4 - core index']
  #allocation1 [shape = 'u32[144,128]{1,0:T(1,128)}', space=vmem, size = 0x12000, scoped, tag = 'internal scratch']
  %s0 = inlined_call_operand.hbm [shape: f32[128,64], index: 0, kind: input, shape index: {}]
  %s1 = inlined_call_operand.vmem [shape: f32[64,32], index: 1, kind: input, shape index: {}]
  %s2 = inlined_call_operand.vmem [shape: f32[1,32], index: 2, kind: input, shape index: {}]
  %s3 = inlined_call_operand.vmem [shape: f32[128,32], index: 3, kind: output, shape index: {}]
  %s4 = sld [smem:[#allocation0]]
  $region49: #{decoding_block_forward.3} parent=0
    _
  %s6 = ssub.s32 1, %s4
  %s7 = scalar_select 0, %s6, %s4
  $region1: #{decoding_block_forward.3} parent=0
    #allocation2 [shape = 'u8[65536]{0}', space=vmem, size = 0x10000, scoped, tag = 'input window, operand 0']
    #allocation3 [shape = 's32[2]{0}', space=sflag, size = 0x8, scoped, tag = 'scoped memory for decoding_block_forward.3']
    %8 = vsyncpa [#allocation3], 0
    %s9 = scalar_lea.sflag [#allocation3], 1
    %10 = vsyncpa %s9, 0
    loop: start=0, step=1, limit=4
    $region2: #{decoding_block_forward.3} parent=1 // loop_pre_header
      _
    $region3: #{decoding_block_forward.3} parent=1 // loop_header
      %s12 = sphi 0, %s16
      %p13 = scmp.ge.s32.totalorder %s12, 4
      %s22 = sphi 0, %s24
      %s25 = sphi 0, %s22
      %s26 = sphi 0, %s25
      %s42 = sphi 0, %s26
      %s46 = sphi 0, %s46
      %s48 = sphi 0, %s46
      %s49 = sphi 0, %s48
      %s63 = sphi 0, %s49
      %s67 = sphi 0, %s67
      %s69 = sphi 0, %s67
      %s70 = sphi 0, %s69
      %s84 = sphi 0, %s70
      %s90 = sphi 0, %s92
      %s93 = sphi 0, %s90
      %s94 = sphi 0, %s93
      %s110 = sphi 0, %s94
    $region4: #{decoding_block_forward.3} parent=1 // loop_header_branch
      %15 = sbr.rel (%p13) target = $region8
    $region5: #{decoding_block_forward.3} parent=1 // loop_body
      %s17 = ssub.s32 %s12, 1
      %s18 = ssub.s32 %s12, 2
      %s19 = sadd.s32 %s12, 1
      %s20 = ssub.s32 %s12, %s19
      %p21 = scmp.eq.s32.totalorder %s20, 0
      %s23 = sadd.s32 %s22, 1
      %s24 = scalar_select %p21, %s22, %s23
      %p27 = pneg %p21
      %p28 = scmp.eq.s32.totalorder %s12, 1
      %p29 = por %p27, %p28
      %p30 = scmp.ne.s32.totalorder %s22, %s25
      %p31 = scmp.eq.s32.totalorder %s12, 0
      %p32 = por %p30, %p31
      %p33 = scmp.ne.s32.totalorder %s22, %s25
      %p34 = scmp.eq.s32.totalorder %s17, 1
      %p35 = por %p33, %p34
      %p36 = scmp.ne.s32.totalorder %s25, %s26
      %p37 = scmp.eq.s32.totalorder %s17, 0
      %p38 = por %p36, %p37
      %p39 = scmp.ne.s32.totalorder %s25, %s26
      %p40 = scmp.eq.s32.totalorder %s18, 1
      %p41 = por %p39, %p40
      %p43 = scmp.ne.s32.totalorder %s26, %s42
      %p44 = scmp.eq.s32.totalorder %s18, 0
      %p45 = por %p43, %p44
      %s47 = sadd.s32 %s46, 1
      %p50 = scmp.eq.s32.totalorder %s12, 1
      %p51 = scmp.ne.s32.totalorder %s46, %s48
      %p52 = scmp.eq.s32.totalorder %s12, 0
      %p53 = por %p51, %p52
      %p54 = scmp.ne.s32.totalorder %s46, %s48
      %p55 = scmp.eq.s32.totalorder %s17, 1
      %p56 = por %p54, %p55
      %p57 = scmp.ne.s32.totalorder %s48, %s49
      %p58 = scmp.eq.s32.totalorder %s17, 0
      %p59 = por %p57, %p58
      %p60 = scmp.ne.s32.totalorder %s48, %s49
      %p61 = scmp.eq.s32.totalorder %s18, 1
      %p62 = por %p60, %p61
      %p64 = scmp.ne.s32.totalorder %s49, %s63
      %p65 = scmp.eq.s32.totalorder %s18, 0
      %p66 = por %p64, %p65
      %s68 = sadd.s32 %s67, 1
      %p71 = scmp.eq.s32.totalorder %s12, 1
      %p72 = scmp.ne.s32.totalorder %s67, %s69
      %p73 = scmp.eq.s32.totalorder %s12, 0
      %p74 = por %p72, %p73
      %p75 = scmp.ne.s32.totalorder %s67, %s69
      %p76 = scmp.eq.s32.totalorder %s17, 1
      %p77 = por %p75, %p76
      %p78 = scmp.ne.s32.totalorder %s69, %s70
      %p79 = scmp.eq.s32.totalorder %s17, 0
      %p80 = por %p78, %p79
      %p81 = scmp.ne.s32.totalorder %s69, %s70
      %p82 = scmp.eq.s32.totalorder %s18, 1
      %p83 = por %p81, %p82
      %p85 = scmp.ne.s32.totalorder %s70, %s84
      %p86 = scmp.eq.s32.totalorder %s18, 0
      %p87 = por %p85, %p86
      %s88 = ssub.s32 %s12, %s19
      %p89 = scmp.eq.s32.totalorder %s88, 0
      %s91 = sadd.s32 %s90, 1
      %s92 = scalar_select %p89, %s90, %s91
      %p95 = pneg %p89
      %p96 = scmp.eq.s32.totalorder %s12, 1
      %p97 = por %p95, %p96
      %p98 = scmp.ne.s32.totalorder %s90, %s93
      %p99 = scmp.eq.s32.totalorder %s12, 0
      %p100 = por %p98, %p99
      %p101 = scmp.ne.s32.totalorder %s90, %s93
      %p102 = scmp.eq.s32.totalorder %s17, 1
      %p103 = por %p101, %p102
      %p104 = scmp.ne.s32.totalorder %s93, %s94
      %p105 = scmp.eq.s32.totalorder %s17, 0
      %p106 = por %p104, %p105
      %p107 = scmp.ne.s32.totalorder %s93, %s94
      %p108 = scmp.eq.s32.totalorder %s18, 1
      %p109 = por %p107, %p108
      %p111 = scmp.ne.s32.totalorder %s94, %s110
      %p112 = scmp.eq.s32.totalorder %s18, 0
      %p113 = por %p111, %p112
      %p114 = scmp.le.s32.totalorder 1, %s12
      %p115 = scmp.lt.s32.totalorder %s12, 3
      %p116 = pnand %p114, %p115
      %p117 = pneg %p116
      // Predicated region
      $region9: #{decoding_block_forward.3} parent=5 // pred_check
        _
      $region10: #{decoding_block_forward.3} parent=5 // pred_check_branch
        %119 = sbr.rel (%p116) target = $region12
      $region11: #{decoding_block_forward.3} parent=5 // pred_region
        %s120 = ssub.s32 %s12, 1
        // Predicated region
        $region13: #{decoding_block_forward.3} parent=11 // pred_check
          %p121 = pneg %p59
        $region14: #{decoding_block_forward.3} parent=11 // pred_check_branch
          %123 = sbr.rel (%p121) target = $region16
        $region15: #{decoding_block_forward.3} parent=11 // pred_region
          _
        $region16: #{decoding_block_forward.3} parent=11 // pred_fallthru
          _
        // Predicated region
        $region17: #{decoding_block_forward.3} parent=11 // pred_check
          %p124 = pneg %p80
        $region18: #{decoding_block_forward.3} parent=11 // pred_check_branch
          %126 = sbr.rel (%p124) target = $region20
        $region19: #{decoding_block_forward.3} parent=11 // pred_region
          _
        $region20: #{decoding_block_forward.3} parent=11 // pred_fallthru
          _
      $region12: #{decoding_block_forward.3} parent=5 // pred_fallthru
        _
      %p127 = scmp.lt.s32.totalorder %s12, 2
      // Predicated region
      $region21: #{decoding_block_forward.3} parent=5 // pred_check
        %p128 = pneg %p127
      $region22: #{decoding_block_forward.3} parent=5 // pred_check_branch
        %130 = sbr.rel (%p128) target = $region24
      $region23: #{decoding_block_forward.3} parent=5 // pred_region
        // Predicated region
        $region25: #{decoding_block_forward.3} parent=23 // pred_check
          %p131 = pneg %p32
        $region26: #{decoding_block_forward.3} parent=23 // pred_check_branch
          %133 = sbr.rel (%p131) target = $region28
        $region27: #{decoding_block_forward.3} parent=23 // pred_region
          %s134 = sand.u32 %s22, 1
          %s135 = scalar_lea.sflag [#allocation3], %s134
          %s136 = sand.u32 %s22, 1
          %s137 = smul.addr %s136, 64
          %s138 = scalar_lea.vmem [#allocation2], %s137
          %s139 = smul.u32 8, %s12
          %s141 = ssub.s32 1024, 1024
          %142 = vsyncadd %s135, %s141
          %s143 = smul.addr %s139, 128
          %s144 = scalar_lea.hbm %s0, %s143
          %s145 = sshll.u32 %s138, 4
          %s146 = int_to_ptr.vmem [resolvable:$true] %s145
          %151 = dma.hbm_to_vmem [thread:$0]  %s144, 1024, %s146, %s135, 128, 128, 8
        $region28: #{decoding_block_forward.3} parent=23 // pred_fallthru
          _
      $region24: #{decoding_block_forward.3} parent=5 // pred_fallthru
        _
      %p152 = scmp.le.s32.totalorder 1, %s12
      %p153 = scmp.lt.s32.totalorder %s12, 3
      %p154 = pnand %p152, %p153
      %p155 = pneg %p154
      // Predicated region
      $region29: #{decoding_block_forward.3} parent=5 // pred_check
        _
      $region30: #{decoding_block_forward.3} parent=5 // pred_check_branch
        %157 = sbr.rel (%p154) target = $region32
      $region31: #{decoding_block_forward.3} parent=5 // pred_region
        %s158 = ssub.s32 %s12, 1
        %s159 = sand.u32 %s25, 1
        %s160 = scalar_lea.sflag [#allocation3], %s159
        %s161 = sand.u32 %s25, 1
        %s162 = smul.addr %s161, 64
        %s163 = scalar_lea.vmem [#allocation2], %s162
        // Predicated region
        $region33: #{decoding_block_forward.3} parent=31 // pred_check
          %p164 = pneg %p38
        $region34: #{decoding_block_forward.3} parent=31 // pred_check_branch
          %166 = sbr.rel (%p164) target = $region36
        $region35: #{decoding_block_forward.3} parent=31 // pred_region
          %167 = dma.done %s160, 1024
        $region36: #{decoding_block_forward.3} parent=31 // pred_fallthru
          _
        %s168 = sand.u32 %s25, 1
        %s169 = scalar_lea.sflag [#allocation3], %s168
        %s170 = sand.u32 %s25, 1
        %s171 = smul.addr %s170, 64
        %s172 = scalar_lea.vmem [#allocation2], %s171
        %p173 = pneg %p38
        %p174 = pneg %p35
        %p175 = pneg %p59
        %p176 = pneg %p56
        %p177 = pneg %p80
        %p178 = pneg %p77
        %p179 = pneg %p106
        %p180 = pneg %p103
        %s181 = smul.u32 8, %s17
        %p182 = scmp.lt.s32.totalorder %s181, 15
        %s183 = scalar_select %p182, %s181, 15
        %s184 = smul.addr %s183, 8
        %s185 = scalar_lea.vmem %s3, %s184
        %s186 = smul.u32 8, %s17
        %s187 = smul.u32 8, %s17
        %p188 = scmp.lt.s32.totalorder %s187, 15
        %s189 = scalar_select %p188, %s187, 15
        %s190 = smul.addr %s189, 8
        %s191 = scalar_lea.vmem %s3, %s190
        %s192 = smul.u32 8, %s17
        %v193 = vld [vmem:[%s163] sm:$0xff]
        %v194 = vld [vmem:[%s163 + $0x8] sm:$0xff]
        %v195 = vld [vmem:[%s163 + $0x10] sm:$0xff]
        %v196 = vld [vmem:[%s163 + $0x18] sm:$0xff]
        %v197 = vld [vmem:[%s163 + $0x20] sm:$0xff]
        %v198 = vld [vmem:[%s163 + $0x28] sm:$0xff]
        %v199 = vld [vmem:[%s163 + $0x30] sm:$0xff]
        %v200 = vld [vmem:[%s163 + $0x38] sm:$0xff]
        %v201 = vld [vmem:[%s1] sm:$0xff]
        %v202 = vld [vmem:[%s1 + $0x8] sm:$0xff]
        %v203 = vld [vmem:[%s1 + $0x10] sm:$0xff]
        %v204 = vld [vmem:[%s1 + $0x18] sm:$0xff]
        %v205 = vld [vmem:[%s1 + $0x20] sm:$0xff]
        %v206 = vld [vmem:[%s1 + $0x28] sm:$0xff]
        %v207 = vld [vmem:[%s1 + $0x30] sm:$0xff]
        %v208 = vld [vmem:[%s1 + $0x38] sm:$0xff]
        %v209 = vld [vmem:[%s2] sm:$0x1]
        %v211 = vlaneseq
        %v212 = vshrl.u32 %v211, 7
        %v213 = vsub.s32 0, %v212
        %v214 = vrot.slane %v209, %v213
        %vm216 = vcmask 523264
        %v218 = vsel %vm216, %v193, 0
        %v221 = vsel %vm216, %v194, 0
        %v224 = vsel %vm216, %v195, 0
        %v227 = vsel %vm216, %v196, 0
        %v230 = vsel %vm216, %v197, 0
        %v233 = vsel %vm216, %v198, 0
        %v236 = vsel %vm216, %v199, 0
        %v239 = vsel %vm216, %v200, 0
        %241 = vmatprep.subr.mxu0 0.0
        %242 = vmatpush1.msra.mxu0 %v201
        %243 = vmatprep.subr.mxu0 0.0
        %244 = vmatpush1.msra.mxu0 %v202
        %245 = vmatprep.subr.mxu0 0.0
        %246 = vmatpush1.msra.mxu0 %v203
        %247 = vmatprep.subr.mxu0 0.0
        %248 = vmatpush1.msra.mxu0 %v204
        %249 = vmatprep.subr.mxu0 0.0
        %250 = vmatpush1.msra.mxu0 %v205
        %251 = vmatprep.subr.mxu0 0.0
        %252 = vmatpush1.msra.mxu0 %v206
        %253 = vmatprep.subr.mxu0 0.0
        %254 = vmatpush1.msra.mxu0 %v207
        %255 = vmatprep.subr.mxu0 0.0
        %256 = vmatpush1.msra.mxu0 %v208
        %257 = vmatprep.subr.mxu0 0.0
        %258 = vmatpush1.msra.mxu0 0.0
        %259 = vmatprep.subr.mxu0 0.0
        %260 = vmatpush1.msra.mxu0 0.0
        %261 = vmatprep.subr.mxu0 0.0
        %262 = vmatpush1.msra.mxu0 0.0
        %263 = vmatprep.subr.mxu0 0.0
        %264 = vmatpush1.msra.mxu0 0.0
        %265 = vmatprep.subr.mxu0 0.0
        %266 = vmatpush1.msra.mxu0 0.0
        %267 = vmatprep.subr.mxu0 0.0
        %268 = vmatpush1.msra.mxu0 0.0
        %269 = vmatprep.subr.mxu0 0.0
        %270 = vmatpush1.msra.mxu0 0.0
        %271 = vmatprep.subr.mxu0 0.0
        %272 = vmatpush1.msra.mxu0 0.0
        %273 = vmatprep.subr.mxu0 0.0
        %274 = vmatpush1.msra.mxu0 0.0
        %275 = vmatprep.subr.mxu0 0.0
        %276 = vmatpush1.msra.mxu0 0.0
        %277 = vmatprep.subr.mxu0 0.0
        %278 = vmatpush1.msra.mxu0 0.0
        %279 = vmatprep.subr.mxu0 0.0
        %280 = vmatpush1.msra.mxu0 0.0
        %281 = vmatprep.subr.mxu0 0.0
        %282 = vmatpush1.msra.mxu0 0.0
        %283 = vmatprep.subr.mxu0 0.0
        %284 = vmatpush1.msra.mxu0 0.0
        %285 = vmatprep.subr.mxu0 0.0
        %286 = vmatpush1.msra.mxu0 0.0
        %287 = vmatprep.subr.mxu0 0.0
        %288 = vmatpush1.msra.mxu0 0.0
        %289 = vmatprep.subr.mxu0 0.0
        %290 = vmatpush1.msra.mxu0 0.0
        %291 = vmatprep.subr.mxu0 0.0
        %292 = vmatpush1.msra.mxu0 0.0
        %293 = vmatprep.subr.mxu0 0.0
        %294 = vmatpush1.msra.mxu0 0.0
        %295 = vmatprep.subr.mxu0 0.0
        %296 = vmatpush1.msra.mxu0 0.0
        %297 = vmatprep.subr.mxu0 0.0
        %298 = vmatpush1.msra.mxu0 0.0
        %299 = vmatprep.subr.mxu0 0.0
        %300 = vmatpush1.msra.mxu0 0.0
        %301 = vmatprep.subr.mxu0 0.0
        %302 = vmatpush1.msra.mxu0 0.0
        %303 = vmatprep.subr.mxu0 0.0
        %304 = vmatpush1.msra.mxu0 0.0
        %305 = vmatprep.mubr.f32.mxu0 0.0
        %306 = vmatmul.mubr.f32.gmra.mrb[0].mxu0 %v218
        %v307 = vpop.f32.mrb[0].mxu0
        %v308 = vadd.f32 %v214, %v307
        %v309 = vpop.f32.mrb[0].mxu0
        %310 = vmatprep.mubr.f32.mxu0 0.0
        %311 = vmatmul.mubr.f32.gmra.mrb[0].mxu0 %v221
        %v312 = vpop.f32.mrb[0].mxu0
        %v313 = vadd.f32 %v214, %v312
        %v314 = vpop.f32.mrb[0].mxu0
        %315 = vmatprep.mubr.f32.mxu0 0.0
        %316 = vmatmul.mubr.f32.gmra.mrb[0].mxu0 %v224
        %v317 = vpop.f32.mrb[0].mxu0
        %v318 = vadd.f32 %v214, %v317
        %v319 = vpop.f32.mrb[0].mxu0
        %320 = vmatprep.mubr.f32.mxu0 0.0
        %321 = vmatmul.mubr.f32.gmra.mrb[0].mxu0 %v227
        %v322 = vpop.f32.mrb[0].mxu0
        %v323 = vadd.f32 %v214, %v322
        %v324 = vpop.f32.mrb[0].mxu0
        %325 = vmatprep.mubr.f32.mxu0 0.0
        %326 = vmatmul.mubr.f32.gmra.mrb[0].mxu0 %v230
        %v327 = vpop.f32.mrb[0].mxu0
        %v328 = vadd.f32 %v214, %v327
        %v329 = vpop.f32.mrb[0].mxu0
        %330 = vmatprep.mubr.f32.mxu0 0.0
        %331 = vmatmul.mubr.f32.gmra.mrb[0].mxu0 %v233
        %v332 = vpop.f32.mrb[0].mxu0
        %v333 = vadd.f32 %v214, %v332
        %v334 = vpop.f32.mrb[0].mxu0
        %335 = vmatprep.mubr.f32.mxu0 0.0
        %336 = vmatmul.mubr.f32.gmra.mrb[0].mxu0 %v236
        %v337 = vpop.f32.mrb[0].mxu0
        %v338 = vadd.f32 %v214, %v337
        %v339 = vpop.f32.mrb[0].mxu0
        %340 = vmatprep.mubr.f32.mxu0 0.0
        %341 = vmatmul.mubr.f32.gmra.mrb[0].mxu0 %v239
        %v342 = vpop.f32.mrb[0].mxu0
        %v343 = vadd.f32 %v214, %v342
        %v344 = vpop.f32.mrb[0].mxu0
        %345 = vdwg.mxu0
        %vm346 = vcmask 261120
        %347 = vst.msk [vmem:[%s191] sm:$0xff] %vm346, %v308
        %348 = vst.msk [vmem:[%s191 + $0x8] sm:$0xff] %vm346, %v313
        %349 = vst.msk [vmem:[%s191 + $0x10] sm:$0xff] %vm346, %v318
        %350 = vst.msk [vmem:[%s191 + $0x18] sm:$0xff] %vm346, %v323
        %351 = vst.msk [vmem:[%s191 + $0x20] sm:$0xff] %vm346, %v328
        %352 = vst.msk [vmem:[%s191 + $0x28] sm:$0xff] %vm346, %v333
        %353 = vst.msk [vmem:[%s191 + $0x30] sm:$0xff] %vm346, %v338
        %354 = vst.msk [vmem:[%s191 + $0x38] sm:$0xff] %vm346, %v343
        %s355 = smul.u32 8, %s17
        %p356 = scmp.lt.s32.totalorder %s355, 15
        %s357 = scalar_select %p356, %s355, 15
        %s358 = smul.addr %s357, 8
        %s359 = scalar_lea.vmem %s3, %s358
        // Predicated region
        $region37: #{decoding_block_forward.3} parent=31 // pred_check
          %p360 = pneg %p103
        $region38: #{decoding_block_forward.3} parent=31 // pred_check_branch
          %362 = sbr.rel (%p360) target = $region40
        $region39: #{decoding_block_forward.3} parent=31 // pred_region
          %s363 = smul.u32 8, %s17
        $region40: #{decoding_block_forward.3} parent=31 // pred_fallthru
          _
      $region32: #{decoding_block_forward.3} parent=5 // pred_fallthru
        _
      %p364 = scmp.le.s32.totalorder 2, %s12
      // Predicated region
      $region41: #{decoding_block_forward.3} parent=5 // pred_check
        %p365 = pneg %p364
      $region42: #{decoding_block_forward.3} parent=5 // pred_check_branch
        %367 = sbr.rel (%p365) target = $region44
      $region43: #{decoding_block_forward.3} parent=5 // pred_region
        %s368 = ssub.s32 %s12, 2
        // Predicated region
        $region45: #{decoding_block_forward.3} parent=43 // pred_check
          %p369 = pneg %p109
        $region46: #{decoding_block_forward.3} parent=43 // pred_check_branch
          %371 = sbr.rel (%p369) target = $region48
        $region47: #{decoding_block_forward.3} parent=43 // pred_region
          %s372 = smul.u32 8, %s18
          %p373 = scmp.lt.s32.totalorder %s372, 15
          %s374 = scalar_select %p373, %s372, 15
          %s375 = smul.addr %s374, 8
          %s376 = scalar_lea.vmem %s3, %s375
        $region48: #{decoding_block_forward.3} parent=43 // pred_fallthru
          _
      $region44: #{decoding_block_forward.3} parent=5 // pred_fallthru
        _
    $region6: #{decoding_block_forward.3} parent=1 // loop_footer
      %s16 = sadd.s32 1, %s12
    $region7: #{decoding_block_forward.3} parent=1 // loop_footer_branch
      %11 = sbr.rel target = $region3
    $region8: #{decoding_block_forward.3} parent=1 // loop_exit
      _
    %377 = vsyncpa [#allocation3], 1
    %s378 = scalar_lea.sflag [#allocation3], 1
    %379 = vsyncpa %s378, 1

// kernel: decoding_block_forward.4
$region0: #{decoding_block_forward.4}
  #allocation0 [shape = 'u32[]', space=smem, size = 0x4, offset = 0x4, fixed_abs, tag = 'smem constant byte address 0x4 - core index']
  #allocation1 [shape = 'u32[144,128]{1,0:T(1,128)}', space=vmem, size = 0x12000, scoped, tag = 'internal scratch']
  #allocation2 [shape = 'f32[1]{0:T(128)S(6)}', space=smem, size = 0x200, scoped, tag = 'scoped memory for decoding_block_forward.4']
  %s0 = inlined_call_operand.vmem [shape: f32[2,368,64], index: 0, kind: input, shape index: {}]
  %s1 = inlined_call_operand.vmem [shape: f32[9,64,32], index: 1, kind: input, shape index: {}]
  %s2 = inlined_call_operand.vmem [shape: f32[1,32], index: 2, kind: input, shape index: {}]
  %s3 = inlined_call_operand.<no memory space> [shape: f32[1], index: 3, kind: input, shape index: {}]
  %s4 = inlined_call_operand.vmem [shape: f32[2,328,32], index: 4, kind: output, shape index: {}]
  %s5 = sld [smem:[#allocation0]]
  $region49: #{decoding_block_forward.4} parent=0
    _
  %s7 = ssub.s32 1, %s5
  %s8 = scalar_select 0, %s7, %s5
  %9 = sst [smem:[#allocation2]] %s3
  loop: start=0, step=1, limit=4
  $region2: #{decoding_block_forward.4} parent=0 // loop_pre_header
    _
  $region3: #{decoding_block_forward.4} parent=0 // loop_header
    %s11 = sphi 0, %s15
    %p12 = scmp.ge.s32.totalorder %s11, 4
    %s21 = sphi 0, %s23
    %s24 = sphi 0, %s21
    %s25 = sphi 0, %s24
    %s41 = sphi 0, %s25
    %s45 = sphi 0, %s45
    %s47 = sphi 0, %s45
    %s48 = sphi 0, %s47
    %s62 = sphi 0, %s48
    %s66 = sphi 0, %s66
    %s68 = sphi 0, %s66
    %s69 = sphi 0, %s68
    %s83 = sphi 0, %s69
    %s87 = sphi 0, %s87
    %s89 = sphi 0, %s87
    %s90 = sphi 0, %s89
    %s104 = sphi 0, %s90
    %s110 = sphi 0, %s112
    %s113 = sphi 0, %s110
    %s114 = sphi 0, %s113
    %s130 = sphi 0, %s114
  $region4: #{decoding_block_forward.4} parent=0 // loop_header_branch
    %14 = sbr.rel (%p12) target = $region8
  $region5: #{decoding_block_forward.4} parent=0 // loop_body
    %s16 = ssub.s32 %s11, 1
    %s17 = ssub.s32 %s11, 2
    %s18 = sadd.s32 %s11, 1
    %s19 = ssub.s32 %s11, %s18
    %p20 = scmp.eq.s32.totalorder %s19, 0
    %s22 = sadd.s32 %s21, 1
    %s23 = scalar_select %p20, %s21, %s22
    %p26 = pneg %p20
    %p27 = scmp.eq.s32.totalorder %s11, 1
    %p28 = por %p26, %p27
    %p29 = scmp.ne.s32.totalorder %s21, %s24
    %p30 = scmp.eq.s32.totalorder %s11, 0
    %p31 = por %p29, %p30
    %p32 = scmp.ne.s32.totalorder %s21, %s24
    %p33 = scmp.eq.s32.totalorder %s16, 1
    %p34 = por %p32, %p33
    %p35 = scmp.ne.s32.totalorder %s24, %s25
    %p36 = scmp.eq.s32.totalorder %s16, 0
    %p37 = por %p35, %p36
    %p38 = scmp.ne.s32.totalorder %s24, %s25
    %p39 = scmp.eq.s32.totalorder %s17, 1
    %p40 = por %p38, %p39
    %p42 = scmp.ne.s32.totalorder %s25, %s41
    %p43 = scmp.eq.s32.totalorder %s17, 0
    %p44 = por %p42, %p43
    %s46 = sadd.s32 %s45, 1
    %p49 = scmp.eq.s32.totalorder %s11, 1
    %p50 = scmp.ne.s32.totalorder %s45, %s47
    %p51 = scmp.eq.s32.totalorder %s11, 0
    %p52 = por %p50, %p51
    %p53 = scmp.ne.s32.totalorder %s45, %s47
    %p54 = scmp.eq.s32.totalorder %s16, 1
    %p55 = por %p53, %p54
    %p56 = scmp.ne.s32.totalorder %s47, %s48
    %p57 = scmp.eq.s32.totalorder %s16, 0
    %p58 = por %p56, %p57
    %p59 = scmp.ne.s32.totalorder %s47, %s48
    %p60 = scmp.eq.s32.totalorder %s17, 1
    %p61 = por %p59, %p60
    %p63 = scmp.ne.s32.totalorder %s48, %s62
    %p64 = scmp.eq.s32.totalorder %s17, 0
    %p65 = por %p63, %p64
    %s67 = sadd.s32 %s66, 1
    %p70 = scmp.eq.s32.totalorder %s11, 1
    %p71 = scmp.ne.s32.totalorder %s66, %s68
    %p72 = scmp.eq.s32.totalorder %s11, 0
    %p73 = por %p71, %p72
    %p74 = scmp.ne.s32.totalorder %s66, %s68
    %p75 = scmp.eq.s32.totalorder %s16, 1
    %p76 = por %p74, %p75
    %p77 = scmp.ne.s32.totalorder %s68, %s69
    %p78 = scmp.eq.s32.totalorder %s16, 0
    %p79 = por %p77, %p78
    %p80 = scmp.ne.s32.totalorder %s68, %s69
    %p81 = scmp.eq.s32.totalorder %s17, 1
    %p82 = por %p80, %p81
    %p84 = scmp.ne.s32.totalorder %s69, %s83
    %p85 = scmp.eq.s32.totalorder %s17, 0
    %p86 = por %p84, %p85
    %s88 = sadd.s32 %s87, 1
    %p91 = scmp.eq.s32.totalorder %s11, 1
    %p92 = scmp.ne.s32.totalorder %s87, %s89
    %p93 = scmp.eq.s32.totalorder %s11, 0
    %p94 = por %p92, %p93
    %p95 = scmp.ne.s32.totalorder %s87, %s89
    %p96 = scmp.eq.s32.totalorder %s16, 1
    %p97 = por %p95, %p96
    %p98 = scmp.ne.s32.totalorder %s89, %s90
    %p99 = scmp.eq.s32.totalorder %s16, 0
    %p100 = por %p98, %p99
    %p101 = scmp.ne.s32.totalorder %s89, %s90
    %p102 = scmp.eq.s32.totalorder %s17, 1
    %p103 = por %p101, %p102
    %p105 = scmp.ne.s32.totalorder %s90, %s104
    %p106 = scmp.eq.s32.totalorder %s17, 0
    %p107 = por %p105, %p106
    %s108 = ssub.s32 %s11, %s18
    %p109 = scmp.eq.s32.totalorder %s108, 0
    %s111 = sadd.s32 %s110, 1
    %s112 = scalar_select %p109, %s110, %s111
    %p115 = pneg %p109
    %p116 = scmp.eq.s32.totalorder %s11, 1
    %p117 = por %p115, %p116
    %p118 = scmp.ne.s32.totalorder %s110, %s113
    %p119 = scmp.eq.s32.totalorder %s11, 0
    %p120 = por %p118, %p119
    %p121 = scmp.ne.s32.totalorder %s110, %s113
    %p122 = scmp.eq.s32.totalorder %s16, 1
    %p123 = por %p121, %p122
    %p124 = scmp.ne.s32.totalorder %s113, %s114
    %p125 = scmp.eq.s32.totalorder %s16, 0
    %p126 = por %p124, %p125
    %p127 = scmp.ne.s32.totalorder %s113, %s114
    %p128 = scmp.eq.s32.totalorder %s17, 1
    %p129 = por %p127, %p128
    %p131 = scmp.ne.s32.totalorder %s114, %s130
    %p132 = scmp.eq.s32.totalorder %s17, 0
    %p133 = por %p131, %p132
    %p134 = scmp.le.s32.totalorder 1, %s11
    %p135 = scmp.lt.s32.totalorder %s11, 3
    %p136 = pnand %p134, %p135
    %p137 = pneg %p136
    // Predicated region
    $region9: #{decoding_block_forward.4} parent=5 // pred_check
      _
    $region10: #{decoding_block_forward.4} parent=5 // pred_check_branch
      %139 = sbr.rel (%p136) target = $region12
    $region11: #{decoding_block_forward.4} parent=5 // pred_region
      %s140 = ssub.s32 %s11, 1
      // Predicated region
      $region13: #{decoding_block_forward.4} parent=11 // pred_check
        %p141 = pneg %p58
      $region14: #{decoding_block_forward.4} parent=11 // pred_check_branch
        %143 = sbr.rel (%p141) target = $region16
      $region15: #{decoding_block_forward.4} parent=11 // pred_region
        _
      $region16: #{decoding_block_forward.4} parent=11 // pred_fallthru
        _
      // Predicated region
      $region17: #{decoding_block_forward.4} parent=11 // pred_check
        %p144 = pneg %p79
      $region18: #{decoding_block_forward.4} parent=11 // pred_check_branch
        %146 = sbr.rel (%p144) target = $region20
      $region19: #{decoding_block_forward.4} parent=11 // pred_region
        _
      $region20: #{decoding_block_forward.4} parent=11 // pred_fallthru
        _
      // Predicated region
      $region21: #{decoding_block_forward.4} parent=11 // pred_check
        %p147 = pneg %p100
      $region22: #{decoding_block_forward.4} parent=11 // pred_check_branch
        %149 = sbr.rel (%p147) target = $region24
      $region23: #{decoding_block_forward.4} parent=11 // pred_region
        _
      $region24: #{decoding_block_forward.4} parent=11 // pred_fallthru
        _
    $region12: #{decoding_block_forward.4} parent=5 // pred_fallthru
      _
    %p150 = scmp.lt.s32.totalorder %s11, 2
    // Predicated region
    $region25: #{decoding_block_forward.4} parent=5 // pred_check
      %p151 = pneg %p150
    $region26: #{decoding_block_forward.4} parent=5 // pred_check_branch
      %153 = sbr.rel (%p151) target = $region28
    $region27: #{decoding_block_forward.4} parent=5 // pred_region
      // Predicated region
      $region29: #{decoding_block_forward.4} parent=27 // pred_check
        %p154 = pneg %p31
      $region30: #{decoding_block_forward.4} parent=27 // pred_check_branch
        %156 = sbr.rel (%p154) target = $region32
      $region31: #{decoding_block_forward.4} parent=27 // pred_region
        %p157 = scmp.lt.s32.totalorder %s11, 1
        %s158 = scalar_select %p157, %s11, 1
        %s159 = smul.addr %s158, 46
        %s160 = smul.addr %s159, 8
        %s161 = scalar_lea.vmem %s0, %s160
      $region32: #{decoding_block_forward.4} parent=27 // pred_fallthru
        _
    $region28: #{decoding_block_forward.4} parent=5 // pred_fallthru
      _
    %p162 = scmp.le.s32.totalorder 1, %s11
    %p163 = scmp.lt.s32.totalorder %s11, 3
    %p164 = pnand %p162, %p163
    %p165 = pneg %p164
    // Predicated region
    $region33: #{decoding_block_forward.4} parent=5 // pred_check
      _
    $region34: #{decoding_block_forward.4} parent=5 // pred_check_branch
      %167 = sbr.rel (%p164) target = $region36
    $region35: #{decoding_block_forward.4} parent=5 // pred_region
      %s168 = ssub.s32 %s11, 1
      %p169 = scmp.lt.s32.totalorder %s16, 1
      %s170 = scalar_select %p169, %s16, 1
      %s171 = smul.addr %s170, 46
      %s172 = smul.addr %s171, 8
      %s173 = scalar_lea.vmem %s0, %s172
      %p174 = pneg %p37
      %p175 = pneg %p34
      %p176 = pneg %p58
      %p177 = pneg %p55
      %p178 = pneg %p79
      %p179 = pneg %p76
      %p180 = pneg %p100
      %p181 = pneg %p97
      %p182 = pneg %p126
      %p183 = pneg %p123
      %p184 = scmp.lt.s32.totalorder %s16, 1
      %s185 = scalar_select %p184, %s16, 1
      %s186 = smul.addr %s185, 41
      %s187 = smul.addr %s186, 8
      %s188 = scalar_lea.vmem %s4, %s187
      %p189 = scmp.lt.s32.totalorder %s16, 1
      %s190 = scalar_select %p189, %s16, 1
      %s191 = smul.addr %s190, 46
      %s192 = smul.addr %s191, 8
      %s193 = scalar_lea.vmem %s0, %s192
      %p194 = scmp.lt.s32.totalorder %s16, 1
      %s195 = scalar_select %p194, %s16, 1
      %s196 = smul.addr %s195, 41
      %s197 = smul.addr %s196, 8
      %s198 = scalar_lea.vmem %s4, %s197
      %v199 = vld [vmem:[%s193] sm:$0xff]
      %v200 = vld [vmem:[%s193 + $0x8] sm:$0xff]
      %v201 = vld [vmem:[%s193 + $0x10] sm:$0xff]
      %v202 = vld [vmem:[%s193 + $0x18] sm:$0xff]
      %v203 = vld [vmem:[%s193 + $0x20] sm:$0xff]
      %v204 = vld [vmem:[%s193 + $0x28] sm:$0xff]
      %v205 = vld [vmem:[%s193 + $0x30] sm:$0xff]
      %v206 = vld [vmem:[%s193 + $0x38] sm:$0xff]
      %v207 = vld [vmem:[%s193 + $0x40] sm:$0xff]
      %v208 = vld [vmem:[%s193 + $0x48] sm:$0xff]
      %v209 = vld [vmem:[%s193 + $0x50] sm:$0xff]
      %v210 = vld [vmem:[%s193 + $0x58] sm:$0xff]
      %v211 = vld [vmem:[%s193 + $0x60] sm:$0xff]
      %v212 = vld [vmem:[%s193 + $0x68] sm:$0xff]
      %v213 = vld [vmem:[%s193 + $0x70] sm:$0xff]
      %v214 = vld [vmem:[%s193 + $0x78] sm:$0xff]
      %v215 = vld [vmem:[%s193 + $0x80] sm:$0xff]
      %v216 = vld [vmem:[%s193 + $0x88] sm:$0xff]
      %v217 = vld [vmem:[%s193 + $0x90] sm:$0xff]
      %v218 = vld [vmem:[%s193 + $0x98] sm:$0xff]
      %v219 = vld [vmem:[%s193 + $0xa0] sm:$0xff]
      %v220 = vld [vmem:[%s193 + $0xa8] sm:$0xff]
      %v221 = vld [vmem:[%s193 + $0xb0] sm:$0xff]
      %v222 = vld [vmem:[%s193 + $0xb8] sm:$0xff]
      %v223 = vld [vmem:[%s193 + $0xc0] sm:$0xff]
      %v224 = vld [vmem:[%s193 + $0xc8] sm:$0xff]
      %v225 = vld [vmem:[%s193 + $0xd0] sm:$0xff]
      %v226 = vld [vmem:[%s193 + $0xd8] sm:$0xff]
      %v227 = vld [vmem:[%s193 + $0xe0] sm:$0xff]
      %v228 = vld [vmem:[%s193 + $0xe8] sm:$0xff]
      %v229 = vld [vmem:[%s193 + $0xf0] sm:$0xff]
      %v230 = vld [vmem:[%s193 + $0xf8] sm:$0xff]
      %v231 = vld [vmem:[%s193 + $0x100] sm:$0xff]
      %v232 = vld [vmem:[%s193 + $0x108] sm:$0xff]
      %v233 = vld [vmem:[%s193 + $0x110] sm:$0xff]
      %v234 = vld [vmem:[%s193 + $0x118] sm:$0xff]
      %v235 = vld [vmem:[%s193 + $0x120] sm:$0xff]
      %v236 = vld [vmem:[%s193 + $0x128] sm:$0xff]
      %v237 = vld [vmem:[%s193 + $0x130] sm:$0xff]
      %v238 = vld [vmem:[%s193 + $0x138] sm:$0xff]
      %v239 = vld [vmem:[%s193 + $0x140] sm:$0xff]
      %v240 = vld [vmem:[%s1] sm:$0xff]
      %v241 = vld [vmem:[%s1 + $0x8] sm:$0xff]
      %v242 = vld [vmem:[%s1 + $0x10] sm:$0xff]
      %v243 = vld [vmem:[%s1 + $0x18] sm:$0xff]
      %v244 = vld [vmem:[%s1 + $0x20] sm:$0xff]
      %v245 = vld [vmem:[%s1 + $0x28] sm:$0xff]
      %v246 = vld [vmem:[%s1 + $0x30] sm:$0xff]
      %v247 = vld [vmem:[%s1 + $0x38] sm:$0xff]
      %v248 = vld [vmem:[%s193 + $0x1] sm:$0xff]
      %v249 = vld [vmem:[%s193 + $0x9] sm:$0xff]
      %v250 = vld [vmem:[%s193 + $0x11] sm:$0xff]
      %v251 = vld [vmem:[%s193 + $0x19] sm:$0xff]
      %v252 = vld [vmem:[%s193 + $0x21] sm:$0xff]
      %v253 = vld [vmem:[%s193 + $0x29] sm:$0xff]
      %v254 = vld [vmem:[%s193 + $0x31] sm:$0xff]
      %v255 = vld [vmem:[%s193 + $0x39] sm:$0xff]
      %v256 = vld [vmem:[%s193 + $0x41] sm:$0xff]
      %v257 = vld [vmem:[%s193 + $0x49] sm:$0xff]
      %v258 = vld [vmem:[%s193 + $0x51] sm:$0xff]
      %v259 = vld [vmem:[%s193 + $0x59] sm:$0xff]
      %v260 = vld [vmem:[%s193 + $0x61] sm:$0xff]
      %v261 = vld [vmem:[%s193 + $0x69] sm:$0xff]
      %v262 = vld [vmem:[%s193 + $0x71] sm:$0xff]
      %v263 = vld [vmem:[%s193 + $0x79] sm:$0xff]
      %v264 = vld [vmem:[%s193 + $0x81] sm:$0xff]
      %v265 = vld [vmem:[%s193 + $0x89] sm:$0xff]
      %v266 = vld [vmem:[%s193 + $0x91] sm:$0xff]
      %v267 = vld [vmem:[%s193 + $0x99] sm:$0xff]
      %v268 = vld [vmem:[%s193 + $0xa1] sm:$0xff]
      %v269 = vld [vmem:[%s193 + $0xa9] sm:$0xff]
      %v270 = vld [vmem:[%s193 + $0xb1] sm:$0xff]
      %v271 = vld [vmem:[%s193 + $0xb9] sm:$0xff]
      %v272 = vld [vmem:[%s193 + $0xc1] sm:$0xff]
      %v273 = vld [vmem:[%s193 + $0xc9] sm:$0xff]
      %v274 = vld [vmem:[%s193 + $0xd1] sm:$0xff]
      %v275 = vld [vmem:[%s193 + $0xd9] sm:$0xff]
      %v276 = vld [vmem:[%s193 + $0xe1] sm:$0xff]
      %v277 = vld [vmem:[%s193 + $0xe9] sm:$0xff]
      %v278 = vld [vmem:[%s193 + $0xf1] sm:$0xff]
      %v279 = vld [vmem:[%s193 + $0xf9] sm:$0xff]
      %v280 = vld [vmem:[%s193 + $0x101] sm:$0xff]
      %v281 = vld [vmem:[%s193 + $0x109] sm:$0xff]
      %v282 = vld [vmem:[%s193 + $0x111] sm:$0xff]
      %v283 = vld [vmem:[%s193 + $0x119] sm:$0xff]
      %v284 = vld [vmem:[%s193 + $0x121] sm:$0xff]
      %v285 = vld [vmem:[%s193 + $0x129] sm:$0xff]
      %v286 = vld [vmem:[%s193 + $0x131] sm:$0xff]
      %v287 = vld [vmem:[%s193 + $0x139] sm:$0xff]
      %v288 = vld [vmem:[%s193 + $0x141] sm:$0xff]
      %s289 = scalar_lea.vmem %s1, 64
      %v290 = vld [vmem:[%s289] sm:$0xff]
      %v291 = vld [vmem:[%s289 + $0x8] sm:$0xff]
      %v292 = vld [vmem:[%s289 + $0x10] sm:$0xff]
      %v293 = vld [vmem:[%s289 + $0x18] sm:$0xff]
      %v294 = vld [vmem:[%s289 + $0x20] sm:$0xff]
      %v295 = vld [vmem:[%s289 + $0x28] sm:$0xff]
      %v296 = vld [vmem:[%s289 + $0x30] sm:$0xff]
      %v297 = vld [vmem:[%s289 + $0x38] sm:$0xff]
      %vm298 = vcmask 523264
      %v300 = vsel %vm298, %v248, 0
      %v303 = vsel %vm298, %v249, 0
      %v306 = vsel %vm298, %v250, 0
      %v309 = vsel %vm298, %v251, 0
      %v312 = vsel %vm298, %v252, 0
      %v315 = vsel %vm298, %v253, 0
      %v318 = vsel %vm298, %v254, 0
      %v321 = vsel %vm298, %v255, 0
      %v324 = vsel %vm298, %v256, 0
      %v327 = vsel %vm298, %v257, 0
      %v330 = vsel %vm298, %v258, 0
      %v333 = vsel %vm298, %v259, 0
      %v336 = vsel %vm298, %v260, 0
      %v339 = vsel %vm298, %v261, 0
      %v342 = vsel %vm298, %v262, 0
      %v345 = vsel %vm298, %v263, 0
      %v348 = vsel %vm298, %v264, 0
      %v351 = vsel %vm298, %v265, 0
      %v354 = vsel %vm298, %v266, 0
      %v357 = vsel %vm298, %v267, 0
      %v360 = vsel %vm298, %v268, 0
      %v363 = vsel %vm298, %v269, 0
      %v366 = vsel %vm298, %v270, 0
      %v369 = vsel %vm298, %v271, 0
      %v372 = vsel %vm298, %v272, 0
      %v375 = vsel %vm298, %v273, 0
      %v378 = vsel %vm298, %v274, 0
      %v381 = vsel %vm298, %v275, 0
      %v384 = vsel %vm298, %v276, 0
      %v387 = vsel %vm298, %v277, 0
      %v390 = vsel %vm298, %v278, 0
      %v393 = vsel %vm298, %v279, 0
      %v396 = vsel %vm298, %v280, 0
      %v399 = vsel %vm298, %v281, 0
      %v402 = vsel %vm298, %v282, 0
      %v405 = vsel %vm298, %v283, 0
      %v408 = vsel %vm298, %v284, 0
      %v411 = vsel %vm298, %v285, 0
      %v414 = vsel %vm298, %v286, 0
      %v417 = vsel %vm298, %v287, 0
      %v420 = vsel %vm298, %v288, 0
      %422 = vmatprep.subr.mxu0 0.0
      %423 = vmatpush1.msra.mxu0 %v290
      %424 = vmatprep.subr.mxu0 0.0
      %425 = vmatpush1.msra.mxu0 %v291
      %426 = vmatprep.subr.mxu0 0.0
      %427 = vmatpush1.msra.mxu0 %v292
      %428 = vmatprep.subr.mxu0 0.0
      %429 = vmatpush1.msra.mxu0 %v293
      %430 = vmatprep.subr.mxu0 0.0
      %431 = vmatpush1.msra.mxu0 %v294
      %432 = vmatprep.subr.mxu0 0.0
      %433 = vmatpush1.msra.mxu0 %v295
      %434 = vmatprep.subr.mxu0 0.0
      %435 = vmatpush1.msra.mxu0 %v296
      %436 = vmatprep.subr.mxu0 0.0
      %437 = vmatpush1.msra.mxu0 %v297
      %438 = vmatprep.subr.mxu0 0.0
      %439 = vmatpush1.msra.mxu0 0.0
      %440 = vmatprep.subr.mxu0 0.0
      %441 = vmatpush1.msra.mxu0 0.0
      %442 = vmatprep.subr.mxu0 0.0
      %443 = vmatpush1.msra.mxu0 0.0
      %444 = vmatprep.subr.mxu0 0.0
      %445 = vmatpush1.msra.mxu0 0.0
      %446 = vmatprep.subr.mxu0 0.0
      %447 = vmatpush1.msra.mxu0 0.0
      %448 = vmatprep.subr.mxu0 0.0
      %449 = vmatpush1.msra.mxu0 0.0
      %450 = vmatprep.subr.mxu0 0.0
      %451 = vmatpush1.msra.mxu0 0.0
      %452 = vmatprep.subr.mxu0 0.0
      %453 = vmatpush1.msra.mxu0 0.0
      %454 = vmatprep.subr.mxu0 0.0
      %455 = vmatpush1.msra.mxu0 0.0
      %456 = vmatprep.subr.mxu0 0.0
      %457 = vmatpush1.msra.mxu0 0.0
      %458 = vmatprep.subr.mxu0 0.0
      %459 = vmatpush1.msra.mxu0 0.0
      %460 = vmatprep.subr.mxu0 0.0
      %461 = vmatpush1.msra.mxu0 0.0
      %462 = vmatprep.subr.mxu0 0.0
      %463 = vmatpush1.msra.mxu0 0.0
      %464 = vmatprep.subr.mxu0 0.0
      %465 = vmatpush1.msra.mxu0 0.0
      %466 = vmatprep.subr.mxu0 0.0
      %467 = vmatpush1.msra.mxu0 0.0
      %468 = vmatprep.subr.mxu0 0.0
      %469 = vmatpush1.msra.mxu0 0.0
      %470 = vmatprep.subr.mxu0 0.0
      %471 = vmatpush1.msra.mxu0 0.0
      %472 = vmatprep.subr.mxu0 0.0
      %473 = vmatpush1.msra.mxu0 0.0
      %474 = vmatprep.subr.mxu0 0.0
      %475 = vmatpush1.msra.mxu0 0.0
      %476 = vmatprep.subr.mxu0 0.0
      %477 = vmatpush1.msra.mxu0 0.0
      %478 = vmatprep.subr.mxu0 0.0
      %479 = vmatpush1.msra.mxu0 0.0
      %480 = vmatprep.subr.mxu0 0.0
      %481 = vmatpush1.msra.mxu0 0.0
      %482 = vmatprep.subr.mxu0 0.0
      %483 = vmatpush1.msra.mxu0 0.0
      %484 = vmatprep.subr.mxu0 0.0
      %485 = vmatpush1.msra.mxu0 0.0
      %486 = vmatprep.mubr.f32.mxu0 0.0
      %487 = vmatmul.mubr.f32.gmra.mrb[0].mxu0 %v300
      %v488 = vpop.f32.mrb[0].mxu0
      %v489 = vadd.f32 0.0, %v488
      %v490 = vpop.f32.mrb[0].mxu0
      %491 = vmatprep.mubr.f32.mxu0 0.0
      %492 = vmatmul.mubr.f32.gmra.mrb[0].mxu0 %v303
      %v493 = vpop.f32.mrb[0].mxu0
      %v494 = vadd.f32 0.0, %v493
      %v495 = vpop.f32.mrb[0].mxu0
      %496 = vmatprep.mubr.f32.mxu0 0.0
      %497 = vmatmul.mubr.f32.gmra.mrb[0].mxu0 %v306
      %v498 = vpop.f32.mrb[0].mxu0
      %v499 = vadd.f32 0.0, %v498
      %v500 = vpop.f32.mrb[0].mxu0
      %501 = vmatprep.mubr.f32.mxu0 0.0
      %502 = vmatmul.mubr.f32.gmra.mrb[0].mxu0 %v309
      %v503 = vpop.f32.mrb[0].mxu0
      %v504 = vadd.f32 0.0, %v503
      %v505 = vpop.f32.mrb[0].mxu0
      %506 = vmatprep.mubr.f32.mxu0 0.0
      %507 = vmatmul.mubr.f32.gmra.mrb[0].mxu0 %v312
      %v508 = vpop.f32.mrb[0].mxu0
      %v509 = vadd.f32 0.0, %v508
      %v510 = vpop.f32.mrb[0].mxu0
      %511 = vmatprep.mubr.f32.mxu0 0.0
      %512 = vmatmul.mubr.f32.gmra.mrb[0].mxu0 %v315
      %v513 = vpop.f32.mrb[0].mxu0
      %v514 = vadd.f32 0.0, %v513
      %v515 = vpop.f32.mrb[0].mxu0
      %516 = vmatprep.mubr.f32.mxu0 0.0
      %517 = vmatmul.mubr.f32.gmra.mrb[0].mxu0 %v318
      %v518 = vpop.f32.mrb[0].mxu0
      %v519 = vadd.f32 0.0, %v518
      %v520 = vpop.f32.mrb[0].mxu0
      %521 = vmatprep.mubr.f32.mxu0 0.0
      %522 = vmatmul.mubr.f32.gmra.mrb[0].mxu0 %v321
      %v523 = vpop.f32.mrb[0].mxu0
      %v524 = vadd.f32 0.0, %v523
      %v525 = vpop.f32.mrb[0].mxu0
      %526 = vmatprep.mubr.f32.mxu0 0.0
      %527 = vmatmul.mubr.f32.gmra.mrb[0].mxu0 %v324
      %v528 = vpop.f32.mrb[0].mxu0
      %v529 = vadd.f32 0.0, %v528
      %v530 = vpop.f32.mrb[0].mxu0
      %531 = vmatprep.mubr.f32.mxu0 0.0
      %532 = vmatmul.mubr.f32.gmra.mrb[0].mxu0 %v327
      %v533 = vpop.f32.mrb[0].mxu0
      %v534 = vadd.f32 0.0, %v533
      %v535 = vpop.f32.mrb[0].mxu0
      %536 = vmatprep.mubr.f32.mxu0 0.0
      %537 = vmatmul.mubr.f32.gmra.mrb[0].mxu0 %v330
      %v538 = vpop.f32.mrb[0].mxu0
      %v539 = vadd.f32 0.0, %v538
      %v540 = vpop.f32.mrb[0].mxu0
      %541 = vmatprep.mubr.f32.mxu0 0.0
      %542 = vmatmul.mubr.f32.gmra.mrb[0].mxu0 %v333
      %v543 = vpop.f32.mrb[0].mxu0
      %v544 = vadd.f32 0.0, %v543
      %v545 = vpop.f32.mrb[0].mxu0
      %546 = vmatprep.mubr.f32.mxu0 0.0
      %547 = vmatmul.mubr.f32.gmra.mrb[0].mxu0 %v336
      %v548 = vpop.f32.mrb[0].mxu0
      %v549 = vadd.f32 0.0, %v548
      %v550 = vpop.f32.mrb[0].mxu0
      %551 = vmatprep.mubr.f32.mxu0 0.0
      %552 = vmatmul.mubr.f32.gmra.mrb[0].mxu0 %v339
      %v553 = vpop.f32.mrb[0].mxu0
      %v554 = vadd.f32 0.0, %v553
      %v555 = vpop.f32.mrb[0].mxu0
      %556 = vmatprep.mubr.f32.mxu0 0.0
      %557 = vmatmul.mubr.f32.gmra.mrb[0].mxu0 %v342
      %v558 = vpop.f32.mrb[0].mxu0
      %v559 = vadd.f32 0.0, %v558
      %v560 = vpop.f32.mrb[0].mxu0
      %561 = vmatprep.mubr.f32.mxu0 0.0
      %562 = vmatmul.mubr.f32.gmra.mrb[0].mxu0 %v345
      %v563 = vpop.f32.mrb[0].mxu0
      %v564 = vadd.f32 0.0, %v563
      %v565 = vpop.f32.mrb[0].mxu0
      %566 = vmatprep.mubr.f32.mxu0 0.0
      %567 = vmatmul.mubr.f32.gmra.mrb[0].mxu0 %v348
      %v568 = vpop.f32.mrb[0].mxu0
      %v569 = vadd.f32 0.0, %v568
      %v570 = vpop.f32.mrb[0].mxu0
      %571 = vmatprep.mubr.f32.mxu0 0.0
      %572 = vmatmul.mubr.f32.gmra.mrb[0].mxu0 %v351
      %v573 = vpop.f32.mrb[0].mxu0
      %v574 = vadd.f32 0.0, %v573
      %v575 = vpop.f32.mrb[0].mxu0
      %576 = vmatprep.mubr.f32.mxu0 0.0
      %577 = vmatmul.mubr.f32.gmra.mrb[0].mxu0 %v354
      %v578 = vpop.f32.mrb[0].mxu0
      %v579 = vadd.f32 0.0, %v578
      %v580 = vpop.f32.mrb[0].mxu0
      %581 = vmatprep.mubr.f32.mxu0 0.0
      %582 = vmatmul.mubr.f32.gmra.mrb[0].mxu0 %v357
      %v583 = vpop.f32.mrb[0].mxu0
      %v584 = vadd.f32 0.0, %v583
      %v585 = vpop.f32.mrb[0].mxu0
      %586 = vmatprep.mubr.f32.mxu0 0.0
      %587 = vmatmul.mubr.f32.gmra.mrb[0].mxu0 %v360
      %v588 = vpop.f32.mrb[0].mxu0
      %v589 = vadd.f32 0.0, %v588
      %v590 = vpop.f32.mrb[0].mxu0
      %591 = vmatprep.mubr.f32.mxu0 0.0
      %592 = vmatmul.mubr.f32.gmra.mrb[0].mxu0 %v363
      %v593 = vpop.f32.mrb[0].mxu0
      %v594 = vadd.f32 0.0, %v593
      %v595 = vpop.f32.mrb[0].mxu0
      %596 = vmatprep.mubr.f32.mxu0 0.0
      %597 = vmatmul.mubr.f32.gmra.mrb[0].mxu0 %v366
      %v598 = vpop.f32.mrb[0].mxu0
      %v599 = vadd.f32 0.0, %v598
      %v600 = vpop.f32.mrb[0].mxu0
      %601 = vmatprep.mubr.f32.mxu0 0.0
      %602 = vmatmul.mubr.f32.gmra.mrb[0].mxu0 %v369
      %v603 = vpop.f32.mrb[0].mxu0
      %v604 = vadd.f32 0.0, %v603
      %v605 = vpop.f32.mrb[0].mxu0
      %606 = vmatprep.mubr.f32.mxu0 0.0
      %607 = vmatmul.mubr.f32.gmra.mrb[0].mxu0 %v372
      %v608 = vpop.f32.mrb[0].mxu0
      %v609 = vadd.f32 0.0, %v608
      %v610 = vpop.f32.mrb[0].mxu0
      %611 = vmatprep.mubr.f32.mxu0 0.0
      %612 = vmatmul.mubr.f32.gmra.mrb[0].mxu0 %v375
      %v613 = vpop.f32.mrb[0].mxu0
      %v614 = vadd.f32 0.0, %v613
      %v615 = vpop.f32.mrb[0].mxu0
      %616 = vmatprep.mubr.f32.mxu0 0.0
      %617 = vmatmul.mubr.f32.gmra.mrb[0].mxu0 %v378
      %v618 = vpop.f32.mrb[0].mxu0
      %v619 = vadd.f32 0.0, %v618
      %v620 = vpop.f32.mrb[0].mxu0
      %621 = vmatprep.mubr.f32.mxu0 0.0
      %622 = vmatmul.mubr.f32.gmra.mrb[0].mxu0 %v381
      %v623 = vpop.f32.mrb[0].mxu0
      %v624 = vadd.f32 0.0, %v623
      %v625 = vpop.f32.mrb[0].mxu0
      %626 = vmatprep.mubr.f32.mxu0 0.0
      %627 = vmatmul.mubr.f32.gmra.mrb[0].mxu0 %v384
      %v628 = vpop.f32.mrb[0].mxu0
      %v629 = vadd.f32 0.0, %v628
      %v630 = vpop.f32.mrb[0].mxu0
      %631 = vmatprep.mubr.f32.mxu0 0.0
      %632 = vmatmul.mubr.f32.gmra.mrb[0].mxu0 %v387
      %v633 = vpop.f32.mrb[0].mxu0
      %v634 = vadd.f32 0.0, %v633
      %v635 = vpop.f32.mrb[0].mxu0
      %636 = vmatprep.mubr.f32.mxu0 0.0
      %637 = vmatmul.mubr.f32.gmra.mrb[0].mxu0 %v390
      %v638 = vpop.f32.mrb[0].mxu0
      %v639 = vadd.f32 0.0, %v638
      %v640 = vpop.f32.mrb[0].mxu0
      %641 = vmatprep.mubr.f32.mxu0 0.0
      %642 = vmatmul.mubr.f32.gmra.mrb[0].mxu0 %v393
      %v643 = vpop.f32.mrb[0].mxu0
      %v644 = vadd.f32 0.0, %v643
      %v645 = vpop.f32.mrb[0].mxu0
      %646 = vmatprep.mubr.f32.mxu0 0.0
      %647 = vmatmul.mubr.f32.gmra.mrb[0].mxu0 %v396
      %v648 = vpop.f32.mrb[0].mxu0
      %v649 = vadd.f32 0.0, %v648
      %v650 = vpop.f32.mrb[0].mxu0
      %651 = vmatprep.mubr.f32.mxu0 0.0
      %652 = vmatmul.mubr.f32.gmra.mrb[0].mxu0 %v399
      %v653 = vpop.f32.mrb[0].mxu0
      %v654 = vadd.f32 0.0, %v653
      %v655 = vpop.f32.mrb[0].mxu0
      %656 = vmatprep.mubr.f32.mxu0 0.0
      %657 = vmatmul.mubr.f32.gmra.mrb[0].mxu0 %v402
      %v658 = vpop.f32.mrb[0].mxu0
      %v659 = vadd.f32 0.0, %v658
      %v660 = vpop.f32.mrb[0].mxu0
      %661 = vmatprep.mubr.f32.mxu0 0.0
      %662 = vmatmul.mubr.f32.gmra.mrb[0].mxu0 %v405
      %v663 = vpop.f32.mrb[0].mxu0
      %v664 = vadd.f32 0.0, %v663
      %v665 = vpop.f32.mrb[0].mxu0
      %666 = vmatprep.mubr.f32.mxu0 0.0
      %667 = vmatmul.mubr.f32.gmra.mrb[0].mxu0 %v408
      %v668 = vpop.f32.mrb[0].mxu0
      %v669 = vadd.f32 0.0, %v668
      %v670 = vpop.f32.mrb[0].mxu0
      %671 = vmatprep.mubr.f32.mxu0 0.0
      %672 = vmatmul.mubr.f32.gmra.mrb[0].mxu0 %v411
      %v673 = vpop.f32.mrb[0].mxu0
      %v674 = vadd.f32 0.0, %v673
      %v675 = vpop.f32.mrb[0].mxu0
      %676 = vmatprep.mubr.f32.mxu0 0.0
      %677 = vmatmul.mubr.f32.gmra.mrb[0].mxu0 %v414
      %v678 = vpop.f32.mrb[0].mxu0
      %v679 = vadd.f32 0.0, %v678
      %v680 = vpop.f32.mrb[0].mxu0
      %681 = vmatprep.mubr.f32.mxu0 0.0
      %682 = vmatmul.mubr.f32.gmra.mrb[0].mxu0 %v417
      %v683 = vpop.f32.mrb[0].mxu0
      %v684 = vadd.f32 0.0, %v683
      %v685 = vpop.f32.mrb[0].mxu0
      %686 = vmatprep.mubr.f32.mxu0 0.0
      %687 = vmatmul.mubr.f32.gmra.mrb[0].mxu0 %v420
      %v688 = vpop.f32.mrb[0].mxu0
      %v689 = vadd.f32 0.0, %v688
      %v690 = vpop.f32.mrb[0].mxu0
      %691 = vdwg.mxu0
      %v693 = vsel %vm298, %v199, 0
      %v696 = vsel %vm298, %v200, 0
      %v699 = vsel %vm298, %v201, 0
      %v702 = vsel %vm298, %v202, 0
      %v705 = vsel %vm298, %v203, 0
      %v708 = vsel %vm298, %v204, 0
      %v711 = vsel %vm298, %v205, 0
      %v714 = vsel %vm298, %v206, 0
      %v717 = vsel %vm298, %v207, 0
      %v720 = vsel %vm298, %v208, 0
      %v723 = vsel %vm298, %v209, 0
      %v726 = vsel %vm298, %v210, 0
      %v729 = vsel %vm298, %v211, 0
      %v732 = vsel %vm298, %v212, 0
      %v735 = vsel %vm298, %v213, 0
      %v738 = vsel %vm298, %v214, 0
      %v741 = vsel %vm298, %v215, 0
      %v744 = vsel %vm298, %v216, 0
      %v747 = vsel %vm298, %v217, 0
      %v750 = vsel %vm298, %v218, 0
      %v753 = vsel %vm298, %v219, 0
      %v756 = vsel %vm298, %v220, 0
      %v759 = vsel %vm298, %v221, 0
      %v762 = vsel %vm298, %v222, 0
      %v765 = vsel %vm298, %v223, 0
      %v768 = vsel %vm298, %v224, 0
      %v771 = vsel %vm298, %v225, 0
      %v774 = vsel %vm298, %v226, 0
      %v777 = vsel %vm298, %v227, 0
      %v780 = vsel %vm298, %v228, 0
      %v783 = vsel %vm298, %v229, 0
      %v786 = vsel %vm298, %v230, 0
      %v789 = vsel %vm298, %v231, 0
      %v792 = vsel %vm298, %v232, 0
      %v795 = vsel %vm298, %v233, 0
      %v798 = vsel %vm298, %v234, 0
      %v801 = vsel %vm298, %v235, 0
      %v804 = vsel %vm298, %v236, 0
      %v807 = vsel %vm298, %v237, 0
      %v810 = vsel %vm298, %v238, 0
      %v813 = vsel %vm298, %v239, 0
      %815 = vmatprep.subr.mxu0 0.0
      %816 = vmatpush1.msra.mxu0 %v240
      %817 = vmatprep.subr.mxu0 0.0
      %818 = vmatpush1.msra.mxu0 %v241
      %819 = vmatprep.subr.mxu0 0.0
      %820 = vmatpush1.msra.mxu0 %v242
      %821 = vmatprep.subr.mxu0 0.0
      %822 = vmatpush1.msra.mxu0 %v243
      %823 = vmatprep.subr.mxu0 0.0
      %824 = vmatpush1.msra.mxu0 %v244
      %825 = vmatprep.subr.mxu0 0.0
      %826 = vmatpush1.msra.mxu0 %v245
      %827 = vmatprep.subr.mxu0 0.0
      %828 = vmatpush1.msra.mxu0 %v246
      %829 = vmatprep.subr.mxu0 0.0
      %830 = vmatpush1.msra.mxu0 %v247
      %831 = vmatprep.subr.mxu0 0.0
      %832 = vmatpush1.msra.mxu0 0.0
      %833 = vmatprep.subr.mxu0 0.0
      %834 = vmatpush1.msra.mxu0 0.0
      %835 = vmatprep.subr.mxu0 0.0
      %836 = vmatpush1.msra.mxu0 0.0
      %837 = vmatprep.subr.mxu0 0.0
      %838 = vmatpush1.msra.mxu0 0.0
      %839 = vmatprep.subr.mxu0 0.0
      %840 = vmatpush1.msra.mxu0 0.0
      %841 = vmatprep.subr.mxu0 0.0
      %842 = vmatpush1.msra.mxu0 0.0
      %843 = vmatprep.subr.mxu0 0.0
      %844 = vmatpush1.msra.mxu0 0.0
      %845 = vmatprep.subr.mxu0 0.0
      %846 = vmatpush1.msra.mxu0 0.0
      %847 = vmatprep.subr.mxu0 0.0
      %848 = vmatpush1.msra.mxu0 0.0
      %849 = vmatprep.subr.mxu0 0.0
      %850 = vmatpush1.msra.mxu0 0.0
      %851 = vmatprep.subr.mxu0 0.0
      %852 = vmatpush1.msra.mxu0 0.0
      %853 = vmatprep.subr.mxu0 0.0
      %854 = vmatpush1.msra.mxu0 0.0
      %855 = vmatprep.subr.mxu0 0.0
      %856 = vmatpush1.msra.mxu0 0.0
      %857 = vmatprep.subr.mxu0 0.0
      %858 = vmatpush1.msra.mxu0 0.0
      %859 = vmatprep.subr.mxu0 0.0
      %860 = vmatpush1.msra.mxu0 0.0
      %861 = vmatprep.subr.mxu0 0.0
      %862 = vmatpush1.msra.mxu0 0.0
      %863 = vmatprep.subr.mxu0 0.0
      %864 = vmatpush1.msra.mxu0 0.0
      %865 = vmatprep.subr.mxu0 0.0
      %866 = vmatpush1.msra.mxu0 0.0
      %867 = vmatprep.subr.mxu0 0.0
      %868 = vmatpush1.msra.mxu0 0.0
      %869 = vmatprep.subr.mxu0 0.0
      %870 = vmatpush1.msra.mxu0 0.0
      %871 = vmatprep.subr.mxu0 0.0
      %872 = vmatpush1.msra.mxu0 0.0
      %873 = vmatprep.subr.mxu0 0.0
      %874 = vmatpush1.msra.mxu0 0.0
      %875 = vmatprep.subr.mxu0 0.0
      %876 = vmatpush1.msra.mxu0 0.0
      %877 = vmatprep.subr.mxu0 0.0
      %878 = vmatpush1.msra.mxu0 0.0
      %879 = vmatprep.mubr.f32.mxu0 0.0
      %880 = vmatmul.mubr.f32.gmra.mrb[0].mxu0 %v693
      %v881 = vpop.f32.mrb[0].mxu0
      %v882 = vadd.f32 %v489, %v881
      %v883 = vpop.f32.mrb[0].mxu0
      %884 = vmatprep.mubr.f32.mxu0 0.0
      %885 = vmatmul.mubr.f32.gmra.mrb[0].mxu0 %v696
      %v886 = vpop.f32.mrb[0].mxu0
      %v887 = vadd.f32 %v494, %v886
      %v888 = vpop.f32.mrb[0].mxu0
      %889 = vmatprep.mubr.f32.mxu0 0.0
      %890 = vmatmul.mubr.f32.gmra.mrb[0].mxu0 %v699
      %v891 = vpop.f32.mrb[0].mxu0
      %v892 = vadd.f32 %v499, %v891
      %v893 = vpop.f32.mrb[0].mxu0
      %894 = vmatprep.mubr.f32.mxu0 0.0
      %895 = vmatmul.mubr.f32.gmra.mrb[0].mxu0 %v702
      %v896 = vpop.f32.mrb[0].mxu0
      %v897 = vadd.f32 %v504, %v896
      %v898 = vpop.f32.mrb[0].mxu0
      %899 = vmatprep.mubr.f32.mxu0 0.0
      %900 = vmatmul.mubr.f32.gmra.mrb[0].mxu0 %v705
      %v901 = vpop.f32.mrb[0].mxu0
      %v902 = vadd.f32 %v509, %v901
      %v903 = vpop.f32.mrb[0].mxu0
      %904 = vmatprep.mubr.f32.mxu0 0.0
      %905 = vmatmul.mubr.f32.gmra.mrb[0].mxu0 %v708
      %v906 = vpop.f32.mrb[0].mxu0
      %v907 = vadd.f32 %v514, %v906
      %v908 = vpop.f32.mrb[0].mxu0
      %909 = vmatprep.mubr.f32.mxu0 0.0
      %910 = vmatmul.mubr.f32.gmra.mrb[0].mxu0 %v711
      %v911 = vpop.f32.mrb[0].mxu0
      %v912 = vadd.f32 %v519, %v911
      %v913 = vpop.f32.mrb[0].mxu0
      %914 = vmatprep.mubr.f32.mxu0 0.0
      %915 = vmatmul.mubr.f32.gmra.mrb[0].mxu0 %v714
      %v916 = vpop.f32.mrb[0].mxu0
      %v917 = vadd.f32 %v524, %v916
      %v918 = vpop.f32.mrb[0].mxu0
      %919 = vmatprep.mubr.f32.mxu0 0.0
      %920 = vmatmul.mubr.f32.gmra.mrb[0].mxu0 %v717
      %v921 = vpop.f32.mrb[0].mxu0
      %v922 = vadd.f32 %v529, %v921
      %v923 = vpop.f32.mrb[0].mxu0
      %924 = vmatprep.mubr.f32.mxu0 0.0
      %925 = vmatmul.mubr.f32.gmra.mrb[0].mxu0 %v720
      %v926 = vpop.f32.mrb[0].mxu0
      %v927 = vadd.f32 %v534, %v926
      %v928 = vpop.f32.mrb[0].mxu0
      %929 = vmatprep.mubr.f32.mxu0 0.0
      %930 = vmatmul.mubr.f32.gmra.mrb[0].mxu0 %v723
      %v931 = vpop.f32.mrb[0].mxu0
      %v932 = vadd.f32 %v539, %v931
      %v933 = vpop.f32.mrb[0].mxu0
      %934 = vmatprep.mubr.f32.mxu0 0.0
      %935 = vmatmul.mubr.f32.gmra.mrb[0].mxu0 %v726
      %v936 = vpop.f32.mrb[0].mxu0
      %v937 = vadd.f32 %v544, %v936
      %v938 = vpop.f32.mrb[0].mxu0
      %939 = vmatprep.mubr.f32.mxu0 0.0
      %940 = vmatmul.mubr.f32.gmra.mrb[0].mxu0 %v729
      %v941 = vpop.f32.mrb[0].mxu0
      %v942 = vadd.f32 %v549, %v941
      %v943 = vpop.f32.mrb[0].mxu0
      %944 = vmatprep.mubr.f32.mxu0 0.0
      %945 = vmatmul.mubr.f32.gmra.mrb[0].mxu0 %v732
      %v946 = vpop.f32.mrb[0].mxu0
      %v947 = vadd.f32 %v554, %v946
      %v948 = vpop.f32.mrb[0].mxu0
      %949 = vmatprep.mubr.f32.mxu0 0.0
      %950 = vmatmul.mubr.f32.gmra.mrb[0].mxu0 %v735
      %v951 = vpop.f32.mrb[0].mxu0
      %v952 = vadd.f32 %v559, %v951
      %v953 = vpop.f32.mrb[0].mxu0
      %954 = vmatprep.mubr.f32.mxu0 0.0
      %955 = vmatmul.mubr.f32.gmra.mrb[0].mxu0 %v738
      %v956 = vpop.f32.mrb[0].mxu0
      %v957 = vadd.f32 %v564, %v956
      %v958 = vpop.f32.mrb[0].mxu0
      %959 = vmatprep.mubr.f32.mxu0 0.0
      %960 = vmatmul.mubr.f32.gmra.mrb[0].mxu0 %v741
      %v961 = vpop.f32.mrb[0].mxu0
      %v962 = vadd.f32 %v569, %v961
      %v963 = vpop.f32.mrb[0].mxu0
      %964 = vmatprep.mubr.f32.mxu0 0.0
      %965 = vmatmul.mubr.f32.gmra.mrb[0].mxu0 %v744
      %v966 = vpop.f32.mrb[0].mxu0
      %v967 = vadd.f32 %v574, %v966
      %v968 = vpop.f32.mrb[0].mxu0
      %969 = vmatprep.mubr.f32.mxu0 0.0
      %970 = vmatmul.mubr.f32.gmra.mrb[0].mxu0 %v747
      %v971 = vpop.f32.mrb[0].mxu0
      %v972 = vadd.f32 %v579, %v971
      %v973 = vpop.f32.mrb[0].mxu0
      %974 = vmatprep.mubr.f32.mxu0 0.0
      %975 = vmatmul.mubr.f32.gmra.mrb[0].mxu0 %v750
      %v976 = vpop.f32.mrb[0].mxu0
      %v977 = vadd.f32 %v584, %v976
      %v978 = vpop.f32.mrb[0].mxu0
      %979 = vmatprep.mubr.f32.mxu0 0.0
      %980 = vmatmul.mubr.f32.gmra.mrb[0].mxu0 %v753
      %v981 = vpop.f32.mrb[0].mxu0
      %v982 = vadd.f32 %v589, %v981
      %v983 = vpop.f32.mrb[0].mxu0
      %984 = vmatprep.mubr.f32.mxu0 0.0
      %985 = vmatmul.mubr.f32.gmra.mrb[0].mxu0 %v756
      %v986 = vpop.f32.mrb[0].mxu0
      %v987 = vadd.f32 %v594, %v986
      %v988 = vpop.f32.mrb[0].mxu0
      %989 = vmatprep.mubr.f32.mxu0 0.0
      %990 = vmatmul.mubr.f32.gmra.mrb[0].mxu0 %v759
      %v991 = vpop.f32.mrb[0].mxu0
      %v992 = vadd.f32 %v599, %v991
      %v993 = vpop.f32.mrb[0].mxu0
      %994 = vmatprep.mubr.f32.mxu0 0.0
      %995 = vmatmul.mubr.f32.gmra.mrb[0].mxu0 %v762
      %v996 = vpop.f32.mrb[0].mxu0
      %v997 = vadd.f32 %v604, %v996
      %v998 = vpop.f32.mrb[0].mxu0
      %999 = vmatprep.mubr.f32.mxu0 0.0
      %1000 = vmatmul.mubr.f32.gmra.mrb[0].mxu0 %v765
      %v1001 = vpop.f32.mrb[0].mxu0
      %v1002 = vadd.f32 %v609, %v1001
      %v1003 = vpop.f32.mrb[0].mxu0
      %1004 = vmatprep.mubr.f32.mxu0 0.0
      %1005 = vmatmul.mubr.f32.gmra.mrb[0].mxu0 %v768
      %v1006 = vpop.f32.mrb[0].mxu0
      %v1007 = vadd.f32 %v614, %v1006
      %v1008 = vpop.f32.mrb[0].mxu0
      %1009 = vmatprep.mubr.f32.mxu0 0.0
      %1010 = vmatmul.mubr.f32.gmra.mrb[0].mxu0 %v771
      %v1011 = vpop.f32.mrb[0].mxu0
      %v1012 = vadd.f32 %v619, %v1011
      %v1013 = vpop.f32.mrb[0].mxu0
      %1014 = vmatprep.mubr.f32.mxu0 0.0
      %1015 = vmatmul.mubr.f32.gmra.mrb[0].mxu0 %v774
      %v1016 = vpop.f32.mrb[0].mxu0
      %v1017 = vadd.f32 %v624, %v1016
      %v1018 = vpop.f32.mrb[0].mxu0
      %1019 = vmatprep.mubr.f32.mxu0 0.0
      %1020 = vmatmul.mubr.f32.gmra.mrb[0].mxu0 %v777
      %v1021 = vpop.f32.mrb[0].mxu0
      %v1022 = vadd.f32 %v629, %v1021
      %v1023 = vpop.f32.mrb[0].mxu0
      %1024 = vmatprep.mubr.f32.mxu0 0.0
      %1025 = vmatmul.mubr.f32.gmra.mrb[0].mxu0 %v780
      %v1026 = vpop.f32.mrb[0].mxu0
      %v1027 = vadd.f32 %v634, %v1026
      %v1028 = vpop.f32.mrb[0].mxu0
      %1029 = vmatprep.mubr.f32.mxu0 0.0
      %1030 = vmatmul.mubr.f32.gmra.mrb[0].mxu0 %v783
      %v1031 = vpop.f32.mrb[0].mxu0
      %v1032 = vadd.f32 %v639, %v1031
      %v1033 = vpop.f32.mrb[0].mxu0
      %1034 = vmatprep.mubr.f32.mxu0 0.0
      %1035 = vmatmul.mubr.f32.gmra.mrb[0].mxu0 %v786
      %v1036 = vpop.f32.mrb[0].mxu0
      %v1037 = vadd.f32 %v644, %v1036
      %v1038 = vpop.f32.mrb[0].mxu0
      %1039 = vmatprep.mubr.f32.mxu0 0.0
      %1040 = vmatmul.mubr.f32.gmra.mrb[0].mxu0 %v789
      %v1041 = vpop.f32.mrb[0].mxu0
      %v1042 = vadd.f32 %v649, %v1041
      %v1043 = vpop.f32.mrb[0].mxu0
      %1044 = vmatprep.mubr.f32.mxu0 0.0
      %1045 = vmatmul.mubr.f32.gmra.mrb[0].mxu0 %v792
      %v1046 = vpop.f32.mrb[0].mxu0
      %v1047 = vadd.f32 %v654, %v1046
      %v1048 = vpop.f32.mrb[0].mxu0
      %1049 = vmatprep.mubr.f32.mxu0 0.0
      %1050 = vmatmul.mubr.f32.gmra.mrb[0].mxu0 %v795
      %v1051 = vpop.f32.mrb[0].mxu0
      %v1052 = vadd.f32 %v659, %v1051
      %v1053 = vpop.f32.mrb[0].mxu0
      %1054 = vmatprep.mubr.f32.mxu0 0.0
      %1055 = vmatmul.mubr.f32.gmra.mrb[0].mxu0 %v798
      %v1056 = vpop.f32.mrb[0].mxu0
      %v1057 = vadd.f32 %v664, %v1056
      %v1058 = vpop.f32.mrb[0].mxu0
      %1059 = vmatprep.mubr.f32.mxu0 0.0
      %1060 = vmatmul.mubr.f32.gmra.mrb[0].mxu0 %v801
      %v1061 = vpop.f32.mrb[0].mxu0
      %v1062 = vadd.f32 %v669, %v1061
      %v1063 = vpop.f32.mrb[0].mxu0
      %1064 = vmatprep.mubr.f32.mxu0 0.0
      %1065 = vmatmul.mubr.f32.gmra.mrb[0].mxu0 %v804
      %v1066 = vpop.f32.mrb[0].mxu0
      %v1067 = vadd.f32 %v674, %v1066
      %v1068 = vpop.f32.mrb[0].mxu0
      %1069 = vmatprep.mubr.f32.mxu0 0.0
      %1070 = vmatmul.mubr.f32.gmra.mrb[0].mxu0 %v807
      %v1071 = vpop.f32.mrb[0].mxu0
      %v1072 = vadd.f32 %v679, %v1071
      %v1073 = vpop.f32.mrb[0].mxu0
      %1074 = vmatprep.mubr.f32.mxu0 0.0
      %1075 = vmatmul.mubr.f32.gmra.mrb[0].mxu0 %v810
      %v1076 = vpop.f32.mrb[0].mxu0
      %v1077 = vadd.f32 %v684, %v1076
      %v1078 = vpop.f32.mrb[0].mxu0
      %1079 = vmatprep.mubr.f32.mxu0 0.0
      %1080 = vmatmul.mubr.f32.gmra.mrb[0].mxu0 %v813
      %v1081 = vpop.f32.mrb[0].mxu0
      %v1082 = vadd.f32 %v689, %v1081
      %v1083 = vpop.f32.mrb[0].mxu0
      %1084 = vdwg.mxu0
      %v1085 = vld [vmem:[%s193 + $0x2] sm:$0xff]
      %v1086 = vld [vmem:[%s193 + $0xa] sm:$0xff]
      %v1087 = vld [vmem:[%s193 + $0x12] sm:$0xff]
      %v1088 = vld [vmem:[%s193 + $0x1a] sm:$0xff]
      %v1089 = vld [vmem:[%s193 + $0x22] sm:$0xff]
      %v1090 = vld [vmem:[%s193 + $0x2a] sm:$0xff]
      %v1091 = vld [vmem:[%s193 + $0x32] sm:$0xff]
      %v1092 = vld [vmem:[%s193 + $0x3a] sm:$0xff]
      %v1093 = vld [vmem:[%s193 + $0x42] sm:$0xff]
      %v1094 = vld [vmem:[%s193 + $0x4a] sm:$0xff]
      %v1095 = vld [vmem:[%s193 + $0x52] sm:$0xff]
      %v1096 = vld [vmem:[%s193 + $0x5a] sm:$0xff]
      %v1097 = vld [vmem:[%s193 + $0x62] sm:$0xff]
      %v1098 = vld [vmem:[%s193 + $0x6a] sm:$0xff]
      %v1099 = vld [vmem:[%s193 + $0x72] sm:$0xff]
      %v1100 = vld [vmem:[%s193 + $0x7a] sm:$0xff]
      %v1101 = vld [vmem:[%s193 + $0x82] sm:$0xff]
      %v1102 = vld [vmem:[%s193 + $0x8a] sm:$0xff]
      %v1103 = vld [vmem:[%s193 + $0x92] sm:$0xff]
      %v1104 = vld [vmem:[%s193 + $0x9a] sm:$0xff]
      %v1105 = vld [vmem:[%s193 + $0xa2] sm:$0xff]
      %v1106 = vld [vmem:[%s193 + $0xaa] sm:$0xff]
      %v1107 = vld [vmem:[%s193 + $0xb2] sm:$0xff]
      %v1108 = vld [vmem:[%s193 + $0xba] sm:$0xff]
      %v1109 = vld [vmem:[%s193 + $0xc2] sm:$0xff]
      %v1110 = vld [vmem:[%s193 + $0xca] sm:$0xff]
      %v1111 = vld [vmem:[%s193 + $0xd2] sm:$0xff]
      %v1112 = vld [vmem:[%s193 + $0xda] sm:$0xff]
      %v1113 = vld [vmem:[%s193 + $0xe2] sm:$0xff]
      %v1114 = vld [vmem:[%s193 + $0xea] sm:$0xff]
      %v1115 = vld [vmem:[%s193 + $0xf2] sm:$0xff]
      %v1116 = vld [vmem:[%s193 + $0xfa] sm:$0xff]
      %v1117 = vld [vmem:[%s193 + $0x102] sm:$0xff]
      %v1118 = vld [vmem:[%s193 + $0x10a] sm:$0xff]
      %v1119 = vld [vmem:[%s193 + $0x112] sm:$0xff]
      %v1120 = vld [vmem:[%s193 + $0x11a] sm:$0xff]
      %v1121 = vld [vmem:[%s193 + $0x122] sm:$0xff]
      %v1122 = vld [vmem:[%s193 + $0x12a] sm:$0xff]
      %v1123 = vld [vmem:[%s193 + $0x132] sm:$0xff]
      %v1124 = vld [vmem:[%s193 + $0x13a] sm:$0xff]
      %v1125 = vld [vmem:[%s193 + $0x142] sm:$0xff]
      %s1126 = scalar_lea.vmem %s1, 128
      %v1127 = vld [vmem:[%s1126] sm:$0xff]
      %v1128 = vld [vmem:[%s1126 + $0x8] sm:$0xff]
      %v1129 = vld [vmem:[%s1126 + $0x10] sm:$0xff]
      %v1130 = vld [vmem:[%s1126 + $0x18] sm:$0xff]
      %v1131 = vld [vmem:[%s1126 + $0x20] sm:$0xff]
      %v1132 = vld [vmem:[%s1126 + $0x28] sm:$0xff]
      %v1133 = vld [vmem:[%s1126 + $0x30] sm:$0xff]
      %v1134 = vld [vmem:[%s1126 + $0x38] sm:$0xff]
      %v1136 = vsel %vm298, %v1085, 0
      %v1139 = vsel %vm298, %v1086, 0
      %v1142 = vsel %vm298, %v1087, 0
      %v1145 = vsel %vm298, %v1088, 0
      %v1148 = vsel %vm298, %v1089, 0
      %v1151 = vsel %vm298, %v1090, 0
      %v1154 = vsel %vm298, %v1091, 0
      %v1157 = vsel %vm298, %v1092, 0
      %v1160 = vsel %vm298, %v1093, 0
      %v1163 = vsel %vm298, %v1094, 0
      %v1166 = vsel %vm298, %v1095, 0
      %v1169 = vsel %vm298, %v1096, 0
      %v1172 = vsel %vm298, %v1097, 0
      %v1175 = vsel %vm298, %v1098, 0
      %v1178 = vsel %vm298, %v1099, 0
      %v1181 = vsel %vm298, %v1100, 0
      %v1184 = vsel %vm298, %v1101, 0
      %v1187 = vsel %vm298, %v1102, 0
      %v1190 = vsel %vm298, %v1103, 0
      %v1193 = vsel %vm298, %v1104, 0
      %v1196 = vsel %vm298, %v1105, 0
      %v1199 = vsel %vm298, %v1106, 0
      %v1202 = vsel %vm298, %v1107, 0
      %v1205 = vsel %vm298, %v1108, 0
      %v1208 = vsel %vm298, %v1109, 0
      %v1211 = vsel %vm298, %v1110, 0
      %v1214 = vsel %vm298, %v1111, 0
      %v1217 = vsel %vm298, %v1112, 0
      %v1220 = vsel %vm298, %v1113, 0
      %v1223 = vsel %vm298, %v1114, 0
      %v1226 = vsel %vm298, %v1115, 0
      %v1229 = vsel %vm298, %v1116, 0
      %v1232 = vsel %vm298, %v1117, 0
      %v1235 = vsel %vm298, %v1118, 0
      %v1238 = vsel %vm298, %v1119, 0
      %v1241 = vsel %vm298, %v1120, 0
      %v1244 = vsel %vm298, %v1121, 0
      %v1247 = vsel %vm298, %v1122, 0
      %v1250 = vsel %vm298, %v1123, 0
      %v1253 = vsel %vm298, %v1124, 0
      %v1256 = vsel %vm298, %v1125, 0
      %1258 = vmatprep.subr.mxu0 0.0
      %1259 = vmatpush1.msra.mxu0 %v1127
      %1260 = vmatprep.subr.mxu0 0.0
      %1261 = vmatpush1.msra.mxu0 %v1128
      %1262 = vmatprep.subr.mxu0 0.0
      %1263 = vmatpush1.msra.mxu0 %v1129
      %1264 = vmatprep.subr.mxu0 0.0
      %1265 = vmatpush1.msra.mxu0 %v1130
      %1266 = vmatprep.subr.mxu0 0.0
      %1267 = vmatpush1.msra.mxu0 %v1131
      %1268 = vmatprep.subr.mxu0 0.0
      %1269 = vmatpush1.msra.mxu0 %v1132
      %1270 = vmatprep.subr.mxu0 0.0
      %1271 = vmatpush1.msra.mxu0 %v1133
      %1272 = vmatprep.subr.mxu0 0.0
      %1273 = vmatpush1.msra.mxu0 %v1134
      %1274 = vmatprep.subr.mxu0 0.0
      %1275 = vmatpush1.msra.mxu0 0.0
      %1276 = vmatprep.subr.mxu0 0.0
      %1277 = vmatpush1.msra.mxu0 0.0
      %1278 = vmatprep.subr.mxu0 0.0
      %1279 = vmatpush1.msra.mxu0 0.0
      %1280 = vmatprep.subr.mxu0 0.0
      %1281 = vmatpush1.msra.mxu0 0.0
      %1282 = vmatprep.subr.mxu0 0.0
      %1283 = vmatpush1.msra.mxu0 0.0
      %1284 = vmatprep.subr.mxu0 0.0
      %1285 = vmatpush1.msra.mxu0 0.0
      %1286 = vmatprep.subr.mxu0 0.0
      %1287 = vmatpush1.msra.mxu0 0.0
      %1288 = vmatprep.subr.mxu0 0.0
      %1289 = vmatpush1.msra.mxu0 0.0
      %1290 = vmatprep.subr.mxu0 0.0
      %1291 = vmatpush1.msra.mxu0 0.0
      %1292 = vmatprep.subr.mxu0 0.0
      %1293 = vmatpush1.msra.mxu0 0.0
      %1294 = vmatprep.subr.mxu0 0.0
      %1295 = vmatpush1.msra.mxu0 0.0
      %1296 = vmatprep.subr.mxu0 0.0
      %1297 = vmatpush1.msra.mxu0 0.0
      %1298 = vmatprep.subr.mxu0 0.0
      %1299 = vmatpush1.msra.mxu0 0.0
      %1300 = vmatprep.subr.mxu0 0.0
      %1301 = vmatpush1.msra.mxu0 0.0
      %1302 = vmatprep.subr.mxu0 0.0
      %1303 = vmatpush1.msra.mxu0 0.0
      %1304 = vmatprep.subr.mxu0 0.0
      %1305 = vmatpush1.msra.mxu0 0.0
      %1306 = vmatprep.subr.mxu0 0.0
      %1307 = vmatpush1.msra.mxu0 0.0
      %1308 = vmatprep.subr.mxu0 0.0
      %1309 = vmatpush1.msra.mxu0 0.0
      %1310 = vmatprep.subr.mxu0 0.0
      %1311 = vmatpush1.msra.mxu0 0.0
      %1312 = vmatprep.subr.mxu0 0.0
      %1313 = vmatpush1.msra.mxu0 0.0
      %1314 = vmatprep.subr.mxu0 0.0
      %1315 = vmatpush1.msra.mxu0 0.0
      %1316 = vmatprep.subr.mxu0 0.0
      %1317 = vmatpush1.msra.mxu0 0.0
      %1318 = vmatprep.subr.mxu0 0.0
      %1319 = vmatpush1.msra.mxu0 0.0
      %1320 = vmatprep.subr.mxu0 0.0
      %1321 = vmatpush1.msra.mxu0 0.0
      %1322 = vmatprep.mubr.f32.mxu0 0.0
      %1323 = vmatmul.mubr.f32.gmra.mrb[0].mxu0 %v1136
      %v1324 = vpop.f32.mrb[0].mxu0
      %v1325 = vadd.f32 0.0, %v1324
      %v1326 = vpop.f32.mrb[0].mxu0
      %1327 = vmatprep.mubr.f32.mxu0 0.0
      %1328 = vmatmul.mubr.f32.gmra.mrb[0].mxu0 %v1139
      %v1329 = vpop.f32.mrb[0].mxu0
      %v1330 = vadd.f32 0.0, %v1329
      %v1331 = vpop.f32.mrb[0].mxu0
      %1332 = vmatprep.mubr.f32.mxu0 0.0
      %1333 = vmatmul.mubr.f32.gmra.mrb[0].mxu0 %v1142
      %v1334 = vpop.f32.mrb[0].mxu0
      %v1335 = vadd.f32 0.0, %v1334
      %v1336 = vpop.f32.mrb[0].mxu0
      %1337 = vmatprep.mubr.f32.mxu0 0.0
      %1338 = vmatmul.mubr.f32.gmra.mrb[0].mxu0 %v1145
      %v1339 = vpop.f32.mrb[0].mxu0
      %v1340 = vadd.f32 0.0, %v1339
      %v1341 = vpop.f32.mrb[0].mxu0
      %1342 = vmatprep.mubr.f32.mxu0 0.0
      %1343 = vmatmul.mubr.f32.gmra.mrb[0].mxu0 %v1148
      %v1344 = vpop.f32.mrb[0].mxu0
      %v1345 = vadd.f32 0.0, %v1344
      %v1346 = vpop.f32.mrb[0].mxu0
      %1347 = vmatprep.mubr.f32.mxu0 0.0
      %1348 = vmatmul.mubr.f32.gmra.mrb[0].mxu0 %v1151
      %v1349 = vpop.f32.mrb[0].mxu0
      %v1350 = vadd.f32 0.0, %v1349
      %v1351 = vpop.f32.mrb[0].mxu0
      %1352 = vmatprep.mubr.f32.mxu0 0.0
      %1353 = vmatmul.mubr.f32.gmra.mrb[0].mxu0 %v1154
      %v1354 = vpop.f32.mrb[0].mxu0
      %v1355 = vadd.f32 0.0, %v1354
      %v1356 = vpop.f32.mrb[0].mxu0
      %1357 = vmatprep.mubr.f32.mxu0 0.0
      %1358 = vmatmul.mubr.f32.gmra.mrb[0].mxu0 %v1157
      %v1359 = vpop.f32.mrb[0].mxu0
      %v1360 = vadd.f32 0.0, %v1359
      %v1361 = vpop.f32.mrb[0].mxu0
      %1362 = vmatprep.mubr.f32.mxu0 0.0
      %1363 = vmatmul.mubr.f32.gmra.mrb[0].mxu0 %v1160
      %v1364 = vpop.f32.mrb[0].mxu0
      %v1365 = vadd.f32 0.0, %v1364
      %v1366 = vpop.f32.mrb[0].mxu0
      %1367 = vmatprep.mubr.f32.mxu0 0.0
      %1368 = vmatmul.mubr.f32.gmra.mrb[0].mxu0 %v1163
      %v1369 = vpop.f32.mrb[0].mxu0
      %v1370 = vadd.f32 0.0, %v1369
      %v1371 = vpop.f32.mrb[0].mxu0
      %1372 = vmatprep.mubr.f32.mxu0 0.0
      %1373 = vmatmul.mubr.f32.gmra.mrb[0].mxu0 %v1166
      %v1374 = vpop.f32.mrb[0].mxu0
      %v1375 = vadd.f32 0.0, %v1374
      %v1376 = vpop.f32.mrb[0].mxu0
      %1377 = vmatprep.mubr.f32.mxu0 0.0
      %1378 = vmatmul.mubr.f32.gmra.mrb[0].mxu0 %v1169
      %v1379 = vpop.f32.mrb[0].mxu0
      %v1380 = vadd.f32 0.0, %v1379
      %v1381 = vpop.f32.mrb[0].mxu0
      %1382 = vmatprep.mubr.f32.mxu0 0.0
      %1383 = vmatmul.mubr.f32.gmra.mrb[0].mxu0 %v1172
      %v1384 = vpop.f32.mrb[0].mxu0
      %v1385 = vadd.f32 0.0, %v1384
      %v1386 = vpop.f32.mrb[0].mxu0
      %1387 = vmatprep.mubr.f32.mxu0 0.0
      %1388 = vmatmul.mubr.f32.gmra.mrb[0].mxu0 %v1175
      %v1389 = vpop.f32.mrb[0].mxu0
      %v1390 = vadd.f32 0.0, %v1389
      %v1391 = vpop.f32.mrb[0].mxu0
      %1392 = vmatprep.mubr.f32.mxu0 0.0
      %1393 = vmatmul.mubr.f32.gmra.mrb[0].mxu0 %v1178
      %v1394 = vpop.f32.mrb[0].mxu0
      %v1395 = vadd.f32 0.0, %v1394
      %v1396 = vpop.f32.mrb[0].mxu0
      %1397 = vmatprep.mubr.f32.mxu0 0.0
      %1398 = vmatmul.mubr.f32.gmra.mrb[0].mxu0 %v1181
      %v1399 = vpop.f32.mrb[0].mxu0
      %v1400 = vadd.f32 0.0, %v1399
      %v1401 = vpop.f32.mrb[0].mxu0
      %1402 = vmatprep.mubr.f32.mxu0 0.0
      %1403 = vmatmul.mubr.f32.gmra.mrb[0].mxu0 %v1184
      %v1404 = vpop.f32.mrb[0].mxu0
      %v1405 = vadd.f32 0.0, %v1404
      %v1406 = vpop.f32.mrb[0].mxu0
      %1407 = vmatprep.mubr.f32.mxu0 0.0
      %1408 = vmatmul.mubr.f32.gmra.mrb[0].mxu0 %v1187
      %v1409 = vpop.f32.mrb[0].mxu0
      %v1410 = vadd.f32 0.0, %v1409
      %v1411 = vpop.f32.mrb[0].mxu0
      %1412 = vmatprep.mubr.f32.mxu0 0.0
      %1413 = vmatmul.mubr.f32.gmra.mrb[0].mxu0 %v1190
      %v1414 = vpop.f32.mrb[0].mxu0
      %v1415 = vadd.f32 0.0, %v1414
      %v1416 = vpop.f32.mrb[0].mxu0
      %1417 = vmatprep.mubr.f32.mxu0 0.0
      %1418 = vmatmul.mubr.f32.gmra.mrb[0].mxu0 %v1193
      %v1419 = vpop.f32.mrb[0].mxu0
      %v1420 = vadd.f32 0.0, %v1419
      %v1421 = vpop.f32.mrb[0].mxu0
      %1422 = vmatprep.mubr.f32.mxu0 0.0
      %1423 = vmatmul.mubr.f32.gmra.mrb[0].mxu0 %v1196
      %v1424 = vpop.f32.mrb[0].mxu0
      %v1425 = vadd.f32 0.0, %v1424
      %v1426 = vpop.f32.mrb[0].mxu0
      %1427 = vmatprep.mubr.f32.mxu0 0.0
      %1428 = vmatmul.mubr.f32.gmra.mrb[0].mxu0 %v1199
      %v1429 = vpop.f32.mrb[0].mxu0
      %v1430 = vadd.f32 0.0, %v1429
      %v1431 = vpop.f32.mrb[0].mxu0
      %1432 = vmatprep.mubr.f32.mxu0 0.0
      %1433 = vmatmul.mubr.f32.gmra.mrb[0].mxu0 %v1202
      %v1434 = vpop.f32.mrb[0].mxu0
      %v1435 = vadd.f32 0.0, %v1434
      %v1436 = vpop.f32.mrb[0].mxu0
      %1437 = vmatprep.mubr.f32.mxu0 0.0
      %1438 = vmatmul.mubr.f32.gmra.mrb[0].mxu0 %v1205
      %v1439 = vpop.f32.mrb[0].mxu0
      %v1440 = vadd.f32 0.0, %v1439
      %v1441 = vpop.f32.mrb[0].mxu0
      %1442 = vmatprep.mubr.f32.mxu0 0.0
      %1443 = vmatmul.mubr.f32.gmra.mrb[0].mxu0 %v1208
      %v1444 = vpop.f32.mrb[0].mxu0
      %v1445 = vadd.f32 0.0, %v1444
      %v1446 = vpop.f32.mrb[0].mxu0
      %1447 = vmatprep.mubr.f32.mxu0 0.0
      %1448 = vmatmul.mubr.f32.gmra.mrb[0].mxu0 %v1211
      %v1449 = vpop.f32.mrb[0].mxu0
      %v1450 = vadd.f32 0.0, %v1449
      %v1451 = vpop.f32.mrb[0].mxu0
      %1452 = vmatprep.mubr.f32.mxu0 0.0
      %1453 = vmatmul.mubr.f32.gmra.mrb[0].mxu0 %v1214
      %v1454 = vpop.f32.mrb[0].mxu0
      %v1455 = vadd.f32 0.0, %v1454
      %v1456 = vpop.f32.mrb[0].mxu0
      %1457 = vmatprep.mubr.f32.mxu0 0.0
      %1458 = vmatmul.mubr.f32.gmra.mrb[0].mxu0 %v1217
      %v1459 = vpop.f32.mrb[0].mxu0
      %v1460 = vadd.f32 0.0, %v1459
      %v1461 = vpop.f32.mrb[0].mxu0
      %1462 = vmatprep.mubr.f32.mxu0 0.0
      %1463 = vmatmul.mubr.f32.gmra.mrb[0].mxu0 %v1220
      %v1464 = vpop.f32.mrb[0].mxu0
      %v1465 = vadd.f32 0.0, %v1464
      %v1466 = vpop.f32.mrb[0].mxu0
      %1467 = vmatprep.mubr.f32.mxu0 0.0
      %1468 = vmatmul.mubr.f32.gmra.mrb[0].mxu0 %v1223
      %v1469 = vpop.f32.mrb[0].mxu0
      %v1470 = vadd.f32 0.0, %v1469
      %v1471 = vpop.f32.mrb[0].mxu0
      %1472 = vmatprep.mubr.f32.mxu0 0.0
      %1473 = vmatmul.mubr.f32.gmra.mrb[0].mxu0 %v1226
      %v1474 = vpop.f32.mrb[0].mxu0
      %v1475 = vadd.f32 0.0, %v1474
      %v1476 = vpop.f32.mrb[0].mxu0
      %1477 = vmatprep.mubr.f32.mxu0 0.0
      %1478 = vmatmul.mubr.f32.gmra.mrb[0].mxu0 %v1229
      %v1479 = vpop.f32.mrb[0].mxu0
      %v1480 = vadd.f32 0.0, %v1479
      %v1481 = vpop.f32.mrb[0].mxu0
      %1482 = vmatprep.mubr.f32.mxu0 0.0
      %1483 = vmatmul.mubr.f32.gmra.mrb[0].mxu0 %v1232
      %v1484 = vpop.f32.mrb[0].mxu0
      %v1485 = vadd.f32 0.0, %v1484
      %v1486 = vpop.f32.mrb[0].mxu0
      %1487 = vmatprep.mubr.f32.mxu0 0.0
      %1488 = vmatmul.mubr.f32.gmra.mrb[0].mxu0 %v1235
      %v1489 = vpop.f32.mrb[0].mxu0
      %v1490 = vadd.f32 0.0, %v1489
      %v1491 = vpop.f32.mrb[0].mxu0
      %1492 = vmatprep.mubr.f32.mxu0 0.0
      %1493 = vmatmul.mubr.f32.gmra.mrb[0].mxu0 %v1238
      %v1494 = vpop.f32.mrb[0].mxu0
      %v1495 = vadd.f32 0.0, %v1494
      %v1496 = vpop.f32.mrb[0].mxu0
      %1497 = vmatprep.mubr.f32.mxu0 0.0
      %1498 = vmatmul.mubr.f32.gmra.mrb[0].mxu0 %v1241
      %v1499 = vpop.f32.mrb[0].mxu0
      %v1500 = vadd.f32 0.0, %v1499
      %v1501 = vpop.f32.mrb[0].mxu0
      %1502 = vmatprep.mubr.f32.mxu0 0.0
      %1503 = vmatmul.mubr.f32.gmra.mrb[0].mxu0 %v1244
      %v1504 = vpop.f32.mrb[0].mxu0
      %v1505 = vadd.f32 0.0, %v1504
      %v1506 = vpop.f32.mrb[0].mxu0
      %1507 = vmatprep.mubr.f32.mxu0 0.0
      %1508 = vmatmul.mubr.f32.gmra.mrb[0].mxu0 %v1247
      %v1509 = vpop.f32.mrb[0].mxu0
      %v1510 = vadd.f32 0.0, %v1509
      %v1511 = vpop.f32.mrb[0].mxu0
      %1512 = vmatprep.mubr.f32.mxu0 0.0
      %1513 = vmatmul.mubr.f32.gmra.mrb[0].mxu0 %v1250
      %v1514 = vpop.f32.mrb[0].mxu0
      %v1515 = vadd.f32 0.0, %v1514
      %v1516 = vpop.f32.mrb[0].mxu0
      %1517 = vmatprep.mubr.f32.mxu0 0.0
      %1518 = vmatmul.mubr.f32.gmra.mrb[0].mxu0 %v1253
      %v1519 = vpop.f32.mrb[0].mxu0
      %v1520 = vadd.f32 0.0, %v1519
      %v1521 = vpop.f32.mrb[0].mxu0
      %1522 = vmatprep.mubr.f32.mxu0 0.0
      %1523 = vmatmul.mubr.f32.gmra.mrb[0].mxu0 %v1256
      %v1524 = vpop.f32.mrb[0].mxu0
      %v1525 = vadd.f32 0.0, %v1524
      %v1526 = vpop.f32.mrb[0].mxu0
      %1527 = vdwg.mxu0
      %v1528 = vadd.f32 %v882, %v1325
      %v1529 = vadd.f32 %v887, %v1330
      %v1530 = vadd.f32 %v892, %v1335
      %v1531 = vadd.f32 %v897, %v1340
      %v1532 = vadd.f32 %v902, %v1345
      %v1533 = vadd.f32 %v907, %v1350
      %v1534 = vadd.f32 %v912, %v1355
      %v1535 = vadd.f32 %v917, %v1360
      %v1536 = vadd.f32 %v922, %v1365
      %v1537 = vadd.f32 %v927, %v1370
      %v1538 = vadd.f32 %v932, %v1375
      %v1539 = vadd.f32 %v937, %v1380
      %v1540 = vadd.f32 %v942, %v1385
      %v1541 = vadd.f32 %v947, %v1390
      %v1542 = vadd.f32 %v952, %v1395
      %v1543 = vadd.f32 %v957, %v1400
      %v1544 = vadd.f32 %v962, %v1405
      %v1545 = vadd.f32 %v967, %v1410
      %v1546 = vadd.f32 %v972, %v1415
      %v1547 = vadd.f32 %v977, %v1420
      %v1548 = vadd.f32 %v982, %v1425
      %v1549 = vadd.f32 %v987, %v1430
      %v1550 = vadd.f32 %v992, %v1435
      %v1551 = vadd.f32 %v997, %v1440
      %v1552 = vadd.f32 %v1002, %v1445
      %v1553 = vadd.f32 %v1007, %v1450
      %v1554 = vadd.f32 %v1012, %v1455
      %v1555 = vadd.f32 %v1017, %v1460
      %v1556 = vadd.f32 %v1022, %v1465
      %v1557 = vadd.f32 %v1027, %v1470
      %v1558 = vadd.f32 %v1032, %v1475
      %v1559 = vadd.f32 %v1037, %v1480
      %v1560 = vadd.f32 %v1042, %v1485
      %v1561 = vadd.f32 %v1047, %v1490
      %v1562 = vadd.f32 %v1052, %v1495
      %v1563 = vadd.f32 %v1057, %v1500
      %v1564 = vadd.f32 %v1062, %v1505
      %v1565 = vadd.f32 %v1067, %v1510
      %v1566 = vadd.f32 %v1072, %v1515
      %v1567 = vadd.f32 %v1077, %v1520
      %v1568 = vadd.f32 %v1082, %v1525
      %v1569 = vld [vmem:[%s193 + $0x12] sm:$0xff]
      %v1570 = vld [vmem:[%s193 + $0x1a] sm:$0xff]
      %v1571 = vld [vmem:[%s193 + $0x22] sm:$0xff]
      %v1572 = vld [vmem:[%s193 + $0x2a] sm:$0xff]
      %v1573 = vld [vmem:[%s193 + $0x32] sm:$0xff]
      %v1574 = vld [vmem:[%s193 + $0x3a] sm:$0xff]
      %v1575 = vld [vmem:[%s193 + $0x42] sm:$0xff]
      %v1576 = vld [vmem:[%s193 + $0x4a] sm:$0xff]
      %v1577 = vld [vmem:[%s193 + $0x52] sm:$0xff]
      %v1578 = vld [vmem:[%s193 + $0x5a] sm:$0xff]
      %v1579 = vld [vmem:[%s193 + $0x62] sm:$0xff]
      %v1580 = vld [vmem:[%s193 + $0x6a] sm:$0xff]
      %v1581 = vld [vmem:[%s193 + $0x72] sm:$0xff]
      %v1582 = vld [vmem:[%s193 + $0x7a] sm:$0xff]
      %v1583 = vld [vmem:[%s193 + $0x82] sm:$0xff]
      %v1584 = vld [vmem:[%s193 + $0x8a] sm:$0xff]
      %v1585 = vld [vmem:[%s193 + $0x92] sm:$0xff]
      %v1586 = vld [vmem:[%s193 + $0x9a] sm:$0xff]
      %v1587 = vld [vmem:[%s193 + $0xa2] sm:$0xff]
      %v1588 = vld [vmem:[%s193 + $0xaa] sm:$0xff]
      %v1589 = vld [vmem:[%s193 + $0xb2] sm:$0xff]
      %v1590 = vld [vmem:[%s193 + $0xba] sm:$0xff]
      %v1591 = vld [vmem:[%s193 + $0xc2] sm:$0xff]
      %v1592 = vld [vmem:[%s193 + $0xca] sm:$0xff]
      %v1593 = vld [vmem:[%s193 + $0xd2] sm:$0xff]
      %v1594 = vld [vmem:[%s193 + $0xda] sm:$0xff]
      %v1595 = vld [vmem:[%s193 + $0xe2] sm:$0xff]
      %v1596 = vld [vmem:[%s193 + $0xea] sm:$0xff]
      %v1597 = vld [vmem:[%s193 + $0xf2] sm:$0xff]
      %v1598 = vld [vmem:[%s193 + $0xfa] sm:$0xff]
      %v1599 = vld [vmem:[%s193 + $0x102] sm:$0xff]
      %v1600 = vld [vmem:[%s193 + $0x10a] sm:$0xff]
      %v1601 = vld [vmem:[%s193 + $0x112] sm:$0xff]
      %v1602 = vld [vmem:[%s193 + $0x11a] sm:$0xff]
      %v1603 = vld [vmem:[%s193 + $0x122] sm:$0xff]
      %v1604 = vld [vmem:[%s193 + $0x12a] sm:$0xff]
      %v1605 = vld [vmem:[%s193 + $0x132] sm:$0xff]
      %v1606 = vld [vmem:[%s193 + $0x13a] sm:$0xff]
      %v1607 = vld [vmem:[%s193 + $0x142] sm:$0xff]
      %v1608 = vld [vmem:[%s193 + $0x14a] sm:$0xff]
      %v1609 = vld [vmem:[%s193 + $0x152] sm:$0xff]
      %s1610 = scalar_lea.vmem %s1, 192
      %v1611 = vld [vmem:[%s1610] sm:$0xff]
      %v1612 = vld [vmem:[%s1610 + $0x8] sm:$0xff]
      %v1613 = vld [vmem:[%s1610 + $0x10] sm:$0xff]
      %v1614 = vld [vmem:[%s1610 + $0x18] sm:$0xff]
      %v1615 = vld [vmem:[%s1610 + $0x20] sm:$0xff]
      %v1616 = vld [vmem:[%s1610 + $0x28] sm:$0xff]
      %v1617 = vld [vmem:[%s1610 + $0x30] sm:$0xff]
      %v1618 = vld [vmem:[%s1610 + $0x38] sm:$0xff]
      %v1620 = vsel %vm298, %v1569, 0
      %v1623 = vsel %vm298, %v1570, 0
      %v1626 = vsel %vm298, %v1571, 0
      %v1629 = vsel %vm298, %v1572, 0
      %v1632 = vsel %vm298, %v1573, 0
      %v1635 = vsel %vm298, %v1574, 0
      %v1638 = vsel %vm298, %v1575, 0
      %v1641 = vsel %vm298, %v1576, 0
      %v1644 = vsel %vm298, %v1577, 0
      %v1647 = vsel %vm298, %v1578, 0
      %v1650 = vsel %vm298, %v1579, 0
      %v1653 = vsel %vm298, %v1580, 0
      %v1656 = vsel %vm298, %v1581, 0
      %v1659 = vsel %vm298, %v1582, 0
      %v1662 = vsel %vm298, %v1583, 0
      %v1665 = vsel %vm298, %v1584, 0
      %v1668 = vsel %vm298, %v1585, 0
      %v1671 = vsel %vm298, %v1586, 0
      %v1674 = vsel %vm298, %v1587, 0
      %v1677 = vsel %vm298, %v1588, 0
      %v1680 = vsel %vm298, %v1589, 0
      %v1683 = vsel %vm298, %v1590, 0
      %v1686 = vsel %vm298, %v1591, 0
      %v1689 = vsel %vm298, %v1592, 0
      %v1692 = vsel %vm298, %v1593, 0
      %v1695 = vsel %vm298, %v1594, 0
      %v1698 = vsel %vm298, %v1595, 0
      %v1701 = vsel %vm298, %v1596, 0
      %v1704 = vsel %vm298, %v1597, 0
      %v1707 = vsel %vm298, %v1598, 0
      %v1710 = vsel %vm298, %v1599, 0
      %v1713 = vsel %vm298, %v1600, 0
      %v1716 = vsel %vm298, %v1601, 0
      %v1719 = vsel %vm298, %v1602, 0
      %v1722 = vsel %vm298, %v1603, 0
      %v1725 = vsel %vm298, %v1604, 0
      %v1728 = vsel %vm298, %v1605, 0
      %v1731 = vsel %vm298, %v1606, 0
      %v1734 = vsel %vm298, %v1607, 0
      %v1737 = vsel %vm298, %v1608, 0
      %v1740 = vsel %vm298, %v1609, 0
      %1742 = vmatprep.subr.mxu0 0.0
      %1743 = vmatpush1.msra.mxu0 %v1611
      %1744 = vmatprep.subr.mxu0 0.0
      %1745 = vmatpush1.msra.mxu0 %v1612
      %1746 = vmatprep.subr.mxu0 0.0
      %1747 = vmatpush1.msra.mxu0 %v1613
      %1748 = vmatprep.subr.mxu0 0.0
      %1749 = vmatpush1.msra.mxu0 %v1614
      %1750 = vmatprep.subr.mxu0 0.0
      %1751 = vmatpush1.msra.mxu0 %v1615
      %1752 = vmatprep.subr.mxu0 0.0
      %1753 = vmatpush1.msra.mxu0 %v1616
      %1754 = vmatprep.subr.mxu0 0.0
      %1755 = vmatpush1.msra.mxu0 %v1617
      %1756 = vmatprep.subr.mxu0 0.0
      %1757 = vmatpush1.msra.mxu0 %v1618
      %1758 = vmatprep.subr.mxu0 0.0
      %1759 = vmatpush1.msra.mxu0 0.0
      %1760 = vmatprep.subr.mxu0 0.0
      %1761 = vmatpush1.msra.mxu0 0.0
      %1762 = vmatprep.subr.mxu0 0.0
      %1763 = vmatpush1.msra.mxu0 0.0
      %1764 = vmatprep.subr.mxu0 0.0
      %1765 = vmatpush1.msra.mxu0 0.0
      %1766 = vmatprep.subr.mxu0 0.0
      %1767 = vmatpush1.msra.mxu0 0.0
      %1768 = vmatprep.subr.mxu0 0.0
      %1769 = vmatpush1.msra.mxu0 0.0
      %1770 = vmatprep.subr.mxu0 0.0
      %1771 = vmatpush1.msra.mxu0 0.0
      %1772 = vmatprep.subr.mxu0 0.0
      %1773 = vmatpush1.msra.mxu0 0.0
      %1774 = vmatprep.subr.mxu0 0.0
      %1775 = vmatpush1.msra.mxu0 0.0
      %1776 = vmatprep.subr.mxu0 0.0
      %1777 = vmatpush1.msra.mxu0 0.0
      %1778 = vmatprep.subr.mxu0 0.0
      %1779 = vmatpush1.msra.mxu0 0.0
      %1780 = vmatprep.subr.mxu0 0.0
      %1781 = vmatpush1.msra.mxu0 0.0
      %1782 = vmatprep.subr.mxu0 0.0
      %1783 = vmatpush1.msra.mxu0 0.0
      %1784 = vmatprep.subr.mxu0 0.0
      %1785 = vmatpush1.msra.mxu0 0.0
      %1786 = vmatprep.subr.mxu0 0.0
      %1787 = vmatpush1.msra.mxu0 0.0
      %1788 = vmatprep.subr.mxu0 0.0
      %1789 = vmatpush1.msra.mxu0 0.0
      %1790 = vmatprep.subr.mxu0 0.0
      %1791 = vmatpush1.msra.mxu0 0.0
      %1792 = vmatprep.subr.mxu0 0.0
      %1793 = vmatpush1.msra.mxu0 0.0
      %1794 = vmatprep.subr.mxu0 0.0
      %1795 = vmatpush1.msra.mxu0 0.0
      %1796 = vmatprep.subr.mxu0 0.0
      %1797 = vmatpush1.msra.mxu0 0.0
      %1798 = vmatprep.subr.mxu0 0.0
      %1799 = vmatpush1.msra.mxu0 0.0
      %1800 = vmatprep.subr.mxu0 0.0
      %1801 = vmatpush1.msra.mxu0 0.0
      %1802 = vmatprep.subr.mxu0 0.0
      %1803 = vmatpush1.msra.mxu0 0.0
      %1804 = vmatprep.subr.mxu0 0.0
      %1805 = vmatpush1.msra.mxu0 0.0
      %1806 = vmatprep.mubr.f32.mxu0 0.0
      %1807 = vmatmul.mubr.f32.gmra.mrb[0].mxu0 %v1620
      %v1808 = vpop.f32.mrb[0].mxu0
      %v1809 = vadd.f32 0.0, %v1808
      %v1810 = vpop.f32.mrb[0].mxu0
      %1811 = vmatprep.mubr.f32.mxu0 0.0
      %1812 = vmatmul.mubr.f32.gmra.mrb[0].mxu0 %v1623
      %v1813 = vpop.f32.mrb[0].mxu0
      %v1814 = vadd.f32 0.0, %v1813
      %v1815 = vpop.f32.mrb[0].mxu0
      %1816 = vmatprep.mubr.f32.mxu0 0.0
      %1817 = vmatmul.mubr.f32.gmra.mrb[0].mxu0 %v1626
      %v1818 = vpop.f32.mrb[0].mxu0
      %v1819 = vadd.f32 0.0, %v1818
      %v1820 = vpop.f32.mrb[0].mxu0
      %1821 = vmatprep.mubr.f32.mxu0 0.0
      %1822 = vmatmul.mubr.f32.gmra.mrb[0].mxu0 %v1629
      %v1823 = vpop.f32.mrb[0].mxu0
      %v1824 = vadd.f32 0.0, %v1823
      %v1825 = vpop.f32.mrb[0].mxu0
      %1826 = vmatprep.mubr.f32.mxu0 0.0
      %1827 = vmatmul.mubr.f32.gmra.mrb[0].mxu0 %v1632
      %v1828 = vpop.f32.mrb[0].mxu0
      %v1829 = vadd.f32 0.0, %v1828
      %v1830 = vpop.f32.mrb[0].mxu0
      %1831 = vmatprep.mubr.f32.mxu0 0.0
      %1832 = vmatmul.mubr.f32.gmra.mrb[0].mxu0 %v1635
      %v1833 = vpop.f32.mrb[0].mxu0
      %v1834 = vadd.f32 0.0, %v1833
      %v1835 = vpop.f32.mrb[0].mxu0
      %1836 = vmatprep.mubr.f32.mxu0 0.0
      %1837 = vmatmul.mubr.f32.gmra.mrb[0].mxu0 %v1638
      %v1838 = vpop.f32.mrb[0].mxu0
      %v1839 = vadd.f32 0.0, %v1838
      %v1840 = vpop.f32.mrb[0].mxu0
      %1841 = vmatprep.mubr.f32.mxu0 0.0
      %1842 = vmatmul.mubr.f32.gmra.mrb[0].mxu0 %v1641
      %v1843 = vpop.f32.mrb[0].mxu0
      %v1844 = vadd.f32 0.0, %v1843
      %v1845 = vpop.f32.mrb[0].mxu0
      %1846 = vmatprep.mubr.f32.mxu0 0.0
      %1847 = vmatmul.mubr.f32.gmra.mrb[0].mxu0 %v1644
      %v1848 = vpop.f32.mrb[0].mxu0
      %v1849 = vadd.f32 0.0, %v1848
      %v1850 = vpop.f32.mrb[0].mxu0
      %1851 = vmatprep.mubr.f32.mxu0 0.0
      %1852 = vmatmul.mubr.f32.gmra.mrb[0].mxu0 %v1647
      %v1853 = vpop.f32.mrb[0].mxu0
      %v1854 = vadd.f32 0.0, %v1853
      %v1855 = vpop.f32.mrb[0].mxu0
      %1856 = vmatprep.mubr.f32.mxu0 0.0
      %1857 = vmatmul.mubr.f32.gmra.mrb[0].mxu0 %v1650
      %v1858 = vpop.f32.mrb[0].mxu0
      %v1859 = vadd.f32 0.0, %v1858
      %v1860 = vpop.f32.mrb[0].mxu0
      %1861 = vmatprep.mubr.f32.mxu0 0.0
      %1862 = vmatmul.mubr.f32.gmra.mrb[0].mxu0 %v1653
      %v1863 = vpop.f32.mrb[0].mxu0
      %v1864 = vadd.f32 0.0, %v1863
      %v1865 = vpop.f32.mrb[0].mxu0
      %1866 = vmatprep.mubr.f32.mxu0 0.0
      %1867 = vmatmul.mubr.f32.gmra.mrb[0].mxu0 %v1656
      %v1868 = vpop.f32.mrb[0].mxu0
      %v1869 = vadd.f32 0.0, %v1868
      %v1870 = vpop.f32.mrb[0].mxu0
      %1871 = vmatprep.mubr.f32.mxu0 0.0
      %1872 = vmatmul.mubr.f32.gmra.mrb[0].mxu0 %v1659
      %v1873 = vpop.f32.mrb[0].mxu0
      %v1874 = vadd.f32 0.0, %v1873
      %v1875 = vpop.f32.mrb[0].mxu0
      %1876 = vmatprep.mubr.f32.mxu0 0.0
      %1877 = vmatmul.mubr.f32.gmra.mrb[0].mxu0 %v1662
      %v1878 = vpop.f32.mrb[0].mxu0
      %v1879 = vadd.f32 0.0, %v1878
      %v1880 = vpop.f32.mrb[0].mxu0
      %1881 = vmatprep.mubr.f32.mxu0 0.0
      %1882 = vmatmul.mubr.f32.gmra.mrb[0].mxu0 %v1665
      %v1883 = vpop.f32.mrb[0].mxu0
      %v1884 = vadd.f32 0.0, %v1883
      %v1885 = vpop.f32.mrb[0].mxu0
      %1886 = vmatprep.mubr.f32.mxu0 0.0
      %1887 = vmatmul.mubr.f32.gmra.mrb[0].mxu0 %v1668
      %v1888 = vpop.f32.mrb[0].mxu0
      %v1889 = vadd.f32 0.0, %v1888
      %v1890 = vpop.f32.mrb[0].mxu0
      %1891 = vmatprep.mubr.f32.mxu0 0.0
      %1892 = vmatmul.mubr.f32.gmra.mrb[0].mxu0 %v1671
      %v1893 = vpop.f32.mrb[0].mxu0
      %v1894 = vadd.f32 0.0, %v1893
      %v1895 = vpop.f32.mrb[0].mxu0
      %1896 = vmatprep.mubr.f32.mxu0 0.0
      %1897 = vmatmul.mubr.f32.gmra.mrb[0].mxu0 %v1674
      %v1898 = vpop.f32.mrb[0].mxu0
      %v1899 = vadd.f32 0.0, %v1898
      %v1900 = vpop.f32.mrb[0].mxu0
      %1901 = vmatprep.mubr.f32.mxu0 0.0
      %1902 = vmatmul.mubr.f32.gmra.mrb[0].mxu0 %v1677
      %v1903 = vpop.f32.mrb[0].mxu0
      %v1904 = vadd.f32 0.0, %v1903
      %v1905 = vpop.f32.mrb[0].mxu0
      %1906 = vmatprep.mubr.f32.mxu0 0.0
      %1907 = vmatmul.mubr.f32.gmra.mrb[0].mxu0 %v1680
      %v1908 = vpop.f32.mrb[0].mxu0
      %v1909 = vadd.f32 0.0, %v1908
      %v1910 = vpop.f32.mrb[0].mxu0
      %1911 = vmatprep.mubr.f32.mxu0 0.0
      %1912 = vmatmul.mubr.f32.gmra.mrb[0].mxu0 %v1683
      %v1913 = vpop.f32.mrb[0].mxu0
      %v1914 = vadd.f32 0.0, %v1913
      %v1915 = vpop.f32.mrb[0].mxu0
      %1916 = vmatprep.mubr.f32.mxu0 0.0
      %1917 = vmatmul.mubr.f32.gmra.mrb[0].mxu0 %v1686
      %v1918 = vpop.f32.mrb[0].mxu0
      %v1919 = vadd.f32 0.0, %v1918
      %v1920 = vpop.f32.mrb[0].mxu0
      %1921 = vmatprep.mubr.f32.mxu0 0.0
      %1922 = vmatmul.mubr.f32.gmra.mrb[0].mxu0 %v1689
      %v1923 = vpop.f32.mrb[0].mxu0
      %v1924 = vadd.f32 0.0, %v1923
      %v1925 = vpop.f32.mrb[0].mxu0
      %1926 = vmatprep.mubr.f32.mxu0 0.0
      %1927 = vmatmul.mubr.f32.gmra.mrb[0].mxu0 %v1692
      %v1928 = vpop.f32.mrb[0].mxu0
      %v1929 = vadd.f32 0.0, %v1928
      %v1930 = vpop.f32.mrb[0].mxu0
      %1931 = vmatprep.mubr.f32.mxu0 0.0
      %1932 = vmatmul.mubr.f32.gmra.mrb[0].mxu0 %v1695
      %v1933 = vpop.f32.mrb[0].mxu0
      %v1934 = vadd.f32 0.0, %v1933
      %v1935 = vpop.f32.mrb[0].mxu0
      %1936 = vmatprep.mubr.f32.mxu0 0.0
      %1937 = vmatmul.mubr.f32.gmra.mrb[0].mxu0 %v1698
      %v1938 = vpop.f32.mrb[0].mxu0
      %v1939 = vadd.f32 0.0, %v1938
      %v1940 = vpop.f32.mrb[0].mxu0
      %1941 = vmatprep.mubr.f32.mxu0 0.0
      %1942 = vmatmul.mubr.f32.gmra.mrb[0].mxu0 %v1701
      %v1943 = vpop.f32.mrb[0].mxu0
      %v1944 = vadd.f32 0.0, %v1943
      %v1945 = vpop.f32.mrb[0].mxu0
      %1946 = vmatprep.mubr.f32.mxu0 0.0
      %1947 = vmatmul.mubr.f32.gmra.mrb[0].mxu0 %v1704
      %v1948 = vpop.f32.mrb[0].mxu0
      %v1949 = vadd.f32 0.0, %v1948
      %v1950 = vpop.f32.mrb[0].mxu0
      %1951 = vmatprep.mubr.f32.mxu0 0.0
      %1952 = vmatmul.mubr.f32.gmra.mrb[0].mxu0 %v1707
      %v1953 = vpop.f32.mrb[0].mxu0
      %v1954 = vadd.f32 0.0, %v1953
      %v1955 = vpop.f32.mrb[0].mxu0
      %1956 = vmatprep.mubr.f32.mxu0 0.0
      %1957 = vmatmul.mubr.f32.gmra.mrb[0].mxu0 %v1710
      %v1958 = vpop.f32.mrb[0].mxu0
      %v1959 = vadd.f32 0.0, %v1958
      %v1960 = vpop.f32.mrb[0].mxu0
      %1961 = vmatprep.mubr.f32.mxu0 0.0
      %1962 = vmatmul.mubr.f32.gmra.mrb[0].mxu0 %v1713
      %v1963 = vpop.f32.mrb[0].mxu0
      %v1964 = vadd.f32 0.0, %v1963
      %v1965 = vpop.f32.mrb[0].mxu0
      %1966 = vmatprep.mubr.f32.mxu0 0.0
      %1967 = vmatmul.mubr.f32.gmra.mrb[0].mxu0 %v1716
      %v1968 = vpop.f32.mrb[0].mxu0
      %v1969 = vadd.f32 0.0, %v1968
      %v1970 = vpop.f32.mrb[0].mxu0
      %1971 = vmatprep.mubr.f32.mxu0 0.0
      %1972 = vmatmul.mubr.f32.gmra.mrb[0].mxu0 %v1719
      %v1973 = vpop.f32.mrb[0].mxu0
      %v1974 = vadd.f32 0.0, %v1973
      %v1975 = vpop.f32.mrb[0].mxu0
      %1976 = vmatprep.mubr.f32.mxu0 0.0
      %1977 = vmatmul.mubr.f32.gmra.mrb[0].mxu0 %v1722
      %v1978 = vpop.f32.mrb[0].mxu0
      %v1979 = vadd.f32 0.0, %v1978
      %v1980 = vpop.f32.mrb[0].mxu0
      %1981 = vmatprep.mubr.f32.mxu0 0.0
      %1982 = vmatmul.mubr.f32.gmra.mrb[0].mxu0 %v1725
      %v1983 = vpop.f32.mrb[0].mxu0
      %v1984 = vadd.f32 0.0, %v1983
      %v1985 = vpop.f32.mrb[0].mxu0
      %1986 = vmatprep.mubr.f32.mxu0 0.0
      %1987 = vmatmul.mubr.f32.gmra.mrb[0].mxu0 %v1728
      %v1988 = vpop.f32.mrb[0].mxu0
      %v1989 = vadd.f32 0.0, %v1988
      %v1990 = vpop.f32.mrb[0].mxu0
      %1991 = vmatprep.mubr.f32.mxu0 0.0
      %1992 = vmatmul.mubr.f32.gmra.mrb[0].mxu0 %v1731
      %v1993 = vpop.f32.mrb[0].mxu0
      %v1994 = vadd.f32 0.0, %v1993
      %v1995 = vpop.f32.mrb[0].mxu0
      %1996 = vmatprep.mubr.f32.mxu0 0.0
      %1997 = vmatmul.mubr.f32.gmra.mrb[0].mxu0 %v1734
      %v1998 = vpop.f32.mrb[0].mxu0
      %v1999 = vadd.f32 0.0, %v1998
      %v2000 = vpop.f32.mrb[0].mxu0
      %2001 = vmatprep.mubr.f32.mxu0 0.0
      %2002 = vmatmul.mubr.f32.gmra.mrb[0].mxu0 %v1737
      %v2003 = vpop.f32.mrb[0].mxu0
      %v2004 = vadd.f32 0.0, %v2003
      %v2005 = vpop.f32.mrb[0].mxu0
      %2006 = vmatprep.mubr.f32.mxu0 0.0
      %2007 = vmatmul.mubr.f32.gmra.mrb[0].mxu0 %v1740
      %v2008 = vpop.f32.mrb[0].mxu0
      %v2009 = vadd.f32 0.0, %v2008
      %v2010 = vpop.f32.mrb[0].mxu0
      %2011 = vdwg.mxu0
      %v2012 = vadd.f32 %v1528, %v1809
      %v2013 = vadd.f32 %v1529, %v1814
      %v2014 = vadd.f32 %v1530, %v1819
      %v2015 = vadd.f32 %v1531, %v1824
      %v2016 = vadd.f32 %v1532, %v1829
      %v2017 = vadd.f32 %v1533, %v1834
      %v2018 = vadd.f32 %v1534, %v1839
      %v2019 = vadd.f32 %v1535, %v1844
      %v2020 = vadd.f32 %v1536, %v1849
      %v2021 = vadd.f32 %v1537, %v1854
      %v2022 = vadd.f32 %v1538, %v1859
      %v2023 = vadd.f32 %v1539, %v1864
      %v2024 = vadd.f32 %v1540, %v1869
      %v2025 = vadd.f32 %v1541, %v1874
      %v2026 = vadd.f32 %v1542, %v1879
      %v2027 = vadd.f32 %v1543, %v1884
      %v2028 = vadd.f32 %v1544, %v1889
      %v2029 = vadd.f32 %v1545, %v1894
      %v2030 = vadd.f32 %v1546, %v1899
      %v2031 = vadd.f32 %v1547, %v1904
      %v2032 = vadd.f32 %v1548, %v1909
      %v2033 = vadd.f32 %v1549, %v1914
      %v2034 = vadd.f32 %v1550, %v1919
      %v2035 = vadd.f32 %v1551, %v1924
      %v2036 = vadd.f32 %v1552, %v1929
      %v2037 = vadd.f32 %v1553, %v1934
      %v2038 = vadd.f32 %v1554, %v1939
      %v2039 = vadd.f32 %v1555, %v1944
      %v2040 = vadd.f32 %v1556, %v1949
      %v2041 = vadd.f32 %v1557, %v1954
      %v2042 = vadd.f32 %v1558, %v1959
      %v2043 = vadd.f32 %v1559, %v1964
      %v2044 = vadd.f32 %v1560, %v1969
      %v2045 = vadd.f32 %v1561, %v1974
      %v2046 = vadd.f32 %v1562, %v1979
      %v2047 = vadd.f32 %v1563, %v1984
      %v2048 = vadd.f32 %v1564, %v1989
      %v2049 = vadd.f32 %v1565, %v1994
      %v2050 = vadd.f32 %v1566, %v1999
      %v2051 = vadd.f32 %v1567, %v2004
      %v2052 = vadd.f32 %v1568, %v2009
      %v2053 = vld [vmem:[%s193 + $0x13] sm:$0xff]
      %v2054 = vld [vmem:[%s193 + $0x1b] sm:$0xff]
      %v2055 = vld [vmem:[%s193 + $0x23] sm:$0xff]
      %v2056 = vld [vmem:[%s193 + $0x2b] sm:$0xff]
      %v2057 = vld [vmem:[%s193 + $0x33] sm:$0xff]
      %v2058 = vld [vmem:[%s193 + $0x3b] sm:$0xff]
      %v2059 = vld [vmem:[%s193 + $0x43] sm:$0xff]
      %v2060 = vld [vmem:[%s193 + $0x4b] sm:$0xff]
      %v2061 = vld [vmem:[%s193 + $0x53] sm:$0xff]
      %v2062 = vld [vmem:[%s193 + $0x5b] sm:$0xff]
      %v2063 = vld [vmem:[%s193 + $0x63] sm:$0xff]
      %v2064 = vld [vmem:[%s193 + $0x6b] sm:$0xff]
      %v2065 = vld [vmem:[%s193 + $0x73] sm:$0xff]
      %v2066 = vld [vmem:[%s193 + $0x7b] sm:$0xff]
      %v2067 = vld [vmem:[%s193 + $0x83] sm:$0xff]
      %v2068 = vld [vmem:[%s193 + $0x8b] sm:$0xff]
      %v2069 = vld [vmem:[%s193 + $0x93] sm:$0xff]
      %v2070 = vld [vmem:[%s193 + $0x9b] sm:$0xff]
      %v2071 = vld [vmem:[%s193 + $0xa3] sm:$0xff]
      %v2072 = vld [vmem:[%s193 + $0xab] sm:$0xff]
      %v2073 = vld [vmem:[%s193 + $0xb3] sm:$0xff]
      %v2074 = vld [vmem:[%s193 + $0xbb] sm:$0xff]
      %v2075 = vld [vmem:[%s193 + $0xc3] sm:$0xff]
      %v2076 = vld [vmem:[%s193 + $0xcb] sm:$0xff]
      %v2077 = vld [vmem:[%s193 + $0xd3] sm:$0xff]
      %v2078 = vld [vmem:[%s193 + $0xdb] sm:$0xff]
      %v2079 = vld [vmem:[%s193 + $0xe3] sm:$0xff]
      %v2080 = vld [vmem:[%s193 + $0xeb] sm:$0xff]
      %v2081 = vld [vmem:[%s193 + $0xf3] sm:$0xff]
      %v2082 = vld [vmem:[%s193 + $0xfb] sm:$0xff]
      %v2083 = vld [vmem:[%s193 + $0x103] sm:$0xff]
      %v2084 = vld [vmem:[%s193 + $0x10b] sm:$0xff]
      %v2085 = vld [vmem:[%s193 + $0x113] sm:$0xff]
      %v2086 = vld [vmem:[%s193 + $0x11b] sm:$0xff]
      %v2087 = vld [vmem:[%s193 + $0x123] sm:$0xff]
      %v2088 = vld [vmem:[%s193 + $0x12b] sm:$0xff]
      %v2089 = vld [vmem:[%s193 + $0x133] sm:$0xff]
      %v2090 = vld [vmem:[%s193 + $0x13b] sm:$0xff]
      %v2091 = vld [vmem:[%s193 + $0x143] sm:$0xff]
      %v2092 = vld [vmem:[%s193 + $0x14b] sm:$0xff]
      %v2093 = vld [vmem:[%s193 + $0x153] sm:$0xff]
      %s2094 = scalar_lea.vmem %s1, 256
      %v2095 = vld [vmem:[%s2094] sm:$0xff]
      %v2096 = vld [vmem:[%s2094 + $0x8] sm:$0xff]
      %v2097 = vld [vmem:[%s2094 + $0x10] sm:$0xff]
      %v2098 = vld [vmem:[%s2094 + $0x18] sm:$0xff]
      %v2099 = vld [vmem:[%s2094 + $0x20] sm:$0xff]
      %v2100 = vld [vmem:[%s2094 + $0x28] sm:$0xff]
      %v2101 = vld [vmem:[%s2094 + $0x30] sm:$0xff]
      %v2102 = vld [vmem:[%s2094 + $0x38] sm:$0xff]
      %v2104 = vsel %vm298, %v2053, 0
      %v2107 = vsel %vm298, %v2054, 0
      %v2110 = vsel %vm298, %v2055, 0
      %v2113 = vsel %vm298, %v2056, 0
      %v2116 = vsel %vm298, %v2057, 0
      %v2119 = vsel %vm298, %v2058, 0
      %v2122 = vsel %vm298, %v2059, 0
      %v2125 = vsel %vm298, %v2060, 0
      %v2128 = vsel %vm298, %v2061, 0
      %v2131 = vsel %vm298, %v2062, 0
      %v2134 = vsel %vm298, %v2063, 0
      %v2137 = vsel %vm298, %v2064, 0
      %v2140 = vsel %vm298, %v2065, 0
      %v2143 = vsel %vm298, %v2066, 0
      %v2146 = vsel %vm298, %v2067, 0
      %v2149 = vsel %vm298, %v2068, 0
      %v2152 = vsel %vm298, %v2069, 0
      %v2155 = vsel %vm298, %v2070, 0
      %v2158 = vsel %vm298, %v2071, 0
      %v2161 = vsel %vm298, %v2072, 0
      %v2164 = vsel %vm298, %v2073, 0
      %v2167 = vsel %vm298, %v2074, 0
      %v2170 = vsel %vm298, %v2075, 0
      %v2173 = vsel %vm298, %v2076, 0
      %v2176 = vsel %vm298, %v2077, 0
      %v2179 = vsel %vm298, %v2078, 0
      %v2182 = vsel %vm298, %v2079, 0
      %v2185 = vsel %vm298, %v2080, 0
      %v2188 = vsel %vm298, %v2081, 0
      %v2191 = vsel %vm298, %v2082, 0
      %v2194 = vsel %vm298, %v2083, 0
      %v2197 = vsel %vm298, %v2084, 0
      %v2200 = vsel %vm298, %v2085, 0
      %v2203 = vsel %vm298, %v2086, 0
      %v2206 = vsel %vm298, %v2087, 0
      %v2209 = vsel %vm298, %v2088, 0
      %v2212 = vsel %vm298, %v2089, 0
      %v2215 = vsel %vm298, %v2090, 0
      %v2218 = vsel %vm298, %v2091, 0
      %v2221 = vsel %vm298, %v2092, 0
      %v2224 = vsel %vm298, %v2093, 0
      %2226 = vmatprep.subr.mxu0 0.0
      %2227 = vmatpush1.msra.mxu0 %v2095
      %2228 = vmatprep.subr.mxu0 0.0
      %2229 = vmatpush1.msra.mxu0 %v2096
      %2230 = vmatprep.subr.mxu0 0.0
      %2231 = vmatpush1.msra.mxu0 %v2097
      %2232 = vmatprep.subr.mxu0 0.0
      %2233 = vmatpush1.msra.mxu0 %v2098
      %2234 = vmatprep.subr.mxu0 0.0
      %2235 = vmatpush1.msra.mxu0 %v2099
      %2236 = vmatprep.subr.mxu0 0.0
      %2237 = vmatpush1.msra.mxu0 %v2100
      %2238 = vmatprep.subr.mxu0 0.0
      %2239 = vmatpush1.msra.mxu0 %v2101
      %2240 = vmatprep.subr.mxu0 0.0
      %2241 = vmatpush1.msra.mxu0 %v2102
      %2242 = vmatprep.subr.mxu0 0.0
      %2243 = vmatpush1.msra.mxu0 0.0
      %2244 = vmatprep.subr.mxu0 0.0
      %2245 = vmatpush1.msra.mxu0 0.0
      %2246 = vmatprep.subr.mxu0 0.0
      %2247 = vmatpush1.msra.mxu0 0.0
      %2248 = vmatprep.subr.mxu0 0.0
      %2249 = vmatpush1.msra.mxu0 0.0
      %2250 = vmatprep.subr.mxu0 0.0
      %2251 = vmatpush1.msra.mxu0 0.0
      %2252 = vmatprep.subr.mxu0 0.0
      %2253 = vmatpush1.msra.mxu0 0.0
      %2254 = vmatprep.subr.mxu0 0.0
      %2255 = vmatpush1.msra.mxu0 0.0
      %2256 = vmatprep.subr.mxu0 0.0
      %2257 = vmatpush1.msra.mxu0 0.0
      %2258 = vmatprep.subr.mxu0 0.0
      %2259 = vmatpush1.msra.mxu0 0.0
      %2260 = vmatprep.subr.mxu0 0.0
      %2261 = vmatpush1.msra.mxu0 0.0
      %2262 = vmatprep.subr.mxu0 0.0
      %2263 = vmatpush1.msra.mxu0 0.0
      %2264 = vmatprep.subr.mxu0 0.0
      %2265 = vmatpush1.msra.mxu0 0.0
      %2266 = vmatprep.subr.mxu0 0.0
      %2267 = vmatpush1.msra.mxu0 0.0
      %2268 = vmatprep.subr.mxu0 0.0
      %2269 = vmatpush1.msra.mxu0 0.0
      %2270 = vmatprep.subr.mxu0 0.0
      %2271 = vmatpush1.msra.mxu0 0.0
      %2272 = vmatprep.subr.mxu0 0.0
      %2273 = vmatpush1.msra.mxu0 0.0
      %2274 = vmatprep.subr.mxu0 0.0
      %2275 = vmatpush1.msra.mxu0 0.0
      %2276 = vmatprep.subr.mxu0 0.0
      %2277 = vmatpush1.msra.mxu0 0.0
      %2278 = vmatprep.subr.mxu0 0.0
      %2279 = vmatpush1.msra.mxu0 0.0
      %2280 = vmatprep.subr.mxu0 0.0
      %2281 = vmatpush1.msra.mxu0 0.0
      %2282 = vmatprep.subr.mxu0 0.0
      %2283 = vmatpush1.msra.mxu0 0.0
      %2284 = vmatprep.subr.mxu0 0.0
      %2285 = vmatpush1.msra.mxu0 0.0
      %2286 = vmatprep.subr.mxu0 0.0
      %2287 = vmatpush1.msra.mxu0 0.0
      %2288 = vmatprep.subr.mxu0 0.0
      %2289 = vmatpush1.msra.mxu0 0.0
      %2290 = vmatprep.mubr.f32.mxu0 0.0
      %2291 = vmatmul.mubr.f32.gmra.mrb[0].mxu0 %v2104
      %v2292 = vpop.f32.mrb[0].mxu0
      %v2293 = vadd.f32 0.0, %v2292
      %v2294 = vpop.f32.mrb[0].mxu0
      %2295 = vmatprep.mubr.f32.mxu0 0.0
      %2296 = vmatmul.mubr.f32.gmra.mrb[0].mxu0 %v2107
      %v2297 = vpop.f32.mrb[0].mxu0
      %v2298 = vadd.f32 0.0, %v2297
      %v2299 = vpop.f32.mrb[0].mxu0
      %2300 = vmatprep.mubr.f32.mxu0 0.0
      %2301 = vmatmul.mubr.f32.gmra.mrb[0].mxu0 %v2110
      %v2302 = vpop.f32.mrb[0].mxu0
      %v2303 = vadd.f32 0.0, %v2302
      %v2304 = vpop.f32.mrb[0].mxu0
      %2305 = vmatprep.mubr.f32.mxu0 0.0
      %2306 = vmatmul.mubr.f32.gmra.mrb[0].mxu0 %v2113
      %v2307 = vpop.f32.mrb[0].mxu0
      %v2308 = vadd.f32 0.0, %v2307
      %v2309 = vpop.f32.mrb[0].mxu0
      %2310 = vmatprep.mubr.f32.mxu0 0.0
      %2311 = vmatmul.mubr.f32.gmra.mrb[0].mxu0 %v2116
      %v2312 = vpop.f32.mrb[0].mxu0
      %v2313 = vadd.f32 0.0, %v2312
      %v2314 = vpop.f32.mrb[0].mxu0
      %2315 = vmatprep.mubr.f32.mxu0 0.0
      %2316 = vmatmul.mubr.f32.gmra.mrb[0].mxu0 %v2119
      %v2317 = vpop.f32.mrb[0].mxu0
      %v2318 = vadd.f32 0.0, %v2317
      %v2319 = vpop.f32.mrb[0].mxu0
      %2320 = vmatprep.mubr.f32.mxu0 0.0
      %2321 = vmatmul.mubr.f32.gmra.mrb[0].mxu0 %v2122
      %v2322 = vpop.f32.mrb[0].mxu0
      %v2323 = vadd.f32 0.0, %v2322
      %v2324 = vpop.f32.mrb[0].mxu0
      %2325 = vmatprep.mubr.f32.mxu0 0.0
      %2326 = vmatmul.mubr.f32.gmra.mrb[0].mxu0 %v2125
      %v2327 = vpop.f32.mrb[0].mxu0
      %v2328 = vadd.f32 0.0, %v2327
      %v2329 = vpop.f32.mrb[0].mxu0
      %2330 = vmatprep.mubr.f32.mxu0 0.0
      %2331 = vmatmul.mubr.f32.gmra.mrb[0].mxu0 %v2128
      %v2332 = vpop.f32.mrb[0].mxu0
      %v2333 = vadd.f32 0.0, %v2332
      %v2334 = vpop.f32.mrb[0].mxu0
      %2335 = vmatprep.mubr.f32.mxu0 0.0
      %2336 = vmatmul.mubr.f32.gmra.mrb[0].mxu0 %v2131
      %v2337 = vpop.f32.mrb[0].mxu0
      %v2338 = vadd.f32 0.0, %v2337
      %v2339 = vpop.f32.mrb[0].mxu0
      %2340 = vmatprep.mubr.f32.mxu0 0.0
      %2341 = vmatmul.mubr.f32.gmra.mrb[0].mxu0 %v2134
      %v2342 = vpop.f32.mrb[0].mxu0
      %v2343 = vadd.f32 0.0, %v2342
      %v2344 = vpop.f32.mrb[0].mxu0
      %2345 = vmatprep.mubr.f32.mxu0 0.0
      %2346 = vmatmul.mubr.f32.gmra.mrb[0].mxu0 %v2137
      %v2347 = vpop.f32.mrb[0].mxu0
      %v2348 = vadd.f32 0.0, %v2347
      %v2349 = vpop.f32.mrb[0].mxu0
      %2350 = vmatprep.mubr.f32.mxu0 0.0
      %2351 = vmatmul.mubr.f32.gmra.mrb[0].mxu0 %v2140
      %v2352 = vpop.f32.mrb[0].mxu0
      %v2353 = vadd.f32 0.0, %v2352
      %v2354 = vpop.f32.mrb[0].mxu0
      %2355 = vmatprep.mubr.f32.mxu0 0.0
      %2356 = vmatmul.mubr.f32.gmra.mrb[0].mxu0 %v2143
      %v2357 = vpop.f32.mrb[0].mxu0
      %v2358 = vadd.f32 0.0, %v2357
      %v2359 = vpop.f32.mrb[0].mxu0
      %2360 = vmatprep.mubr.f32.mxu0 0.0
      %2361 = vmatmul.mubr.f32.gmra.mrb[0].mxu0 %v2146
      %v2362 = vpop.f32.mrb[0].mxu0
      %v2363 = vadd.f32 0.0, %v2362
      %v2364 = vpop.f32.mrb[0].mxu0
      %2365 = vmatprep.mubr.f32.mxu0 0.0
      %2366 = vmatmul.mubr.f32.gmra.mrb[0].mxu0 %v2149
      %v2367 = vpop.f32.mrb[0].mxu0
      %v2368 = vadd.f32 0.0, %v2367
      %v2369 = vpop.f32.mrb[0].mxu0
      %2370 = vmatprep.mubr.f32.mxu0 0.0
      %2371 = vmatmul.mubr.f32.gmra.mrb[0].mxu0 %v2152
      %v2372 = vpop.f32.mrb[0].mxu0
      %v2373 = vadd.f32 0.0, %v2372
      %v2374 = vpop.f32.mrb[0].mxu0
      %2375 = vmatprep.mubr.f32.mxu0 0.0
      %2376 = vmatmul.mubr.f32.gmra.mrb[0].mxu0 %v2155
      %v2377 = vpop.f32.mrb[0].mxu0
      %v2378 = vadd.f32 0.0, %v2377
      %v2379 = vpop.f32.mrb[0].mxu0
      %2380 = vmatprep.mubr.f32.mxu0 0.0
      %2381 = vmatmul.mubr.f32.gmra.mrb[0].mxu0 %v2158
      %v2382 = vpop.f32.mrb[0].mxu0
      %v2383 = vadd.f32 0.0, %v2382
      %v2384 = vpop.f32.mrb[0].mxu0
      %2385 = vmatprep.mubr.f32.mxu0 0.0
      %2386 = vmatmul.mubr.f32.gmra.mrb[0].mxu0 %v2161
      %v2387 = vpop.f32.mrb[0].mxu0
      %v2388 = vadd.f32 0.0, %v2387
      %v2389 = vpop.f32.mrb[0].mxu0
      %2390 = vmatprep.mubr.f32.mxu0 0.0
      %2391 = vmatmul.mubr.f32.gmra.mrb[0].mxu0 %v2164
      %v2392 = vpop.f32.mrb[0].mxu0
      %v2393 = vadd.f32 0.0, %v2392
      %v2394 = vpop.f32.mrb[0].mxu0
      %2395 = vmatprep.mubr.f32.mxu0 0.0
      %2396 = vmatmul.mubr.f32.gmra.mrb[0].mxu0 %v2167
      %v2397 = vpop.f32.mrb[0].mxu0
      %v2398 = vadd.f32 0.0, %v2397
      %v2399 = vpop.f32.mrb[0].mxu0
      %2400 = vmatprep.mubr.f32.mxu0 0.0
      %2401 = vmatmul.mubr.f32.gmra.mrb[0].mxu0 %v2170
      %v2402 = vpop.f32.mrb[0].mxu0
      %v2403 = vadd.f32 0.0, %v2402
      %v2404 = vpop.f32.mrb[0].mxu0
      %2405 = vmatprep.mubr.f32.mxu0 0.0
      %2406 = vmatmul.mubr.f32.gmra.mrb[0].mxu0 %v2173
      %v2407 = vpop.f32.mrb[0].mxu0
      %v2408 = vadd.f32 0.0, %v2407
      %v2409 = vpop.f32.mrb[0].mxu0
      %2410 = vmatprep.mubr.f32.mxu0 0.0
      %2411 = vmatmul.mubr.f32.gmra.mrb[0].mxu0 %v2176
      %v2412 = vpop.f32.mrb[0].mxu0
      %v2413 = vadd.f32 0.0, %v2412
      %v2414 = vpop.f32.mrb[0].mxu0
      %2415 = vmatprep.mubr.f32.mxu0 0.0
      %2416 = vmatmul.mubr.f32.gmra.mrb[0].mxu0 %v2179
      %v2417 = vpop.f32.mrb[0].mxu0
      %v2418 = vadd.f32 0.0, %v2417
      %v2419 = vpop.f32.mrb[0].mxu0
      %2420 = vmatprep.mubr.f32.mxu0 0.0
      %2421 = vmatmul.mubr.f32.gmra.mrb[0].mxu0 %v2182
      %v2422 = vpop.f32.mrb[0].mxu0
      %v2423 = vadd.f32 0.0, %v2422
      %v2424 = vpop.f32.mrb[0].mxu0
      %2425 = vmatprep.mubr.f32.mxu0 0.0
      %2426 = vmatmul.mubr.f32.gmra.mrb[0].mxu0 %v2185
      %v2427 = vpop.f32.mrb[0].mxu0
      %v2428 = vadd.f32 0.0, %v2427
      %v2429 = vpop.f32.mrb[0].mxu0
      %2430 = vmatprep.mubr.f32.mxu0 0.0
      %2431 = vmatmul.mubr.f32.gmra.mrb[0].mxu0 %v2188
      %v2432 = vpop.f32.mrb[0].mxu0
      %v2433 = vadd.f32 0.0, %v2432
      %v2434 = vpop.f32.mrb[0].mxu0
      %2435 = vmatprep.mubr.f32.mxu0 0.0
      %2436 = vmatmul.mubr.f32.gmra.mrb[0].mxu0 %v2191
      %v2437 = vpop.f32.mrb[0].mxu0
      %v2438 = vadd.f32 0.0, %v2437
      %v2439 = vpop.f32.mrb[0].mxu0
      %2440 = vmatprep.mubr.f32.mxu0 0.0
      %2441 = vmatmul.mubr.f32.gmra.mrb[0].mxu0 %v2194
      %v2442 = vpop.f32.mrb[0].mxu0
      %v2443 = vadd.f32 0.0, %v2442
      %v2444 = vpop.f32.mrb[0].mxu0
      %2445 = vmatprep.mubr.f32.mxu0 0.0
      %2446 = vmatmul.mubr.f32.gmra.mrb[0].mxu0 %v2197
      %v2447 = vpop.f32.mrb[0].mxu0
      %v2448 = vadd.f32 0.0, %v2447
      %v2449 = vpop.f32.mrb[0].mxu0
      %2450 = vmatprep.mubr.f32.mxu0 0.0
      %2451 = vmatmul.mubr.f32.gmra.mrb[0].mxu0 %v2200
      %v2452 = vpop.f32.mrb[0].mxu0
      %v2453 = vadd.f32 0.0, %v2452
      %v2454 = vpop.f32.mrb[0].mxu0
      %2455 = vmatprep.mubr.f32.mxu0 0.0
      %2456 = vmatmul.mubr.f32.gmra.mrb[0].mxu0 %v2203
      %v2457 = vpop.f32.mrb[0].mxu0
      %v2458 = vadd.f32 0.0, %v2457
      %v2459 = vpop.f32.mrb[0].mxu0
      %2460 = vmatprep.mubr.f32.mxu0 0.0
      %2461 = vmatmul.mubr.f32.gmra.mrb[0].mxu0 %v2206
      %v2462 = vpop.f32.mrb[0].mxu0
      %v2463 = vadd.f32 0.0, %v2462
      %v2464 = vpop.f32.mrb[0].mxu0
      %2465 = vmatprep.mubr.f32.mxu0 0.0
      %2466 = vmatmul.mubr.f32.gmra.mrb[0].mxu0 %v2209
      %v2467 = vpop.f32.mrb[0].mxu0
      %v2468 = vadd.f32 0.0, %v2467
      %v2469 = vpop.f32.mrb[0].mxu0
      %2470 = vmatprep.mubr.f32.mxu0 0.0
      %2471 = vmatmul.mubr.f32.gmra.mrb[0].mxu0 %v2212
      %v2472 = vpop.f32.mrb[0].mxu0
      %v2473 = vadd.f32 0.0, %v2472
      %v2474 = vpop.f32.mrb[0].mxu0
      %2475 = vmatprep.mubr.f32.mxu0 0.0
      %2476 = vmatmul.mubr.f32.gmra.mrb[0].mxu0 %v2215
      %v2477 = vpop.f32.mrb[0].mxu0
      %v2478 = vadd.f32 0.0, %v2477
      %v2479 = vpop.f32.mrb[0].mxu0
      %2480 = vmatprep.mubr.f32.mxu0 0.0
      %2481 = vmatmul.mubr.f32.gmra.mrb[0].mxu0 %v2218
      %v2482 = vpop.f32.mrb[0].mxu0
      %v2483 = vadd.f32 0.0, %v2482
      %v2484 = vpop.f32.mrb[0].mxu0
      %2485 = vmatprep.mubr.f32.mxu0 0.0
      %2486 = vmatmul.mubr.f32.gmra.mrb[0].mxu0 %v2221
      %v2487 = vpop.f32.mrb[0].mxu0
      %v2488 = vadd.f32 0.0, %v2487
      %v2489 = vpop.f32.mrb[0].mxu0
      %2490 = vmatprep.mubr.f32.mxu0 0.0
      %2491 = vmatmul.mubr.f32.gmra.mrb[0].mxu0 %v2224
      %v2492 = vpop.f32.mrb[0].mxu0
      %v2493 = vadd.f32 0.0, %v2492
      %v2494 = vpop.f32.mrb[0].mxu0
      %2495 = vdwg.mxu0
      %v2496 = vadd.f32 %v2012, %v2293
      %v2497 = vadd.f32 %v2013, %v2298
      %v2498 = vadd.f32 %v2014, %v2303
      %v2499 = vadd.f32 %v2015, %v2308
      %v2500 = vadd.f32 %v2016, %v2313
      %v2501 = vadd.f32 %v2017, %v2318
      %v2502 = vadd.f32 %v2018, %v2323
      %v2503 = vadd.f32 %v2019, %v2328
      %v2504 = vadd.f32 %v2020, %v2333
      %v2505 = vadd.f32 %v2021, %v2338
      %v2506 = vadd.f32 %v2022, %v2343
      %v2507 = vadd.f32 %v2023, %v2348
      %v2508 = vadd.f32 %v2024, %v2353
      %v2509 = vadd.f32 %v2025, %v2358
      %v2510 = vadd.f32 %v2026, %v2363
      %v2511 = vadd.f32 %v2027, %v2368
      %v2512 = vadd.f32 %v2028, %v2373
      %v2513 = vadd.f32 %v2029, %v2378
      %v2514 = vadd.f32 %v2030, %v2383
      %v2515 = vadd.f32 %v2031, %v2388
      %v2516 = vadd.f32 %v2032, %v2393
      %v2517 = vadd.f32 %v2033, %v2398
      %v2518 = vadd.f32 %v2034, %v2403
      %v2519 = vadd.f32 %v2035, %v2408
      %v2520 = vadd.f32 %v2036, %v2413
      %v2521 = vadd.f32 %v2037, %v2418
      %v2522 = vadd.f32 %v2038, %v2423
      %v2523 = vadd.f32 %v2039, %v2428
      %v2524 = vadd.f32 %v2040, %v2433
      %v2525 = vadd.f32 %v2041, %v2438
      %v2526 = vadd.f32 %v2042, %v2443
      %v2527 = vadd.f32 %v2043, %v2448
      %v2528 = vadd.f32 %v2044, %v2453
      %v2529 = vadd.f32 %v2045, %v2458
      %v2530 = vadd.f32 %v2046, %v2463
      %v2531 = vadd.f32 %v2047, %v2468
      %v2532 = vadd.f32 %v2048, %v2473
      %v2533 = vadd.f32 %v2049, %v2478
      %v2534 = vadd.f32 %v2050, %v2483
      %v2535 = vadd.f32 %v2051, %v2488
      %v2536 = vadd.f32 %v2052, %v2493
      %v2537 = vld [vmem:[%s193 + $0x14] sm:$0xff]
      %v2538 = vld [vmem:[%s193 + $0x1c] sm:$0xff]
      %v2539 = vld [vmem:[%s193 + $0x24] sm:$0xff]
      %v2540 = vld [vmem:[%s193 + $0x2c] sm:$0xff]
      %v2541 = vld [vmem:[%s193 + $0x34] sm:$0xff]
      %v2542 = vld [vmem:[%s193 + $0x3c] sm:$0xff]
      %v2543 = vld [vmem:[%s193 + $0x44] sm:$0xff]
      %v2544 = vld [vmem:[%s193 + $0x4c] sm:$0xff]
      %v2545 = vld [vmem:[%s193 + $0x54] sm:$0xff]
      %v2546 = vld [vmem:[%s193 + $0x5c] sm:$0xff]
      %v2547 = vld [vmem:[%s193 + $0x64] sm:$0xff]
      %v2548 = vld [vmem:[%s193 + $0x6c] sm:$0xff]
      %v2549 = vld [vmem:[%s193 + $0x74] sm:$0xff]
      %v2550 = vld [vmem:[%s193 + $0x7c] sm:$0xff]
      %v2551 = vld [vmem:[%s193 + $0x84] sm:$0xff]
      %v2552 = vld [vmem:[%s193 + $0x8c] sm:$0xff]
      %v2553 = vld [vmem:[%s193 + $0x94] sm:$0xff]
      %v2554 = vld [vmem:[%s193 + $0x9c] sm:$0xff]
      %v2555 = vld [vmem:[%s193 + $0xa4] sm:$0xff]
      %v2556 = vld [vmem:[%s193 + $0xac] sm:$0xff]
      %v2557 = vld [vmem:[%s193 + $0xb4] sm:$0xff]
      %v2558 = vld [vmem:[%s193 + $0xbc] sm:$0xff]
      %v2559 = vld [vmem:[%s193 + $0xc4] sm:$0xff]
      %v2560 = vld [vmem:[%s193 + $0xcc] sm:$0xff]
      %v2561 = vld [vmem:[%s193 + $0xd4] sm:$0xff]
      %v2562 = vld [vmem:[%s193 + $0xdc] sm:$0xff]
      %v2563 = vld [vmem:[%s193 + $0xe4] sm:$0xff]
      %v2564 = vld [vmem:[%s193 + $0xec] sm:$0xff]
      %v2565 = vld [vmem:[%s193 + $0xf4] sm:$0xff]
      %v2566 = vld [vmem:[%s193 + $0xfc] sm:$0xff]
      %v2567 = vld [vmem:[%s193 + $0x104] sm:$0xff]
      %v2568 = vld [vmem:[%s193 + $0x10c] sm:$0xff]
      %v2569 = vld [vmem:[%s193 + $0x114] sm:$0xff]
      %v2570 = vld [vmem:[%s193 + $0x11c] sm:$0xff]
      %v2571 = vld [vmem:[%s193 + $0x124] sm:$0xff]
      %v2572 = vld [vmem:[%s193 + $0x12c] sm:$0xff]
      %v2573 = vld [vmem:[%s193 + $0x134] sm:$0xff]
      %v2574 = vld [vmem:[%s193 + $0x13c] sm:$0xff]
      %v2575 = vld [vmem:[%s193 + $0x144] sm:$0xff]
      %v2576 = vld [vmem:[%s193 + $0x14c] sm:$0xff]
      %v2577 = vld [vmem:[%s193 + $0x154] sm:$0xff]
      %s2578 = scalar_lea.vmem %s1, 320
      %v2579 = vld [vmem:[%s2578] sm:$0xff]
      %v2580 = vld [vmem:[%s2578 + $0x8] sm:$0xff]
      %v2581 = vld [vmem:[%s2578 + $0x10] sm:$0xff]
      %v2582 = vld [vmem:[%s2578 + $0x18] sm:$0xff]
      %v2583 = vld [vmem:[%s2578 + $0x20] sm:$0xff]
      %v2584 = vld [vmem:[%s2578 + $0x28] sm:$0xff]
      %v2585 = vld [vmem:[%s2578 + $0x30] sm:$0xff]
      %v2586 = vld [vmem:[%s2578 + $0x38] sm:$0xff]
      %v2588 = vsel %vm298, %v2537, 0
      %v2591 = vsel %vm298, %v2538, 0
      %v2594 = vsel %vm298, %v2539, 0
      %v2597 = vsel %vm298, %v2540, 0
      %v2600 = vsel %vm298, %v2541, 0
      %v2603 = vsel %vm298, %v2542, 0
      %v2606 = vsel %vm298, %v2543, 0
      %v2609 = vsel %vm298, %v2544, 0
      %v2612 = vsel %vm298, %v2545, 0
      %v2615 = vsel %vm298, %v2546, 0
      %v2618 = vsel %vm298, %v2547, 0
      %v2621 = vsel %vm298, %v2548, 0
      %v2624 = vsel %vm298, %v2549, 0
      %v2627 = vsel %vm298, %v2550, 0
      %v2630 = vsel %vm298, %v2551, 0
      %v2633 = vsel %vm298, %v2552, 0
      %v2636 = vsel %vm298, %v2553, 0
      %v2639 = vsel %vm298, %v2554, 0
      %v2642 = vsel %vm298, %v2555, 0
      %v2645 = vsel %vm298, %v2556, 0
      %v2648 = vsel %vm298, %v2557, 0
      %v2651 = vsel %vm298, %v2558, 0
      %v2654 = vsel %vm298, %v2559, 0
      %v2657 = vsel %vm298, %v2560, 0
      %v2660 = vsel %vm298, %v2561, 0
      %v2663 = vsel %vm298, %v2562, 0
      %v2666 = vsel %vm298, %v2563, 0
      %v2669 = vsel %vm298, %v2564, 0
      %v2672 = vsel %vm298, %v2565, 0
      %v2675 = vsel %vm298, %v2566, 0
      %v2678 = vsel %vm298, %v2567, 0
      %v2681 = vsel %vm298, %v2568, 0
      %v2684 = vsel %vm298, %v2569, 0
      %v2687 = vsel %vm298, %v2570, 0
      %v2690 = vsel %vm298, %v2571, 0
      %v2693 = vsel %vm298, %v2572, 0
      %v2696 = vsel %vm298, %v2573, 0
      %v2699 = vsel %vm298, %v2574, 0
      %v2702 = vsel %vm298, %v2575, 0
      %v2705 = vsel %vm298, %v2576, 0
      %v2708 = vsel %vm298, %v2577, 0
      %2710 = vmatprep.subr.mxu0 0.0
      %2711 = vmatpush1.msra.mxu0 %v2579
      %2712 = vmatprep.subr.mxu0 0.0
      %2713 = vmatpush1.msra.mxu0 %v2580
      %2714 = vmatprep.subr.mxu0 0.0
      %2715 = vmatpush1.msra.mxu0 %v2581
      %2716 = vmatprep.subr.mxu0 0.0
      %2717 = vmatpush1.msra.mxu0 %v2582
      %2718 = vmatprep.subr.mxu0 0.0
      %2719 = vmatpush1.msra.mxu0 %v2583
      %2720 = vmatprep.subr.mxu0 0.0
      %2721 = vmatpush1.msra.mxu0 %v2584
      %2722 = vmatprep.subr.mxu0 0.0
      %2723 = vmatpush1.msra.mxu0 %v2585
      %2724 = vmatprep.subr.mxu0 0.0
      %2725 = vmatpush1.msra.mxu0 %v2586
      %2726 = vmatprep.subr.mxu0 0.0
      %2727 = vmatpush1.msra.mxu0 0.0
      %2728 = vmatprep.subr.mxu0 0.0
      %2729 = vmatpush1.msra.mxu0 0.0
      %2730 = vmatprep.subr.mxu0 0.0
      %2731 = vmatpush1.msra.mxu0 0.0
      %2732 = vmatprep.subr.mxu0 0.0
      %2733 = vmatpush1.msra.mxu0 0.0
      %2734 = vmatprep.subr.mxu0 0.0
      %2735 = vmatpush1.msra.mxu0 0.0
      %2736 = vmatprep.subr.mxu0 0.0
      %2737 = vmatpush1.msra.mxu0 0.0
      %2738 = vmatprep.subr.mxu0 0.0
      %2739 = vmatpush1.msra.mxu0 0.0
      %2740 = vmatprep.subr.mxu0 0.0
      %2741 = vmatpush1.msra.mxu0 0.0
      %2742 = vmatprep.subr.mxu0 0.0
      %2743 = vmatpush1.msra.mxu0 0.0
      %2744 = vmatprep.subr.mxu0 0.0
      %2745 = vmatpush1.msra.mxu0 0.0
      %2746 = vmatprep.subr.mxu0 0.0
      %2747 = vmatpush1.msra.mxu0 0.0
      %2748 = vmatprep.subr.mxu0 0.0
      %2749 = vmatpush1.msra.mxu0 0.0
      %2750 = vmatprep.subr.mxu0 0.0
      %2751 = vmatpush1.msra.mxu0 0.0
      %2752 = vmatprep.subr.mxu0 0.0
      %2753 = vmatpush1.msra.mxu0 0.0
      %2754 = vmatprep.subr.mxu0 0.0
      %2755 = vmatpush1.msra.mxu0 0.0
      %2756 = vmatprep.subr.mxu0 0.0
      %2757 = vmatpush1.msra.mxu0 0.0
      %2758 = vmatprep.subr.mxu0 0.0
      %2759 = vmatpush1.msra.mxu0 0.0
      %2760 = vmatprep.subr.mxu0 0.0
      %2761 = vmatpush1.msra.mxu0 0.0
      %2762 = vmatprep.subr.mxu0 0.0
      %2763 = vmatpush1.msra.mxu0 0.0
      %2764 = vmatprep.subr.mxu0 0.0
      %2765 = vmatpush1.msra.mxu0 0.0
      %2766 = vmatprep.subr.mxu0 0.0
      %2767 = vmatpush1.msra.mxu0 0.0
      %2768 = vmatprep.subr.mxu0 0.0
      %2769 = vmatpush1.msra.mxu0 0.0
      %2770 = vmatprep.subr.mxu0 0.0
      %2771 = vmatpush1.msra.mxu0 0.0
      %2772 = vmatprep.subr.mxu0 0.0
      %2773 = vmatpush1.msra.mxu0 0.0
      %2774 = vmatprep.mubr.f32.mxu0 0.0
      %2775 = vmatmul.mubr.f32.gmra.mrb[0].mxu0 %v2588
      %v2776 = vpop.f32.mrb[0].mxu0
      %v2777 = vadd.f32 0.0, %v2776
      %v2778 = vpop.f32.mrb[0].mxu0
      %2779 = vmatprep.mubr.f32.mxu0 0.0
      %2780 = vmatmul.mubr.f32.gmra.mrb[0].mxu0 %v2591
      %v2781 = vpop.f32.mrb[0].mxu0
      %v2782 = vadd.f32 0.0, %v2781
      %v2783 = vpop.f32.mrb[0].mxu0
      %2784 = vmatprep.mubr.f32.mxu0 0.0
      %2785 = vmatmul.mubr.f32.gmra.mrb[0].mxu0 %v2594
      %v2786 = vpop.f32.mrb[0].mxu0
      %v2787 = vadd.f32 0.0, %v2786
      %v2788 = vpop.f32.mrb[0].mxu0
      %2789 = vmatprep.mubr.f32.mxu0 0.0
      %2790 = vmatmul.mubr.f32.gmra.mrb[0].mxu0 %v2597
      %v2791 = vpop.f32.mrb[0].mxu0
      %v2792 = vadd.f32 0.0, %v2791
      %v2793 = vpop.f32.mrb[0].mxu0
      %2794 = vmatprep.mubr.f32.mxu0 0.0
      %2795 = vmatmul.mubr.f32.gmra.mrb[0].mxu0 %v2600
      %v2796 = vpop.f32.mrb[0].mxu0
      %v2797 = vadd.f32 0.0, %v2796
      %v2798 = vpop.f32.mrb[0].mxu0
      %2799 = vmatprep.mubr.f32.mxu0 0.0
      %2800 = vmatmul.mubr.f32.gmra.mrb[0].mxu0 %v2603
      %v2801 = vpop.f32.mrb[0].mxu0
      %v2802 = vadd.f32 0.0, %v2801
      %v2803 = vpop.f32.mrb[0].mxu0
      %2804 = vmatprep.mubr.f32.mxu0 0.0
      %2805 = vmatmul.mubr.f32.gmra.mrb[0].mxu0 %v2606
      %v2806 = vpop.f32.mrb[0].mxu0
      %v2807 = vadd.f32 0.0, %v2806
      %v2808 = vpop.f32.mrb[0].mxu0
      %2809 = vmatprep.mubr.f32.mxu0 0.0
      %2810 = vmatmul.mubr.f32.gmra.mrb[0].mxu0 %v2609
      %v2811 = vpop.f32.mrb[0].mxu0
      %v2812 = vadd.f32 0.0, %v2811
      %v2813 = vpop.f32.mrb[0].mxu0
      %2814 = vmatprep.mubr.f32.mxu0 0.0
      %2815 = vmatmul.mubr.f32.gmra.mrb[0].mxu0 %v2612
      %v2816 = vpop.f32.mrb[0].mxu0
      %v2817 = vadd.f32 0.0, %v2816
      %v2818 = vpop.f32.mrb[0].mxu0
      %2819 = vmatprep.mubr.f32.mxu0 0.0
      %2820 = vmatmul.mubr.f32.gmra.mrb[0].mxu0 %v2615
      %v2821 = vpop.f32.mrb[0].mxu0
      %v2822 = vadd.f32 0.0, %v2821
      %v2823 = vpop.f32.mrb[0].mxu0
      %2824 = vmatprep.mubr.f32.mxu0 0.0
      %2825 = vmatmul.mubr.f32.gmra.mrb[0].mxu0 %v2618
      %v2826 = vpop.f32.mrb[0].mxu0
      %v2827 = vadd.f32 0.0, %v2826
      %v2828 = vpop.f32.mrb[0].mxu0
      %2829 = vmatprep.mubr.f32.mxu0 0.0
      %2830 = vmatmul.mubr.f32.gmra.mrb[0].mxu0 %v2621
      %v2831 = vpop.f32.mrb[0].mxu0
      %v2832 = vadd.f32 0.0, %v2831
      %v2833 = vpop.f32.mrb[0].mxu0
      %2834 = vmatprep.mubr.f32.mxu0 0.0
      %2835 = vmatmul.mubr.f32.gmra.mrb[0].mxu0 %v2624
      %v2836 = vpop.f32.mrb[0].mxu0
      %v2837 = vadd.f32 0.0, %v2836
      %v2838 = vpop.f32.mrb[0].mxu0
      %2839 = vmatprep.mubr.f32.mxu0 0.0
      %2840 = vmatmul.mubr.f32.gmra.mrb[0].mxu0 %v2627
      %v2841 = vpop.f32.mrb[0].mxu0
      %v2842 = vadd.f32 0.0, %v2841
      %v2843 = vpop.f32.mrb[0].mxu0
      %2844 = vmatprep.mubr.f32.mxu0 0.0
      %2845 = vmatmul.mubr.f32.gmra.mrb[0].mxu0 %v2630
      %v2846 = vpop.f32.mrb[0].mxu0
      %v2847 = vadd.f32 0.0, %v2846
      %v2848 = vpop.f32.mrb[0].mxu0
      %2849 = vmatprep.mubr.f32.mxu0 0.0
      %2850 = vmatmul.mubr.f32.gmra.mrb[0].mxu0 %v2633
      %v2851 = vpop.f32.mrb[0].mxu0
      %v2852 = vadd.f32 0.0, %v2851
      %v2853 = vpop.f32.mrb[0].mxu0
      %2854 = vmatprep.mubr.f32.mxu0 0.0
      %2855 = vmatmul.mubr.f32.gmra.mrb[0].mxu0 %v2636
      %v2856 = vpop.f32.mrb[0].mxu0
      %v2857 = vadd.f32 0.0, %v2856
      %v2858 = vpop.f32.mrb[0].mxu0
      %2859 = vmatprep.mubr.f32.mxu0 0.0
      %2860 = vmatmul.mubr.f32.gmra.mrb[0].mxu0 %v2639
      %v2861 = vpop.f32.mrb[0].mxu0
      %v2862 = vadd.f32 0.0, %v2861
      %v2863 = vpop.f32.mrb[0].mxu0
      %2864 = vmatprep.mubr.f32.mxu0 0.0
      %2865 = vmatmul.mubr.f32.gmra.mrb[0].mxu0 %v2642
      %v2866 = vpop.f32.mrb[0].mxu0
      %v2867 = vadd.f32 0.0, %v2866
      %v2868 = vpop.f32.mrb[0].mxu0
      %2869 = vmatprep.mubr.f32.mxu0 0.0
      %2870 = vmatmul.mubr.f32.gmra.mrb[0].mxu0 %v2645
      %v2871 = vpop.f32.mrb[0].mxu0
      %v2872 = vadd.f32 0.0, %v2871
      %v2873 = vpop.f32.mrb[0].mxu0
      %2874 = vmatprep.mubr.f32.mxu0 0.0
      %2875 = vmatmul.mubr.f32.gmra.mrb[0].mxu0 %v2648
      %v2876 = vpop.f32.mrb[0].mxu0
      %v2877 = vadd.f32 0.0, %v2876
      %v2878 = vpop.f32.mrb[0].mxu0
      %2879 = vmatprep.mubr.f32.mxu0 0.0
      %2880 = vmatmul.mubr.f32.gmra.mrb[0].mxu0 %v2651
      %v2881 = vpop.f32.mrb[0].mxu0
      %v2882 = vadd.f32 0.0, %v2881
      %v2883 = vpop.f32.mrb[0].mxu0
      %2884 = vmatprep.mubr.f32.mxu0 0.0
      %2885 = vmatmul.mubr.f32.gmra.mrb[0].mxu0 %v2654
      %v2886 = vpop.f32.mrb[0].mxu0
      %v2887 = vadd.f32 0.0, %v2886
      %v2888 = vpop.f32.mrb[0].mxu0
      %2889 = vmatprep.mubr.f32.mxu0 0.0
      %2890 = vmatmul.mubr.f32.gmra.mrb[0].mxu0 %v2657
      %v2891 = vpop.f32.mrb[0].mxu0
      %v2892 = vadd.f32 0.0, %v2891
      %v2893 = vpop.f32.mrb[0].mxu0
      %2894 = vmatprep.mubr.f32.mxu0 0.0
      %2895 = vmatmul.mubr.f32.gmra.mrb[0].mxu0 %v2660
      %v2896 = vpop.f32.mrb[0].mxu0
      %v2897 = vadd.f32 0.0, %v2896
      %v2898 = vpop.f32.mrb[0].mxu0
      %2899 = vmatprep.mubr.f32.mxu0 0.0
      %2900 = vmatmul.mubr.f32.gmra.mrb[0].mxu0 %v2663
      %v2901 = vpop.f32.mrb[0].mxu0
      %v2902 = vadd.f32 0.0, %v2901
      %v2903 = vpop.f32.mrb[0].mxu0
      %2904 = vmatprep.mubr.f32.mxu0 0.0
      %2905 = vmatmul.mubr.f32.gmra.mrb[0].mxu0 %v2666
      %v2906 = vpop.f32.mrb[0].mxu0
      %v2907 = vadd.f32 0.0, %v2906
      %v2908 = vpop.f32.mrb[0].mxu0
      %2909 = vmatprep.mubr.f32.mxu0 0.0
      %2910 = vmatmul.mubr.f32.gmra.mrb[0].mxu0 %v2669
      %v2911 = vpop.f32.mrb[0].mxu0
      %v2912 = vadd.f32 0.0, %v2911
      %v2913 = vpop.f32.mrb[0].mxu0
      %2914 = vmatprep.mubr.f32.mxu0 0.0
      %2915 = vmatmul.mubr.f32.gmra.mrb[0].mxu0 %v2672
      %v2916 = vpop.f32.mrb[0].mxu0
      %v2917 = vadd.f32 0.0, %v2916
      %v2918 = vpop.f32.mrb[0].mxu0
      %2919 = vmatprep.mubr.f32.mxu0 0.0
      %2920 = vmatmul.mubr.f32.gmra.mrb[0].mxu0 %v2675
      %v2921 = vpop.f32.mrb[0].mxu0
      %v2922 = vadd.f32 0.0, %v2921
      %v2923 = vpop.f32.mrb[0].mxu0
      %2924 = vmatprep.mubr.f32.mxu0 0.0
      %2925 = vmatmul.mubr.f32.gmra.mrb[0].mxu0 %v2678
      %v2926 = vpop.f32.mrb[0].mxu0
      %v2927 = vadd.f32 0.0, %v2926
      %v2928 = vpop.f32.mrb[0].mxu0
      %2929 = vmatprep.mubr.f32.mxu0 0.0
      %2930 = vmatmul.mubr.f32.gmra.mrb[0].mxu0 %v2681
      %v2931 = vpop.f32.mrb[0].mxu0
      %v2932 = vadd.f32 0.0, %v2931
      %v2933 = vpop.f32.mrb[0].mxu0
      %2934 = vmatprep.mubr.f32.mxu0 0.0
      %2935 = vmatmul.mubr.f32.gmra.mrb[0].mxu0 %v2684
      %v2936 = vpop.f32.mrb[0].mxu0
      %v2937 = vadd.f32 0.0, %v2936
      %v2938 = vpop.f32.mrb[0].mxu0
      %2939 = vmatprep.mubr.f32.mxu0 0.0
      %2940 = vmatmul.mubr.f32.gmra.mrb[0].mxu0 %v2687
      %v2941 = vpop.f32.mrb[0].mxu0
      %v2942 = vadd.f32 0.0, %v2941
      %v2943 = vpop.f32.mrb[0].mxu0
      %2944 = vmatprep.mubr.f32.mxu0 0.0
      %2945 = vmatmul.mubr.f32.gmra.mrb[0].mxu0 %v2690
      %v2946 = vpop.f32.mrb[0].mxu0
      %v2947 = vadd.f32 0.0, %v2946
      %v2948 = vpop.f32.mrb[0].mxu0
      %2949 = vmatprep.mubr.f32.mxu0 0.0
      %2950 = vmatmul.mubr.f32.gmra.mrb[0].mxu0 %v2693
      %v2951 = vpop.f32.mrb[0].mxu0
      %v2952 = vadd.f32 0.0, %v2951
      %v2953 = vpop.f32.mrb[0].mxu0
      %2954 = vmatprep.mubr.f32.mxu0 0.0
      %2955 = vmatmul.mubr.f32.gmra.mrb[0].mxu0 %v2696
      %v2956 = vpop.f32.mrb[0].mxu0
      %v2957 = vadd.f32 0.0, %v2956
      %v2958 = vpop.f32.mrb[0].mxu0
      %2959 = vmatprep.mubr.f32.mxu0 0.0
      %2960 = vmatmul.mubr.f32.gmra.mrb[0].mxu0 %v2699
      %v2961 = vpop.f32.mrb[0].mxu0
      %v2962 = vadd.f32 0.0, %v2961
      %v2963 = vpop.f32.mrb[0].mxu0
      %2964 = vmatprep.mubr.f32.mxu0 0.0
      %2965 = vmatmul.mubr.f32.gmra.mrb[0].mxu0 %v2702
      %v2966 = vpop.f32.mrb[0].mxu0
      %v2967 = vadd.f32 0.0, %v2966
      %v2968 = vpop.f32.mrb[0].mxu0
      %2969 = vmatprep.mubr.f32.mxu0 0.0
      %2970 = vmatmul.mubr.f32.gmra.mrb[0].mxu0 %v2705
      %v2971 = vpop.f32.mrb[0].mxu0
      %v2972 = vadd.f32 0.0, %v2971
      %v2973 = vpop.f32.mrb[0].mxu0
      %2974 = vmatprep.mubr.f32.mxu0 0.0
      %2975 = vmatmul.mubr.f32.gmra.mrb[0].mxu0 %v2708
      %v2976 = vpop.f32.mrb[0].mxu0
      %v2977 = vadd.f32 0.0, %v2976
      %v2978 = vpop.f32.mrb[0].mxu0
      %2979 = vdwg.mxu0
      %v2980 = vadd.f32 %v2496, %v2777
      %v2981 = vadd.f32 %v2497, %v2782
      %v2982 = vadd.f32 %v2498, %v2787
      %v2983 = vadd.f32 %v2499, %v2792
      %v2984 = vadd.f32 %v2500, %v2797
      %v2985 = vadd.f32 %v2501, %v2802
      %v2986 = vadd.f32 %v2502, %v2807
      %v2987 = vadd.f32 %v2503, %v2812
      %v2988 = vadd.f32 %v2504, %v2817
      %v2989 = vadd.f32 %v2505, %v2822
      %v2990 = vadd.f32 %v2506, %v2827
      %v2991 = vadd.f32 %v2507, %v2832
      %v2992 = vadd.f32 %v2508, %v2837
      %v2993 = vadd.f32 %v2509, %v2842
      %v2994 = vadd.f32 %v2510, %v2847
      %v2995 = vadd.f32 %v2511, %v2852
      %v2996 = vadd.f32 %v2512, %v2857
      %v2997 = vadd.f32 %v2513, %v2862
      %v2998 = vadd.f32 %v2514, %v2867
      %v2999 = vadd.f32 %v2515, %v2872
      %v3000 = vadd.f32 %v2516, %v2877
      %v3001 = vadd.f32 %v2517, %v2882
      %v3002 = vadd.f32 %v2518, %v2887
      %v3003 = vadd.f32 %v2519, %v2892
      %v3004 = vadd.f32 %v2520, %v2897
      %v3005 = vadd.f32 %v2521, %v2902
      %v3006 = vadd.f32 %v2522, %v2907
      %v3007 = vadd.f32 %v2523, %v2912
      %v3008 = vadd.f32 %v2524, %v2917
      %v3009 = vadd.f32 %v2525, %v2922
      %v3010 = vadd.f32 %v2526, %v2927
      %v3011 = vadd.f32 %v2527, %v2932
      %v3012 = vadd.f32 %v2528, %v2937
      %v3013 = vadd.f32 %v2529, %v2942
      %v3014 = vadd.f32 %v2530, %v2947
      %v3015 = vadd.f32 %v2531, %v2952
      %v3016 = vadd.f32 %v2532, %v2957
      %v3017 = vadd.f32 %v2533, %v2962
      %v3018 = vadd.f32 %v2534, %v2967
      %v3019 = vadd.f32 %v2535, %v2972
      %v3020 = vadd.f32 %v2536, %v2977
      %v3021 = vld [vmem:[%s193 + $0x24] sm:$0xff]
      %v3022 = vld [vmem:[%s193 + $0x2c] sm:$0xff]
      %v3023 = vld [vmem:[%s193 + $0x34] sm:$0xff]
      %v3024 = vld [vmem:[%s193 + $0x3c] sm:$0xff]
      %v3025 = vld [vmem:[%s193 + $0x44] sm:$0xff]
      %v3026 = vld [vmem:[%s193 + $0x4c] sm:$0xff]
      %v3027 = vld [vmem:[%s193 + $0x54] sm:$0xff]
      %v3028 = vld [vmem:[%s193 + $0x5c] sm:$0xff]
      %v3029 = vld [vmem:[%s193 + $0x64] sm:$0xff]
      %v3030 = vld [vmem:[%s193 + $0x6c] sm:$0xff]
      %v3031 = vld [vmem:[%s193 + $0x74] sm:$0xff]
      %v3032 = vld [vmem:[%s193 + $0x7c] sm:$0xff]
      %v3033 = vld [vmem:[%s193 + $0x84] sm:$0xff]
      %v3034 = vld [vmem:[%s193 + $0x8c] sm:$0xff]
      %v3035 = vld [vmem:[%s193 + $0x94] sm:$0xff]
      %v3036 = vld [vmem:[%s193 + $0x9c] sm:$0xff]
      %v3037 = vld [vmem:[%s193 + $0xa4] sm:$0xff]
      %v3038 = vld [vmem:[%s193 + $0xac] sm:$0xff]
      %v3039 = vld [vmem:[%s193 + $0xb4] sm:$0xff]
      %v3040 = vld [vmem:[%s193 + $0xbc] sm:$0xff]
      %v3041 = vld [vmem:[%s193 + $0xc4] sm:$0xff]
      %v3042 = vld [vmem:[%s193 + $0xcc] sm:$0xff]
      %v3043 = vld [vmem:[%s193 + $0xd4] sm:$0xff]
      %v3044 = vld [vmem:[%s193 + $0xdc] sm:$0xff]
      %v3045 = vld [vmem:[%s193 + $0xe4] sm:$0xff]
      %v3046 = vld [vmem:[%s193 + $0xec] sm:$0xff]
      %v3047 = vld [vmem:[%s193 + $0xf4] sm:$0xff]
      %v3048 = vld [vmem:[%s193 + $0xfc] sm:$0xff]
      %v3049 = vld [vmem:[%s193 + $0x104] sm:$0xff]
      %v3050 = vld [vmem:[%s193 + $0x10c] sm:$0xff]
      %v3051 = vld [vmem:[%s193 + $0x114] sm:$0xff]
      %v3052 = vld [vmem:[%s193 + $0x11c] sm:$0xff]
      %v3053 = vld [vmem:[%s193 + $0x124] sm:$0xff]
      %v3054 = vld [vmem:[%s193 + $0x12c] sm:$0xff]
      %v3055 = vld [vmem:[%s193 + $0x134] sm:$0xff]
      %v3056 = vld [vmem:[%s193 + $0x13c] sm:$0xff]
      %v3057 = vld [vmem:[%s193 + $0x144] sm:$0xff]
      %v3058 = vld [vmem:[%s193 + $0x14c] sm:$0xff]
      %v3059 = vld [vmem:[%s193 + $0x154] sm:$0xff]
      %v3060 = vld [vmem:[%s193 + $0x15c] sm:$0xff]
      %v3061 = vld [vmem:[%s193 + $0x164] sm:$0xff]
      %s3062 = scalar_lea.vmem %s1, 384
      %v3063 = vld [vmem:[%s3062] sm:$0xff]
      %v3064 = vld [vmem:[%s3062 + $0x8] sm:$0xff]
      %v3065 = vld [vmem:[%s3062 + $0x10] sm:$0xff]
      %v3066 = vld [vmem:[%s3062 + $0x18] sm:$0xff]
      %v3067 = vld [vmem:[%s3062 + $0x20] sm:$0xff]
      %v3068 = vld [vmem:[%s3062 + $0x28] sm:$0xff]
      %v3069 = vld [vmem:[%s3062 + $0x30] sm:$0xff]
      %v3070 = vld [vmem:[%s3062 + $0x38] sm:$0xff]
      %v3072 = vsel %vm298, %v3021, 0
      %v3075 = vsel %vm298, %v3022, 0
      %v3078 = vsel %vm298, %v3023, 0
      %v3081 = vsel %vm298, %v3024, 0
      %v3084 = vsel %vm298, %v3025, 0
      %v3087 = vsel %vm298, %v3026, 0
      %v3090 = vsel %vm298, %v3027, 0
      %v3093 = vsel %vm298, %v3028, 0
      %v3096 = vsel %vm298, %v3029, 0
      %v3099 = vsel %vm298, %v3030, 0
      %v3102 = vsel %vm298, %v3031, 0
      %v3105 = vsel %vm298, %v3032, 0
      %v3108 = vsel %vm298, %v3033, 0
      %v3111 = vsel %vm298, %v3034, 0
      %v3114 = vsel %vm298, %v3035, 0
      %v3117 = vsel %vm298, %v3036, 0
      %v3120 = vsel %vm298, %v3037, 0
      %v3123 = vsel %vm298, %v3038, 0
      %v3126 = vsel %vm298, %v3039, 0
      %v3129 = vsel %vm298, %v3040, 0
      %v3132 = vsel %vm298, %v3041, 0
      %v3135 = vsel %vm298, %v3042, 0
      %v3138 = vsel %vm298, %v3043, 0
      %v3141 = vsel %vm298, %v3044, 0
      %v3144 = vsel %vm298, %v3045, 0
      %v3147 = vsel %vm298, %v3046, 0
      %v3150 = vsel %vm298, %v3047, 0
      %v3153 = vsel %vm298, %v3048, 0
      %v3156 = vsel %vm298, %v3049, 0
      %v3159 = vsel %vm298, %v3050, 0
      %v3162 = vsel %vm298, %v3051, 0
      %v3165 = vsel %vm298, %v3052, 0
      %v3168 = vsel %vm298, %v3053, 0
      %v3171 = vsel %vm298, %v3054, 0
      %v3174 = vsel %vm298, %v3055, 0
      %v3177 = vsel %vm298, %v3056, 0
      %v3180 = vsel %vm298, %v3057, 0
      %v3183 = vsel %vm298, %v3058, 0
      %v3186 = vsel %vm298, %v3059, 0
      %v3189 = vsel %vm298, %v3060, 0
      %v3192 = vsel %vm298, %v3061, 0
      %3194 = vmatprep.subr.mxu0 0.0
      %3195 = vmatpush1.msra.mxu0 %v3063
      %3196 = vmatprep.subr.mxu0 0.0
      %3197 = vmatpush1.msra.mxu0 %v3064
      %3198 = vmatprep.subr.mxu0 0.0
      %3199 = vmatpush1.msra.mxu0 %v3065
      %3200 = vmatprep.subr.mxu0 0.0
      %3201 = vmatpush1.msra.mxu0 %v3066
      %3202 = vmatprep.subr.mxu0 0.0
      %3203 = vmatpush1.msra.mxu0 %v3067
      %3204 = vmatprep.subr.mxu0 0.0
      %3205 = vmatpush1.msra.mxu0 %v3068
      %3206 = vmatprep.subr.mxu0 0.0
      %3207 = vmatpush1.msra.mxu0 %v3069
      %3208 = vmatprep.subr.mxu0 0.0
      %3209 = vmatpush1.msra.mxu0 %v3070
      %3210 = vmatprep.subr.mxu0 0.0
      %3211 = vmatpush1.msra.mxu0 0.0
      %3212 = vmatprep.subr.mxu0 0.0
      %3213 = vmatpush1.msra.mxu0 0.0
      %3214 = vmatprep.subr.mxu0 0.0
      %3215 = vmatpush1.msra.mxu0 0.0
      %3216 = vmatprep.subr.mxu0 0.0
      %3217 = vmatpush1.msra.mxu0 0.0
      %3218 = vmatprep.subr.mxu0 0.0
      %3219 = vmatpush1.msra.mxu0 0.0
      %3220 = vmatprep.subr.mxu0 0.0
      %3221 = vmatpush1.msra.mxu0 0.0
      %3222 = vmatprep.subr.mxu0 0.0
      %3223 = vmatpush1.msra.mxu0 0.0
      %3224 = vmatprep.subr.mxu0 0.0
      %3225 = vmatpush1.msra.mxu0 0.0
      %3226 = vmatprep.subr.mxu0 0.0
      %3227 = vmatpush1.msra.mxu0 0.0
      %3228 = vmatprep.subr.mxu0 0.0
      %3229 = vmatpush1.msra.mxu0 0.0
      %3230 = vmatprep.subr.mxu0 0.0
      %3231 = vmatpush1.msra.mxu0 0.0
      %3232 = vmatprep.subr.mxu0 0.0
      %3233 = vmatpush1.msra.mxu0 0.0
      %3234 = vmatprep.subr.mxu0 0.0
      %3235 = vmatpush1.msra.mxu0 0.0
      %3236 = vmatprep.subr.mxu0 0.0
      %3237 = vmatpush1.msra.mxu0 0.0
      %3238 = vmatprep.subr.mxu0 0.0
      %3239 = vmatpush1.msra.mxu0 0.0
      %3240 = vmatprep.subr.mxu0 0.0
      %3241 = vmatpush1.msra.mxu0 0.0
      %3242 = vmatprep.subr.mxu0 0.0
      %3243 = vmatpush1.msra.mxu0 0.0
      %3244 = vmatprep.subr.mxu0 0.0
      %3245 = vmatpush1.msra.mxu0 0.0
      %3246 = vmatprep.subr.mxu0 0.0
      %3247 = vmatpush1.msra.mxu0 0.0
      %3248 = vmatprep.subr.mxu0 0.0
      %3249 = vmatpush1.msra.mxu0 0.0
      %3250 = vmatprep.subr.mxu0 0.0
      %3251 = vmatpush1.msra.mxu0 0.0
      %3252 = vmatprep.subr.mxu0 0.0
      %3253 = vmatpush1.msra.mxu0 0.0
      %3254 = vmatprep.subr.mxu0 0.0
      %3255 = vmatpush1.msra.mxu0 0.0
      %3256 = vmatprep.subr.mxu0 0.0
      %3257 = vmatpush1.msra.mxu0 0.0
      %3258 = vmatprep.mubr.f32.mxu0 0.0
      %3259 = vmatmul.mubr.f32.gmra.mrb[0].mxu0 %v3072
      %v3260 = vpop.f32.mrb[0].mxu0
      %v3261 = vadd.f32 0.0, %v3260
      %v3262 = vpop.f32.mrb[0].mxu0
      %3263 = vmatprep.mubr.f32.mxu0 0.0
      %3264 = vmatmul.mubr.f32.gmra.mrb[0].mxu0 %v3075
      %v3265 = vpop.f32.mrb[0].mxu0
      %v3266 = vadd.f32 0.0, %v3265
      %v3267 = vpop.f32.mrb[0].mxu0
      %3268 = vmatprep.mubr.f32.mxu0 0.0
      %3269 = vmatmul.mubr.f32.gmra.mrb[0].mxu0 %v3078
      %v3270 = vpop.f32.mrb[0].mxu0
      %v3271 = vadd.f32 0.0, %v3270
      %v3272 = vpop.f32.mrb[0].mxu0
      %3273 = vmatprep.mubr.f32.mxu0 0.0
      %3274 = vmatmul.mubr.f32.gmra.mrb[0].mxu0 %v3081
      %v3275 = vpop.f32.mrb[0].mxu0
      %v3276 = vadd.f32 0.0, %v3275
      %v3277 = vpop.f32.mrb[0].mxu0
      %3278 = vmatprep.mubr.f32.mxu0 0.0
      %3279 = vmatmul.mubr.f32.gmra.mrb[0].mxu0 %v3084
      %v3280 = vpop.f32.mrb[0].mxu0
      %v3281 = vadd.f32 0.0, %v3280
      %v3282 = vpop.f32.mrb[0].mxu0
      %3283 = vmatprep.mubr.f32.mxu0 0.0
      %3284 = vmatmul.mubr.f32.gmra.mrb[0].mxu0 %v3087
      %v3285 = vpop.f32.mrb[0].mxu0
      %v3286 = vadd.f32 0.0, %v3285
      %v3287 = vpop.f32.mrb[0].mxu0
      %3288 = vmatprep.mubr.f32.mxu0 0.0
      %3289 = vmatmul.mubr.f32.gmra.mrb[0].mxu0 %v3090
      %v3290 = vpop.f32.mrb[0].mxu0
      %v3291 = vadd.f32 0.0, %v3290
      %v3292 = vpop.f32.mrb[0].mxu0
      %3293 = vmatprep.mubr.f32.mxu0 0.0
      %3294 = vmatmul.mubr.f32.gmra.mrb[0].mxu0 %v3093
      %v3295 = vpop.f32.mrb[0].mxu0
      %v3296 = vadd.f32 0.0, %v3295
      %v3297 = vpop.f32.mrb[0].mxu0
      %3298 = vmatprep.mubr.f32.mxu0 0.0
      %3299 = vmatmul.mubr.f32.gmra.mrb[0].mxu0 %v3096
      %v3300 = vpop.f32.mrb[0].mxu0
      %v3301 = vadd.f32 0.0, %v3300
      %v3302 = vpop.f32.mrb[0].mxu0
      %3303 = vmatprep.mubr.f32.mxu0 0.0
      %3304 = vmatmul.mubr.f32.gmra.mrb[0].mxu0 %v3099
      %v3305 = vpop.f32.mrb[0].mxu0
      %v3306 = vadd.f32 0.0, %v3305
      %v3307 = vpop.f32.mrb[0].mxu0
      %3308 = vmatprep.mubr.f32.mxu0 0.0
      %3309 = vmatmul.mubr.f32.gmra.mrb[0].mxu0 %v3102
      %v3310 = vpop.f32.mrb[0].mxu0
      %v3311 = vadd.f32 0.0, %v3310
      %v3312 = vpop.f32.mrb[0].mxu0
      %3313 = vmatprep.mubr.f32.mxu0 0.0
      %3314 = vmatmul.mubr.f32.gmra.mrb[0].mxu0 %v3105
      %v3315 = vpop.f32.mrb[0].mxu0
      %v3316 = vadd.f32 0.0, %v3315
      %v3317 = vpop.f32.mrb[0].mxu0
      %3318 = vmatprep.mubr.f32.mxu0 0.0
      %3319 = vmatmul.mubr.f32.gmra.mrb[0].mxu0 %v3108
      %v3320 = vpop.f32.mrb[0].mxu0
      %v3321 = vadd.f32 0.0, %v3320
      %v3322 = vpop.f32.mrb[0].mxu0
      %3323 = vmatprep.mubr.f32.mxu0 0.0
      %3324 = vmatmul.mubr.f32.gmra.mrb[0].mxu0 %v3111
      %v3325 = vpop.f32.mrb[0].mxu0
      %v3326 = vadd.f32 0.0, %v3325
      %v3327 = vpop.f32.mrb[0].mxu0
      %3328 = vmatprep.mubr.f32.mxu0 0.0
      %3329 = vmatmul.mubr.f32.gmra.mrb[0].mxu0 %v3114
      %v3330 = vpop.f32.mrb[0].mxu0
      %v3331 = vadd.f32 0.0, %v3330
      %v3332 = vpop.f32.mrb[0].mxu0
      %3333 = vmatprep.mubr.f32.mxu0 0.0
      %3334 = vmatmul.mubr.f32.gmra.mrb[0].mxu0 %v3117
      %v3335 = vpop.f32.mrb[0].mxu0
      %v3336 = vadd.f32 0.0, %v3335
      %v3337 = vpop.f32.mrb[0].mxu0
      %3338 = vmatprep.mubr.f32.mxu0 0.0
      %3339 = vmatmul.mubr.f32.gmra.mrb[0].mxu0 %v3120
      %v3340 = vpop.f32.mrb[0].mxu0
      %v3341 = vadd.f32 0.0, %v3340
      %v3342 = vpop.f32.mrb[0].mxu0
      %3343 = vmatprep.mubr.f32.mxu0 0.0
      %3344 = vmatmul.mubr.f32.gmra.mrb[0].mxu0 %v3123
      %v3345 = vpop.f32.mrb[0].mxu0
      %v3346 = vadd.f32 0.0, %v3345
      %v3347 = vpop.f32.mrb[0].mxu0
      %3348 = vmatprep.mubr.f32.mxu0 0.0
      %3349 = vmatmul.mubr.f32.gmra.mrb[0].mxu0 %v3126
      %v3350 = vpop.f32.mrb[0].mxu0
      %v3351 = vadd.f32 0.0, %v3350
      %v3352 = vpop.f32.mrb[0].mxu0
      %3353 = vmatprep.mubr.f32.mxu0 0.0
      %3354 = vmatmul.mubr.f32.gmra.mrb[0].mxu0 %v3129
      %v3355 = vpop.f32.mrb[0].mxu0
      %v3356 = vadd.f32 0.0, %v3355
      %v3357 = vpop.f32.mrb[0].mxu0
      %3358 = vmatprep.mubr.f32.mxu0 0.0
      %3359 = vmatmul.mubr.f32.gmra.mrb[0].mxu0 %v3132
      %v3360 = vpop.f32.mrb[0].mxu0
      %v3361 = vadd.f32 0.0, %v3360
      %v3362 = vpop.f32.mrb[0].mxu0
      %3363 = vmatprep.mubr.f32.mxu0 0.0
      %3364 = vmatmul.mubr.f32.gmra.mrb[0].mxu0 %v3135
      %v3365 = vpop.f32.mrb[0].mxu0
      %v3366 = vadd.f32 0.0, %v3365
      %v3367 = vpop.f32.mrb[0].mxu0
      %3368 = vmatprep.mubr.f32.mxu0 0.0
      %3369 = vmatmul.mubr.f32.gmra.mrb[0].mxu0 %v3138
      %v3370 = vpop.f32.mrb[0].mxu0
      %v3371 = vadd.f32 0.0, %v3370
      %v3372 = vpop.f32.mrb[0].mxu0
      %3373 = vmatprep.mubr.f32.mxu0 0.0
      %3374 = vmatmul.mubr.f32.gmra.mrb[0].mxu0 %v3141
      %v3375 = vpop.f32.mrb[0].mxu0
      %v3376 = vadd.f32 0.0, %v3375
      %v3377 = vpop.f32.mrb[0].mxu0
      %3378 = vmatprep.mubr.f32.mxu0 0.0
      %3379 = vmatmul.mubr.f32.gmra.mrb[0].mxu0 %v3144
      %v3380 = vpop.f32.mrb[0].mxu0
      %v3381 = vadd.f32 0.0, %v3380
      %v3382 = vpop.f32.mrb[0].mxu0
      %3383 = vmatprep.mubr.f32.mxu0 0.0
      %3384 = vmatmul.mubr.f32.gmra.mrb[0].mxu0 %v3147
      %v3385 = vpop.f32.mrb[0].mxu0
      %v3386 = vadd.f32 0.0, %v3385
      %v3387 = vpop.f32.mrb[0].mxu0
      %3388 = vmatprep.mubr.f32.mxu0 0.0
      %3389 = vmatmul.mubr.f32.gmra.mrb[0].mxu0 %v3150
      %v3390 = vpop.f32.mrb[0].mxu0
      %v3391 = vadd.f32 0.0, %v3390
      %v3392 = vpop.f32.mrb[0].mxu0
      %3393 = vmatprep.mubr.f32.mxu0 0.0
      %3394 = vmatmul.mubr.f32.gmra.mrb[0].mxu0 %v3153
      %v3395 = vpop.f32.mrb[0].mxu0
      %v3396 = vadd.f32 0.0, %v3395
      %v3397 = vpop.f32.mrb[0].mxu0
      %3398 = vmatprep.mubr.f32.mxu0 0.0
      %3399 = vmatmul.mubr.f32.gmra.mrb[0].mxu0 %v3156
      %v3400 = vpop.f32.mrb[0].mxu0
      %v3401 = vadd.f32 0.0, %v3400
      %v3402 = vpop.f32.mrb[0].mxu0
      %3403 = vmatprep.mubr.f32.mxu0 0.0
      %3404 = vmatmul.mubr.f32.gmra.mrb[0].mxu0 %v3159
      %v3405 = vpop.f32.mrb[0].mxu0
      %v3406 = vadd.f32 0.0, %v3405
      %v3407 = vpop.f32.mrb[0].mxu0
      %3408 = vmatprep.mubr.f32.mxu0 0.0
      %3409 = vmatmul.mubr.f32.gmra.mrb[0].mxu0 %v3162
      %v3410 = vpop.f32.mrb[0].mxu0
      %v3411 = vadd.f32 0.0, %v3410
      %v3412 = vpop.f32.mrb[0].mxu0
      %3413 = vmatprep.mubr.f32.mxu0 0.0
      %3414 = vmatmul.mubr.f32.gmra.mrb[0].mxu0 %v3165
      %v3415 = vpop.f32.mrb[0].mxu0
      %v3416 = vadd.f32 0.0, %v3415
      %v3417 = vpop.f32.mrb[0].mxu0
      %3418 = vmatprep.mubr.f32.mxu0 0.0
      %3419 = vmatmul.mubr.f32.gmra.mrb[0].mxu0 %v3168
      %v3420 = vpop.f32.mrb[0].mxu0
      %v3421 = vadd.f32 0.0, %v3420
      %v3422 = vpop.f32.mrb[0].mxu0
      %3423 = vmatprep.mubr.f32.mxu0 0.0
      %3424 = vmatmul.mubr.f32.gmra.mrb[0].mxu0 %v3171
      %v3425 = vpop.f32.mrb[0].mxu0
      %v3426 = vadd.f32 0.0, %v3425
      %v3427 = vpop.f32.mrb[0].mxu0
      %3428 = vmatprep.mubr.f32.mxu0 0.0
      %3429 = vmatmul.mubr.f32.gmra.mrb[0].mxu0 %v3174
      %v3430 = vpop.f32.mrb[0].mxu0
      %v3431 = vadd.f32 0.0, %v3430
      %v3432 = vpop.f32.mrb[0].mxu0
      %3433 = vmatprep.mubr.f32.mxu0 0.0
      %3434 = vmatmul.mubr.f32.gmra.mrb[0].mxu0 %v3177
      %v3435 = vpop.f32.mrb[0].mxu0
      %v3436 = vadd.f32 0.0, %v3435
      %v3437 = vpop.f32.mrb[0].mxu0
      %3438 = vmatprep.mubr.f32.mxu0 0.0
      %3439 = vmatmul.mubr.f32.gmra.mrb[0].mxu0 %v3180
      %v3440 = vpop.f32.mrb[0].mxu0
      %v3441 = vadd.f32 0.0, %v3440
      %v3442 = vpop.f32.mrb[0].mxu0
      %3443 = vmatprep.mubr.f32.mxu0 0.0
      %3444 = vmatmul.mubr.f32.gmra.mrb[0].mxu0 %v3183
      %v3445 = vpop.f32.mrb[0].mxu0
      %v3446 = vadd.f32 0.0, %v3445
      %v3447 = vpop.f32.mrb[0].mxu0
      %3448 = vmatprep.mubr.f32.mxu0 0.0
      %3449 = vmatmul.mubr.f32.gmra.mrb[0].mxu0 %v3186
      %v3450 = vpop.f32.mrb[0].mxu0
      %v3451 = vadd.f32 0.0, %v3450
      %v3452 = vpop.f32.mrb[0].mxu0
      %3453 = vmatprep.mubr.f32.mxu0 0.0
      %3454 = vmatmul.mubr.f32.gmra.mrb[0].mxu0 %v3189
      %v3455 = vpop.f32.mrb[0].mxu0
      %v3456 = vadd.f32 0.0, %v3455
      %v3457 = vpop.f32.mrb[0].mxu0
      %3458 = vmatprep.mubr.f32.mxu0 0.0
      %3459 = vmatmul.mubr.f32.gmra.mrb[0].mxu0 %v3192
      %v3460 = vpop.f32.mrb[0].mxu0
      %v3461 = vadd.f32 0.0, %v3460
      %v3462 = vpop.f32.mrb[0].mxu0
      %3463 = vdwg.mxu0
      %v3464 = vadd.f32 %v2980, %v3261
      %v3465 = vadd.f32 %v2981, %v3266
      %v3466 = vadd.f32 %v2982, %v3271
      %v3467 = vadd.f32 %v2983, %v3276
      %v3468 = vadd.f32 %v2984, %v3281
      %v3469 = vadd.f32 %v2985, %v3286
      %v3470 = vadd.f32 %v2986, %v3291
      %v3471 = vadd.f32 %v2987, %v3296
      %v3472 = vadd.f32 %v2988, %v3301
      %v3473 = vadd.f32 %v2989, %v3306
      %v3474 = vadd.f32 %v2990, %v3311
      %v3475 = vadd.f32 %v2991, %v3316
      %v3476 = vadd.f32 %v2992, %v3321
      %v3477 = vadd.f32 %v2993, %v3326
      %v3478 = vadd.f32 %v2994, %v3331
      %v3479 = vadd.f32 %v2995, %v3336
      %v3480 = vadd.f32 %v2996, %v3341
      %v3481 = vadd.f32 %v2997, %v3346
      %v3482 = vadd.f32 %v2998, %v3351
      %v3483 = vadd.f32 %v2999, %v3356
      %v3484 = vadd.f32 %v3000, %v3361
      %v3485 = vadd.f32 %v3001, %v3366
      %v3486 = vadd.f32 %v3002, %v3371
      %v3487 = vadd.f32 %v3003, %v3376
      %v3488 = vadd.f32 %v3004, %v3381
      %v3489 = vadd.f32 %v3005, %v3386
      %v3490 = vadd.f32 %v3006, %v3391
      %v3491 = vadd.f32 %v3007, %v3396
      %v3492 = vadd.f32 %v3008, %v3401
      %v3493 = vadd.f32 %v3009, %v3406
      %v3494 = vadd.f32 %v3010, %v3411
      %v3495 = vadd.f32 %v3011, %v3416
      %v3496 = vadd.f32 %v3012, %v3421
      %v3497 = vadd.f32 %v3013, %v3426
      %v3498 = vadd.f32 %v3014, %v3431
      %v3499 = vadd.f32 %v3015, %v3436
      %v3500 = vadd.f32 %v3016, %v3441
      %v3501 = vadd.f32 %v3017, %v3446
      %v3502 = vadd.f32 %v3018, %v3451
      %v3503 = vadd.f32 %v3019, %v3456
      %v3504 = vadd.f32 %v3020, %v3461
      %v3505 = vld [vmem:[%s193 + $0x25] sm:$0xff]
      %v3506 = vld [vmem:[%s193 + $0x2d] sm:$0xff]
      %v3507 = vld [vmem:[%s193 + $0x35] sm:$0xff]
      %v3508 = vld [vmem:[%s193 + $0x3d] sm:$0xff]
      %v3509 = vld [vmem:[%s193 + $0x45] sm:$0xff]
      %v3510 = vld [vmem:[%s193 + $0x4d] sm:$0xff]
      %v3511 = vld [vmem:[%s193 + $0x55] sm:$0xff]
      %v3512 = vld [vmem:[%s193 + $0x5d] sm:$0xff]
      %v3513 = vld [vmem:[%s193 + $0x65] sm:$0xff]
      %v3514 = vld [vmem:[%s193 + $0x6d] sm:$0xff]
      %v3515 = vld [vmem:[%s193 + $0x75] sm:$0xff]
      %v3516 = vld [vmem:[%s193 + $0x7d] sm:$0xff]
      %v3517 = vld [vmem:[%s193 + $0x85] sm:$0xff]
      %v3518 = vld [vmem:[%s193 + $0x8d] sm:$0xff]
      %v3519 = vld [vmem:[%s193 + $0x95] sm:$0xff]
      %v3520 = vld [vmem:[%s193 + $0x9d] sm:$0xff]
      %v3521 = vld [vmem:[%s193 + $0xa5] sm:$0xff]
      %v3522 = vld [vmem:[%s193 + $0xad] sm:$0xff]
      %v3523 = vld [vmem:[%s193 + $0xb5] sm:$0xff]
      %v3524 = vld [vmem:[%s193 + $0xbd] sm:$0xff]
      %v3525 = vld [vmem:[%s193 + $0xc5] sm:$0xff]
      %v3526 = vld [vmem:[%s193 + $0xcd] sm:$0xff]
      %v3527 = vld [vmem:[%s193 + $0xd5] sm:$0xff]
      %v3528 = vld [vmem:[%s193 + $0xdd] sm:$0xff]
      %v3529 = vld [vmem:[%s193 + $0xe5] sm:$0xff]
      %v3530 = vld [vmem:[%s193 + $0xed] sm:$0xff]
      %v3531 = vld [vmem:[%s193 + $0xf5] sm:$0xff]
      %v3532 = vld [vmem:[%s193 + $0xfd] sm:$0xff]
      %v3533 = vld [vmem:[%s193 + $0x105] sm:$0xff]
      %v3534 = vld [vmem:[%s193 + $0x10d] sm:$0xff]
      %v3535 = vld [vmem:[%s193 + $0x115] sm:$0xff]
      %v3536 = vld [vmem:[%s193 + $0x11d] sm:$0xff]
      %v3537 = vld [vmem:[%s193 + $0x125] sm:$0xff]
      %v3538 = vld [vmem:[%s193 + $0x12d] sm:$0xff]
      %v3539 = vld [vmem:[%s193 + $0x135] sm:$0xff]
      %v3540 = vld [vmem:[%s193 + $0x13d] sm:$0xff]
      %v3541 = vld [vmem:[%s193 + $0x145] sm:$0xff]
      %v3542 = vld [vmem:[%s193 + $0x14d] sm:$0xff]
      %v3543 = vld [vmem:[%s193 + $0x155] sm:$0xff]
      %v3544 = vld [vmem:[%s193 + $0x15d] sm:$0xff]
      %v3545 = vld [vmem:[%s193 + $0x165] sm:$0xff]
      %s3546 = scalar_lea.vmem %s1, 448
      %v3547 = vld [vmem:[%s3546] sm:$0xff]
      %v3548 = vld [vmem:[%s3546 + $0x8] sm:$0xff]
      %v3549 = vld [vmem:[%s3546 + $0x10] sm:$0xff]
      %v3550 = vld [vmem:[%s3546 + $0x18] sm:$0xff]
      %v3551 = vld [vmem:[%s3546 + $0x20] sm:$0xff]
      %v3552 = vld [vmem:[%s3546 + $0x28] sm:$0xff]
      %v3553 = vld [vmem:[%s3546 + $0x30] sm:$0xff]
      %v3554 = vld [vmem:[%s3546 + $0x38] sm:$0xff]
      %v3556 = vsel %vm298, %v3505, 0
      %v3559 = vsel %vm298, %v3506, 0
      %v3562 = vsel %vm298, %v3507, 0
      %v3565 = vsel %vm298, %v3508, 0
      %v3568 = vsel %vm298, %v3509, 0
      %v3571 = vsel %vm298, %v3510, 0
      %v3574 = vsel %vm298, %v3511, 0
      %v3577 = vsel %vm298, %v3512, 0
      %v3580 = vsel %vm298, %v3513, 0
      %v3583 = vsel %vm298, %v3514, 0
      %v3586 = vsel %vm298, %v3515, 0
      %v3589 = vsel %vm298, %v3516, 0
      %v3592 = vsel %vm298, %v3517, 0
      %v3595 = vsel %vm298, %v3518, 0
      %v3598 = vsel %vm298, %v3519, 0
      %v3601 = vsel %vm298, %v3520, 0
      %v3604 = vsel %vm298, %v3521, 0
      %v3607 = vsel %vm298, %v3522, 0
      %v3610 = vsel %vm298, %v3523, 0
      %v3613 = vsel %vm298, %v3524, 0
      %v3616 = vsel %vm298, %v3525, 0
      %v3619 = vsel %vm298, %v3526, 0
      %v3622 = vsel %vm298, %v3527, 0
      %v3625 = vsel %vm298, %v3528, 0
      %v3628 = vsel %vm298, %v3529, 0
      %v3631 = vsel %vm298, %v3530, 0
      %v3634 = vsel %vm298, %v3531, 0
      %v3637 = vsel %vm298, %v3532, 0
      %v3640 = vsel %vm298, %v3533, 0
      %v3643 = vsel %vm298, %v3534, 0
      %v3646 = vsel %vm298, %v3535, 0
      %v3649 = vsel %vm298, %v3536, 0
      %v3652 = vsel %vm298, %v3537, 0
      %v3655 = vsel %vm298, %v3538, 0
      %v3658 = vsel %vm298, %v3539, 0
      %v3661 = vsel %vm298, %v3540, 0
      %v3664 = vsel %vm298, %v3541, 0
      %v3667 = vsel %vm298, %v3542, 0
      %v3670 = vsel %vm298, %v3543, 0
      %v3673 = vsel %vm298, %v3544, 0
      %v3676 = vsel %vm298, %v3545, 0
      %3678 = vmatprep.subr.mxu0 0.0
      %3679 = vmatpush1.msra.mxu0 %v3547
      %3680 = vmatprep.subr.mxu0 0.0
      %3681 = vmatpush1.msra.mxu0 %v3548
      %3682 = vmatprep.subr.mxu0 0.0
      %3683 = vmatpush1.msra.mxu0 %v3549
      %3684 = vmatprep.subr.mxu0 0.0
      %3685 = vmatpush1.msra.mxu0 %v3550
      %3686 = vmatprep.subr.mxu0 0.0
      %3687 = vmatpush1.msra.mxu0 %v3551
      %3688 = vmatprep.subr.mxu0 0.0
      %3689 = vmatpush1.msra.mxu0 %v3552
      %3690 = vmatprep.subr.mxu0 0.0
      %3691 = vmatpush1.msra.mxu0 %v3553
      %3692 = vmatprep.subr.mxu0 0.0
      %3693 = vmatpush1.msra.mxu0 %v3554
      %3694 = vmatprep.subr.mxu0 0.0
      %3695 = vmatpush1.msra.mxu0 0.0
      %3696 = vmatprep.subr.mxu0 0.0
      %3697 = vmatpush1.msra.mxu0 0.0
      %3698 = vmatprep.subr.mxu0 0.0
      %3699 = vmatpush1.msra.mxu0 0.0
      %3700 = vmatprep.subr.mxu0 0.0
      %3701 = vmatpush1.msra.mxu0 0.0
      %3702 = vmatprep.subr.mxu0 0.0
      %3703 = vmatpush1.msra.mxu0 0.0
      %3704 = vmatprep.subr.mxu0 0.0
      %3705 = vmatpush1.msra.mxu0 0.0
      %3706 = vmatprep.subr.mxu0 0.0
      %3707 = vmatpush1.msra.mxu0 0.0
      %3708 = vmatprep.subr.mxu0 0.0
      %3709 = vmatpush1.msra.mxu0 0.0
      %3710 = vmatprep.subr.mxu0 0.0
      %3711 = vmatpush1.msra.mxu0 0.0
      %3712 = vmatprep.subr.mxu0 0.0
      %3713 = vmatpush1.msra.mxu0 0.0
      %3714 = vmatprep.subr.mxu0 0.0
      %3715 = vmatpush1.msra.mxu0 0.0
      %3716 = vmatprep.subr.mxu0 0.0
      %3717 = vmatpush1.msra.mxu0 0.0
      %3718 = vmatprep.subr.mxu0 0.0
      %3719 = vmatpush1.msra.mxu0 0.0
      %3720 = vmatprep.subr.mxu0 0.0
      %3721 = vmatpush1.msra.mxu0 0.0
      %3722 = vmatprep.subr.mxu0 0.0
      %3723 = vmatpush1.msra.mxu0 0.0
      %3724 = vmatprep.subr.mxu0 0.0
      %3725 = vmatpush1.msra.mxu0 0.0
      %3726 = vmatprep.subr.mxu0 0.0
      %3727 = vmatpush1.msra.mxu0 0.0
      %3728 = vmatprep.subr.mxu0 0.0
      %3729 = vmatpush1.msra.mxu0 0.0
      %3730 = vmatprep.subr.mxu0 0.0
      %3731 = vmatpush1.msra.mxu0 0.0
      %3732 = vmatprep.subr.mxu0 0.0
      %3733 = vmatpush1.msra.mxu0 0.0
      %3734 = vmatprep.subr.mxu0 0.0
      %3735 = vmatpush1.msra.mxu0 0.0
      %3736 = vmatprep.subr.mxu0 0.0
      %3737 = vmatpush1.msra.mxu0 0.0
      %3738 = vmatprep.subr.mxu0 0.0
      %3739 = vmatpush1.msra.mxu0 0.0
      %3740 = vmatprep.subr.mxu0 0.0
      %3741 = vmatpush1.msra.mxu0 0.0
      %3742 = vmatprep.mubr.f32.mxu0 0.0
      %3743 = vmatmul.mubr.f32.gmra.mrb[0].mxu0 %v3556
      %v3744 = vpop.f32.mrb[0].mxu0
      %v3745 = vadd.f32 0.0, %v3744
      %v3746 = vpop.f32.mrb[0].mxu0
      %3747 = vmatprep.mubr.f32.mxu0 0.0
      %3748 = vmatmul.mubr.f32.gmra.mrb[0].mxu0 %v3559
      %v3749 = vpop.f32.mrb[0].mxu0
      %v3750 = vadd.f32 0.0, %v3749
      %v3751 = vpop.f32.mrb[0].mxu0
      %3752 = vmatprep.mubr.f32.mxu0 0.0
      %3753 = vmatmul.mubr.f32.gmra.mrb[0].mxu0 %v3562
      %v3754 = vpop.f32.mrb[0].mxu0
      %v3755 = vadd.f32 0.0, %v3754
      %v3756 = vpop.f32.mrb[0].mxu0
      %3757 = vmatprep.mubr.f32.mxu0 0.0
      %3758 = vmatmul.mubr.f32.gmra.mrb[0].mxu0 %v3565
      %v3759 = vpop.f32.mrb[0].mxu0
      %v3760 = vadd.f32 0.0, %v3759
      %v3761 = vpop.f32.mrb[0].mxu0
      %3762 = vmatprep.mubr.f32.mxu0 0.0
      %3763 = vmatmul.mubr.f32.gmra.mrb[0].mxu0 %v3568
      %v3764 = vpop.f32.mrb[0].mxu0
      %v3765 = vadd.f32 0.0, %v3764
      %v3766 = vpop.f32.mrb[0].mxu0
      %3767 = vmatprep.mubr.f32.mxu0 0.0
      %3768 = vmatmul.mubr.f32.gmra.mrb[0].mxu0 %v3571
      %v3769 = vpop.f32.mrb[0].mxu0
      %v3770 = vadd.f32 0.0, %v3769
      %v3771 = vpop.f32.mrb[0].mxu0
      %3772 = vmatprep.mubr.f32.mxu0 0.0
      %3773 = vmatmul.mubr.f32.gmra.mrb[0].mxu0 %v3574
      %v3774 = vpop.f32.mrb[0].mxu0
      %v3775 = vadd.f32 0.0, %v3774
      %v3776 = vpop.f32.mrb[0].mxu0
      %3777 = vmatprep.mubr.f32.mxu0 0.0
      %3778 = vmatmul.mubr.f32.gmra.mrb[0].mxu0 %v3577
      %v3779 = vpop.f32.mrb[0].mxu0
      %v3780 = vadd.f32 0.0, %v3779
      %v3781 = vpop.f32.mrb[0].mxu0
      %3782 = vmatprep.mubr.f32.mxu0 0.0
      %3783 = vmatmul.mubr.f32.gmra.mrb[0].mxu0 %v3580
      %v3784 = vpop.f32.mrb[0].mxu0
      %v3785 = vadd.f32 0.0, %v3784
      %v3786 = vpop.f32.mrb[0].mxu0
      %3787 = vmatprep.mubr.f32.mxu0 0.0
      %3788 = vmatmul.mubr.f32.gmra.mrb[0].mxu0 %v3583
      %v3789 = vpop.f32.mrb[0].mxu0
      %v3790 = vadd.f32 0.0, %v3789
      %v3791 = vpop.f32.mrb[0].mxu0
      %3792 = vmatprep.mubr.f32.mxu0 0.0
      %3793 = vmatmul.mubr.f32.gmra.mrb[0].mxu0 %v3586
      %v3794 = vpop.f32.mrb[0].mxu0
      %v3795 = vadd.f32 0.0, %v3794
      %v3796 = vpop.f32.mrb[0].mxu0
      %3797 = vmatprep.mubr.f32.mxu0 0.0
      %3798 = vmatmul.mubr.f32.gmra.mrb[0].mxu0 %v3589
      %v3799 = vpop.f32.mrb[0].mxu0
      %v3800 = vadd.f32 0.0, %v3799
      %v3801 = vpop.f32.mrb[0].mxu0
      %3802 = vmatprep.mubr.f32.mxu0 0.0
      %3803 = vmatmul.mubr.f32.gmra.mrb[0].mxu0 %v3592
      %v3804 = vpop.f32.mrb[0].mxu0
      %v3805 = vadd.f32 0.0, %v3804
      %v3806 = vpop.f32.mrb[0].mxu0
      %3807 = vmatprep.mubr.f32.mxu0 0.0
      %3808 = vmatmul.mubr.f32.gmra.mrb[0].mxu0 %v3595
      %v3809 = vpop.f32.mrb[0].mxu0
      %v3810 = vadd.f32 0.0, %v3809
      %v3811 = vpop.f32.mrb[0].mxu0
      %3812 = vmatprep.mubr.f32.mxu0 0.0
      %3813 = vmatmul.mubr.f32.gmra.mrb[0].mxu0 %v3598
      %v3814 = vpop.f32.mrb[0].mxu0
      %v3815 = vadd.f32 0.0, %v3814
      %v3816 = vpop.f32.mrb[0].mxu0
      %3817 = vmatprep.mubr.f32.mxu0 0.0
      %3818 = vmatmul.mubr.f32.gmra.mrb[0].mxu0 %v3601
      %v3819 = vpop.f32.mrb[0].mxu0
      %v3820 = vadd.f32 0.0, %v3819
      %v3821 = vpop.f32.mrb[0].mxu0
      %3822 = vmatprep.mubr.f32.mxu0 0.0
      %3823 = vmatmul.mubr.f32.gmra.mrb[0].mxu0 %v3604
      %v3824 = vpop.f32.mrb[0].mxu0
      %v3825 = vadd.f32 0.0, %v3824
      %v3826 = vpop.f32.mrb[0].mxu0
      %3827 = vmatprep.mubr.f32.mxu0 0.0
      %3828 = vmatmul.mubr.f32.gmra.mrb[0].mxu0 %v3607
      %v3829 = vpop.f32.mrb[0].mxu0
      %v3830 = vadd.f32 0.0, %v3829
      %v3831 = vpop.f32.mrb[0].mxu0
      %3832 = vmatprep.mubr.f32.mxu0 0.0
      %3833 = vmatmul.mubr.f32.gmra.mrb[0].mxu0 %v3610
      %v3834 = vpop.f32.mrb[0].mxu0
      %v3835 = vadd.f32 0.0, %v3834
      %v3836 = vpop.f32.mrb[0].mxu0
      %3837 = vmatprep.mubr.f32.mxu0 0.0
      %3838 = vmatmul.mubr.f32.gmra.mrb[0].mxu0 %v3613
      %v3839 = vpop.f32.mrb[0].mxu0
      %v3840 = vadd.f32 0.0, %v3839
      %v3841 = vpop.f32.mrb[0].mxu0
      %3842 = vmatprep.mubr.f32.mxu0 0.0
      %3843 = vmatmul.mubr.f32.gmra.mrb[0].mxu0 %v3616
      %v3844 = vpop.f32.mrb[0].mxu0
      %v3845 = vadd.f32 0.0, %v3844
      %v3846 = vpop.f32.mrb[0].mxu0
      %3847 = vmatprep.mubr.f32.mxu0 0.0
      %3848 = vmatmul.mubr.f32.gmra.mrb[0].mxu0 %v3619
      %v3849 = vpop.f32.mrb[0].mxu0
      %v3850 = vadd.f32 0.0, %v3849
      %v3851 = vpop.f32.mrb[0].mxu0
      %3852 = vmatprep.mubr.f32.mxu0 0.0
      %3853 = vmatmul.mubr.f32.gmra.mrb[0].mxu0 %v3622
      %v3854 = vpop.f32.mrb[0].mxu0
      %v3855 = vadd.f32 0.0, %v3854
      %v3856 = vpop.f32.mrb[0].mxu0
      %3857 = vmatprep.mubr.f32.mxu0 0.0
      %3858 = vmatmul.mubr.f32.gmra.mrb[0].mxu0 %v3625
      %v3859 = vpop.f32.mrb[0].mxu0
      %v3860 = vadd.f32 0.0, %v3859
      %v3861 = vpop.f32.mrb[0].mxu0
      %3862 = vmatprep.mubr.f32.mxu0 0.0
      %3863 = vmatmul.mubr.f32.gmra.mrb[0].mxu0 %v3628
      %v3864 = vpop.f32.mrb[0].mxu0
      %v3865 = vadd.f32 0.0, %v3864
      %v3866 = vpop.f32.mrb[0].mxu0
      %3867 = vmatprep.mubr.f32.mxu0 0.0
      %3868 = vmatmul.mubr.f32.gmra.mrb[0].mxu0 %v3631
      %v3869 = vpop.f32.mrb[0].mxu0
      %v3870 = vadd.f32 0.0, %v3869
      %v3871 = vpop.f32.mrb[0].mxu0
      %3872 = vmatprep.mubr.f32.mxu0 0.0
      %3873 = vmatmul.mubr.f32.gmra.mrb[0].mxu0 %v3634
      %v3874 = vpop.f32.mrb[0].mxu0
      %v3875 = vadd.f32 0.0, %v3874
      %v3876 = vpop.f32.mrb[0].mxu0
      %3877 = vmatprep.mubr.f32.mxu0 0.0
      %3878 = vmatmul.mubr.f32.gmra.mrb[0].mxu0 %v3637
      %v3879 = vpop.f32.mrb[0].mxu0
      %v3880 = vadd.f32 0.0, %v3879
      %v3881 = vpop.f32.mrb[0].mxu0
      %3882 = vmatprep.mubr.f32.mxu0 0.0
      %3883 = vmatmul.mubr.f32.gmra.mrb[0].mxu0 %v3640
      %v3884 = vpop.f32.mrb[0].mxu0
      %v3885 = vadd.f32 0.0, %v3884
      %v3886 = vpop.f32.mrb[0].mxu0
      %3887 = vmatprep.mubr.f32.mxu0 0.0
      %3888 = vmatmul.mubr.f32.gmra.mrb[0].mxu0 %v3643
      %v3889 = vpop.f32.mrb[0].mxu0
      %v3890 = vadd.f32 0.0, %v3889
      %v3891 = vpop.f32.mrb[0].mxu0
      %3892 = vmatprep.mubr.f32.mxu0 0.0
      %3893 = vmatmul.mubr.f32.gmra.mrb[0].mxu0 %v3646
      %v3894 = vpop.f32.mrb[0].mxu0
      %v3895 = vadd.f32 0.0, %v3894
      %v3896 = vpop.f32.mrb[0].mxu0
      %3897 = vmatprep.mubr.f32.mxu0 0.0
      %3898 = vmatmul.mubr.f32.gmra.mrb[0].mxu0 %v3649
      %v3899 = vpop.f32.mrb[0].mxu0
      %v3900 = vadd.f32 0.0, %v3899
      %v3901 = vpop.f32.mrb[0].mxu0
      %3902 = vmatprep.mubr.f32.mxu0 0.0
      %3903 = vmatmul.mubr.f32.gmra.mrb[0].mxu0 %v3652
      %v3904 = vpop.f32.mrb[0].mxu0
      %v3905 = vadd.f32 0.0, %v3904
      %v3906 = vpop.f32.mrb[0].mxu0
      %3907 = vmatprep.mubr.f32.mxu0 0.0
      %3908 = vmatmul.mubr.f32.gmra.mrb[0].mxu0 %v3655
      %v3909 = vpop.f32.mrb[0].mxu0
      %v3910 = vadd.f32 0.0, %v3909
      %v3911 = vpop.f32.mrb[0].mxu0
      %3912 = vmatprep.mubr.f32.mxu0 0.0
      %3913 = vmatmul.mubr.f32.gmra.mrb[0].mxu0 %v3658
      %v3914 = vpop.f32.mrb[0].mxu0
      %v3915 = vadd.f32 0.0, %v3914
      %v3916 = vpop.f32.mrb[0].mxu0
      %3917 = vmatprep.mubr.f32.mxu0 0.0
      %3918 = vmatmul.mubr.f32.gmra.mrb[0].mxu0 %v3661
      %v3919 = vpop.f32.mrb[0].mxu0
      %v3920 = vadd.f32 0.0, %v3919
      %v3921 = vpop.f32.mrb[0].mxu0
      %3922 = vmatprep.mubr.f32.mxu0 0.0
      %3923 = vmatmul.mubr.f32.gmra.mrb[0].mxu0 %v3664
      %v3924 = vpop.f32.mrb[0].mxu0
      %v3925 = vadd.f32 0.0, %v3924
      %v3926 = vpop.f32.mrb[0].mxu0
      %3927 = vmatprep.mubr.f32.mxu0 0.0
      %3928 = vmatmul.mubr.f32.gmra.mrb[0].mxu0 %v3667
      %v3929 = vpop.f32.mrb[0].mxu0
      %v3930 = vadd.f32 0.0, %v3929
      %v3931 = vpop.f32.mrb[0].mxu0
      %3932 = vmatprep.mubr.f32.mxu0 0.0
      %3933 = vmatmul.mubr.f32.gmra.mrb[0].mxu0 %v3670
      %v3934 = vpop.f32.mrb[0].mxu0
      %v3935 = vadd.f32 0.0, %v3934
      %v3936 = vpop.f32.mrb[0].mxu0
      %3937 = vmatprep.mubr.f32.mxu0 0.0
      %3938 = vmatmul.mubr.f32.gmra.mrb[0].mxu0 %v3673
      %v3939 = vpop.f32.mrb[0].mxu0
      %v3940 = vadd.f32 0.0, %v3939
      %v3941 = vpop.f32.mrb[0].mxu0
      %3942 = vmatprep.mubr.f32.mxu0 0.0
      %3943 = vmatmul.mubr.f32.gmra.mrb[0].mxu0 %v3676
      %v3944 = vpop.f32.mrb[0].mxu0
      %v3945 = vadd.f32 0.0, %v3944
      %v3946 = vpop.f32.mrb[0].mxu0
      %3947 = vdwg.mxu0
      %v3948 = vadd.f32 %v3464, %v3745
      %v3949 = vadd.f32 %v3465, %v3750
      %v3950 = vadd.f32 %v3466, %v3755
      %v3951 = vadd.f32 %v3467, %v3760
      %v3952 = vadd.f32 %v3468, %v3765
      %v3953 = vadd.f32 %v3469, %v3770
      %v3954 = vadd.f32 %v3470, %v3775
      %v3955 = vadd.f32 %v3471, %v3780
      %v3956 = vadd.f32 %v3472, %v3785
      %v3957 = vadd.f32 %v3473, %v3790
      %v3958 = vadd.f32 %v3474, %v3795
      %v3959 = vadd.f32 %v3475, %v3800
      %v3960 = vadd.f32 %v3476, %v3805
      %v3961 = vadd.f32 %v3477, %v3810
      %v3962 = vadd.f32 %v3478, %v3815
      %v3963 = vadd.f32 %v3479, %v3820
      %v3964 = vadd.f32 %v3480, %v3825
      %v3965 = vadd.f32 %v3481, %v3830
      %v3966 = vadd.f32 %v3482, %v3835
      %v3967 = vadd.f32 %v3483, %v3840
      %v3968 = vadd.f32 %v3484, %v3845
      %v3969 = vadd.f32 %v3485, %v3850
      %v3970 = vadd.f32 %v3486, %v3855
      %v3971 = vadd.f32 %v3487, %v3860
      %v3972 = vadd.f32 %v3488, %v3865
      %v3973 = vadd.f32 %v3489, %v3870
      %v3974 = vadd.f32 %v3490, %v3875
      %v3975 = vadd.f32 %v3491, %v3880
      %v3976 = vadd.f32 %v3492, %v3885
      %v3977 = vadd.f32 %v3493, %v3890
      %v3978 = vadd.f32 %v3494, %v3895
      %v3979 = vadd.f32 %v3495, %v3900
      %v3980 = vadd.f32 %v3496, %v3905
      %v3981 = vadd.f32 %v3497, %v3910
      %v3982 = vadd.f32 %v3498, %v3915
      %v3983 = vadd.f32 %v3499, %v3920
      %v3984 = vadd.f32 %v3500, %v3925
      %v3985 = vadd.f32 %v3501, %v3930
      %v3986 = vadd.f32 %v3502, %v3935
      %v3987 = vadd.f32 %v3503, %v3940
      %v3988 = vadd.f32 %v3504, %v3945
      %v3989 = vld [vmem:[%s193 + $0x26] sm:$0xff]
      %v3990 = vld [vmem:[%s193 + $0x2e] sm:$0xff]
      %v3991 = vld [vmem:[%s193 + $0x36] sm:$0xff]
      %v3992 = vld [vmem:[%s193 + $0x3e] sm:$0xff]
      %v3993 = vld [vmem:[%s193 + $0x46] sm:$0xff]
      %v3994 = vld [vmem:[%s193 + $0x4e] sm:$0xff]
      %v3995 = vld [vmem:[%s193 + $0x56] sm:$0xff]
      %v3996 = vld [vmem:[%s193 + $0x5e] sm:$0xff]
      %v3997 = vld [vmem:[%s193 + $0x66] sm:$0xff]
      %v3998 = vld [vmem:[%s193 + $0x6e] sm:$0xff]
      %v3999 = vld [vmem:[%s193 + $0x76] sm:$0xff]
      %v4000 = vld [vmem:[%s193 + $0x7e] sm:$0xff]
      %v4001 = vld [vmem:[%s193 + $0x86] sm:$0xff]
      %v4002 = vld [vmem:[%s193 + $0x8e] sm:$0xff]
      %v4003 = vld [vmem:[%s193 + $0x96] sm:$0xff]
      %v4004 = vld [vmem:[%s193 + $0x9e] sm:$0xff]
      %v4005 = vld [vmem:[%s193 + $0xa6] sm:$0xff]
      %v4006 = vld [vmem:[%s193 + $0xae] sm:$0xff]
      %v4007 = vld [vmem:[%s193 + $0xb6] sm:$0xff]
      %v4008 = vld [vmem:[%s193 + $0xbe] sm:$0xff]
      %v4009 = vld [vmem:[%s193 + $0xc6] sm:$0xff]
      %v4010 = vld [vmem:[%s193 + $0xce] sm:$0xff]
      %v4011 = vld [vmem:[%s193 + $0xd6] sm:$0xff]
      %v4012 = vld [vmem:[%s193 + $0xde] sm:$0xff]
      %v4013 = vld [vmem:[%s193 + $0xe6] sm:$0xff]
      %v4014 = vld [vmem:[%s193 + $0xee] sm:$0xff]
      %v4015 = vld [vmem:[%s193 + $0xf6] sm:$0xff]
      %v4016 = vld [vmem:[%s193 + $0xfe] sm:$0xff]
      %v4017 = vld [vmem:[%s193 + $0x106] sm:$0xff]
      %v4018 = vld [vmem:[%s193 + $0x10e] sm:$0xff]
      %v4019 = vld [vmem:[%s193 + $0x116] sm:$0xff]
      %v4020 = vld [vmem:[%s193 + $0x11e] sm:$0xff]
      %v4021 = vld [vmem:[%s193 + $0x126] sm:$0xff]
      %v4022 = vld [vmem:[%s193 + $0x12e] sm:$0xff]
      %v4023 = vld [vmem:[%s193 + $0x136] sm:$0xff]
      %v4024 = vld [vmem:[%s193 + $0x13e] sm:$0xff]
      %v4025 = vld [vmem:[%s193 + $0x146] sm:$0xff]
      %v4026 = vld [vmem:[%s193 + $0x14e] sm:$0xff]
      %v4027 = vld [vmem:[%s193 + $0x156] sm:$0xff]
      %v4028 = vld [vmem:[%s193 + $0x15e] sm:$0xff]
      %v4029 = vld [vmem:[%s193 + $0x166] sm:$0xff]
      %s4030 = scalar_lea.vmem %s1, 512
      %v4031 = vld [vmem:[%s4030] sm:$0xff]
      %v4032 = vld [vmem:[%s4030 + $0x8] sm:$0xff]
      %v4033 = vld [vmem:[%s4030 + $0x10] sm:$0xff]
      %v4034 = vld [vmem:[%s4030 + $0x18] sm:$0xff]
      %v4035 = vld [vmem:[%s4030 + $0x20] sm:$0xff]
      %v4036 = vld [vmem:[%s4030 + $0x28] sm:$0xff]
      %v4037 = vld [vmem:[%s4030 + $0x30] sm:$0xff]
      %v4038 = vld [vmem:[%s4030 + $0x38] sm:$0xff]
      %v4040 = vsel %vm298, %v3989, 0
      %v4043 = vsel %vm298, %v3990, 0
      %v4046 = vsel %vm298, %v3991, 0
      %v4049 = vsel %vm298, %v3992, 0
      %v4052 = vsel %vm298, %v3993, 0
      %v4055 = vsel %vm298, %v3994, 0
      %v4058 = vsel %vm298, %v3995, 0
      %v4061 = vsel %vm298, %v3996, 0
      %v4064 = vsel %vm298, %v3997, 0
      %v4067 = vsel %vm298, %v3998, 0
      %v4070 = vsel %vm298, %v3999, 0
      %v4073 = vsel %vm298, %v4000, 0
      %v4076 = vsel %vm298, %v4001, 0
      %v4079 = vsel %vm298, %v4002, 0
      %v4082 = vsel %vm298, %v4003, 0
      %v4085 = vsel %vm298, %v4004, 0
      %v4088 = vsel %vm298, %v4005, 0
      %v4091 = vsel %vm298, %v4006, 0
      %v4094 = vsel %vm298, %v4007, 0
      %v4097 = vsel %vm298, %v4008, 0
      %v4100 = vsel %vm298, %v4009, 0
      %v4103 = vsel %vm298, %v4010, 0
      %v4106 = vsel %vm298, %v4011, 0
      %v4109 = vsel %vm298, %v4012, 0
      %v4112 = vsel %vm298, %v4013, 0
      %v4115 = vsel %vm298, %v4014, 0
      %v4118 = vsel %vm298, %v4015, 0
      %v4121 = vsel %vm298, %v4016, 0
      %v4124 = vsel %vm298, %v4017, 0
      %v4127 = vsel %vm298, %v4018, 0
      %v4130 = vsel %vm298, %v4019, 0
      %v4133 = vsel %vm298, %v4020, 0
      %v4136 = vsel %vm298, %v4021, 0
      %v4139 = vsel %vm298, %v4022, 0
      %v4142 = vsel %vm298, %v4023, 0
      %v4145 = vsel %vm298, %v4024, 0
      %v4148 = vsel %vm298, %v4025, 0
      %v4151 = vsel %vm298, %v4026, 0
      %v4154 = vsel %vm298, %v4027, 0
      %v4157 = vsel %vm298, %v4028, 0
      %v4160 = vsel %vm298, %v4029, 0
      %4162 = vmatprep.subr.mxu0 0.0
      %4163 = vmatpush1.msra.mxu0 %v4031
      %4164 = vmatprep.subr.mxu0 0.0
      %4165 = vmatpush1.msra.mxu0 %v4032
      %4166 = vmatprep.subr.mxu0 0.0
      %4167 = vmatpush1.msra.mxu0 %v4033
      %4168 = vmatprep.subr.mxu0 0.0
      %4169 = vmatpush1.msra.mxu0 %v4034
      %4170 = vmatprep.subr.mxu0 0.0
      %4171 = vmatpush1.msra.mxu0 %v4035
      %4172 = vmatprep.subr.mxu0 0.0
      %4173 = vmatpush1.msra.mxu0 %v4036
      %4174 = vmatprep.subr.mxu0 0.0
      %4175 = vmatpush1.msra.mxu0 %v4037
      %4176 = vmatprep.subr.mxu0 0.0
      %4177 = vmatpush1.msra.mxu0 %v4038
      %4178 = vmatprep.subr.mxu0 0.0
      %4179 = vmatpush1.msra.mxu0 0.0
      %4180 = vmatprep.subr.mxu0 0.0
      %4181 = vmatpush1.msra.mxu0 0.0
      %4182 = vmatprep.subr.mxu0 0.0
      %4183 = vmatpush1.msra.mxu0 0.0
      %4184 = vmatprep.subr.mxu0 0.0
      %4185 = vmatpush1.msra.mxu0 0.0
      %4186 = vmatprep.subr.mxu0 0.0
      %4187 = vmatpush1.msra.mxu0 0.0
      %4188 = vmatprep.subr.mxu0 0.0
      %4189 = vmatpush1.msra.mxu0 0.0
      %4190 = vmatprep.subr.mxu0 0.0
      %4191 = vmatpush1.msra.mxu0 0.0
      %4192 = vmatprep.subr.mxu0 0.0
      %4193 = vmatpush1.msra.mxu0 0.0
      %4194 = vmatprep.subr.mxu0 0.0
      %4195 = vmatpush1.msra.mxu0 0.0
      %4196 = vmatprep.subr.mxu0 0.0
      %4197 = vmatpush1.msra.mxu0 0.0
      %4198 = vmatprep.subr.mxu0 0.0
      %4199 = vmatpush1.msra.mxu0 0.0
      %4200 = vmatprep.subr.mxu0 0.0
      %4201 = vmatpush1.msra.mxu0 0.0
      %4202 = vmatprep.subr.mxu0 0.0
      %4203 = vmatpush1.msra.mxu0 0.0
      %4204 = vmatprep.subr.mxu0 0.0
      %4205 = vmatpush1.msra.mxu0 0.0
      %4206 = vmatprep.subr.mxu0 0.0
      %4207 = vmatpush1.msra.mxu0 0.0
      %4208 = vmatprep.subr.mxu0 0.0
      %4209 = vmatpush1.msra.mxu0 0.0
      %4210 = vmatprep.subr.mxu0 0.0
      %4211 = vmatpush1.msra.mxu0 0.0
      %4212 = vmatprep.subr.mxu0 0.0
      %4213 = vmatpush1.msra.mxu0 0.0
      %4214 = vmatprep.subr.mxu0 0.0
      %4215 = vmatpush1.msra.mxu0 0.0
      %4216 = vmatprep.subr.mxu0 0.0
      %4217 = vmatpush1.msra.mxu0 0.0
      %4218 = vmatprep.subr.mxu0 0.0
      %4219 = vmatpush1.msra.mxu0 0.0
      %4220 = vmatprep.subr.mxu0 0.0
      %4221 = vmatpush1.msra.mxu0 0.0
      %4222 = vmatprep.subr.mxu0 0.0
      %4223 = vmatpush1.msra.mxu0 0.0
      %4224 = vmatprep.subr.mxu0 0.0
      %4225 = vmatpush1.msra.mxu0 0.0
      %4226 = vmatprep.mubr.f32.mxu0 0.0
      %4227 = vmatmul.mubr.f32.gmra.mrb[0].mxu0 %v4040
      %v4228 = vpop.f32.mrb[0].mxu0
      %v4229 = vadd.f32 0.0, %v4228
      %v4230 = vpop.f32.mrb[0].mxu0
      %4231 = vmatprep.mubr.f32.mxu0 0.0
      %4232 = vmatmul.mubr.f32.gmra.mrb[0].mxu0 %v4043
      %v4233 = vpop.f32.mrb[0].mxu0
      %v4234 = vadd.f32 0.0, %v4233
      %v4235 = vpop.f32.mrb[0].mxu0
      %4236 = vmatprep.mubr.f32.mxu0 0.0
      %4237 = vmatmul.mubr.f32.gmra.mrb[0].mxu0 %v4046
      %v4238 = vpop.f32.mrb[0].mxu0
      %v4239 = vadd.f32 0.0, %v4238
      %v4240 = vpop.f32.mrb[0].mxu0
      %4241 = vmatprep.mubr.f32.mxu0 0.0
      %4242 = vmatmul.mubr.f32.gmra.mrb[0].mxu0 %v4049
      %v4243 = vpop.f32.mrb[0].mxu0
      %v4244 = vadd.f32 0.0, %v4243
      %v4245 = vpop.f32.mrb[0].mxu0
      %4246 = vmatprep.mubr.f32.mxu0 0.0
      %4247 = vmatmul.mubr.f32.gmra.mrb[0].mxu0 %v4052
      %v4248 = vpop.f32.mrb[0].mxu0
      %v4249 = vadd.f32 0.0, %v4248
      %v4250 = vpop.f32.mrb[0].mxu0
      %4251 = vmatprep.mubr.f32.mxu0 0.0
      %4252 = vmatmul.mubr.f32.gmra.mrb[0].mxu0 %v4055
      %v4253 = vpop.f32.mrb[0].mxu0
      %v4254 = vadd.f32 0.0, %v4253
      %v4255 = vpop.f32.mrb[0].mxu0
      %4256 = vmatprep.mubr.f32.mxu0 0.0
      %4257 = vmatmul.mubr.f32.gmra.mrb[0].mxu0 %v4058
      %v4258 = vpop.f32.mrb[0].mxu0
      %v4259 = vadd.f32 0.0, %v4258
      %v4260 = vpop.f32.mrb[0].mxu0
      %4261 = vmatprep.mubr.f32.mxu0 0.0
      %4262 = vmatmul.mubr.f32.gmra.mrb[0].mxu0 %v4061
      %v4263 = vpop.f32.mrb[0].mxu0
      %v4264 = vadd.f32 0.0, %v4263
      %v4265 = vpop.f32.mrb[0].mxu0
      %4266 = vmatprep.mubr.f32.mxu0 0.0
      %4267 = vmatmul.mubr.f32.gmra.mrb[0].mxu0 %v4064
      %v4268 = vpop.f32.mrb[0].mxu0
      %v4269 = vadd.f32 0.0, %v4268
      %v4270 = vpop.f32.mrb[0].mxu0
      %4271 = vmatprep.mubr.f32.mxu0 0.0
      %4272 = vmatmul.mubr.f32.gmra.mrb[0].mxu0 %v4067
      %v4273 = vpop.f32.mrb[0].mxu0
      %v4274 = vadd.f32 0.0, %v4273
      %v4275 = vpop.f32.mrb[0].mxu0
      %4276 = vmatprep.mubr.f32.mxu0 0.0
      %4277 = vmatmul.mubr.f32.gmra.mrb[0].mxu0 %v4070
      %v4278 = vpop.f32.mrb[0].mxu0
      %v4279 = vadd.f32 0.0, %v4278
      %v4280 = vpop.f32.mrb[0].mxu0
      %4281 = vmatprep.mubr.f32.mxu0 0.0
      %4282 = vmatmul.mubr.f32.gmra.mrb[0].mxu0 %v4073
      %v4283 = vpop.f32.mrb[0].mxu0
      %v4284 = vadd.f32 0.0, %v4283
      %v4285 = vpop.f32.mrb[0].mxu0
      %4286 = vmatprep.mubr.f32.mxu0 0.0
      %4287 = vmatmul.mubr.f32.gmra.mrb[0].mxu0 %v4076
      %v4288 = vpop.f32.mrb[0].mxu0
      %v4289 = vadd.f32 0.0, %v4288
      %v4290 = vpop.f32.mrb[0].mxu0
      %4291 = vmatprep.mubr.f32.mxu0 0.0
      %4292 = vmatmul.mubr.f32.gmra.mrb[0].mxu0 %v4079
      %v4293 = vpop.f32.mrb[0].mxu0
      %v4294 = vadd.f32 0.0, %v4293
      %v4295 = vpop.f32.mrb[0].mxu0
      %4296 = vmatprep.mubr.f32.mxu0 0.0
      %4297 = vmatmul.mubr.f32.gmra.mrb[0].mxu0 %v4082
      %v4298 = vpop.f32.mrb[0].mxu0
      %v4299 = vadd.f32 0.0, %v4298
      %v4300 = vpop.f32.mrb[0].mxu0
      %4301 = vmatprep.mubr.f32.mxu0 0.0
      %4302 = vmatmul.mubr.f32.gmra.mrb[0].mxu0 %v4085
      %v4303 = vpop.f32.mrb[0].mxu0
      %v4304 = vadd.f32 0.0, %v4303
      %v4305 = vpop.f32.mrb[0].mxu0
      %4306 = vmatprep.mubr.f32.mxu0 0.0
      %4307 = vmatmul.mubr.f32.gmra.mrb[0].mxu0 %v4088
      %v4308 = vpop.f32.mrb[0].mxu0
      %v4309 = vadd.f32 0.0, %v4308
      %v4310 = vpop.f32.mrb[0].mxu0
      %4311 = vmatprep.mubr.f32.mxu0 0.0
      %4312 = vmatmul.mubr.f32.gmra.mrb[0].mxu0 %v4091
      %v4313 = vpop.f32.mrb[0].mxu0
      %v4314 = vadd.f32 0.0, %v4313
      %v4315 = vpop.f32.mrb[0].mxu0
      %4316 = vmatprep.mubr.f32.mxu0 0.0
      %4317 = vmatmul.mubr.f32.gmra.mrb[0].mxu0 %v4094
      %v4318 = vpop.f32.mrb[0].mxu0
      %v4319 = vadd.f32 0.0, %v4318
      %v4320 = vpop.f32.mrb[0].mxu0
      %4321 = vmatprep.mubr.f32.mxu0 0.0
      %4322 = vmatmul.mubr.f32.gmra.mrb[0].mxu0 %v4097
      %v4323 = vpop.f32.mrb[0].mxu0
      %v4324 = vadd.f32 0.0, %v4323
      %v4325 = vpop.f32.mrb[0].mxu0
      %4326 = vmatprep.mubr.f32.mxu0 0.0
      %4327 = vmatmul.mubr.f32.gmra.mrb[0].mxu0 %v4100
      %v4328 = vpop.f32.mrb[0].mxu0
      %v4329 = vadd.f32 0.0, %v4328
      %v4330 = vpop.f32.mrb[0].mxu0
      %4331 = vmatprep.mubr.f32.mxu0 0.0
      %4332 = vmatmul.mubr.f32.gmra.mrb[0].mxu0 %v4103
      %v4333 = vpop.f32.mrb[0].mxu0
      %v4334 = vadd.f32 0.0, %v4333
      %v4335 = vpop.f32.mrb[0].mxu0
      %4336 = vmatprep.mubr.f32.mxu0 0.0
      %4337 = vmatmul.mubr.f32.gmra.mrb[0].mxu0 %v4106
      %v4338 = vpop.f32.mrb[0].mxu0
      %v4339 = vadd.f32 0.0, %v4338
      %v4340 = vpop.f32.mrb[0].mxu0
      %4341 = vmatprep.mubr.f32.mxu0 0.0
      %4342 = vmatmul.mubr.f32.gmra.mrb[0].mxu0 %v4109
      %v4343 = vpop.f32.mrb[0].mxu0
      %v4344 = vadd.f32 0.0, %v4343
      %v4345 = vpop.f32.mrb[0].mxu0
      %4346 = vmatprep.mubr.f32.mxu0 0.0
      %4347 = vmatmul.mubr.f32.gmra.mrb[0].mxu0 %v4112
      %v4348 = vpop.f32.mrb[0].mxu0
      %v4349 = vadd.f32 0.0, %v4348
      %v4350 = vpop.f32.mrb[0].mxu0
      %4351 = vmatprep.mubr.f32.mxu0 0.0
      %4352 = vmatmul.mubr.f32.gmra.mrb[0].mxu0 %v4115
      %v4353 = vpop.f32.mrb[0].mxu0
      %v4354 = vadd.f32 0.0, %v4353
      %v4355 = vpop.f32.mrb[0].mxu0
      %4356 = vmatprep.mubr.f32.mxu0 0.0
      %4357 = vmatmul.mubr.f32.gmra.mrb[0].mxu0 %v4118
      %v4358 = vpop.f32.mrb[0].mxu0
      %v4359 = vadd.f32 0.0, %v4358
      %v4360 = vpop.f32.mrb[0].mxu0
      %4361 = vmatprep.mubr.f32.mxu0 0.0
      %4362 = vmatmul.mubr.f32.gmra.mrb[0].mxu0 %v4121
      %v4363 = vpop.f32.mrb[0].mxu0
      %v4364 = vadd.f32 0.0, %v4363
      %v4365 = vpop.f32.mrb[0].mxu0
      %4366 = vmatprep.mubr.f32.mxu0 0.0
      %4367 = vmatmul.mubr.f32.gmra.mrb[0].mxu0 %v4124
      %v4368 = vpop.f32.mrb[0].mxu0
      %v4369 = vadd.f32 0.0, %v4368
      %v4370 = vpop.f32.mrb[0].mxu0
      %4371 = vmatprep.mubr.f32.mxu0 0.0
      %4372 = vmatmul.mubr.f32.gmra.mrb[0].mxu0 %v4127
      %v4373 = vpop.f32.mrb[0].mxu0
      %v4374 = vadd.f32 0.0, %v4373
      %v4375 = vpop.f32.mrb[0].mxu0
      %4376 = vmatprep.mubr.f32.mxu0 0.0
      %4377 = vmatmul.mubr.f32.gmra.mrb[0].mxu0 %v4130
      %v4378 = vpop.f32.mrb[0].mxu0
      %v4379 = vadd.f32 0.0, %v4378
      %v4380 = vpop.f32.mrb[0].mxu0
      %4381 = vmatprep.mubr.f32.mxu0 0.0
      %4382 = vmatmul.mubr.f32.gmra.mrb[0].mxu0 %v4133
      %v4383 = vpop.f32.mrb[0].mxu0
      %v4384 = vadd.f32 0.0, %v4383
      %v4385 = vpop.f32.mrb[0].mxu0
      %4386 = vmatprep.mubr.f32.mxu0 0.0
      %4387 = vmatmul.mubr.f32.gmra.mrb[0].mxu0 %v4136
      %v4388 = vpop.f32.mrb[0].mxu0
      %v4389 = vadd.f32 0.0, %v4388
      %v4390 = vpop.f32.mrb[0].mxu0
      %4391 = vmatprep.mubr.f32.mxu0 0.0
      %4392 = vmatmul.mubr.f32.gmra.mrb[0].mxu0 %v4139
      %v4393 = vpop.f32.mrb[0].mxu0
      %v4394 = vadd.f32 0.0, %v4393
      %v4395 = vpop.f32.mrb[0].mxu0
      %4396 = vmatprep.mubr.f32.mxu0 0.0
      %4397 = vmatmul.mubr.f32.gmra.mrb[0].mxu0 %v4142
      %v4398 = vpop.f32.mrb[0].mxu0
      %v4399 = vadd.f32 0.0, %v4398
      %v4400 = vpop.f32.mrb[0].mxu0
      %4401 = vmatprep.mubr.f32.mxu0 0.0
      %4402 = vmatmul.mubr.f32.gmra.mrb[0].mxu0 %v4145
      %v4403 = vpop.f32.mrb[0].mxu0
      %v4404 = vadd.f32 0.0, %v4403
      %v4405 = vpop.f32.mrb[0].mxu0
      %4406 = vmatprep.mubr.f32.mxu0 0.0
      %4407 = vmatmul.mubr.f32.gmra.mrb[0].mxu0 %v4148
      %v4408 = vpop.f32.mrb[0].mxu0
      %v4409 = vadd.f32 0.0, %v4408
      %v4410 = vpop.f32.mrb[0].mxu0
      %4411 = vmatprep.mubr.f32.mxu0 0.0
      %4412 = vmatmul.mubr.f32.gmra.mrb[0].mxu0 %v4151
      %v4413 = vpop.f32.mrb[0].mxu0
      %v4414 = vadd.f32 0.0, %v4413
      %v4415 = vpop.f32.mrb[0].mxu0
      %4416 = vmatprep.mubr.f32.mxu0 0.0
      %4417 = vmatmul.mubr.f32.gmra.mrb[0].mxu0 %v4154
      %v4418 = vpop.f32.mrb[0].mxu0
      %v4419 = vadd.f32 0.0, %v4418
      %v4420 = vpop.f32.mrb[0].mxu0
      %4421 = vmatprep.mubr.f32.mxu0 0.0
      %4422 = vmatmul.mubr.f32.gmra.mrb[0].mxu0 %v4157
      %v4423 = vpop.f32.mrb[0].mxu0
      %v4424 = vadd.f32 0.0, %v4423
      %v4425 = vpop.f32.mrb[0].mxu0
      %4426 = vmatprep.mubr.f32.mxu0 0.0
      %4427 = vmatmul.mubr.f32.gmra.mrb[0].mxu0 %v4160
      %v4428 = vpop.f32.mrb[0].mxu0
      %v4429 = vadd.f32 0.0, %v4428
      %v4430 = vpop.f32.mrb[0].mxu0
      %4431 = vdwg.mxu0
      %v4432 = vadd.f32 %v3948, %v4229
      %v4433 = vadd.f32 %v3949, %v4234
      %v4434 = vadd.f32 %v3950, %v4239
      %v4435 = vadd.f32 %v3951, %v4244
      %v4436 = vadd.f32 %v3952, %v4249
      %v4437 = vadd.f32 %v3953, %v4254
      %v4438 = vadd.f32 %v3954, %v4259
      %v4439 = vadd.f32 %v3955, %v4264
      %v4440 = vadd.f32 %v3956, %v4269
      %v4441 = vadd.f32 %v3957, %v4274
      %v4442 = vadd.f32 %v3958, %v4279
      %v4443 = vadd.f32 %v3959, %v4284
      %v4444 = vadd.f32 %v3960, %v4289
      %v4445 = vadd.f32 %v3961, %v4294
      %v4446 = vadd.f32 %v3962, %v4299
      %v4447 = vadd.f32 %v3963, %v4304
      %v4448 = vadd.f32 %v3964, %v4309
      %v4449 = vadd.f32 %v3965, %v4314
      %v4450 = vadd.f32 %v3966, %v4319
      %v4451 = vadd.f32 %v3967, %v4324
      %v4452 = vadd.f32 %v3968, %v4329
      %v4453 = vadd.f32 %v3969, %v4334
      %v4454 = vadd.f32 %v3970, %v4339
      %v4455 = vadd.f32 %v3971, %v4344
      %v4456 = vadd.f32 %v3972, %v4349
      %v4457 = vadd.f32 %v3973, %v4354
      %v4458 = vadd.f32 %v3974, %v4359
      %v4459 = vadd.f32 %v3975, %v4364
      %v4460 = vadd.f32 %v3976, %v4369
      %v4461 = vadd.f32 %v3977, %v4374
      %v4462 = vadd.f32 %v3978, %v4379
      %v4463 = vadd.f32 %v3979, %v4384
      %v4464 = vadd.f32 %v3980, %v4389
      %v4465 = vadd.f32 %v3981, %v4394
      %v4466 = vadd.f32 %v3982, %v4399
      %v4467 = vadd.f32 %v3983, %v4404
      %v4468 = vadd.f32 %v3984, %v4409
      %v4469 = vadd.f32 %v3985, %v4414
      %v4470 = vadd.f32 %v3986, %v4419
      %v4471 = vadd.f32 %v3987, %v4424
      %v4472 = vadd.f32 %v3988, %v4429
      %v4473 = vld [vmem:[%s2] sm:$0x1]
      %v4475 = vlaneseq
      %v4476 = vshrl.u32 %v4475, 7
      %v4477 = vsub.s32 0, %v4476
      %v4478 = vrot.slane %v4473, %v4477
      %v4480 = vadd.f32 %v4432, %v4478
      %v4481 = vadd.f32 %v4433, %v4478
      %v4482 = vadd.f32 %v4434, %v4478
      %v4483 = vadd.f32 %v4435, %v4478
      %v4484 = vadd.f32 %v4436, %v4478
      %v4485 = vadd.f32 %v4437, %v4478
      %v4486 = vadd.f32 %v4438, %v4478
      %v4487 = vadd.f32 %v4439, %v4478
      %v4488 = vadd.f32 %v4440, %v4478
      %v4489 = vadd.f32 %v4441, %v4478
      %v4490 = vadd.f32 %v4442, %v4478
      %v4491 = vadd.f32 %v4443, %v4478
      %v4492 = vadd.f32 %v4444, %v4478
      %v4493 = vadd.f32 %v4445, %v4478
      %v4494 = vadd.f32 %v4446, %v4478
      %v4495 = vadd.f32 %v4447, %v4478
      %v4496 = vadd.f32 %v4448, %v4478
      %v4497 = vadd.f32 %v4449, %v4478
      %v4498 = vadd.f32 %v4450, %v4478
      %v4499 = vadd.f32 %v4451, %v4478
      %v4500 = vadd.f32 %v4452, %v4478
      %v4501 = vadd.f32 %v4453, %v4478
      %v4502 = vadd.f32 %v4454, %v4478
      %v4503 = vadd.f32 %v4455, %v4478
      %v4504 = vadd.f32 %v4456, %v4478
      %v4505 = vadd.f32 %v4457, %v4478
      %v4506 = vadd.f32 %v4458, %v4478
      %v4507 = vadd.f32 %v4459, %v4478
      %v4508 = vadd.f32 %v4460, %v4478
      %v4509 = vadd.f32 %v4461, %v4478
      %v4510 = vadd.f32 %v4462, %v4478
      %v4511 = vadd.f32 %v4463, %v4478
      %v4512 = vadd.f32 %v4464, %v4478
      %v4513 = vadd.f32 %v4465, %v4478
      %v4514 = vadd.f32 %v4466, %v4478
      %v4515 = vadd.f32 %v4467, %v4478
      %v4516 = vadd.f32 %v4468, %v4478
      %v4517 = vadd.f32 %v4469, %v4478
      %v4518 = vadd.f32 %v4470, %v4478
      %v4519 = vadd.f32 %v4471, %v4478
      %v4520 = vadd.f32 %v4472, %v4478
      %s4521 = sld [smem:[#allocation2]]
      %vm4522 = vcmp.ge.f32.partialorder %v4480, 0.0
      %vm4523 = vcmp.ge.f32.partialorder %v4481, 0.0
      %vm4524 = vcmp.ge.f32.partialorder %v4482, 0.0
      %vm4525 = vcmp.ge.f32.partialorder %v4483, 0.0
      %vm4526 = vcmp.ge.f32.partialorder %v4484, 0.0
      %vm4527 = vcmp.ge.f32.partialorder %v4485, 0.0
      %vm4528 = vcmp.ge.f32.partialorder %v4486, 0.0
      %vm4529 = vcmp.ge.f32.partialorder %v4487, 0.0
      %vm4530 = vcmp.ge.f32.partialorder %v4488, 0.0
      %vm4531 = vcmp.ge.f32.partialorder %v4489, 0.0
      %vm4532 = vcmp.ge.f32.partialorder %v4490, 0.0
      %vm4533 = vcmp.ge.f32.partialorder %v4491, 0.0
      %vm4534 = vcmp.ge.f32.partialorder %v4492, 0.0
      %vm4535 = vcmp.ge.f32.partialorder %v4493, 0.0
      %vm4536 = vcmp.ge.f32.partialorder %v4494, 0.0
      %vm4537 = vcmp.ge.f32.partialorder %v4495, 0.0
      %vm4538 = vcmp.ge.f32.partialorder %v4496, 0.0
      %vm4539 = vcmp.ge.f32.partialorder %v4497, 0.0
      %vm4540 = vcmp.ge.f32.partialorder %v4498, 0.0
      %vm4541 = vcmp.ge.f32.partialorder %v4499, 0.0
      %vm4542 = vcmp.ge.f32.partialorder %v4500, 0.0
      %vm4543 = vcmp.ge.f32.partialorder %v4501, 0.0
      %vm4544 = vcmp.ge.f32.partialorder %v4502, 0.0
      %vm4545 = vcmp.ge.f32.partialorder %v4503, 0.0
      %vm4546 = vcmp.ge.f32.partialorder %v4504, 0.0
      %vm4547 = vcmp.ge.f32.partialorder %v4505, 0.0
      %vm4548 = vcmp.ge.f32.partialorder %v4506, 0.0
      %vm4549 = vcmp.ge.f32.partialorder %v4507, 0.0
      %vm4550 = vcmp.ge.f32.partialorder %v4508, 0.0
      %vm4551 = vcmp.ge.f32.partialorder %v4509, 0.0
      %vm4552 = vcmp.ge.f32.partialorder %v4510, 0.0
      %vm4553 = vcmp.ge.f32.partialorder %v4511, 0.0
      %vm4554 = vcmp.ge.f32.partialorder %v4512, 0.0
      %vm4555 = vcmp.ge.f32.partialorder %v4513, 0.0
      %vm4556 = vcmp.ge.f32.partialorder %v4514, 0.0
      %vm4557 = vcmp.ge.f32.partialorder %v4515, 0.0
      %vm4558 = vcmp.ge.f32.partialorder %v4516, 0.0
      %vm4559 = vcmp.ge.f32.partialorder %v4517, 0.0
      %vm4560 = vcmp.ge.f32.partialorder %v4518, 0.0
      %vm4561 = vcmp.ge.f32.partialorder %v4519, 0.0
      %vm4562 = vcmp.ge.f32.partialorder %v4520, 0.0
      %v4563 = vstv %s4521
      %v4564 = vmul.f32 %v4563, %v4480
      %v4565 = vmul.f32 %v4563, %v4481
      %v4566 = vmul.f32 %v4563, %v4482
      %v4567 = vmul.f32 %v4563, %v4483
      %v4568 = vmul.f32 %v4563, %v4484
      %v4569 = vmul.f32 %v4563, %v4485
      %v4570 = vmul.f32 %v4563, %v4486
      %v4571 = vmul.f32 %v4563, %v4487
      %v4572 = vmul.f32 %v4563, %v4488
      %v4573 = vmul.f32 %v4563, %v4489
      %v4574 = vmul.f32 %v4563, %v4490
      %v4575 = vmul.f32 %v4563, %v4491
      %v4576 = vmul.f32 %v4563, %v4492
      %v4577 = vmul.f32 %v4563, %v4493
      %v4578 = vmul.f32 %v4563, %v4494
      %v4579 = vmul.f32 %v4563, %v4495
      %v4580 = vmul.f32 %v4563, %v4496
      %v4581 = vmul.f32 %v4563, %v4497
      %v4582 = vmul.f32 %v4563, %v4498
      %v4583 = vmul.f32 %v4563, %v4499
      %v4584 = vmul.f32 %v4563, %v4500
      %v4585 = vmul.f32 %v4563, %v4501
      %v4586 = vmul.f32 %v4563, %v4502
      %v4587 = vmul.f32 %v4563, %v4503
      %v4588 = vmul.f32 %v4563, %v4504
      %v4589 = vmul.f32 %v4563, %v4505
      %v4590 = vmul.f32 %v4563, %v4506
      %v4591 = vmul.f32 %v4563, %v4507
      %v4592 = vmul.f32 %v4563, %v4508
      %v4593 = vmul.f32 %v4563, %v4509
      %v4594 = vmul.f32 %v4563, %v4510
      %v4595 = vmul.f32 %v4563, %v4511
      %v4596 = vmul.f32 %v4563, %v4512
      %v4597 = vmul.f32 %v4563, %v4513
      %v4598 = vmul.f32 %v4563, %v4514
      %v4599 = vmul.f32 %v4563, %v4515
      %v4600 = vmul.f32 %v4563, %v4516
      %v4601 = vmul.f32 %v4563, %v4517
      %v4602 = vmul.f32 %v4563, %v4518
      %v4603 = vmul.f32 %v4563, %v4519
      %v4604 = vmul.f32 %v4563, %v4520
      %v4605 = vsel %vm4522, %v4480, %v4564
      %v4606 = vsel %vm4523, %v4481, %v4565
      %v4607 = vsel %vm4524, %v4482, %v4566
      %v4608 = vsel %vm4525, %v4483, %v4567
      %v4609 = vsel %vm4526, %v4484, %v4568
      %v4610 = vsel %vm4527, %v4485, %v4569
      %v4611 = vsel %vm4528, %v4486, %v4570
      %v4612 = vsel %vm4529, %v4487, %v4571
      %v4613 = vsel %vm4530, %v4488, %v4572
      %v4614 = vsel %vm4531, %v4489, %v4573
      %v4615 = vsel %vm4532, %v4490, %v4574
      %v4616 = vsel %vm4533, %v4491, %v4575
      %v4617 = vsel %vm4534, %v4492, %v4576
      %v4618 = vsel %vm4535, %v4493, %v4577
      %v4619 = vsel %vm4536, %v4494, %v4578
      %v4620 = vsel %vm4537, %v4495, %v4579
      %v4621 = vsel %vm4538, %v4496, %v4580
      %v4622 = vsel %vm4539, %v4497, %v4581
      %v4623 = vsel %vm4540, %v4498, %v4582
      %v4624 = vsel %vm4541, %v4499, %v4583
      %v4625 = vsel %vm4542, %v4500, %v4584
      %v4626 = vsel %vm4543, %v4501, %v4585
      %v4627 = vsel %vm4544, %v4502, %v4586
      %v4628 = vsel %vm4545, %v4503, %v4587
      %v4629 = vsel %vm4546, %v4504, %v4588
      %v4630 = vsel %vm4547, %v4505, %v4589
      %v4631 = vsel %vm4548, %v4506, %v4590
      %v4632 = vsel %vm4549, %v4507, %v4591
      %v4633 = vsel %vm4550, %v4508, %v4592
      %v4634 = vsel %vm4551, %v4509, %v4593
      %v4635 = vsel %vm4552, %v4510, %v4594
      %v4636 = vsel %vm4553, %v4511, %v4595
      %v4637 = vsel %vm4554, %v4512, %v4596
      %v4638 = vsel %vm4555, %v4513, %v4597
      %v4639 = vsel %vm4556, %v4514, %v4598
      %v4640 = vsel %vm4557, %v4515, %v4599
      %v4641 = vsel %vm4558, %v4516, %v4600
      %v4642 = vsel %vm4559, %v4517, %v4601
      %v4643 = vsel %vm4560, %v4518, %v4602
      %v4644 = vsel %vm4561, %v4519, %v4603
      %v4645 = vsel %vm4562, %v4520, %v4604
      %vm4646 = vcmask 261120
      %4647 = vst.msk [vmem:[%s198] sm:$0xff] %vm4646, %v4605
      %4648 = vst.msk [vmem:[%s198 + $0x8] sm:$0xff] %vm4646, %v4606
      %4649 = vst.msk [vmem:[%s198 + $0x10] sm:$0xff] %vm4646, %v4607
      %4650 = vst.msk [vmem:[%s198 + $0x18] sm:$0xff] %vm4646, %v4608
      %4651 = vst.msk [vmem:[%s198 + $0x20] sm:$0xff] %vm4646, %v4609
      %4652 = vst.msk [vmem:[%s198 + $0x28] sm:$0xff] %vm4646, %v4610
      %4653 = vst.msk [vmem:[%s198 + $0x30] sm:$0xff] %vm4646, %v4611
      %4654 = vst.msk [vmem:[%s198 + $0x38] sm:$0xff] %vm4646, %v4612
      %4655 = vst.msk [vmem:[%s198 + $0x40] sm:$0xff] %vm4646, %v4613
      %4656 = vst.msk [vmem:[%s198 + $0x48] sm:$0xff] %vm4646, %v4614
      %4657 = vst.msk [vmem:[%s198 + $0x50] sm:$0xff] %vm4646, %v4615
      %4658 = vst.msk [vmem:[%s198 + $0x58] sm:$0xff] %vm4646, %v4616
      %4659 = vst.msk [vmem:[%s198 + $0x60] sm:$0xff] %vm4646, %v4617
      %4660 = vst.msk [vmem:[%s198 + $0x68] sm:$0xff] %vm4646, %v4618
      %4661 = vst.msk [vmem:[%s198 + $0x70] sm:$0xff] %vm4646, %v4619
      %4662 = vst.msk [vmem:[%s198 + $0x78] sm:$0xff] %vm4646, %v4620
      %4663 = vst.msk [vmem:[%s198 + $0x80] sm:$0xff] %vm4646, %v4621
      %4664 = vst.msk [vmem:[%s198 + $0x88] sm:$0xff] %vm4646, %v4622
      %4665 = vst.msk [vmem:[%s198 + $0x90] sm:$0xff] %vm4646, %v4623
      %4666 = vst.msk [vmem:[%s198 + $0x98] sm:$0xff] %vm4646, %v4624
      %4667 = vst.msk [vmem:[%s198 + $0xa0] sm:$0xff] %vm4646, %v4625
      %4668 = vst.msk [vmem:[%s198 + $0xa8] sm:$0xff] %vm4646, %v4626
      %4669 = vst.msk [vmem:[%s198 + $0xb0] sm:$0xff] %vm4646, %v4627
      %4670 = vst.msk [vmem:[%s198 + $0xb8] sm:$0xff] %vm4646, %v4628
      %4671 = vst.msk [vmem:[%s198 + $0xc0] sm:$0xff] %vm4646, %v4629
      %4672 = vst.msk [vmem:[%s198 + $0xc8] sm:$0xff] %vm4646, %v4630
      %4673 = vst.msk [vmem:[%s198 + $0xd0] sm:$0xff] %vm4646, %v4631
      %4674 = vst.msk [vmem:[%s198 + $0xd8] sm:$0xff] %vm4646, %v4632
      %4675 = vst.msk [vmem:[%s198 + $0xe0] sm:$0xff] %vm4646, %v4633
      %4676 = vst.msk [vmem:[%s198 + $0xe8] sm:$0xff] %vm4646, %v4634
      %4677 = vst.msk [vmem:[%s198 + $0xf0] sm:$0xff] %vm4646, %v4635
      %4678 = vst.msk [vmem:[%s198 + $0xf8] sm:$0xff] %vm4646, %v4636
      %4679 = vst.msk [vmem:[%s198 + $0x100] sm:$0xff] %vm4646, %v4637
      %4680 = vst.msk [vmem:[%s198 + $0x108] sm:$0xff] %vm4646, %v4638
      %4681 = vst.msk [vmem:[%s198 + $0x110] sm:$0xff] %vm4646, %v4639
      %4682 = vst.msk [vmem:[%s198 + $0x118] sm:$0xff] %vm4646, %v4640
      %4683 = vst.msk [vmem:[%s198 + $0x120] sm:$0xff] %vm4646, %v4641
      %4684 = vst.msk [vmem:[%s198 + $0x128] sm:$0xff] %vm4646, %v4642
      %4685 = vst.msk [vmem:[%s198 + $0x130] sm:$0xff] %vm4646, %v4643
      %4686 = vst.msk [vmem:[%s198 + $0x138] sm:$0xff] %vm4646, %v4644
      %4687 = vst.msk [vmem:[%s198 + $0x140] sm:$0xff] %vm4646, %v4645
      %p4688 = scmp.lt.s32.totalorder %s16, 1
      %s4689 = scalar_select %p4688, %s16, 1
      %s4690 = smul.addr %s4689, 41
      %s4691 = smul.addr %s4690, 8
      %s4692 = scalar_lea.vmem %s4, %s4691
      // Predicated region
      $region37: #{decoding_block_forward.4} parent=35 // pred_check
        %p4693 = pneg %p123
      $region38: #{decoding_block_forward.4} parent=35 // pred_check_branch
        %4695 = sbr.rel (%p4693) target = $region40
      $region39: #{decoding_block_forward.4} parent=35 // pred_region
        _
      $region40: #{decoding_block_forward.4} parent=35 // pred_fallthru
        _
    $region36: #{decoding_block_forward.4} parent=5 // pred_fallthru
      _
    %p4696 = scmp.le.s32.totalorder 2, %s11
    // Predicated region
    $region41: #{decoding_block_forward.4} parent=5 // pred_check
      %p4697 = pneg %p4696
    $region42: #{decoding_block_forward.4} parent=5 // pred_check_branch
      %4699 = sbr.rel (%p4697) target = $region44
    $region43: #{decoding_block_forward.4} parent=5 // pred_region
      %s4700 = ssub.s32 %s11, 2
      // Predicated region
      $region45: #{decoding_block_forward.4} parent=43 // pred_check
        %p4701 = pneg %p129
      $region46: #{decoding_block_forward.4} parent=43 // pred_check_branch
        %4703 = sbr.rel (%p4701) target = $region48
      $region47: #{decoding_block_forward.4} parent=43 // pred_region
        %p4704 = scmp.lt.s32.totalorder %s17, 1
        %s4705 = scalar_select %p4704, %s17, 1
        %s4706 = smul.addr %s4705, 41
        %s4707 = smul.addr %s4706, 8
        %s4708 = scalar_lea.vmem %s4, %s4707
      $region48: #{decoding_block_forward.4} parent=43 // pred_fallthru
        _
    $region44: #{decoding_block_forward.4} parent=5 // pred_fallthru
      _
  $region6: #{decoding_block_forward.4} parent=0 // loop_footer
    %s15 = sadd.s32 1, %s11
  $region7: #{decoding_block_forward.4} parent=0 // loop_footer_branch
    %10 = sbr.rel target = $region3
  $region8: #{decoding_block_forward.4} parent=0 // loop_exit
    _

// kernel: decoding_block_forward.5
$region0: #{decoding_block_forward.5}
  #allocation0 [shape = 'u32[]', space=smem, size = 0x4, offset = 0x4, fixed_abs, tag = 'smem constant byte address 0x4 - core index']
  #allocation1 [shape = 'u32[144,128]{1,0:T(1,128)}', space=vmem, size = 0x12000, scoped, tag = 'internal scratch']
  #allocation2 [shape = 'f32[1]{0:T(128)S(6)}', space=smem, size = 0x200, scoped, tag = 'scoped memory for decoding_block_forward.5']
  %s0 = inlined_call_operand.vmem [shape: f32[2,368,32], index: 0, kind: input, shape index: {}]
  %s1 = inlined_call_operand.vmem [shape: f32[9,32,32], index: 1, kind: input, shape index: {}]
  %s2 = inlined_call_operand.vmem [shape: f32[1,32], index: 2, kind: input, shape index: {}]
  %s3 = inlined_call_operand.<no memory space> [shape: f32[1], index: 3, kind: input, shape index: {}]
  %s4 = inlined_call_operand.vmem [shape: f32[2,328,32], index: 4, kind: output, shape index: {}]
  %s5 = sld [smem:[#allocation0]]
  $region49: #{decoding_block_forward.5} parent=0
    _
  %s7 = ssub.s32 1, %s5
  %s8 = scalar_select 0, %s7, %s5
  %9 = sst [smem:[#allocation2]] %s3
  loop: start=0, step=1, limit=4
  $region2: #{decoding_block_forward.5} parent=0 // loop_pre_header
    _
  $region3: #{decoding_block_forward.5} parent=0 // loop_header
    %s11 = sphi 0, %s15
    %p12 = scmp.ge.s32.totalorder %s11, 4
    %s21 = sphi 0, %s23
    %s24 = sphi 0, %s21
    %s25 = sphi 0, %s24
    %s41 = sphi 0, %s25
    %s45 = sphi 0, %s45
    %s47 = sphi 0, %s45
    %s48 = sphi 0, %s47
    %s62 = sphi 0, %s48
    %s66 = sphi 0, %s66
    %s68 = sphi 0, %s66
    %s69 = sphi 0, %s68
    %s83 = sphi 0, %s69
    %s87 = sphi 0, %s87
    %s89 = sphi 0, %s87
    %s90 = sphi 0, %s89
    %s104 = sphi 0, %s90
    %s110 = sphi 0, %s112
    %s113 = sphi 0, %s110
    %s114 = sphi 0, %s113
    %s130 = sphi 0, %s114
  $region4: #{decoding_block_forward.5} parent=0 // loop_header_branch
    %14 = sbr.rel (%p12) target = $region8
  $region5: #{decoding_block_forward.5} parent=0 // loop_body
    %s16 = ssub.s32 %s11, 1
    %s17 = ssub.s32 %s11, 2
    %s18 = sadd.s32 %s11, 1
    %s19 = ssub.s32 %s11, %s18
    %p20 = scmp.eq.s32.totalorder %s19, 0
    %s22 = sadd.s32 %s21, 1
    %s23 = scalar_select %p20, %s21, %s22
    %p26 = pneg %p20
    %p27 = scmp.eq.s32.totalorder %s11, 1
    %p28 = por %p26, %p27
    %p29 = scmp.ne.s32.totalorder %s21, %s24
    %p30 = scmp.eq.s32.totalorder %s11, 0
    %p31 = por %p29, %p30
    %p32 = scmp.ne.s32.totalorder %s21, %s24
    %p33 = scmp.eq.s32.totalorder %s16, 1
    %p34 = por %p32, %p33
    %p35 = scmp.ne.s32.totalorder %s24, %s25
    %p36 = scmp.eq.s32.totalorder %s16, 0
    %p37 = por %p35, %p36
    %p38 = scmp.ne.s32.totalorder %s24, %s25
    %p39 = scmp.eq.s32.totalorder %s17, 1
    %p40 = por %p38, %p39
    %p42 = scmp.ne.s32.totalorder %s25, %s41
    %p43 = scmp.eq.s32.totalorder %s17, 0
    %p44 = por %p42, %p43
    %s46 = sadd.s32 %s45, 1
    %p49 = scmp.eq.s32.totalorder %s11, 1
    %p50 = scmp.ne.s32.totalorder %s45, %s47
    %p51 = scmp.eq.s32.totalorder %s11, 0
    %p52 = por %p50, %p51
    %p53 = scmp.ne.s32.totalorder %s45, %s47
    %p54 = scmp.eq.s32.totalorder %s16, 1
    %p55 = por %p53, %p54
    %p56 = scmp.ne.s32.totalorder %s47, %s48
    %p57 = scmp.eq.s32.totalorder %s16, 0
    %p58 = por %p56, %p57
    %p59 = scmp.ne.s32.totalorder %s47, %s48
    %p60 = scmp.eq.s32.totalorder %s17, 1
    %p61 = por %p59, %p60
    %p63 = scmp.ne.s32.totalorder %s48, %s62
    %p64 = scmp.eq.s32.totalorder %s17, 0
    %p65 = por %p63, %p64
    %s67 = sadd.s32 %s66, 1
    %p70 = scmp.eq.s32.totalorder %s11, 1
    %p71 = scmp.ne.s32.totalorder %s66, %s68
    %p72 = scmp.eq.s32.totalorder %s11, 0
    %p73 = por %p71, %p72
    %p74 = scmp.ne.s32.totalorder %s66, %s68
    %p75 = scmp.eq.s32.totalorder %s16, 1
    %p76 = por %p74, %p75
    %p77 = scmp.ne.s32.totalorder %s68, %s69
    %p78 = scmp.eq.s32.totalorder %s16, 0
    %p79 = por %p77, %p78
    %p80 = scmp.ne.s32.totalorder %s68, %s69
    %p81 = scmp.eq.s32.totalorder %s17, 1
    %p82 = por %p80, %p81
    %p84 = scmp.ne.s32.totalorder %s69, %s83
    %p85 = scmp.eq.s32.totalorder %s17, 0
    %p86 = por %p84, %p85
    %s88 = sadd.s32 %s87, 1
    %p91 = scmp.eq.s32.totalorder %s11, 1
    %p92 = scmp.ne.s32.totalorder %s87, %s89
    %p93 = scmp.eq.s32.totalorder %s11, 0
    %p94 = por %p92, %p93
    %p95 = scmp.ne.s32.totalorder %s87, %s89
    %p96 = scmp.eq.s32.totalorder %s16, 1
    %p97 = por %p95, %p96
    %p98 = scmp.ne.s32.totalorder %s89, %s90
    %p99 = scmp.eq.s32.totalorder %s16, 0
    %p100 = por %p98, %p99
    %p101 = scmp.ne.s32.totalorder %s89, %s90
    %p102 = scmp.eq.s32.totalorder %s17, 1
    %p103 = por %p101, %p102
    %p105 = scmp.ne.s32.totalorder %s90, %s104
    %p106 = scmp.eq.s32.totalorder %s17, 0
    %p107 = por %p105, %p106
    %s108 = ssub.s32 %s11, %s18
    %p109 = scmp.eq.s32.totalorder %s108, 0
    %s111 = sadd.s32 %s110, 1
    %s112 = scalar_select %p109, %s110, %s111
    %p115 = pneg %p109
    %p116 = scmp.eq.s32.totalorder %s11, 1
    %p117 = por %p115, %p116
    %p118 = scmp.ne.s32.totalorder %s110, %s113
    %p119 = scmp.eq.s32.totalorder %s11, 0
    %p120 = por %p118, %p119
    %p121 = scmp.ne.s32.totalorder %s110, %s113
    %p122 = scmp.eq.s32.totalorder %s16, 1
    %p123 = por %p121, %p122
    %p124 = scmp.ne.s32.totalorder %s113, %s114
    %p125 = scmp.eq.s32.totalorder %s16, 0
    %p126 = por %p124, %p125
    %p127 = scmp.ne.s32.totalorder %s113, %s114
    %p128 = scmp.eq.s32.totalorder %s17, 1
    %p129 = por %p127, %p128
    %p131 = scmp.ne.s32.totalorder %s114, %s130
    %p132 = scmp.eq.s32.totalorder %s17, 0
    %p133 = por %p131, %p132
    %p134 = scmp.le.s32.totalorder 1, %s11
    %p135 = scmp.lt.s32.totalorder %s11, 3
    %p136 = pnand %p134, %p135
    %p137 = pneg %p136
    // Predicated region
    $region9: #{decoding_block_forward.5} parent=5 // pred_check
      _
    $region10: #{decoding_block_forward.5} parent=5 // pred_check_branch
      %139 = sbr.rel (%p136) target = $region12
    $region11: #{decoding_block_forward.5} parent=5 // pred_region
      %s140 = ssub.s32 %s11, 1
      // Predicated region
      $region13: #{decoding_block_forward.5} parent=11 // pred_check
        %p141 = pneg %p58
      $region14: #{decoding_block_forward.5} parent=11 // pred_check_branch
        %143 = sbr.rel (%p141) target = $region16
      $region15: #{decoding_block_forward.5} parent=11 // pred_region
        _
      $region16: #{decoding_block_forward.5} parent=11 // pred_fallthru
        _
      // Predicated region
      $region17: #{decoding_block_forward.5} parent=11 // pred_check
        %p144 = pneg %p79
      $region18: #{decoding_block_forward.5} parent=11 // pred_check_branch
        %146 = sbr.rel (%p144) target = $region20
      $region19: #{decoding_block_forward.5} parent=11 // pred_region
        _
      $region20: #{decoding_block_forward.5} parent=11 // pred_fallthru
        _
      // Predicated region
      $region21: #{decoding_block_forward.5} parent=11 // pred_check
        %p147 = pneg %p100
      $region22: #{decoding_block_forward.5} parent=11 // pred_check_branch
        %149 = sbr.rel (%p147) target = $region24
      $region23: #{decoding_block_forward.5} parent=11 // pred_region
        _
      $region24: #{decoding_block_forward.5} parent=11 // pred_fallthru
        _
    $region12: #{decoding_block_forward.5} parent=5 // pred_fallthru
      _
    %p150 = scmp.lt.s32.totalorder %s11, 2
    // Predicated region
    $region25: #{decoding_block_forward.5} parent=5 // pred_check
      %p151 = pneg %p150
    $region26: #{decoding_block_forward.5} parent=5 // pred_check_branch
      %153 = sbr.rel (%p151) target = $region28
    $region27: #{decoding_block_forward.5} parent=5 // pred_region
      // Predicated region
      $region29: #{decoding_block_forward.5} parent=27 // pred_check
        %p154 = pneg %p31
      $region30: #{decoding_block_forward.5} parent=27 // pred_check_branch
        %156 = sbr.rel (%p154) target = $region32
      $region31: #{decoding_block_forward.5} parent=27 // pred_region
        %p157 = scmp.lt.s32.totalorder %s11, 1
        %s158 = scalar_select %p157, %s11, 1
        %s159 = smul.addr %s158, 46
        %s160 = smul.addr %s159, 8
        %s161 = scalar_lea.vmem %s0, %s160
      $region32: #{decoding_block_forward.5} parent=27 // pred_fallthru
        _
    $region28: #{decoding_block_forward.5} parent=5 // pred_fallthru
      _
    %p162 = scmp.le.s32.totalorder 1, %s11
    %p163 = scmp.lt.s32.totalorder %s11, 3
    %p164 = pnand %p162, %p163
    %p165 = pneg %p164
    // Predicated region
    $region33: #{decoding_block_forward.5} parent=5 // pred_check
      _
    $region34: #{decoding_block_forward.5} parent=5 // pred_check_branch
      %167 = sbr.rel (%p164) target = $region36
    $region35: #{decoding_block_forward.5} parent=5 // pred_region
      %s168 = ssub.s32 %s11, 1
      %p169 = scmp.lt.s32.totalorder %s16, 1
      %s170 = scalar_select %p169, %s16, 1
      %s171 = smul.addr %s170, 46
      %s172 = smul.addr %s171, 8
      %s173 = scalar_lea.vmem %s0, %s172
      %p174 = pneg %p37
      %p175 = pneg %p34
      %p176 = pneg %p58
      %p177 = pneg %p55
      %p178 = pneg %p79
      %p179 = pneg %p76
      %p180 = pneg %p100
      %p181 = pneg %p97
      %p182 = pneg %p126
      %p183 = pneg %p123
      %p184 = scmp.lt.s32.totalorder %s16, 1
      %s185 = scalar_select %p184, %s16, 1
      %s186 = smul.addr %s185, 41
      %s187 = smul.addr %s186, 8
      %s188 = scalar_lea.vmem %s4, %s187
      %p189 = scmp.lt.s32.totalorder %s16, 1
      %s190 = scalar_select %p189, %s16, 1
      %s191 = smul.addr %s190, 46
      %s192 = smul.addr %s191, 8
      %s193 = scalar_lea.vmem %s0, %s192
      %p194 = scmp.lt.s32.totalorder %s16, 1
      %s195 = scalar_select %p194, %s16, 1
      %s196 = smul.addr %s195, 41
      %s197 = smul.addr %s196, 8
      %s198 = scalar_lea.vmem %s4, %s197
      %v199 = vld [vmem:[%s193] sm:$0xff]
      %v200 = vld [vmem:[%s193 + $0x8] sm:$0xff]
      %v201 = vld [vmem:[%s193 + $0x10] sm:$0xff]
      %v202 = vld [vmem:[%s193 + $0x18] sm:$0xff]
      %v203 = vld [vmem:[%s193 + $0x20] sm:$0xff]
      %v204 = vld [vmem:[%s193 + $0x28] sm:$0xff]
      %v205 = vld [vmem:[%s193 + $0x30] sm:$0xff]
      %v206 = vld [vmem:[%s193 + $0x38] sm:$0xff]
      %v207 = vld [vmem:[%s193 + $0x40] sm:$0xff]
      %v208 = vld [vmem:[%s193 + $0x48] sm:$0xff]
      %v209 = vld [vmem:[%s193 + $0x50] sm:$0xff]
      %v210 = vld [vmem:[%s193 + $0x58] sm:$0xff]
      %v211 = vld [vmem:[%s193 + $0x60] sm:$0xff]
      %v212 = vld [vmem:[%s193 + $0x68] sm:$0xff]
      %v213 = vld [vmem:[%s193 + $0x70] sm:$0xff]
      %v214 = vld [vmem:[%s193 + $0x78] sm:$0xff]
      %v215 = vld [vmem:[%s193 + $0x80] sm:$0xff]
      %v216 = vld [vmem:[%s193 + $0x88] sm:$0xff]
      %v217 = vld [vmem:[%s193 + $0x90] sm:$0xff]
      %v218 = vld [vmem:[%s193 + $0x98] sm:$0xff]
      %v219 = vld [vmem:[%s193 + $0xa0] sm:$0xff]
      %v220 = vld [vmem:[%s193 + $0xa8] sm:$0xff]
      %v221 = vld [vmem:[%s193 + $0xb0] sm:$0xff]
      %v222 = vld [vmem:[%s193 + $0xb8] sm:$0xff]
      %v223 = vld [vmem:[%s193 + $0xc0] sm:$0xff]
      %v224 = vld [vmem:[%s193 + $0xc8] sm:$0xff]
      %v225 = vld [vmem:[%s193 + $0xd0] sm:$0xff]
      %v226 = vld [vmem:[%s193 + $0xd8] sm:$0xff]
      %v227 = vld [vmem:[%s193 + $0xe0] sm:$0xff]
      %v228 = vld [vmem:[%s193 + $0xe8] sm:$0xff]
      %v229 = vld [vmem:[%s193 + $0xf0] sm:$0xff]
      %v230 = vld [vmem:[%s193 + $0xf8] sm:$0xff]
      %v231 = vld [vmem:[%s193 + $0x100] sm:$0xff]
      %v232 = vld [vmem:[%s193 + $0x108] sm:$0xff]
      %v233 = vld [vmem:[%s193 + $0x110] sm:$0xff]
      %v234 = vld [vmem:[%s193 + $0x118] sm:$0xff]
      %v235 = vld [vmem:[%s193 + $0x120] sm:$0xff]
      %v236 = vld [vmem:[%s193 + $0x128] sm:$0xff]
      %v237 = vld [vmem:[%s193 + $0x130] sm:$0xff]
      %v238 = vld [vmem:[%s193 + $0x138] sm:$0xff]
      %v239 = vld [vmem:[%s193 + $0x140] sm:$0xff]
      %v240 = vld [vmem:[%s1] sm:$0xff]
      %v241 = vld [vmem:[%s1 + $0x8] sm:$0xff]
      %v242 = vld [vmem:[%s1 + $0x10] sm:$0xff]
      %v243 = vld [vmem:[%s1 + $0x18] sm:$0xff]
      %v244 = vld [vmem:[%s193 + $0x1] sm:$0xff]
      %v245 = vld [vmem:[%s193 + $0x9] sm:$0xff]
      %v246 = vld [vmem:[%s193 + $0x11] sm:$0xff]
      %v247 = vld [vmem:[%s193 + $0x19] sm:$0xff]
      %v248 = vld [vmem:[%s193 + $0x21] sm:$0xff]
      %v249 = vld [vmem:[%s193 + $0x29] sm:$0xff]
      %v250 = vld [vmem:[%s193 + $0x31] sm:$0xff]
      %v251 = vld [vmem:[%s193 + $0x39] sm:$0xff]
      %v252 = vld [vmem:[%s193 + $0x41] sm:$0xff]
      %v253 = vld [vmem:[%s193 + $0x49] sm:$0xff]
      %v254 = vld [vmem:[%s193 + $0x51] sm:$0xff]
      %v255 = vld [vmem:[%s193 + $0x59] sm:$0xff]
      %v256 = vld [vmem:[%s193 + $0x61] sm:$0xff]
      %v257 = vld [vmem:[%s193 + $0x69] sm:$0xff]
      %v258 = vld [vmem:[%s193 + $0x71] sm:$0xff]
      %v259 = vld [vmem:[%s193 + $0x79] sm:$0xff]
      %v260 = vld [vmem:[%s193 + $0x81] sm:$0xff]
      %v261 = vld [vmem:[%s193 + $0x89] sm:$0xff]
      %v262 = vld [vmem:[%s193 + $0x91] sm:$0xff]
      %v263 = vld [vmem:[%s193 + $0x99] sm:$0xff]
      %v264 = vld [vmem:[%s193 + $0xa1] sm:$0xff]
      %v265 = vld [vmem:[%s193 + $0xa9] sm:$0xff]
      %v266 = vld [vmem:[%s193 + $0xb1] sm:$0xff]
      %v267 = vld [vmem:[%s193 + $0xb9] sm:$0xff]
      %v268 = vld [vmem:[%s193 + $0xc1] sm:$0xff]
      %v269 = vld [vmem:[%s193 + $0xc9] sm:$0xff]
      %v270 = vld [vmem:[%s193 + $0xd1] sm:$0xff]
      %v271 = vld [vmem:[%s193 + $0xd9] sm:$0xff]
      %v272 = vld [vmem:[%s193 + $0xe1] sm:$0xff]
      %v273 = vld [vmem:[%s193 + $0xe9] sm:$0xff]
      %v274 = vld [vmem:[%s193 + $0xf1] sm:$0xff]
      %v275 = vld [vmem:[%s193 + $0xf9] sm:$0xff]
      %v276 = vld [vmem:[%s193 + $0x101] sm:$0xff]
      %v277 = vld [vmem:[%s193 + $0x109] sm:$0xff]
      %v278 = vld [vmem:[%s193 + $0x111] sm:$0xff]
      %v279 = vld [vmem:[%s193 + $0x119] sm:$0xff]
      %v280 = vld [vmem:[%s193 + $0x121] sm:$0xff]
      %v281 = vld [vmem:[%s193 + $0x129] sm:$0xff]
      %v282 = vld [vmem:[%s193 + $0x131] sm:$0xff]
      %v283 = vld [vmem:[%s193 + $0x139] sm:$0xff]
      %v284 = vld [vmem:[%s193 + $0x141] sm:$0xff]
      %s285 = scalar_lea.vmem %s1, 32
      %v286 = vld [vmem:[%s285] sm:$0xff]
      %v287 = vld [vmem:[%s285 + $0x8] sm:$0xff]
      %v288 = vld [vmem:[%s285 + $0x10] sm:$0xff]
      %v289 = vld [vmem:[%s285 + $0x18] sm:$0xff]
      %vm290 = vcmask 261120
      %v292 = vsel %vm290, %v244, 0
      %v295 = vsel %vm290, %v245, 0
      %v298 = vsel %vm290, %v246, 0
      %v301 = vsel %vm290, %v247, 0
      %v304 = vsel %vm290, %v248, 0
      %v307 = vsel %vm290, %v249, 0
      %v310 = vsel %vm290, %v250, 0
      %v313 = vsel %vm290, %v251, 0
      %v316 = vsel %vm290, %v252, 0
      %v319 = vsel %vm290, %v253, 0
      %v322 = vsel %vm290, %v254, 0
      %v325 = vsel %vm290, %v255, 0
      %v328 = vsel %vm290, %v256, 0
      %v331 = vsel %vm290, %v257, 0
      %v334 = vsel %vm290, %v258, 0
      %v337 = vsel %vm290, %v259, 0
      %v340 = vsel %vm290, %v260, 0
      %v343 = vsel %vm290, %v261, 0
      %v346 = vsel %vm290, %v262, 0
      %v349 = vsel %vm290, %v263, 0
      %v352 = vsel %vm290, %v264, 0
      %v355 = vsel %vm290, %v265, 0
      %v358 = vsel %vm290, %v266, 0
      %v361 = vsel %vm290, %v267, 0
      %v364 = vsel %vm290, %v268, 0
      %v367 = vsel %vm290, %v269, 0
      %v370 = vsel %vm290, %v270, 0
      %v373 = vsel %vm290, %v271, 0
      %v376 = vsel %vm290, %v272, 0
      %v379 = vsel %vm290, %v273, 0
      %v382 = vsel %vm290, %v274, 0
      %v385 = vsel %vm290, %v275, 0
      %v388 = vsel %vm290, %v276, 0
      %v391 = vsel %vm290, %v277, 0
      %v394 = vsel %vm290, %v278, 0
      %v397 = vsel %vm290, %v279, 0
      %v400 = vsel %vm290, %v280, 0
      %v403 = vsel %vm290, %v281, 0
      %v406 = vsel %vm290, %v282, 0
      %v409 = vsel %vm290, %v283, 0
      %v412 = vsel %vm290, %v284, 0
      %414 = vmatprep.subr.mxu0 0.0
      %415 = vmatpush1.msra.mxu0 %v286
      %416 = vmatprep.subr.mxu0 0.0
      %417 = vmatpush1.msra.mxu0 %v287
      %418 = vmatprep.subr.mxu0 0.0
      %419 = vmatpush1.msra.mxu0 %v288
      %420 = vmatprep.subr.mxu0 0.0
      %421 = vmatpush1.msra.mxu0 %v289
      %422 = vmatprep.subr.mxu0 0.0
      %423 = vmatpush1.msra.mxu0 0.0
      %424 = vmatprep.subr.mxu0 0.0
      %425 = vmatpush1.msra.mxu0 0.0
      %426 = vmatprep.subr.mxu0 0.0
      %427 = vmatpush1.msra.mxu0 0.0
      %428 = vmatprep.subr.mxu0 0.0
      %429 = vmatpush1.msra.mxu0 0.0
      %430 = vmatprep.subr.mxu0 0.0
      %431 = vmatpush1.msra.mxu0 0.0
      %432 = vmatprep.subr.mxu0 0.0
      %433 = vmatpush1.msra.mxu0 0.0
      %434 = vmatprep.subr.mxu0 0.0
      %435 = vmatpush1.msra.mxu0 0.0
      %436 = vmatprep.subr.mxu0 0.0
      %437 = vmatpush1.msra.mxu0 0.0
      %438 = vmatprep.subr.mxu0 0.0
      %439 = vmatpush1.msra.mxu0 0.0
      %440 = vmatprep.subr.mxu0 0.0
      %441 = vmatpush1.msra.mxu0 0.0
      %442 = vmatprep.subr.mxu0 0.0
      %443 = vmatpush1.msra.mxu0 0.0
      %444 = vmatprep.subr.mxu0 0.0
      %445 = vmatpush1.msra.mxu0 0.0
      %446 = vmatprep.subr.mxu0 0.0
      %447 = vmatpush1.msra.mxu0 0.0
      %448 = vmatprep.subr.mxu0 0.0
      %449 = vmatpush1.msra.mxu0 0.0
      %450 = vmatprep.subr.mxu0 0.0
      %451 = vmatpush1.msra.mxu0 0.0
      %452 = vmatprep.subr.mxu0 0.0
      %453 = vmatpush1.msra.mxu0 0.0
      %454 = vmatprep.subr.mxu0 0.0
      %455 = vmatpush1.msra.mxu0 0.0
      %456 = vmatprep.subr.mxu0 0.0
      %457 = vmatpush1.msra.mxu0 0.0
      %458 = vmatprep.subr.mxu0 0.0
      %459 = vmatpush1.msra.mxu0 0.0
      %460 = vmatprep.subr.mxu0 0.0
      %461 = vmatpush1.msra.mxu0 0.0
      %462 = vmatprep.subr.mxu0 0.0
      %463 = vmatpush1.msra.mxu0 0.0
      %464 = vmatprep.subr.mxu0 0.0
      %465 = vmatpush1.msra.mxu0 0.0
      %466 = vmatprep.subr.mxu0 0.0
      %467 = vmatpush1.msra.mxu0 0.0
      %468 = vmatprep.subr.mxu0 0.0
      %469 = vmatpush1.msra.mxu0 0.0
      %470 = vmatprep.subr.mxu0 0.0
      %471 = vmatpush1.msra.mxu0 0.0
      %472 = vmatprep.subr.mxu0 0.0
      %473 = vmatpush1.msra.mxu0 0.0
      %474 = vmatprep.subr.mxu0 0.0
      %475 = vmatpush1.msra.mxu0 0.0
      %476 = vmatprep.subr.mxu0 0.0
      %477 = vmatpush1.msra.mxu0 0.0
      %478 = vmatprep.mubr.f32.mxu0 0.0
      %479 = vmatmul.mubr.f32.gmra.mrb[0].mxu0 %v292
      %v480 = vpop.f32.mrb[0].mxu0
      %v481 = vadd.f32 0.0, %v480
      %v482 = vpop.f32.mrb[0].mxu0
      %483 = vmatprep.mubr.f32.mxu0 0.0
      %484 = vmatmul.mubr.f32.gmra.mrb[0].mxu0 %v295
      %v485 = vpop.f32.mrb[0].mxu0
      %v486 = vadd.f32 0.0, %v485
      %v487 = vpop.f32.mrb[0].mxu0
      %488 = vmatprep.mubr.f32.mxu0 0.0
      %489 = vmatmul.mubr.f32.gmra.mrb[0].mxu0 %v298
      %v490 = vpop.f32.mrb[0].mxu0
      %v491 = vadd.f32 0.0, %v490
      %v492 = vpop.f32.mrb[0].mxu0
      %493 = vmatprep.mubr.f32.mxu0 0.0
      %494 = vmatmul.mubr.f32.gmra.mrb[0].mxu0 %v301
      %v495 = vpop.f32.mrb[0].mxu0
      %v496 = vadd.f32 0.0, %v495
      %v497 = vpop.f32.mrb[0].mxu0
      %498 = vmatprep.mubr.f32.mxu0 0.0
      %499 = vmatmul.mubr.f32.gmra.mrb[0].mxu0 %v304
      %v500 = vpop.f32.mrb[0].mxu0
      %v501 = vadd.f32 0.0, %v500
      %v502 = vpop.f32.mrb[0].mxu0
      %503 = vmatprep.mubr.f32.mxu0 0.0
      %504 = vmatmul.mubr.f32.gmra.mrb[0].mxu0 %v307
      %v505 = vpop.f32.mrb[0].mxu0
      %v506 = vadd.f32 0.0, %v505
      %v507 = vpop.f32.mrb[0].mxu0
      %508 = vmatprep.mubr.f32.mxu0 0.0
      %509 = vmatmul.mubr.f32.gmra.mrb[0].mxu0 %v310
      %v510 = vpop.f32.mrb[0].mxu0
      %v511 = vadd.f32 0.0, %v510
      %v512 = vpop.f32.mrb[0].mxu0
      %513 = vmatprep.mubr.f32.mxu0 0.0
      %514 = vmatmul.mubr.f32.gmra.mrb[0].mxu0 %v313
      %v515 = vpop.f32.mrb[0].mxu0
      %v516 = vadd.f32 0.0, %v515
      %v517 = vpop.f32.mrb[0].mxu0
      %518 = vmatprep.mubr.f32.mxu0 0.0
      %519 = vmatmul.mubr.f32.gmra.mrb[0].mxu0 %v316
      %v520 = vpop.f32.mrb[0].mxu0
      %v521 = vadd.f32 0.0, %v520
      %v522 = vpop.f32.mrb[0].mxu0
      %523 = vmatprep.mubr.f32.mxu0 0.0
      %524 = vmatmul.mubr.f32.gmra.mrb[0].mxu0 %v319
      %v525 = vpop.f32.mrb[0].mxu0
      %v526 = vadd.f32 0.0, %v525
      %v527 = vpop.f32.mrb[0].mxu0
      %528 = vmatprep.mubr.f32.mxu0 0.0
      %529 = vmatmul.mubr.f32.gmra.mrb[0].mxu0 %v322
      %v530 = vpop.f32.mrb[0].mxu0
      %v531 = vadd.f32 0.0, %v530
      %v532 = vpop.f32.mrb[0].mxu0
      %533 = vmatprep.mubr.f32.mxu0 0.0
      %534 = vmatmul.mubr.f32.gmra.mrb[0].mxu0 %v325
      %v535 = vpop.f32.mrb[0].mxu0
      %v536 = vadd.f32 0.0, %v535
      %v537 = vpop.f32.mrb[0].mxu0
      %538 = vmatprep.mubr.f32.mxu0 0.0
      %539 = vmatmul.mubr.f32.gmra.mrb[0].mxu0 %v328
      %v540 = vpop.f32.mrb[0].mxu0
      %v541 = vadd.f32 0.0, %v540
      %v542 = vpop.f32.mrb[0].mxu0
      %543 = vmatprep.mubr.f32.mxu0 0.0
      %544 = vmatmul.mubr.f32.gmra.mrb[0].mxu0 %v331
      %v545 = vpop.f32.mrb[0].mxu0
      %v546 = vadd.f32 0.0, %v545
      %v547 = vpop.f32.mrb[0].mxu0
      %548 = vmatprep.mubr.f32.mxu0 0.0
      %549 = vmatmul.mubr.f32.gmra.mrb[0].mxu0 %v334
      %v550 = vpop.f32.mrb[0].mxu0
      %v551 = vadd.f32 0.0, %v550
      %v552 = vpop.f32.mrb[0].mxu0
      %553 = vmatprep.mubr.f32.mxu0 0.0
      %554 = vmatmul.mubr.f32.gmra.mrb[0].mxu0 %v337
      %v555 = vpop.f32.mrb[0].mxu0
      %v556 = vadd.f32 0.0, %v555
      %v557 = vpop.f32.mrb[0].mxu0
      %558 = vmatprep.mubr.f32.mxu0 0.0
      %559 = vmatmul.mubr.f32.gmra.mrb[0].mxu0 %v340
      %v560 = vpop.f32.mrb[0].mxu0
      %v561 = vadd.f32 0.0, %v560
      %v562 = vpop.f32.mrb[0].mxu0
      %563 = vmatprep.mubr.f32.mxu0 0.0
      %564 = vmatmul.mubr.f32.gmra.mrb[0].mxu0 %v343
      %v565 = vpop.f32.mrb[0].mxu0
      %v566 = vadd.f32 0.0, %v565
      %v567 = vpop.f32.mrb[0].mxu0
      %568 = vmatprep.mubr.f32.mxu0 0.0
      %569 = vmatmul.mubr.f32.gmra.mrb[0].mxu0 %v346
      %v570 = vpop.f32.mrb[0].mxu0
      %v571 = vadd.f32 0.0, %v570
      %v572 = vpop.f32.mrb[0].mxu0
      %573 = vmatprep.mubr.f32.mxu0 0.0
      %574 = vmatmul.mubr.f32.gmra.mrb[0].mxu0 %v349
      %v575 = vpop.f32.mrb[0].mxu0
      %v576 = vadd.f32 0.0, %v575
      %v577 = vpop.f32.mrb[0].mxu0
      %578 = vmatprep.mubr.f32.mxu0 0.0
      %579 = vmatmul.mubr.f32.gmra.mrb[0].mxu0 %v352
      %v580 = vpop.f32.mrb[0].mxu0
      %v581 = vadd.f32 0.0, %v580
      %v582 = vpop.f32.mrb[0].mxu0
      %583 = vmatprep.mubr.f32.mxu0 0.0
      %584 = vmatmul.mubr.f32.gmra.mrb[0].mxu0 %v355
      %v585 = vpop.f32.mrb[0].mxu0
      %v586 = vadd.f32 0.0, %v585
      %v587 = vpop.f32.mrb[0].mxu0
      %588 = vmatprep.mubr.f32.mxu0 0.0
      %589 = vmatmul.mubr.f32.gmra.mrb[0].mxu0 %v358
      %v590 = vpop.f32.mrb[0].mxu0
      %v591 = vadd.f32 0.0, %v590
      %v592 = vpop.f32.mrb[0].mxu0
      %593 = vmatprep.mubr.f32.mxu0 0.0
      %594 = vmatmul.mubr.f32.gmra.mrb[0].mxu0 %v361
      %v595 = vpop.f32.mrb[0].mxu0
      %v596 = vadd.f32 0.0, %v595
      %v597 = vpop.f32.mrb[0].mxu0
      %598 = vmatprep.mubr.f32.mxu0 0.0
      %599 = vmatmul.mubr.f32.gmra.mrb[0].mxu0 %v364
      %v600 = vpop.f32.mrb[0].mxu0
      %v601 = vadd.f32 0.0, %v600
      %v602 = vpop.f32.mrb[0].mxu0
      %603 = vmatprep.mubr.f32.mxu0 0.0
      %604 = vmatmul.mubr.f32.gmra.mrb[0].mxu0 %v367
      %v605 = vpop.f32.mrb[0].mxu0
      %v606 = vadd.f32 0.0, %v605
      %v607 = vpop.f32.mrb[0].mxu0
      %608 = vmatprep.mubr.f32.mxu0 0.0
      %609 = vmatmul.mubr.f32.gmra.mrb[0].mxu0 %v370
      %v610 = vpop.f32.mrb[0].mxu0
      %v611 = vadd.f32 0.0, %v610
      %v612 = vpop.f32.mrb[0].mxu0
      %613 = vmatprep.mubr.f32.mxu0 0.0
      %614 = vmatmul.mubr.f32.gmra.mrb[0].mxu0 %v373
      %v615 = vpop.f32.mrb[0].mxu0
      %v616 = vadd.f32 0.0, %v615
      %v617 = vpop.f32.mrb[0].mxu0
      %618 = vmatprep.mubr.f32.mxu0 0.0
      %619 = vmatmul.mubr.f32.gmra.mrb[0].mxu0 %v376
      %v620 = vpop.f32.mrb[0].mxu0
      %v621 = vadd.f32 0.0, %v620
      %v622 = vpop.f32.mrb[0].mxu0
      %623 = vmatprep.mubr.f32.mxu0 0.0
      %624 = vmatmul.mubr.f32.gmra.mrb[0].mxu0 %v379
      %v625 = vpop.f32.mrb[0].mxu0
      %v626 = vadd.f32 0.0, %v625
      %v627 = vpop.f32.mrb[0].mxu0
      %628 = vmatprep.mubr.f32.mxu0 0.0
      %629 = vmatmul.mubr.f32.gmra.mrb[0].mxu0 %v382
      %v630 = vpop.f32.mrb[0].mxu0
      %v631 = vadd.f32 0.0, %v630
      %v632 = vpop.f32.mrb[0].mxu0
      %633 = vmatprep.mubr.f32.mxu0 0.0
      %634 = vmatmul.mubr.f32.gmra.mrb[0].mxu0 %v385
      %v635 = vpop.f32.mrb[0].mxu0
      %v636 = vadd.f32 0.0, %v635
      %v637 = vpop.f32.mrb[0].mxu0
      %638 = vmatprep.mubr.f32.mxu0 0.0
      %639 = vmatmul.mubr.f32.gmra.mrb[0].mxu0 %v388
      %v640 = vpop.f32.mrb[0].mxu0
      %v641 = vadd.f32 0.0, %v640
      %v642 = vpop.f32.mrb[0].mxu0
      %643 = vmatprep.mubr.f32.mxu0 0.0
      %644 = vmatmul.mubr.f32.gmra.mrb[0].mxu0 %v391
      %v645 = vpop.f32.mrb[0].mxu0
      %v646 = vadd.f32 0.0, %v645
      %v647 = vpop.f32.mrb[0].mxu0
      %648 = vmatprep.mubr.f32.mxu0 0.0
      %649 = vmatmul.mubr.f32.gmra.mrb[0].mxu0 %v394
      %v650 = vpop.f32.mrb[0].mxu0
      %v651 = vadd.f32 0.0, %v650
      %v652 = vpop.f32.mrb[0].mxu0
      %653 = vmatprep.mubr.f32.mxu0 0.0
      %654 = vmatmul.mubr.f32.gmra.mrb[0].mxu0 %v397
      %v655 = vpop.f32.mrb[0].mxu0
      %v656 = vadd.f32 0.0, %v655
      %v657 = vpop.f32.mrb[0].mxu0
      %658 = vmatprep.mubr.f32.mxu0 0.0
      %659 = vmatmul.mubr.f32.gmra.mrb[0].mxu0 %v400
      %v660 = vpop.f32.mrb[0].mxu0
      %v661 = vadd.f32 0.0, %v660
      %v662 = vpop.f32.mrb[0].mxu0
      %663 = vmatprep.mubr.f32.mxu0 0.0
      %664 = vmatmul.mubr.f32.gmra.mrb[0].mxu0 %v403
      %v665 = vpop.f32.mrb[0].mxu0
      %v666 = vadd.f32 0.0, %v665
      %v667 = vpop.f32.mrb[0].mxu0
      %668 = vmatprep.mubr.f32.mxu0 0.0
      %669 = vmatmul.mubr.f32.gmra.mrb[0].mxu0 %v406
      %v670 = vpop.f32.mrb[0].mxu0
      %v671 = vadd.f32 0.0, %v670
      %v672 = vpop.f32.mrb[0].mxu0
      %673 = vmatprep.mubr.f32.mxu0 0.0
      %674 = vmatmul.mubr.f32.gmra.mrb[0].mxu0 %v409
      %v675 = vpop.f32.mrb[0].mxu0
      %v676 = vadd.f32 0.0, %v675
      %v677 = vpop.f32.mrb[0].mxu0
      %678 = vmatprep.mubr.f32.mxu0 0.0
      %679 = vmatmul.mubr.f32.gmra.mrb[0].mxu0 %v412
      %v680 = vpop.f32.mrb[0].mxu0
      %v681 = vadd.f32 0.0, %v680
      %v682 = vpop.f32.mrb[0].mxu0
      %683 = vdwg.mxu0
      %v685 = vsel %vm290, %v199, 0
      %v688 = vsel %vm290, %v200, 0
      %v691 = vsel %vm290, %v201, 0
      %v694 = vsel %vm290, %v202, 0
      %v697 = vsel %vm290, %v203, 0
      %v700 = vsel %vm290, %v204, 0
      %v703 = vsel %vm290, %v205, 0
      %v706 = vsel %vm290, %v206, 0
      %v709 = vsel %vm290, %v207, 0
      %v712 = vsel %vm290, %v208, 0
      %v715 = vsel %vm290, %v209, 0
      %v718 = vsel %vm290, %v210, 0
      %v721 = vsel %vm290, %v211, 0
      %v724 = vsel %vm290, %v212, 0
      %v727 = vsel %vm290, %v213, 0
      %v730 = vsel %vm290, %v214, 0
      %v733 = vsel %vm290, %v215, 0
      %v736 = vsel %vm290, %v216, 0
      %v739 = vsel %vm290, %v217, 0
      %v742 = vsel %vm290, %v218, 0
      %v745 = vsel %vm290, %v219, 0
      %v748 = vsel %vm290, %v220, 0
      %v751 = vsel %vm290, %v221, 0
      %v754 = vsel %vm290, %v222, 0
      %v757 = vsel %vm290, %v223, 0
      %v760 = vsel %vm290, %v224, 0
      %v763 = vsel %vm290, %v225, 0
      %v766 = vsel %vm290, %v226, 0
      %v769 = vsel %vm290, %v227, 0
      %v772 = vsel %vm290, %v228, 0
      %v775 = vsel %vm290, %v229, 0
      %v778 = vsel %vm290, %v230, 0
      %v781 = vsel %vm290, %v231, 0
      %v784 = vsel %vm290, %v232, 0
      %v787 = vsel %vm290, %v233, 0
      %v790 = vsel %vm290, %v234, 0
      %v793 = vsel %vm290, %v235, 0
      %v796 = vsel %vm290, %v236, 0
      %v799 = vsel %vm290, %v237, 0
      %v802 = vsel %vm290, %v238, 0
      %v805 = vsel %vm290, %v239, 0
      %807 = vmatprep.subr.mxu0 0.0
      %808 = vmatpush1.msra.mxu0 %v240
      %809 = vmatprep.subr.mxu0 0.0
      %810 = vmatpush1.msra.mxu0 %v241
      %811 = vmatprep.subr.mxu0 0.0
      %812 = vmatpush1.msra.mxu0 %v242
      %813 = vmatprep.subr.mxu0 0.0
      %814 = vmatpush1.msra.mxu0 %v243
      %815 = vmatprep.subr.mxu0 0.0
      %816 = vmatpush1.msra.mxu0 0.0
      %817 = vmatprep.subr.mxu0 0.0
      %818 = vmatpush1.msra.mxu0 0.0
      %819 = vmatprep.subr.mxu0 0.0
      %820 = vmatpush1.msra.mxu0 0.0
      %821 = vmatprep.subr.mxu0 0.0
      %822 = vmatpush1.msra.mxu0 0.0
      %823 = vmatprep.subr.mxu0 0.0
      %824 = vmatpush1.msra.mxu0 0.0
      %825 = vmatprep.subr.mxu0 0.0
      %826 = vmatpush1.msra.mxu0 0.0
      %827 = vmatprep.subr.mxu0 0.0
      %828 = vmatpush1.msra.mxu0 0.0
      %829 = vmatprep.subr.mxu0 0.0
      %830 = vmatpush1.msra.mxu0 0.0
      %831 = vmatprep.subr.mxu0 0.0
      %832 = vmatpush1.msra.mxu0 0.0
      %833 = vmatprep.subr.mxu0 0.0
      %834 = vmatpush1.msra.mxu0 0.0
      %835 = vmatprep.subr.mxu0 0.0
      %836 = vmatpush1.msra.mxu0 0.0
      %837 = vmatprep.subr.mxu0 0.0
      %838 = vmatpush1.msra.mxu0 0.0
      %839 = vmatprep.subr.mxu0 0.0
      %840 = vmatpush1.msra.mxu0 0.0
      %841 = vmatprep.subr.mxu0 0.0
      %842 = vmatpush1.msra.mxu0 0.0
      %843 = vmatprep.subr.mxu0 0.0
      %844 = vmatpush1.msra.mxu0 0.0
      %845 = vmatprep.subr.mxu0 0.0
      %846 = vmatpush1.msra.mxu0 0.0
      %847 = vmatprep.subr.mxu0 0.0
      %848 = vmatpush1.msra.mxu0 0.0
      %849 = vmatprep.subr.mxu0 0.0
      %850 = vmatpush1.msra.mxu0 0.0
      %851 = vmatprep.subr.mxu0 0.0
      %852 = vmatpush1.msra.mxu0 0.0
      %853 = vmatprep.subr.mxu0 0.0
      %854 = vmatpush1.msra.mxu0 0.0
      %855 = vmatprep.subr.mxu0 0.0
      %856 = vmatpush1.msra.mxu0 0.0
      %857 = vmatprep.subr.mxu0 0.0
      %858 = vmatpush1.msra.mxu0 0.0
      %859 = vmatprep.subr.mxu0 0.0
      %860 = vmatpush1.msra.mxu0 0.0
      %861 = vmatprep.subr.mxu0 0.0
      %862 = vmatpush1.msra.mxu0 0.0
      %863 = vmatprep.subr.mxu0 0.0
      %864 = vmatpush1.msra.mxu0 0.0
      %865 = vmatprep.subr.mxu0 0.0
      %866 = vmatpush1.msra.mxu0 0.0
      %867 = vmatprep.subr.mxu0 0.0
      %868 = vmatpush1.msra.mxu0 0.0
      %869 = vmatprep.subr.mxu0 0.0
      %870 = vmatpush1.msra.mxu0 0.0
      %871 = vmatprep.mubr.f32.mxu0 0.0
      %872 = vmatmul.mubr.f32.gmra.mrb[0].mxu0 %v685
      %v873 = vpop.f32.mrb[0].mxu0
      %v874 = vadd.f32 %v481, %v873
      %v875 = vpop.f32.mrb[0].mxu0
      %876 = vmatprep.mubr.f32.mxu0 0.0
      %877 = vmatmul.mubr.f32.gmra.mrb[0].mxu0 %v688
      %v878 = vpop.f32.mrb[0].mxu0
      %v879 = vadd.f32 %v486, %v878
      %v880 = vpop.f32.mrb[0].mxu0
      %881 = vmatprep.mubr.f32.mxu0 0.0
      %882 = vmatmul.mubr.f32.gmra.mrb[0].mxu0 %v691
      %v883 = vpop.f32.mrb[0].mxu0
      %v884 = vadd.f32 %v491, %v883
      %v885 = vpop.f32.mrb[0].mxu0
      %886 = vmatprep.mubr.f32.mxu0 0.0
      %887 = vmatmul.mubr.f32.gmra.mrb[0].mxu0 %v694
      %v888 = vpop.f32.mrb[0].mxu0
      %v889 = vadd.f32 %v496, %v888
      %v890 = vpop.f32.mrb[0].mxu0
      %891 = vmatprep.mubr.f32.mxu0 0.0
      %892 = vmatmul.mubr.f32.gmra.mrb[0].mxu0 %v697
      %v893 = vpop.f32.mrb[0].mxu0
      %v894 = vadd.f32 %v501, %v893
      %v895 = vpop.f32.mrb[0].mxu0
      %896 = vmatprep.mubr.f32.mxu0 0.0
      %897 = vmatmul.mubr.f32.gmra.mrb[0].mxu0 %v700
      %v898 = vpop.f32.mrb[0].mxu0
      %v899 = vadd.f32 %v506, %v898
      %v900 = vpop.f32.mrb[0].mxu0
      %901 = vmatprep.mubr.f32.mxu0 0.0
      %902 = vmatmul.mubr.f32.gmra.mrb[0].mxu0 %v703
      %v903 = vpop.f32.mrb[0].mxu0
      %v904 = vadd.f32 %v511, %v903
      %v905 = vpop.f32.mrb[0].mxu0
      %906 = vmatprep.mubr.f32.mxu0 0.0
      %907 = vmatmul.mubr.f32.gmra.mrb[0].mxu0 %v706
      %v908 = vpop.f32.mrb[0].mxu0
      %v909 = vadd.f32 %v516, %v908
      %v910 = vpop.f32.mrb[0].mxu0
      %911 = vmatprep.mubr.f32.mxu0 0.0
      %912 = vmatmul.mubr.f32.gmra.mrb[0].mxu0 %v709
      %v913 = vpop.f32.mrb[0].mxu0
      %v914 = vadd.f32 %v521, %v913
      %v915 = vpop.f32.mrb[0].mxu0
      %916 = vmatprep.mubr.f32.mxu0 0.0
      %917 = vmatmul.mubr.f32.gmra.mrb[0].mxu0 %v712
      %v918 = vpop.f32.mrb[0].mxu0
      %v919 = vadd.f32 %v526, %v918
      %v920 = vpop.f32.mrb[0].mxu0
      %921 = vmatprep.mubr.f32.mxu0 0.0
      %922 = vmatmul.mubr.f32.gmra.mrb[0].mxu0 %v715
      %v923 = vpop.f32.mrb[0].mxu0
      %v924 = vadd.f32 %v531, %v923
      %v925 = vpop.f32.mrb[0].mxu0
      %926 = vmatprep.mubr.f32.mxu0 0.0
      %927 = vmatmul.mubr.f32.gmra.mrb[0].mxu0 %v718
      %v928 = vpop.f32.mrb[0].mxu0
      %v929 = vadd.f32 %v536, %v928
      %v930 = vpop.f32.mrb[0].mxu0
      %931 = vmatprep.mubr.f32.mxu0 0.0
      %932 = vmatmul.mubr.f32.gmra.mrb[0].mxu0 %v721
      %v933 = vpop.f32.mrb[0].mxu0
      %v934 = vadd.f32 %v541, %v933
      %v935 = vpop.f32.mrb[0].mxu0
      %936 = vmatprep.mubr.f32.mxu0 0.0
      %937 = vmatmul.mubr.f32.gmra.mrb[0].mxu0 %v724
      %v938 = vpop.f32.mrb[0].mxu0
      %v939 = vadd.f32 %v546, %v938
      %v940 = vpop.f32.mrb[0].mxu0
      %941 = vmatprep.mubr.f32.mxu0 0.0
      %942 = vmatmul.mubr.f32.gmra.mrb[0].mxu0 %v727
      %v943 = vpop.f32.mrb[0].mxu0
      %v944 = vadd.f32 %v551, %v943
      %v945 = vpop.f32.mrb[0].mxu0
      %946 = vmatprep.mubr.f32.mxu0 0.0
      %947 = vmatmul.mubr.f32.gmra.mrb[0].mxu0 %v730
      %v948 = vpop.f32.mrb[0].mxu0
      %v949 = vadd.f32 %v556, %v948
      %v950 = vpop.f32.mrb[0].mxu0
      %951 = vmatprep.mubr.f32.mxu0 0.0
      %952 = vmatmul.mubr.f32.gmra.mrb[0].mxu0 %v733
      %v953 = vpop.f32.mrb[0].mxu0
      %v954 = vadd.f32 %v561, %v953
      %v955 = vpop.f32.mrb[0].mxu0
      %956 = vmatprep.mubr.f32.mxu0 0.0
      %957 = vmatmul.mubr.f32.gmra.mrb[0].mxu0 %v736
      %v958 = vpop.f32.mrb[0].mxu0
      %v959 = vadd.f32 %v566, %v958
      %v960 = vpop.f32.mrb[0].mxu0
      %961 = vmatprep.mubr.f32.mxu0 0.0
      %962 = vmatmul.mubr.f32.gmra.mrb[0].mxu0 %v739
      %v963 = vpop.f32.mrb[0].mxu0
      %v964 = vadd.f32 %v571, %v963
      %v965 = vpop.f32.mrb[0].mxu0
      %966 = vmatprep.mubr.f32.mxu0 0.0
      %967 = vmatmul.mubr.f32.gmra.mrb[0].mxu0 %v742
      %v968 = vpop.f32.mrb[0].mxu0
      %v969 = vadd.f32 %v576, %v968
      %v970 = vpop.f32.mrb[0].mxu0
      %971 = vmatprep.mubr.f32.mxu0 0.0
      %972 = vmatmul.mubr.f32.gmra.mrb[0].mxu0 %v745
      %v973 = vpop.f32.mrb[0].mxu0
      %v974 = vadd.f32 %v581, %v973
      %v975 = vpop.f32.mrb[0].mxu0
      %976 = vmatprep.mubr.f32.mxu0 0.0
      %977 = vmatmul.mubr.f32.gmra.mrb[0].mxu0 %v748
      %v978 = vpop.f32.mrb[0].mxu0
      %v979 = vadd.f32 %v586, %v978
      %v980 = vpop.f32.mrb[0].mxu0
      %981 = vmatprep.mubr.f32.mxu0 0.0
      %982 = vmatmul.mubr.f32.gmra.mrb[0].mxu0 %v751
      %v983 = vpop.f32.mrb[0].mxu0
      %v984 = vadd.f32 %v591, %v983
      %v985 = vpop.f32.mrb[0].mxu0
      %986 = vmatprep.mubr.f32.mxu0 0.0
      %987 = vmatmul.mubr.f32.gmra.mrb[0].mxu0 %v754
      %v988 = vpop.f32.mrb[0].mxu0
      %v989 = vadd.f32 %v596, %v988
      %v990 = vpop.f32.mrb[0].mxu0
      %991 = vmatprep.mubr.f32.mxu0 0.0
      %992 = vmatmul.mubr.f32.gmra.mrb[0].mxu0 %v757
      %v993 = vpop.f32.mrb[0].mxu0
      %v994 = vadd.f32 %v601, %v993
      %v995 = vpop.f32.mrb[0].mxu0
      %996 = vmatprep.mubr.f32.mxu0 0.0
      %997 = vmatmul.mubr.f32.gmra.mrb[0].mxu0 %v760
      %v998 = vpop.f32.mrb[0].mxu0
      %v999 = vadd.f32 %v606, %v998
      %v1000 = vpop.f32.mrb[0].mxu0
      %1001 = vmatprep.mubr.f32.mxu0 0.0
      %1002 = vmatmul.mubr.f32.gmra.mrb[0].mxu0 %v763
      %v1003 = vpop.f32.mrb[0].mxu0
      %v1004 = vadd.f32 %v611, %v1003
      %v1005 = vpop.f32.mrb[0].mxu0
      %1006 = vmatprep.mubr.f32.mxu0 0.0
      %1007 = vmatmul.mubr.f32.gmra.mrb[0].mxu0 %v766
      %v1008 = vpop.f32.mrb[0].mxu0
      %v1009 = vadd.f32 %v616, %v1008
      %v1010 = vpop.f32.mrb[0].mxu0
      %1011 = vmatprep.mubr.f32.mxu0 0.0
      %1012 = vmatmul.mubr.f32.gmra.mrb[0].mxu0 %v769
      %v1013 = vpop.f32.mrb[0].mxu0
      %v1014 = vadd.f32 %v621, %v1013
      %v1015 = vpop.f32.mrb[0].mxu0
      %1016 = vmatprep.mubr.f32.mxu0 0.0
      %1017 = vmatmul.mubr.f32.gmra.mrb[0].mxu0 %v772
      %v1018 = vpop.f32.mrb[0].mxu0
      %v1019 = vadd.f32 %v626, %v1018
      %v1020 = vpop.f32.mrb[0].mxu0
      %1021 = vmatprep.mubr.f32.mxu0 0.0
      %1022 = vmatmul.mubr.f32.gmra.mrb[0].mxu0 %v775
      %v1023 = vpop.f32.mrb[0].mxu0
      %v1024 = vadd.f32 %v631, %v1023
      %v1025 = vpop.f32.mrb[0].mxu0
      %1026 = vmatprep.mubr.f32.mxu0 0.0
      %1027 = vmatmul.mubr.f32.gmra.mrb[0].mxu0 %v778
      %v1028 = vpop.f32.mrb[0].mxu0
      %v1029 = vadd.f32 %v636, %v1028
      %v1030 = vpop.f32.mrb[0].mxu0
      %1031 = vmatprep.mubr.f32.mxu0 0.0
      %1032 = vmatmul.mubr.f32.gmra.mrb[0].mxu0 %v781
      %v1033 = vpop.f32.mrb[0].mxu0
      %v1034 = vadd.f32 %v641, %v1033
      %v1035 = vpop.f32.mrb[0].mxu0
      %1036 = vmatprep.mubr.f32.mxu0 0.0
      %1037 = vmatmul.mubr.f32.gmra.mrb[0].mxu0 %v784
      %v1038 = vpop.f32.mrb[0].mxu0
      %v1039 = vadd.f32 %v646, %v1038
      %v1040 = vpop.f32.mrb[0].mxu0
      %1041 = vmatprep.mubr.f32.mxu0 0.0
      %1042 = vmatmul.mubr.f32.gmra.mrb[0].mxu0 %v787
      %v1043 = vpop.f32.mrb[0].mxu0
      %v1044 = vadd.f32 %v651, %v1043
      %v1045 = vpop.f32.mrb[0].mxu0
      %1046 = vmatprep.mubr.f32.mxu0 0.0
      %1047 = vmatmul.mubr.f32.gmra.mrb[0].mxu0 %v790
      %v1048 = vpop.f32.mrb[0].mxu0
      %v1049 = vadd.f32 %v656, %v1048
      %v1050 = vpop.f32.mrb[0].mxu0
      %1051 = vmatprep.mubr.f32.mxu0 0.0
      %1052 = vmatmul.mubr.f32.gmra.mrb[0].mxu0 %v793
      %v1053 = vpop.f32.mrb[0].mxu0
      %v1054 = vadd.f32 %v661, %v1053
      %v1055 = vpop.f32.mrb[0].mxu0
      %1056 = vmatprep.mubr.f32.mxu0 0.0
      %1057 = vmatmul.mubr.f32.gmra.mrb[0].mxu0 %v796
      %v1058 = vpop.f32.mrb[0].mxu0
      %v1059 = vadd.f32 %v666, %v1058
      %v1060 = vpop.f32.mrb[0].mxu0
      %1061 = vmatprep.mubr.f32.mxu0 0.0
      %1062 = vmatmul.mubr.f32.gmra.mrb[0].mxu0 %v799
      %v1063 = vpop.f32.mrb[0].mxu0
      %v1064 = vadd.f32 %v671, %v1063
      %v1065 = vpop.f32.mrb[0].mxu0
      %1066 = vmatprep.mubr.f32.mxu0 0.0
      %1067 = vmatmul.mubr.f32.gmra.mrb[0].mxu0 %v802
      %v1068 = vpop.f32.mrb[0].mxu0
      %v1069 = vadd.f32 %v676, %v1068
      %v1070 = vpop.f32.mrb[0].mxu0
      %1071 = vmatprep.mubr.f32.mxu0 0.0
      %1072 = vmatmul.mubr.f32.gmra.mrb[0].mxu0 %v805
      %v1073 = vpop.f32.mrb[0].mxu0
      %v1074 = vadd.f32 %v681, %v1073
      %v1075 = vpop.f32.mrb[0].mxu0
      %1076 = vdwg.mxu0
      %v1077 = vld [vmem:[%s193 + $0x2] sm:$0xff]
      %v1078 = vld [vmem:[%s193 + $0xa] sm:$0xff]
      %v1079 = vld [vmem:[%s193 + $0x12] sm:$0xff]
      %v1080 = vld [vmem:[%s193 + $0x1a] sm:$0xff]
      %v1081 = vld [vmem:[%s193 + $0x22] sm:$0xff]
      %v1082 = vld [vmem:[%s193 + $0x2a] sm:$0xff]
      %v1083 = vld [vmem:[%s193 + $0x32] sm:$0xff]
      %v1084 = vld [vmem:[%s193 + $0x3a] sm:$0xff]
      %v1085 = vld [vmem:[%s193 + $0x42] sm:$0xff]
      %v1086 = vld [vmem:[%s193 + $0x4a] sm:$0xff]
      %v1087 = vld [vmem:[%s193 + $0x52] sm:$0xff]
      %v1088 = vld [vmem:[%s193 + $0x5a] sm:$0xff]
      %v1089 = vld [vmem:[%s193 + $0x62] sm:$0xff]
      %v1090 = vld [vmem:[%s193 + $0x6a] sm:$0xff]
      %v1091 = vld [vmem:[%s193 + $0x72] sm:$0xff]
      %v1092 = vld [vmem:[%s193 + $0x7a] sm:$0xff]
      %v1093 = vld [vmem:[%s193 + $0x82] sm:$0xff]
      %v1094 = vld [vmem:[%s193 + $0x8a] sm:$0xff]
      %v1095 = vld [vmem:[%s193 + $0x92] sm:$0xff]
      %v1096 = vld [vmem:[%s193 + $0x9a] sm:$0xff]
      %v1097 = vld [vmem:[%s193 + $0xa2] sm:$0xff]
      %v1098 = vld [vmem:[%s193 + $0xaa] sm:$0xff]
      %v1099 = vld [vmem:[%s193 + $0xb2] sm:$0xff]
      %v1100 = vld [vmem:[%s193 + $0xba] sm:$0xff]
      %v1101 = vld [vmem:[%s193 + $0xc2] sm:$0xff]
      %v1102 = vld [vmem:[%s193 + $0xca] sm:$0xff]
      %v1103 = vld [vmem:[%s193 + $0xd2] sm:$0xff]
      %v1104 = vld [vmem:[%s193 + $0xda] sm:$0xff]
      %v1105 = vld [vmem:[%s193 + $0xe2] sm:$0xff]
      %v1106 = vld [vmem:[%s193 + $0xea] sm:$0xff]
      %v1107 = vld [vmem:[%s193 + $0xf2] sm:$0xff]
      %v1108 = vld [vmem:[%s193 + $0xfa] sm:$0xff]
      %v1109 = vld [vmem:[%s193 + $0x102] sm:$0xff]
      %v1110 = vld [vmem:[%s193 + $0x10a] sm:$0xff]
      %v1111 = vld [vmem:[%s193 + $0x112] sm:$0xff]
      %v1112 = vld [vmem:[%s193 + $0x11a] sm:$0xff]
      %v1113 = vld [vmem:[%s193 + $0x122] sm:$0xff]
      %v1114 = vld [vmem:[%s193 + $0x12a] sm:$0xff]
      %v1115 = vld [vmem:[%s193 + $0x132] sm:$0xff]
      %v1116 = vld [vmem:[%s193 + $0x13a] sm:$0xff]
      %v1117 = vld [vmem:[%s193 + $0x142] sm:$0xff]
      %s1118 = scalar_lea.vmem %s1, 64
      %v1119 = vld [vmem:[%s1118] sm:$0xff]
      %v1120 = vld [vmem:[%s1118 + $0x8] sm:$0xff]
      %v1121 = vld [vmem:[%s1118 + $0x10] sm:$0xff]
      %v1122 = vld [vmem:[%s1118 + $0x18] sm:$0xff]
      %v1124 = vsel %vm290, %v1077, 0
      %v1127 = vsel %vm290, %v1078, 0
      %v1130 = vsel %vm290, %v1079, 0
      %v1133 = vsel %vm290, %v1080, 0
      %v1136 = vsel %vm290, %v1081, 0
      %v1139 = vsel %vm290, %v1082, 0
      %v1142 = vsel %vm290, %v1083, 0
      %v1145 = vsel %vm290, %v1084, 0
      %v1148 = vsel %vm290, %v1085, 0
      %v1151 = vsel %vm290, %v1086, 0
      %v1154 = vsel %vm290, %v1087, 0
      %v1157 = vsel %vm290, %v1088, 0
      %v1160 = vsel %vm290, %v1089, 0
      %v1163 = vsel %vm290, %v1090, 0
      %v1166 = vsel %vm290, %v1091, 0
      %v1169 = vsel %vm290, %v1092, 0
      %v1172 = vsel %vm290, %v1093, 0
      %v1175 = vsel %vm290, %v1094, 0
      %v1178 = vsel %vm290, %v1095, 0
      %v1181 = vsel %vm290, %v1096, 0
      %v1184 = vsel %vm290, %v1097, 0
      %v1187 = vsel %vm290, %v1098, 0
      %v1190 = vsel %vm290, %v1099, 0
      %v1193 = vsel %vm290, %v1100, 0
      %v1196 = vsel %vm290, %v1101, 0
      %v1199 = vsel %vm290, %v1102, 0
      %v1202 = vsel %vm290, %v1103, 0
      %v1205 = vsel %vm290, %v1104, 0
      %v1208 = vsel %vm290, %v1105, 0
      %v1211 = vsel %vm290, %v1106, 0
      %v1214 = vsel %vm290, %v1107, 0
      %v1217 = vsel %vm290, %v1108, 0
      %v1220 = vsel %vm290, %v1109, 0
      %v1223 = vsel %vm290, %v1110, 0
      %v1226 = vsel %vm290, %v1111, 0
      %v1229 = vsel %vm290, %v1112, 0
      %v1232 = vsel %vm290, %v1113, 0
      %v1235 = vsel %vm290, %v1114, 0
      %v1238 = vsel %vm290, %v1115, 0
      %v1241 = vsel %vm290, %v1116, 0
      %v1244 = vsel %vm290, %v1117, 0
      %1246 = vmatprep.subr.mxu0 0.0
      %1247 = vmatpush1.msra.mxu0 %v1119
      %1248 = vmatprep.subr.mxu0 0.0
      %1249 = vmatpush1.msra.mxu0 %v1120
      %1250 = vmatprep.subr.mxu0 0.0
      %1251 = vmatpush1.msra.mxu0 %v1121
      %1252 = vmatprep.subr.mxu0 0.0
      %1253 = vmatpush1.msra.mxu0 %v1122
      %1254 = vmatprep.subr.mxu0 0.0
      %1255 = vmatpush1.msra.mxu0 0.0
      %1256 = vmatprep.subr.mxu0 0.0
      %1257 = vmatpush1.msra.mxu0 0.0
      %1258 = vmatprep.subr.mxu0 0.0
      %1259 = vmatpush1.msra.mxu0 0.0
      %1260 = vmatprep.subr.mxu0 0.0
      %1261 = vmatpush1.msra.mxu0 0.0
      %1262 = vmatprep.subr.mxu0 0.0
      %1263 = vmatpush1.msra.mxu0 0.0
      %1264 = vmatprep.subr.mxu0 0.0
      %1265 = vmatpush1.msra.mxu0 0.0
      %1266 = vmatprep.subr.mxu0 0.0
      %1267 = vmatpush1.msra.mxu0 0.0
      %1268 = vmatprep.subr.mxu0 0.0
      %1269 = vmatpush1.msra.mxu0 0.0
      %1270 = vmatprep.subr.mxu0 0.0
      %1271 = vmatpush1.msra.mxu0 0.0
      %1272 = vmatprep.subr.mxu0 0.0
      %1273 = vmatpush1.msra.mxu0 0.0
      %1274 = vmatprep.subr.mxu0 0.0
      %1275 = vmatpush1.msra.mxu0 0.0
      %1276 = vmatprep.subr.mxu0 0.0
      %1277 = vmatpush1.msra.mxu0 0.0
      %1278 = vmatprep.subr.mxu0 0.0
      %1279 = vmatpush1.msra.mxu0 0.0
      %1280 = vmatprep.subr.mxu0 0.0
      %1281 = vmatpush1.msra.mxu0 0.0
      %1282 = vmatprep.subr.mxu0 0.0
      %1283 = vmatpush1.msra.mxu0 0.0
      %1284 = vmatprep.subr.mxu0 0.0
      %1285 = vmatpush1.msra.mxu0 0.0
      %1286 = vmatprep.subr.mxu0 0.0
      %1287 = vmatpush1.msra.mxu0 0.0
      %1288 = vmatprep.subr.mxu0 0.0
      %1289 = vmatpush1.msra.mxu0 0.0
      %1290 = vmatprep.subr.mxu0 0.0
      %1291 = vmatpush1.msra.mxu0 0.0
      %1292 = vmatprep.subr.mxu0 0.0
      %1293 = vmatpush1.msra.mxu0 0.0
      %1294 = vmatprep.subr.mxu0 0.0
      %1295 = vmatpush1.msra.mxu0 0.0
      %1296 = vmatprep.subr.mxu0 0.0
      %1297 = vmatpush1.msra.mxu0 0.0
      %1298 = vmatprep.subr.mxu0 0.0
      %1299 = vmatpush1.msra.mxu0 0.0
      %1300 = vmatprep.subr.mxu0 0.0
      %1301 = vmatpush1.msra.mxu0 0.0
      %1302 = vmatprep.subr.mxu0 0.0
      %1303 = vmatpush1.msra.mxu0 0.0
      %1304 = vmatprep.subr.mxu0 0.0
      %1305 = vmatpush1.msra.mxu0 0.0
      %1306 = vmatprep.subr.mxu0 0.0
      %1307 = vmatpush1.msra.mxu0 0.0
      %1308 = vmatprep.subr.mxu0 0.0
      %1309 = vmatpush1.msra.mxu0 0.0
      %1310 = vmatprep.mubr.f32.mxu0 0.0
      %1311 = vmatmul.mubr.f32.gmra.mrb[0].mxu0 %v1124
      %v1312 = vpop.f32.mrb[0].mxu0
      %v1313 = vadd.f32 0.0, %v1312
      %v1314 = vpop.f32.mrb[0].mxu0
      %1315 = vmatprep.mubr.f32.mxu0 0.0
      %1316 = vmatmul.mubr.f32.gmra.mrb[0].mxu0 %v1127
      %v1317 = vpop.f32.mrb[0].mxu0
      %v1318 = vadd.f32 0.0, %v1317
      %v1319 = vpop.f32.mrb[0].mxu0
      %1320 = vmatprep.mubr.f32.mxu0 0.0
      %1321 = vmatmul.mubr.f32.gmra.mrb[0].mxu0 %v1130
      %v1322 = vpop.f32.mrb[0].mxu0
      %v1323 = vadd.f32 0.0, %v1322
      %v1324 = vpop.f32.mrb[0].mxu0
      %1325 = vmatprep.mubr.f32.mxu0 0.0
      %1326 = vmatmul.mubr.f32.gmra.mrb[0].mxu0 %v1133
      %v1327 = vpop.f32.mrb[0].mxu0
      %v1328 = vadd.f32 0.0, %v1327
      %v1329 = vpop.f32.mrb[0].mxu0
      %1330 = vmatprep.mubr.f32.mxu0 0.0
      %1331 = vmatmul.mubr.f32.gmra.mrb[0].mxu0 %v1136
      %v1332 = vpop.f32.mrb[0].mxu0
      %v1333 = vadd.f32 0.0, %v1332
      %v1334 = vpop.f32.mrb[0].mxu0
      %1335 = vmatprep.mubr.f32.mxu0 0.0
      %1336 = vmatmul.mubr.f32.gmra.mrb[0].mxu0 %v1139
      %v1337 = vpop.f32.mrb[0].mxu0
      %v1338 = vadd.f32 0.0, %v1337
      %v1339 = vpop.f32.mrb[0].mxu0
      %1340 = vmatprep.mubr.f32.mxu0 0.0
      %1341 = vmatmul.mubr.f32.gmra.mrb[0].mxu0 %v1142
      %v1342 = vpop.f32.mrb[0].mxu0
      %v1343 = vadd.f32 0.0, %v1342
      %v1344 = vpop.f32.mrb[0].mxu0
      %1345 = vmatprep.mubr.f32.mxu0 0.0
      %1346 = vmatmul.mubr.f32.gmra.mrb[0].mxu0 %v1145
      %v1347 = vpop.f32.mrb[0].mxu0
      %v1348 = vadd.f32 0.0, %v1347
      %v1349 = vpop.f32.mrb[0].mxu0
      %1350 = vmatprep.mubr.f32.mxu0 0.0
      %1351 = vmatmul.mubr.f32.gmra.mrb[0].mxu0 %v1148
      %v1352 = vpop.f32.mrb[0].mxu0
      %v1353 = vadd.f32 0.0, %v1352
      %v1354 = vpop.f32.mrb[0].mxu0
      %1355 = vmatprep.mubr.f32.mxu0 0.0
      %1356 = vmatmul.mubr.f32.gmra.mrb[0].mxu0 %v1151
      %v1357 = vpop.f32.mrb[0].mxu0
      %v1358 = vadd.f32 0.0, %v1357
      %v1359 = vpop.f32.mrb[0].mxu0
      %1360 = vmatprep.mubr.f32.mxu0 0.0
      %1361 = vmatmul.mubr.f32.gmra.mrb[0].mxu0 %v1154
      %v1362 = vpop.f32.mrb[0].mxu0
      %v1363 = vadd.f32 0.0, %v1362
      %v1364 = vpop.f32.mrb[0].mxu0
      %1365 = vmatprep.mubr.f32.mxu0 0.0
      %1366 = vmatmul.mubr.f32.gmra.mrb[0].mxu0 %v1157
      %v1367 = vpop.f32.mrb[0].mxu0
      %v1368 = vadd.f32 0.0, %v1367
      %v1369 = vpop.f32.mrb[0].mxu0
      %1370 = vmatprep.mubr.f32.mxu0 0.0
      %1371 = vmatmul.mubr.f32.gmra.mrb[0].mxu0 %v1160
      %v1372 = vpop.f32.mrb[0].mxu0
      %v1373 = vadd.f32 0.0, %v1372
      %v1374 = vpop.f32.mrb[0].mxu0
      %1375 = vmatprep.mubr.f32.mxu0 0.0
      %1376 = vmatmul.mubr.f32.gmra.mrb[0].mxu0 %v1163
      %v1377 = vpop.f32.mrb[0].mxu0
      %v1378 = vadd.f32 0.0, %v1377
      %v1379 = vpop.f32.mrb[0].mxu0
      %1380 = vmatprep.mubr.f32.mxu0 0.0
      %1381 = vmatmul.mubr.f32.gmra.mrb[0].mxu0 %v1166
      %v1382 = vpop.f32.mrb[0].mxu0
      %v1383 = vadd.f32 0.0, %v1382
      %v1384 = vpop.f32.mrb[0].mxu0
      %1385 = vmatprep.mubr.f32.mxu0 0.0
      %1386 = vmatmul.mubr.f32.gmra.mrb[0].mxu0 %v1169
      %v1387 = vpop.f32.mrb[0].mxu0
      %v1388 = vadd.f32 0.0, %v1387
      %v1389 = vpop.f32.mrb[0].mxu0
      %1390 = vmatprep.mubr.f32.mxu0 0.0
      %1391 = vmatmul.mubr.f32.gmra.mrb[0].mxu0 %v1172
      %v1392 = vpop.f32.mrb[0].mxu0
      %v1393 = vadd.f32 0.0, %v1392
      %v1394 = vpop.f32.mrb[0].mxu0
      %1395 = vmatprep.mubr.f32.mxu0 0.0
      %1396 = vmatmul.mubr.f32.gmra.mrb[0].mxu0 %v1175
      %v1397 = vpop.f32.mrb[0].mxu0
      %v1398 = vadd.f32 0.0, %v1397
      %v1399 = vpop.f32.mrb[0].mxu0
      %1400 = vmatprep.mubr.f32.mxu0 0.0
      %1401 = vmatmul.mubr.f32.gmra.mrb[0].mxu0 %v1178
      %v1402 = vpop.f32.mrb[0].mxu0
      %v1403 = vadd.f32 0.0, %v1402
      %v1404 = vpop.f32.mrb[0].mxu0
      %1405 = vmatprep.mubr.f32.mxu0 0.0
      %1406 = vmatmul.mubr.f32.gmra.mrb[0].mxu0 %v1181
      %v1407 = vpop.f32.mrb[0].mxu0
      %v1408 = vadd.f32 0.0, %v1407
      %v1409 = vpop.f32.mrb[0].mxu0
      %1410 = vmatprep.mubr.f32.mxu0 0.0
      %1411 = vmatmul.mubr.f32.gmra.mrb[0].mxu0 %v1184
      %v1412 = vpop.f32.mrb[0].mxu0
      %v1413 = vadd.f32 0.0, %v1412
      %v1414 = vpop.f32.mrb[0].mxu0
      %1415 = vmatprep.mubr.f32.mxu0 0.0
      %1416 = vmatmul.mubr.f32.gmra.mrb[0].mxu0 %v1187
      %v1417 = vpop.f32.mrb[0].mxu0
      %v1418 = vadd.f32 0.0, %v1417
      %v1419 = vpop.f32.mrb[0].mxu0
      %1420 = vmatprep.mubr.f32.mxu0 0.0
      %1421 = vmatmul.mubr.f32.gmra.mrb[0].mxu0 %v1190
      %v1422 = vpop.f32.mrb[0].mxu0
      %v1423 = vadd.f32 0.0, %v1422
      %v1424 = vpop.f32.mrb[0].mxu0
      %1425 = vmatprep.mubr.f32.mxu0 0.0
      %1426 = vmatmul.mubr.f32.gmra.mrb[0].mxu0 %v1193
      %v1427 = vpop.f32.mrb[0].mxu0
      %v1428 = vadd.f32 0.0, %v1427
      %v1429 = vpop.f32.mrb[0].mxu0
      %1430 = vmatprep.mubr.f32.mxu0 0.0
      %1431 = vmatmul.mubr.f32.gmra.mrb[0].mxu0 %v1196
      %v1432 = vpop.f32.mrb[0].mxu0
      %v1433 = vadd.f32 0.0, %v1432
      %v1434 = vpop.f32.mrb[0].mxu0
      %1435 = vmatprep.mubr.f32.mxu0 0.0
      %1436 = vmatmul.mubr.f32.gmra.mrb[0].mxu0 %v1199
      %v1437 = vpop.f32.mrb[0].mxu0
      %v1438 = vadd.f32 0.0, %v1437
      %v1439 = vpop.f32.mrb[0].mxu0
      %1440 = vmatprep.mubr.f32.mxu0 0.0
      %1441 = vmatmul.mubr.f32.gmra.mrb[0].mxu0 %v1202
      %v1442 = vpop.f32.mrb[0].mxu0
      %v1443 = vadd.f32 0.0, %v1442
      %v1444 = vpop.f32.mrb[0].mxu0
      %1445 = vmatprep.mubr.f32.mxu0 0.0
      %1446 = vmatmul.mubr.f32.gmra.mrb[0].mxu0 %v1205
      %v1447 = vpop.f32.mrb[0].mxu0
      %v1448 = vadd.f32 0.0, %v1447
      %v1449 = vpop.f32.mrb[0].mxu0
      %1450 = vmatprep.mubr.f32.mxu0 0.0
      %1451 = vmatmul.mubr.f32.gmra.mrb[0].mxu0 %v1208
      %v1452 = vpop.f32.mrb[0].mxu0
      %v1453 = vadd.f32 0.0, %v1452
      %v1454 = vpop.f32.mrb[0].mxu0
      %1455 = vmatprep.mubr.f32.mxu0 0.0
      %1456 = vmatmul.mubr.f32.gmra.mrb[0].mxu0 %v1211
      %v1457 = vpop.f32.mrb[0].mxu0
      %v1458 = vadd.f32 0.0, %v1457
      %v1459 = vpop.f32.mrb[0].mxu0
      %1460 = vmatprep.mubr.f32.mxu0 0.0
      %1461 = vmatmul.mubr.f32.gmra.mrb[0].mxu0 %v1214
      %v1462 = vpop.f32.mrb[0].mxu0
      %v1463 = vadd.f32 0.0, %v1462
      %v1464 = vpop.f32.mrb[0].mxu0
      %1465 = vmatprep.mubr.f32.mxu0 0.0
      %1466 = vmatmul.mubr.f32.gmra.mrb[0].mxu0 %v1217
      %v1467 = vpop.f32.mrb[0].mxu0
      %v1468 = vadd.f32 0.0, %v1467
      %v1469 = vpop.f32.mrb[0].mxu0
      %1470 = vmatprep.mubr.f32.mxu0 0.0
      %1471 = vmatmul.mubr.f32.gmra.mrb[0].mxu0 %v1220
      %v1472 = vpop.f32.mrb[0].mxu0
      %v1473 = vadd.f32 0.0, %v1472
      %v1474 = vpop.f32.mrb[0].mxu0
      %1475 = vmatprep.mubr.f32.mxu0 0.0
      %1476 = vmatmul.mubr.f32.gmra.mrb[0].mxu0 %v1223
      %v1477 = vpop.f32.mrb[0].mxu0
      %v1478 = vadd.f32 0.0, %v1477
      %v1479 = vpop.f32.mrb[0].mxu0
      %1480 = vmatprep.mubr.f32.mxu0 0.0
      %1481 = vmatmul.mubr.f32.gmra.mrb[0].mxu0 %v1226
      %v1482 = vpop.f32.mrb[0].mxu0
      %v1483 = vadd.f32 0.0, %v1482
      %v1484 = vpop.f32.mrb[0].mxu0
      %1485 = vmatprep.mubr.f32.mxu0 0.0
      %1486 = vmatmul.mubr.f32.gmra.mrb[0].mxu0 %v1229
      %v1487 = vpop.f32.mrb[0].mxu0
      %v1488 = vadd.f32 0.0, %v1487
      %v1489 = vpop.f32.mrb[0].mxu0
      %1490 = vmatprep.mubr.f32.mxu0 0.0
      %1491 = vmatmul.mubr.f32.gmra.mrb[0].mxu0 %v1232
      %v1492 = vpop.f32.mrb[0].mxu0
      %v1493 = vadd.f32 0.0, %v1492
      %v1494 = vpop.f32.mrb[0].mxu0
      %1495 = vmatprep.mubr.f32.mxu0 0.0
      %1496 = vmatmul.mubr.f32.gmra.mrb[0].mxu0 %v1235
      %v1497 = vpop.f32.mrb[0].mxu0
      %v1498 = vadd.f32 0.0, %v1497
      %v1499 = vpop.f32.mrb[0].mxu0
      %1500 = vmatprep.mubr.f32.mxu0 0.0
      %1501 = vmatmul.mubr.f32.gmra.mrb[0].mxu0 %v1238
      %v1502 = vpop.f32.mrb[0].mxu0
      %v1503 = vadd.f32 0.0, %v1502
      %v1504 = vpop.f32.mrb[0].mxu0
      %1505 = vmatprep.mubr.f32.mxu0 0.0
      %1506 = vmatmul.mubr.f32.gmra.mrb[0].mxu0 %v1241
      %v1507 = vpop.f32.mrb[0].mxu0
      %v1508 = vadd.f32 0.0, %v1507
      %v1509 = vpop.f32.mrb[0].mxu0
      %1510 = vmatprep.mubr.f32.mxu0 0.0
      %1511 = vmatmul.mubr.f32.gmra.mrb[0].mxu0 %v1244
      %v1512 = vpop.f32.mrb[0].mxu0
      %v1513 = vadd.f32 0.0, %v1512
      %v1514 = vpop.f32.mrb[0].mxu0
      %1515 = vdwg.mxu0
      %v1516 = vadd.f32 %v874, %v1313
      %v1517 = vadd.f32 %v879, %v1318
      %v1518 = vadd.f32 %v884, %v1323
      %v1519 = vadd.f32 %v889, %v1328
      %v1520 = vadd.f32 %v894, %v1333
      %v1521 = vadd.f32 %v899, %v1338
      %v1522 = vadd.f32 %v904, %v1343
      %v1523 = vadd.f32 %v909, %v1348
      %v1524 = vadd.f32 %v914, %v1353
      %v1525 = vadd.f32 %v919, %v1358
      %v1526 = vadd.f32 %v924, %v1363
      %v1527 = vadd.f32 %v929, %v1368
      %v1528 = vadd.f32 %v934, %v1373
      %v1529 = vadd.f32 %v939, %v1378
      %v1530 = vadd.f32 %v944, %v1383
      %v1531 = vadd.f32 %v949, %v1388
      %v1532 = vadd.f32 %v954, %v1393
      %v1533 = vadd.f32 %v959, %v1398
      %v1534 = vadd.f32 %v964, %v1403
      %v1535 = vadd.f32 %v969, %v1408
      %v1536 = vadd.f32 %v974, %v1413
      %v1537 = vadd.f32 %v979, %v1418
      %v1538 = vadd.f32 %v984, %v1423
      %v1539 = vadd.f32 %v989, %v1428
      %v1540 = vadd.f32 %v994, %v1433
      %v1541 = vadd.f32 %v999, %v1438
      %v1542 = vadd.f32 %v1004, %v1443
      %v1543 = vadd.f32 %v1009, %v1448
      %v1544 = vadd.f32 %v1014, %v1453
      %v1545 = vadd.f32 %v1019, %v1458
      %v1546 = vadd.f32 %v1024, %v1463
      %v1547 = vadd.f32 %v1029, %v1468
      %v1548 = vadd.f32 %v1034, %v1473
      %v1549 = vadd.f32 %v1039, %v1478
      %v1550 = vadd.f32 %v1044, %v1483
      %v1551 = vadd.f32 %v1049, %v1488
      %v1552 = vadd.f32 %v1054, %v1493
      %v1553 = vadd.f32 %v1059, %v1498
      %v1554 = vadd.f32 %v1064, %v1503
      %v1555 = vadd.f32 %v1069, %v1508
      %v1556 = vadd.f32 %v1074, %v1513
      %v1557 = vld [vmem:[%s193 + $0x12] sm:$0xff]
      %v1558 = vld [vmem:[%s193 + $0x1a] sm:$0xff]
      %v1559 = vld [vmem:[%s193 + $0x22] sm:$0xff]
      %v1560 = vld [vmem:[%s193 + $0x2a] sm:$0xff]
      %v1561 = vld [vmem:[%s193 + $0x32] sm:$0xff]
      %v1562 = vld [vmem:[%s193 + $0x3a] sm:$0xff]
      %v1563 = vld [vmem:[%s193 + $0x42] sm:$0xff]
      %v1564 = vld [vmem:[%s193 + $0x4a] sm:$0xff]
      %v1565 = vld [vmem:[%s193 + $0x52] sm:$0xff]
      %v1566 = vld [vmem:[%s193 + $0x5a] sm:$0xff]
      %v1567 = vld [vmem:[%s193 + $0x62] sm:$0xff]
      %v1568 = vld [vmem:[%s193 + $0x6a] sm:$0xff]
      %v1569 = vld [vmem:[%s193 + $0x72] sm:$0xff]
      %v1570 = vld [vmem:[%s193 + $0x7a] sm:$0xff]
      %v1571 = vld [vmem:[%s193 + $0x82] sm:$0xff]
      %v1572 = vld [vmem:[%s193 + $0x8a] sm:$0xff]
      %v1573 = vld [vmem:[%s193 + $0x92] sm:$0xff]
      %v1574 = vld [vmem:[%s193 + $0x9a] sm:$0xff]
      %v1575 = vld [vmem:[%s193 + $0xa2] sm:$0xff]
      %v1576 = vld [vmem:[%s193 + $0xaa] sm:$0xff]
      %v1577 = vld [vmem:[%s193 + $0xb2] sm:$0xff]
      %v1578 = vld [vmem:[%s193 + $0xba] sm:$0xff]
      %v1579 = vld [vmem:[%s193 + $0xc2] sm:$0xff]
      %v1580 = vld [vmem:[%s193 + $0xca] sm:$0xff]
      %v1581 = vld [vmem:[%s193 + $0xd2] sm:$0xff]
      %v1582 = vld [vmem:[%s193 + $0xda] sm:$0xff]
      %v1583 = vld [vmem:[%s193 + $0xe2] sm:$0xff]
      %v1584 = vld [vmem:[%s193 + $0xea] sm:$0xff]
      %v1585 = vld [vmem:[%s193 + $0xf2] sm:$0xff]
      %v1586 = vld [vmem:[%s193 + $0xfa] sm:$0xff]
      %v1587 = vld [vmem:[%s193 + $0x102] sm:$0xff]
      %v1588 = vld [vmem:[%s193 + $0x10a] sm:$0xff]
      %v1589 = vld [vmem:[%s193 + $0x112] sm:$0xff]
      %v1590 = vld [vmem:[%s193 + $0x11a] sm:$0xff]
      %v1591 = vld [vmem:[%s193 + $0x122] sm:$0xff]
      %v1592 = vld [vmem:[%s193 + $0x12a] sm:$0xff]
      %v1593 = vld [vmem:[%s193 + $0x132] sm:$0xff]
      %v1594 = vld [vmem:[%s193 + $0x13a] sm:$0xff]
      %v1595 = vld [vmem:[%s193 + $0x142] sm:$0xff]
      %v1596 = vld [vmem:[%s193 + $0x14a] sm:$0xff]
      %v1597 = vld [vmem:[%s193 + $0x152] sm:$0xff]
      %s1598 = scalar_lea.vmem %s1, 96
      %v1599 = vld [vmem:[%s1598] sm:$0xff]
      %v1600 = vld [vmem:[%s1598 + $0x8] sm:$0xff]
      %v1601 = vld [vmem:[%s1598 + $0x10] sm:$0xff]
      %v1602 = vld [vmem:[%s1598 + $0x18] sm:$0xff]
      %v1604 = vsel %vm290, %v1557, 0
      %v1607 = vsel %vm290, %v1558, 0
      %v1610 = vsel %vm290, %v1559, 0
      %v1613 = vsel %vm290, %v1560, 0
      %v1616 = vsel %vm290, %v1561, 0
      %v1619 = vsel %vm290, %v1562, 0
      %v1622 = vsel %vm290, %v1563, 0
      %v1625 = vsel %vm290, %v1564, 0
      %v1628 = vsel %vm290, %v1565, 0
      %v1631 = vsel %vm290, %v1566, 0
      %v1634 = vsel %vm290, %v1567, 0
      %v1637 = vsel %vm290, %v1568, 0
      %v1640 = vsel %vm290, %v1569, 0
      %v1643 = vsel %vm290, %v1570, 0
      %v1646 = vsel %vm290, %v1571, 0
      %v1649 = vsel %vm290, %v1572, 0
      %v1652 = vsel %vm290, %v1573, 0
      %v1655 = vsel %vm290, %v1574, 0
      %v1658 = vsel %vm290, %v1575, 0
      %v1661 = vsel %vm290, %v1576, 0
      %v1664 = vsel %vm290, %v1577, 0
      %v1667 = vsel %vm290, %v1578, 0
      %v1670 = vsel %vm290, %v1579, 0
      %v1673 = vsel %vm290, %v1580, 0
      %v1676 = vsel %vm290, %v1581, 0
      %v1679 = vsel %vm290, %v1582, 0
      %v1682 = vsel %vm290, %v1583, 0
      %v1685 = vsel %vm290, %v1584, 0
      %v1688 = vsel %vm290, %v1585, 0
      %v1691 = vsel %vm290, %v1586, 0
      %v1694 = vsel %vm290, %v1587, 0
      %v1697 = vsel %vm290, %v1588, 0
      %v1700 = vsel %vm290, %v1589, 0
      %v1703 = vsel %vm290, %v1590, 0
      %v1706 = vsel %vm290, %v1591, 0
      %v1709 = vsel %vm290, %v1592, 0
      %v1712 = vsel %vm290, %v1593, 0
      %v1715 = vsel %vm290, %v1594, 0
      %v1718 = vsel %vm290, %v1595, 0
      %v1721 = vsel %vm290, %v1596, 0
      %v1724 = vsel %vm290, %v1597, 0
      %1726 = vmatprep.subr.mxu0 0.0
      %1727 = vmatpush1.msra.mxu0 %v1599
      %1728 = vmatprep.subr.mxu0 0.0
      %1729 = vmatpush1.msra.mxu0 %v1600
      %1730 = vmatprep.subr.mxu0 0.0
      %1731 = vmatpush1.msra.mxu0 %v1601
      %1732 = vmatprep.subr.mxu0 0.0
      %1733 = vmatpush1.msra.mxu0 %v1602
      %1734 = vmatprep.subr.mxu0 0.0
      %1735 = vmatpush1.msra.mxu0 0.0
      %1736 = vmatprep.subr.mxu0 0.0
      %1737 = vmatpush1.msra.mxu0 0.0
      %1738 = vmatprep.subr.mxu0 0.0
      %1739 = vmatpush1.msra.mxu0 0.0
      %1740 = vmatprep.subr.mxu0 0.0
      %1741 = vmatpush1.msra.mxu0 0.0
      %1742 = vmatprep.subr.mxu0 0.0
      %1743 = vmatpush1.msra.mxu0 0.0
      %1744 = vmatprep.subr.mxu0 0.0
      %1745 = vmatpush1.msra.mxu0 0.0
      %1746 = vmatprep.subr.mxu0 0.0
      %1747 = vmatpush1.msra.mxu0 0.0
      %1748 = vmatprep.subr.mxu0 0.0
      %1749 = vmatpush1.msra.mxu0 0.0
      %1750 = vmatprep.subr.mxu0 0.0
      %1751 = vmatpush1.msra.mxu0 0.0
      %1752 = vmatprep.subr.mxu0 0.0
      %1753 = vmatpush1.msra.mxu0 0.0
      %1754 = vmatprep.subr.mxu0 0.0
      %1755 = vmatpush1.msra.mxu0 0.0
      %1756 = vmatprep.subr.mxu0 0.0
      %1757 = vmatpush1.msra.mxu0 0.0
      %1758 = vmatprep.subr.mxu0 0.0
      %1759 = vmatpush1.msra.mxu0 0.0
      %1760 = vmatprep.subr.mxu0 0.0
      %1761 = vmatpush1.msra.mxu0 0.0
      %1762 = vmatprep.subr.mxu0 0.0
      %1763 = vmatpush1.msra.mxu0 0.0
      %1764 = vmatprep.subr.mxu0 0.0
      %1765 = vmatpush1.msra.mxu0 0.0
      %1766 = vmatprep.subr.mxu0 0.0
      %1767 = vmatpush1.msra.mxu0 0.0
      %1768 = vmatprep.subr.mxu0 0.0
      %1769 = vmatpush1.msra.mxu0 0.0
      %1770 = vmatprep.subr.mxu0 0.0
      %1771 = vmatpush1.msra.mxu0 0.0
      %1772 = vmatprep.subr.mxu0 0.0
      %1773 = vmatpush1.msra.mxu0 0.0
      %1774 = vmatprep.subr.mxu0 0.0
      %1775 = vmatpush1.msra.mxu0 0.0
      %1776 = vmatprep.subr.mxu0 0.0
      %1777 = vmatpush1.msra.mxu0 0.0
      %1778 = vmatprep.subr.mxu0 0.0
      %1779 = vmatpush1.msra.mxu0 0.0
      %1780 = vmatprep.subr.mxu0 0.0
      %1781 = vmatpush1.msra.mxu0 0.0
      %1782 = vmatprep.subr.mxu0 0.0
      %1783 = vmatpush1.msra.mxu0 0.0
      %1784 = vmatprep.subr.mxu0 0.0
      %1785 = vmatpush1.msra.mxu0 0.0
      %1786 = vmatprep.subr.mxu0 0.0
      %1787 = vmatpush1.msra.mxu0 0.0
      %1788 = vmatprep.subr.mxu0 0.0
      %1789 = vmatpush1.msra.mxu0 0.0
      %1790 = vmatprep.mubr.f32.mxu0 0.0
      %1791 = vmatmul.mubr.f32.gmra.mrb[0].mxu0 %v1604
      %v1792 = vpop.f32.mrb[0].mxu0
      %v1793 = vadd.f32 0.0, %v1792
      %v1794 = vpop.f32.mrb[0].mxu0
      %1795 = vmatprep.mubr.f32.mxu0 0.0
      %1796 = vmatmul.mubr.f32.gmra.mrb[0].mxu0 %v1607
      %v1797 = vpop.f32.mrb[0].mxu0
      %v1798 = vadd.f32 0.0, %v1797
      %v1799 = vpop.f32.mrb[0].mxu0
      %1800 = vmatprep.mubr.f32.mxu0 0.0
      %1801 = vmatmul.mubr.f32.gmra.mrb[0].mxu0 %v1610
      %v1802 = vpop.f32.mrb[0].mxu0
      %v1803 = vadd.f32 0.0, %v1802
      %v1804 = vpop.f32.mrb[0].mxu0
      %1805 = vmatprep.mubr.f32.mxu0 0.0
      %1806 = vmatmul.mubr.f32.gmra.mrb[0].mxu0 %v1613
      %v1807 = vpop.f32.mrb[0].mxu0
      %v1808 = vadd.f32 0.0, %v1807
      %v1809 = vpop.f32.mrb[0].mxu0
      %1810 = vmatprep.mubr.f32.mxu0 0.0
      %1811 = vmatmul.mubr.f32.gmra.mrb[0].mxu0 %v1616
      %v1812 = vpop.f32.mrb[0].mxu0
      %v1813 = vadd.f32 0.0, %v1812
      %v1814 = vpop.f32.mrb[0].mxu0
      %1815 = vmatprep.mubr.f32.mxu0 0.0
      %1816 = vmatmul.mubr.f32.gmra.mrb[0].mxu0 %v1619
      %v1817 = vpop.f32.mrb[0].mxu0
      %v1818 = vadd.f32 0.0, %v1817
      %v1819 = vpop.f32.mrb[0].mxu0
      %1820 = vmatprep.mubr.f32.mxu0 0.0
      %1821 = vmatmul.mubr.f32.gmra.mrb[0].mxu0 %v1622
      %v1822 = vpop.f32.mrb[0].mxu0
      %v1823 = vadd.f32 0.0, %v1822
      %v1824 = vpop.f32.mrb[0].mxu0
      %1825 = vmatprep.mubr.f32.mxu0 0.0
      %1826 = vmatmul.mubr.f32.gmra.mrb[0].mxu0 %v1625
      %v1827 = vpop.f32.mrb[0].mxu0
      %v1828 = vadd.f32 0.0, %v1827
      %v1829 = vpop.f32.mrb[0].mxu0
      %1830 = vmatprep.mubr.f32.mxu0 0.0
      %1831 = vmatmul.mubr.f32.gmra.mrb[0].mxu0 %v1628
      %v1832 = vpop.f32.mrb[0].mxu0
      %v1833 = vadd.f32 0.0, %v1832
      %v1834 = vpop.f32.mrb[0].mxu0
      %1835 = vmatprep.mubr.f32.mxu0 0.0
      %1836 = vmatmul.mubr.f32.gmra.mrb[0].mxu0 %v1631
      %v1837 = vpop.f32.mrb[0].mxu0
      %v1838 = vadd.f32 0.0, %v1837
      %v1839 = vpop.f32.mrb[0].mxu0
      %1840 = vmatprep.mubr.f32.mxu0 0.0
      %1841 = vmatmul.mubr.f32.gmra.mrb[0].mxu0 %v1634
      %v1842 = vpop.f32.mrb[0].mxu0
      %v1843 = vadd.f32 0.0, %v1842
      %v1844 = vpop.f32.mrb[0].mxu0
      %1845 = vmatprep.mubr.f32.mxu0 0.0
      %1846 = vmatmul.mubr.f32.gmra.mrb[0].mxu0 %v1637
      %v1847 = vpop.f32.mrb[0].mxu0
      %v1848 = vadd.f32 0.0, %v1847
      %v1849 = vpop.f32.mrb[0].mxu0
      %1850 = vmatprep.mubr.f32.mxu0 0.0
      %1851 = vmatmul.mubr.f32.gmra.mrb[0].mxu0 %v1640
      %v1852 = vpop.f32.mrb[0].mxu0
      %v1853 = vadd.f32 0.0, %v1852
      %v1854 = vpop.f32.mrb[0].mxu0
      %1855 = vmatprep.mubr.f32.mxu0 0.0
      %1856 = vmatmul.mubr.f32.gmra.mrb[0].mxu0 %v1643
      %v1857 = vpop.f32.mrb[0].mxu0
      %v1858 = vadd.f32 0.0, %v1857
      %v1859 = vpop.f32.mrb[0].mxu0
      %1860 = vmatprep.mubr.f32.mxu0 0.0
      %1861 = vmatmul.mubr.f32.gmra.mrb[0].mxu0 %v1646
      %v1862 = vpop.f32.mrb[0].mxu0
      %v1863 = vadd.f32 0.0, %v1862
      %v1864 = vpop.f32.mrb[0].mxu0
      %1865 = vmatprep.mubr.f32.mxu0 0.0
      %1866 = vmatmul.mubr.f32.gmra.mrb[0].mxu0 %v1649
      %v1867 = vpop.f32.mrb[0].mxu0
      %v1868 = vadd.f32 0.0, %v1867
      %v1869 = vpop.f32.mrb[0].mxu0
      %1870 = vmatprep.mubr.f32.mxu0 0.0
      %1871 = vmatmul.mubr.f32.gmra.mrb[0].mxu0 %v1652
      %v1872 = vpop.f32.mrb[0].mxu0
      %v1873 = vadd.f32 0.0, %v1872
      %v1874 = vpop.f32.mrb[0].mxu0
      %1875 = vmatprep.mubr.f32.mxu0 0.0
      %1876 = vmatmul.mubr.f32.gmra.mrb[0].mxu0 %v1655
      %v1877 = vpop.f32.mrb[0].mxu0
      %v1878 = vadd.f32 0.0, %v1877
      %v1879 = vpop.f32.mrb[0].mxu0
      %1880 = vmatprep.mubr.f32.mxu0 0.0
      %1881 = vmatmul.mubr.f32.gmra.mrb[0].mxu0 %v1658
      %v1882 = vpop.f32.mrb[0].mxu0
      %v1883 = vadd.f32 0.0, %v1882
      %v1884 = vpop.f32.mrb[0].mxu0
      %1885 = vmatprep.mubr.f32.mxu0 0.0
      %1886 = vmatmul.mubr.f32.gmra.mrb[0].mxu0 %v1661
      %v1887 = vpop.f32.mrb[0].mxu0
      %v1888 = vadd.f32 0.0, %v1887
      %v1889 = vpop.f32.mrb[0].mxu0
      %1890 = vmatprep.mubr.f32.mxu0 0.0
      %1891 = vmatmul.mubr.f32.gmra.mrb[0].mxu0 %v1664
      %v1892 = vpop.f32.mrb[0].mxu0
      %v1893 = vadd.f32 0.0, %v1892
      %v1894 = vpop.f32.mrb[0].mxu0
      %1895 = vmatprep.mubr.f32.mxu0 0.0
      %1896 = vmatmul.mubr.f32.gmra.mrb[0].mxu0 %v1667
      %v1897 = vpop.f32.mrb[0].mxu0
      %v1898 = vadd.f32 0.0, %v1897
      %v1899 = vpop.f32.mrb[0].mxu0
      %1900 = vmatprep.mubr.f32.mxu0 0.0
      %1901 = vmatmul.mubr.f32.gmra.mrb[0].mxu0 %v1670
      %v1902 = vpop.f32.mrb[0].mxu0
      %v1903 = vadd.f32 0.0, %v1902
      %v1904 = vpop.f32.mrb[0].mxu0
      %1905 = vmatprep.mubr.f32.mxu0 0.0
      %1906 = vmatmul.mubr.f32.gmra.mrb[0].mxu0 %v1673
      %v1907 = vpop.f32.mrb[0].mxu0
      %v1908 = vadd.f32 0.0, %v1907
      %v1909 = vpop.f32.mrb[0].mxu0
      %1910 = vmatprep.mubr.f32.mxu0 0.0
      %1911 = vmatmul.mubr.f32.gmra.mrb[0].mxu0 %v1676
      %v1912 = vpop.f32.mrb[0].mxu0
      %v1913 = vadd.f32 0.0, %v1912
      %v1914 = vpop.f32.mrb[0].mxu0
      %1915 = vmatprep.mubr.f32.mxu0 0.0
      %1916 = vmatmul.mubr.f32.gmra.mrb[0].mxu0 %v1679
      %v1917 = vpop.f32.mrb[0].mxu0
      %v1918 = vadd.f32 0.0, %v1917
      %v1919 = vpop.f32.mrb[0].mxu0
      %1920 = vmatprep.mubr.f32.mxu0 0.0
      %1921 = vmatmul.mubr.f32.gmra.mrb[0].mxu0 %v1682
      %v1922 = vpop.f32.mrb[0].mxu0
      %v1923 = vadd.f32 0.0, %v1922
      %v1924 = vpop.f32.mrb[0].mxu0
      %1925 = vmatprep.mubr.f32.mxu0 0.0
      %1926 = vmatmul.mubr.f32.gmra.mrb[0].mxu0 %v1685
      %v1927 = vpop.f32.mrb[0].mxu0
      %v1928 = vadd.f32 0.0, %v1927
      %v1929 = vpop.f32.mrb[0].mxu0
      %1930 = vmatprep.mubr.f32.mxu0 0.0
      %1931 = vmatmul.mubr.f32.gmra.mrb[0].mxu0 %v1688
      %v1932 = vpop.f32.mrb[0].mxu0
      %v1933 = vadd.f32 0.0, %v1932
      %v1934 = vpop.f32.mrb[0].mxu0
      %1935 = vmatprep.mubr.f32.mxu0 0.0
      %1936 = vmatmul.mubr.f32.gmra.mrb[0].mxu0 %v1691
      %v1937 = vpop.f32.mrb[0].mxu0
      %v1938 = vadd.f32 0.0, %v1937
      %v1939 = vpop.f32.mrb[0].mxu0
      %1940 = vmatprep.mubr.f32.mxu0 0.0
      %1941 = vmatmul.mubr.f32.gmra.mrb[0].mxu0 %v1694
      %v1942 = vpop.f32.mrb[0].mxu0
      %v1943 = vadd.f32 0.0, %v1942
      %v1944 = vpop.f32.mrb[0].mxu0
      %1945 = vmatprep.mubr.f32.mxu0 0.0
      %1946 = vmatmul.mubr.f32.gmra.mrb[0].mxu0 %v1697
      %v1947 = vpop.f32.mrb[0].mxu0
      %v1948 = vadd.f32 0.0, %v1947
      %v1949 = vpop.f32.mrb[0].mxu0
      %1950 = vmatprep.mubr.f32.mxu0 0.0
      %1951 = vmatmul.mubr.f32.gmra.mrb[0].mxu0 %v1700
      %v1952 = vpop.f32.mrb[0].mxu0
      %v1953 = vadd.f32 0.0, %v1952
      %v1954 = vpop.f32.mrb[0].mxu0
      %1955 = vmatprep.mubr.f32.mxu0 0.0
      %1956 = vmatmul.mubr.f32.gmra.mrb[0].mxu0 %v1703
      %v1957 = vpop.f32.mrb[0].mxu0
      %v1958 = vadd.f32 0.0, %v1957
      %v1959 = vpop.f32.mrb[0].mxu0
      %1960 = vmatprep.mubr.f32.mxu0 0.0
      %1961 = vmatmul.mubr.f32.gmra.mrb[0].mxu0 %v1706
      %v1962 = vpop.f32.mrb[0].mxu0
      %v1963 = vadd.f32 0.0, %v1962
      %v1964 = vpop.f32.mrb[0].mxu0
      %1965 = vmatprep.mubr.f32.mxu0 0.0
      %1966 = vmatmul.mubr.f32.gmra.mrb[0].mxu0 %v1709
      %v1967 = vpop.f32.mrb[0].mxu0
      %v1968 = vadd.f32 0.0, %v1967
      %v1969 = vpop.f32.mrb[0].mxu0
      %1970 = vmatprep.mubr.f32.mxu0 0.0
      %1971 = vmatmul.mubr.f32.gmra.mrb[0].mxu0 %v1712
      %v1972 = vpop.f32.mrb[0].mxu0
      %v1973 = vadd.f32 0.0, %v1972
      %v1974 = vpop.f32.mrb[0].mxu0
      %1975 = vmatprep.mubr.f32.mxu0 0.0
      %1976 = vmatmul.mubr.f32.gmra.mrb[0].mxu0 %v1715
      %v1977 = vpop.f32.mrb[0].mxu0
      %v1978 = vadd.f32 0.0, %v1977
      %v1979 = vpop.f32.mrb[0].mxu0
      %1980 = vmatprep.mubr.f32.mxu0 0.0
      %1981 = vmatmul.mubr.f32.gmra.mrb[0].mxu0 %v1718
      %v1982 = vpop.f32.mrb[0].mxu0
      %v1983 = vadd.f32 0.0, %v1982
      %v1984 = vpop.f32.mrb[0].mxu0
      %1985 = vmatprep.mubr.f32.mxu0 0.0
      %1986 = vmatmul.mubr.f32.gmra.mrb[0].mxu0 %v1721
      %v1987 = vpop.f32.mrb[0].mxu0
      %v1988 = vadd.f32 0.0, %v1987
      %v1989 = vpop.f32.mrb[0].mxu0
      %1990 = vmatprep.mubr.f32.mxu0 0.0
      %1991 = vmatmul.mubr.f32.gmra.mrb[0].mxu0 %v1724
      %v1992 = vpop.f32.mrb[0].mxu0
      %v1993 = vadd.f32 0.0, %v1992
      %v1994 = vpop.f32.mrb[0].mxu0
      %1995 = vdwg.mxu0
      %v1996 = vadd.f32 %v1516, %v1793
      %v1997 = vadd.f32 %v1517, %v1798
      %v1998 = vadd.f32 %v1518, %v1803
      %v1999 = vadd.f32 %v1519, %v1808
      %v2000 = vadd.f32 %v1520, %v1813
      %v2001 = vadd.f32 %v1521, %v1818
      %v2002 = vadd.f32 %v1522, %v1823
      %v2003 = vadd.f32 %v1523, %v1828
      %v2004 = vadd.f32 %v1524, %v1833
      %v2005 = vadd.f32 %v1525, %v1838
      %v2006 = vadd.f32 %v1526, %v1843
      %v2007 = vadd.f32 %v1527, %v1848
      %v2008 = vadd.f32 %v1528, %v1853
      %v2009 = vadd.f32 %v1529, %v1858
      %v2010 = vadd.f32 %v1530, %v1863
      %v2011 = vadd.f32 %v1531, %v1868
      %v2012 = vadd.f32 %v1532, %v1873
      %v2013 = vadd.f32 %v1533, %v1878
      %v2014 = vadd.f32 %v1534, %v1883
      %v2015 = vadd.f32 %v1535, %v1888
      %v2016 = vadd.f32 %v1536, %v1893
      %v2017 = vadd.f32 %v1537, %v1898
      %v2018 = vadd.f32 %v1538, %v1903
      %v2019 = vadd.f32 %v1539, %v1908
      %v2020 = vadd.f32 %v1540, %v1913
      %v2021 = vadd.f32 %v1541, %v1918
      %v2022 = vadd.f32 %v1542, %v1923
      %v2023 = vadd.f32 %v1543, %v1928
      %v2024 = vadd.f32 %v1544, %v1933
      %v2025 = vadd.f32 %v1545, %v1938
      %v2026 = vadd.f32 %v1546, %v1943
      %v2027 = vadd.f32 %v1547, %v1948
      %v2028 = vadd.f32 %v1548, %v1953
      %v2029 = vadd.f32 %v1549, %v1958
      %v2030 = vadd.f32 %v1550, %v1963
      %v2031 = vadd.f32 %v1551, %v1968
      %v2032 = vadd.f32 %v1552, %v1973
      %v2033 = vadd.f32 %v1553, %v1978
      %v2034 = vadd.f32 %v1554, %v1983
      %v2035 = vadd.f32 %v1555, %v1988
      %v2036 = vadd.f32 %v1556, %v1993
      %v2037 = vld [vmem:[%s193 + $0x13] sm:$0xff]
      %v2038 = vld [vmem:[%s193 + $0x1b] sm:$0xff]
      %v2039 = vld [vmem:[%s193 + $0x23] sm:$0xff]
      %v2040 = vld [vmem:[%s193 + $0x2b] sm:$0xff]
      %v2041 = vld [vmem:[%s193 + $0x33] sm:$0xff]
      %v2042 = vld [vmem:[%s193 + $0x3b] sm:$0xff]
      %v2043 = vld [vmem:[%s193 + $0x43] sm:$0xff]
      %v2044 = vld [vmem:[%s193 + $0x4b] sm:$0xff]
      %v2045 = vld [vmem:[%s193 + $0x53] sm:$0xff]
      %v2046 = vld [vmem:[%s193 + $0x5b] sm:$0xff]
      %v2047 = vld [vmem:[%s193 + $0x63] sm:$0xff]
      %v2048 = vld [vmem:[%s193 + $0x6b] sm:$0xff]
      %v2049 = vld [vmem:[%s193 + $0x73] sm:$0xff]
      %v2050 = vld [vmem:[%s193 + $0x7b] sm:$0xff]
      %v2051 = vld [vmem:[%s193 + $0x83] sm:$0xff]
      %v2052 = vld [vmem:[%s193 + $0x8b] sm:$0xff]
      %v2053 = vld [vmem:[%s193 + $0x93] sm:$0xff]
      %v2054 = vld [vmem:[%s193 + $0x9b] sm:$0xff]
      %v2055 = vld [vmem:[%s193 + $0xa3] sm:$0xff]
      %v2056 = vld [vmem:[%s193 + $0xab] sm:$0xff]
      %v2057 = vld [vmem:[%s193 + $0xb3] sm:$0xff]
      %v2058 = vld [vmem:[%s193 + $0xbb] sm:$0xff]
      %v2059 = vld [vmem:[%s193 + $0xc3] sm:$0xff]
      %v2060 = vld [vmem:[%s193 + $0xcb] sm:$0xff]
      %v2061 = vld [vmem:[%s193 + $0xd3] sm:$0xff]
      %v2062 = vld [vmem:[%s193 + $0xdb] sm:$0xff]
      %v2063 = vld [vmem:[%s193 + $0xe3] sm:$0xff]
      %v2064 = vld [vmem:[%s193 + $0xeb] sm:$0xff]
      %v2065 = vld [vmem:[%s193 + $0xf3] sm:$0xff]
      %v2066 = vld [vmem:[%s193 + $0xfb] sm:$0xff]
      %v2067 = vld [vmem:[%s193 + $0x103] sm:$0xff]
      %v2068 = vld [vmem:[%s193 + $0x10b] sm:$0xff]
      %v2069 = vld [vmem:[%s193 + $0x113] sm:$0xff]
      %v2070 = vld [vmem:[%s193 + $0x11b] sm:$0xff]
      %v2071 = vld [vmem:[%s193 + $0x123] sm:$0xff]
      %v2072 = vld [vmem:[%s193 + $0x12b] sm:$0xff]
      %v2073 = vld [vmem:[%s193 + $0x133] sm:$0xff]
      %v2074 = vld [vmem:[%s193 + $0x13b] sm:$0xff]
      %v2075 = vld [vmem:[%s193 + $0x143] sm:$0xff]
      %v2076 = vld [vmem:[%s193 + $0x14b] sm:$0xff]
      %v2077 = vld [vmem:[%s193 + $0x153] sm:$0xff]
      %s2078 = scalar_lea.vmem %s1, 128
      %v2079 = vld [vmem:[%s2078] sm:$0xff]
      %v2080 = vld [vmem:[%s2078 + $0x8] sm:$0xff]
      %v2081 = vld [vmem:[%s2078 + $0x10] sm:$0xff]
      %v2082 = vld [vmem:[%s2078 + $0x18] sm:$0xff]
      %v2084 = vsel %vm290, %v2037, 0
      %v2087 = vsel %vm290, %v2038, 0
      %v2090 = vsel %vm290, %v2039, 0
      %v2093 = vsel %vm290, %v2040, 0
      %v2096 = vsel %vm290, %v2041, 0
      %v2099 = vsel %vm290, %v2042, 0
      %v2102 = vsel %vm290, %v2043, 0
      %v2105 = vsel %vm290, %v2044, 0
      %v2108 = vsel %vm290, %v2045, 0
      %v2111 = vsel %vm290, %v2046, 0
      %v2114 = vsel %vm290, %v2047, 0
      %v2117 = vsel %vm290, %v2048, 0
      %v2120 = vsel %vm290, %v2049, 0
      %v2123 = vsel %vm290, %v2050, 0
      %v2126 = vsel %vm290, %v2051, 0
      %v2129 = vsel %vm290, %v2052, 0
      %v2132 = vsel %vm290, %v2053, 0
      %v2135 = vsel %vm290, %v2054, 0
      %v2138 = vsel %vm290, %v2055, 0
      %v2141 = vsel %vm290, %v2056, 0
      %v2144 = vsel %vm290, %v2057, 0
      %v2147 = vsel %vm290, %v2058, 0
      %v2150 = vsel %vm290, %v2059, 0
      %v2153 = vsel %vm290, %v2060, 0
      %v2156 = vsel %vm290, %v2061, 0
      %v2159 = vsel %vm290, %v2062, 0
      %v2162 = vsel %vm290, %v2063, 0
      %v2165 = vsel %vm290, %v2064, 0
      %v2168 = vsel %vm290, %v2065, 0
      %v2171 = vsel %vm290, %v2066, 0
      %v2174 = vsel %vm290, %v2067, 0
      %v2177 = vsel %vm290, %v2068, 0
      %v2180 = vsel %vm290, %v2069, 0
      %v2183 = vsel %vm290, %v2070, 0
      %v2186 = vsel %vm290, %v2071, 0
      %v2189 = vsel %vm290, %v2072, 0
      %v2192 = vsel %vm290, %v2073, 0
      %v2195 = vsel %vm290, %v2074, 0
      %v2198 = vsel %vm290, %v2075, 0
      %v2201 = vsel %vm290, %v2076, 0
      %v2204 = vsel %vm290, %v2077, 0
      %2206 = vmatprep.subr.mxu0 0.0
      %2207 = vmatpush1.msra.mxu0 %v2079
      %2208 = vmatprep.subr.mxu0 0.0
      %2209 = vmatpush1.msra.mxu0 %v2080
      %2210 = vmatprep.subr.mxu0 0.0
      %2211 = vmatpush1.msra.mxu0 %v2081
      %2212 = vmatprep.subr.mxu0 0.0
      %2213 = vmatpush1.msra.mxu0 %v2082
      %2214 = vmatprep.subr.mxu0 0.0
      %2215 = vmatpush1.msra.mxu0 0.0
      %2216 = vmatprep.subr.mxu0 0.0
      %2217 = vmatpush1.msra.mxu0 0.0
      %2218 = vmatprep.subr.mxu0 0.0
      %2219 = vmatpush1.msra.mxu0 0.0
      %2220 = vmatprep.subr.mxu0 0.0
      %2221 = vmatpush1.msra.mxu0 0.0
      %2222 = vmatprep.subr.mxu0 0.0
      %2223 = vmatpush1.msra.mxu0 0.0
      %2224 = vmatprep.subr.mxu0 0.0
      %2225 = vmatpush1.msra.mxu0 0.0
      %2226 = vmatprep.subr.mxu0 0.0
      %2227 = vmatpush1.msra.mxu0 0.0
      %2228 = vmatprep.subr.mxu0 0.0
      %2229 = vmatpush1.msra.mxu0 0.0
      %2230 = vmatprep.subr.mxu0 0.0
      %2231 = vmatpush1.msra.mxu0 0.0
      %2232 = vmatprep.subr.mxu0 0.0
      %2233 = vmatpush1.msra.mxu0 0.0
      %2234 = vmatprep.subr.mxu0 0.0
      %2235 = vmatpush1.msra.mxu0 0.0
      %2236 = vmatprep.subr.mxu0 0.0
      %2237 = vmatpush1.msra.mxu0 0.0
      %2238 = vmatprep.subr.mxu0 0.0
      %2239 = vmatpush1.msra.mxu0 0.0
      %2240 = vmatprep.subr.mxu0 0.0
      %2241 = vmatpush1.msra.mxu0 0.0
      %2242 = vmatprep.subr.mxu0 0.0
      %2243 = vmatpush1.msra.mxu0 0.0
      %2244 = vmatprep.subr.mxu0 0.0
      %2245 = vmatpush1.msra.mxu0 0.0
      %2246 = vmatprep.subr.mxu0 0.0
      %2247 = vmatpush1.msra.mxu0 0.0
      %2248 = vmatprep.subr.mxu0 0.0
      %2249 = vmatpush1.msra.mxu0 0.0
      %2250 = vmatprep.subr.mxu0 0.0
      %2251 = vmatpush1.msra.mxu0 0.0
      %2252 = vmatprep.subr.mxu0 0.0
      %2253 = vmatpush1.msra.mxu0 0.0
      %2254 = vmatprep.subr.mxu0 0.0
      %2255 = vmatpush1.msra.mxu0 0.0
      %2256 = vmatprep.subr.mxu0 0.0
      %2257 = vmatpush1.msra.mxu0 0.0
      %2258 = vmatprep.subr.mxu0 0.0
      %2259 = vmatpush1.msra.mxu0 0.0
      %2260 = vmatprep.subr.mxu0 0.0
      %2261 = vmatpush1.msra.mxu0 0.0
      %2262 = vmatprep.subr.mxu0 0.0
      %2263 = vmatpush1.msra.mxu0 0.0
      %2264 = vmatprep.subr.mxu0 0.0
      %2265 = vmatpush1.msra.mxu0 0.0
      %2266 = vmatprep.subr.mxu0 0.0
      %2267 = vmatpush1.msra.mxu0 0.0
      %2268 = vmatprep.subr.mxu0 0.0
      %2269 = vmatpush1.msra.mxu0 0.0
      %2270 = vmatprep.mubr.f32.mxu0 0.0
      %2271 = vmatmul.mubr.f32.gmra.mrb[0].mxu0 %v2084
      %v2272 = vpop.f32.mrb[0].mxu0
      %v2273 = vadd.f32 0.0, %v2272
      %v2274 = vpop.f32.mrb[0].mxu0
      %2275 = vmatprep.mubr.f32.mxu0 0.0
      %2276 = vmatmul.mubr.f32.gmra.mrb[0].mxu0 %v2087
      %v2277 = vpop.f32.mrb[0].mxu0
      %v2278 = vadd.f32 0.0, %v2277
      %v2279 = vpop.f32.mrb[0].mxu0
      %2280 = vmatprep.mubr.f32.mxu0 0.0
      %2281 = vmatmul.mubr.f32.gmra.mrb[0].mxu0 %v2090
      %v2282 = vpop.f32.mrb[0].mxu0
      %v2283 = vadd.f32 0.0, %v2282
      %v2284 = vpop.f32.mrb[0].mxu0
      %2285 = vmatprep.mubr.f32.mxu0 0.0
      %2286 = vmatmul.mubr.f32.gmra.mrb[0].mxu0 %v2093
      %v2287 = vpop.f32.mrb[0].mxu0
      %v2288 = vadd.f32 0.0, %v2287
      %v2289 = vpop.f32.mrb[0].mxu0
      %2290 = vmatprep.mubr.f32.mxu0 0.0
      %2291 = vmatmul.mubr.f32.gmra.mrb[0].mxu0 %v2096
      %v2292 = vpop.f32.mrb[0].mxu0
      %v2293 = vadd.f32 0.0, %v2292
      %v2294 = vpop.f32.mrb[0].mxu0
      %2295 = vmatprep.mubr.f32.mxu0 0.0
      %2296 = vmatmul.mubr.f32.gmra.mrb[0].mxu0 %v2099
      %v2297 = vpop.f32.mrb[0].mxu0
      %v2298 = vadd.f32 0.0, %v2297
      %v2299 = vpop.f32.mrb[0].mxu0
      %2300 = vmatprep.mubr.f32.mxu0 0.0
      %2301 = vmatmul.mubr.f32.gmra.mrb[0].mxu0 %v2102
      %v2302 = vpop.f32.mrb[0].mxu0
      %v2303 = vadd.f32 0.0, %v2302
      %v2304 = vpop.f32.mrb[0].mxu0
      %2305 = vmatprep.mubr.f32.mxu0 0.0
      %2306 = vmatmul.mubr.f32.gmra.mrb[0].mxu0 %v2105
      %v2307 = vpop.f32.mrb[0].mxu0
      %v2308 = vadd.f32 0.0, %v2307
      %v2309 = vpop.f32.mrb[0].mxu0
      %2310 = vmatprep.mubr.f32.mxu0 0.0
      %2311 = vmatmul.mubr.f32.gmra.mrb[0].mxu0 %v2108
      %v2312 = vpop.f32.mrb[0].mxu0
      %v2313 = vadd.f32 0.0, %v2312
      %v2314 = vpop.f32.mrb[0].mxu0
      %2315 = vmatprep.mubr.f32.mxu0 0.0
      %2316 = vmatmul.mubr.f32.gmra.mrb[0].mxu0 %v2111
      %v2317 = vpop.f32.mrb[0].mxu0
      %v2318 = vadd.f32 0.0, %v2317
      %v2319 = vpop.f32.mrb[0].mxu0
      %2320 = vmatprep.mubr.f32.mxu0 0.0
      %2321 = vmatmul.mubr.f32.gmra.mrb[0].mxu0 %v2114
      %v2322 = vpop.f32.mrb[0].mxu0
      %v2323 = vadd.f32 0.0, %v2322
      %v2324 = vpop.f32.mrb[0].mxu0
      %2325 = vmatprep.mubr.f32.mxu0 0.0
      %2326 = vmatmul.mubr.f32.gmra.mrb[0].mxu0 %v2117
      %v2327 = vpop.f32.mrb[0].mxu0
      %v2328 = vadd.f32 0.0, %v2327
      %v2329 = vpop.f32.mrb[0].mxu0
      %2330 = vmatprep.mubr.f32.mxu0 0.0
      %2331 = vmatmul.mubr.f32.gmra.mrb[0].mxu0 %v2120
      %v2332 = vpop.f32.mrb[0].mxu0
      %v2333 = vadd.f32 0.0, %v2332
      %v2334 = vpop.f32.mrb[0].mxu0
      %2335 = vmatprep.mubr.f32.mxu0 0.0
      %2336 = vmatmul.mubr.f32.gmra.mrb[0].mxu0 %v2123
      %v2337 = vpop.f32.mrb[0].mxu0
      %v2338 = vadd.f32 0.0, %v2337
      %v2339 = vpop.f32.mrb[0].mxu0
      %2340 = vmatprep.mubr.f32.mxu0 0.0
      %2341 = vmatmul.mubr.f32.gmra.mrb[0].mxu0 %v2126
      %v2342 = vpop.f32.mrb[0].mxu0
      %v2343 = vadd.f32 0.0, %v2342
      %v2344 = vpop.f32.mrb[0].mxu0
      %2345 = vmatprep.mubr.f32.mxu0 0.0
      %2346 = vmatmul.mubr.f32.gmra.mrb[0].mxu0 %v2129
      %v2347 = vpop.f32.mrb[0].mxu0
      %v2348 = vadd.f32 0.0, %v2347
      %v2349 = vpop.f32.mrb[0].mxu0
      %2350 = vmatprep.mubr.f32.mxu0 0.0
      %2351 = vmatmul.mubr.f32.gmra.mrb[0].mxu0 %v2132
      %v2352 = vpop.f32.mrb[0].mxu0
      %v2353 = vadd.f32 0.0, %v2352
      %v2354 = vpop.f32.mrb[0].mxu0
      %2355 = vmatprep.mubr.f32.mxu0 0.0
      %2356 = vmatmul.mubr.f32.gmra.mrb[0].mxu0 %v2135
      %v2357 = vpop.f32.mrb[0].mxu0
      %v2358 = vadd.f32 0.0, %v2357
      %v2359 = vpop.f32.mrb[0].mxu0
      %2360 = vmatprep.mubr.f32.mxu0 0.0
      %2361 = vmatmul.mubr.f32.gmra.mrb[0].mxu0 %v2138
      %v2362 = vpop.f32.mrb[0].mxu0
      %v2363 = vadd.f32 0.0, %v2362
      %v2364 = vpop.f32.mrb[0].mxu0
      %2365 = vmatprep.mubr.f32.mxu0 0.0
      %2366 = vmatmul.mubr.f32.gmra.mrb[0].mxu0 %v2141
      %v2367 = vpop.f32.mrb[0].mxu0
      %v2368 = vadd.f32 0.0, %v2367
      %v2369 = vpop.f32.mrb[0].mxu0
      %2370 = vmatprep.mubr.f32.mxu0 0.0
      %2371 = vmatmul.mubr.f32.gmra.mrb[0].mxu0 %v2144
      %v2372 = vpop.f32.mrb[0].mxu0
      %v2373 = vadd.f32 0.0, %v2372
      %v2374 = vpop.f32.mrb[0].mxu0
      %2375 = vmatprep.mubr.f32.mxu0 0.0
      %2376 = vmatmul.mubr.f32.gmra.mrb[0].mxu0 %v2147
      %v2377 = vpop.f32.mrb[0].mxu0
      %v2378 = vadd.f32 0.0, %v2377
      %v2379 = vpop.f32.mrb[0].mxu0
      %2380 = vmatprep.mubr.f32.mxu0 0.0
      %2381 = vmatmul.mubr.f32.gmra.mrb[0].mxu0 %v2150
      %v2382 = vpop.f32.mrb[0].mxu0
      %v2383 = vadd.f32 0.0, %v2382
      %v2384 = vpop.f32.mrb[0].mxu0
      %2385 = vmatprep.mubr.f32.mxu0 0.0
      %2386 = vmatmul.mubr.f32.gmra.mrb[0].mxu0 %v2153
      %v2387 = vpop.f32.mrb[0].mxu0
      %v2388 = vadd.f32 0.0, %v2387
      %v2389 = vpop.f32.mrb[0].mxu0
      %2390 = vmatprep.mubr.f32.mxu0 0.0
      %2391 = vmatmul.mubr.f32.gmra.mrb[0].mxu0 %v2156
      %v2392 = vpop.f32.mrb[0].mxu0
      %v2393 = vadd.f32 0.0, %v2392
      %v2394 = vpop.f32.mrb[0].mxu0
      %2395 = vmatprep.mubr.f32.mxu0 0.0
      %2396 = vmatmul.mubr.f32.gmra.mrb[0].mxu0 %v2159
      %v2397 = vpop.f32.mrb[0].mxu0
      %v2398 = vadd.f32 0.0, %v2397
      %v2399 = vpop.f32.mrb[0].mxu0
      %2400 = vmatprep.mubr.f32.mxu0 0.0
      %2401 = vmatmul.mubr.f32.gmra.mrb[0].mxu0 %v2162
      %v2402 = vpop.f32.mrb[0].mxu0
      %v2403 = vadd.f32 0.0, %v2402
      %v2404 = vpop.f32.mrb[0].mxu0
      %2405 = vmatprep.mubr.f32.mxu0 0.0
      %2406 = vmatmul.mubr.f32.gmra.mrb[0].mxu0 %v2165
      %v2407 = vpop.f32.mrb[0].mxu0
      %v2408 = vadd.f32 0.0, %v2407
      %v2409 = vpop.f32.mrb[0].mxu0
      %2410 = vmatprep.mubr.f32.mxu0 0.0
      %2411 = vmatmul.mubr.f32.gmra.mrb[0].mxu0 %v2168
      %v2412 = vpop.f32.mrb[0].mxu0
      %v2413 = vadd.f32 0.0, %v2412
      %v2414 = vpop.f32.mrb[0].mxu0
      %2415 = vmatprep.mubr.f32.mxu0 0.0
      %2416 = vmatmul.mubr.f32.gmra.mrb[0].mxu0 %v2171
      %v2417 = vpop.f32.mrb[0].mxu0
      %v2418 = vadd.f32 0.0, %v2417
      %v2419 = vpop.f32.mrb[0].mxu0
      %2420 = vmatprep.mubr.f32.mxu0 0.0
      %2421 = vmatmul.mubr.f32.gmra.mrb[0].mxu0 %v2174
      %v2422 = vpop.f32.mrb[0].mxu0
      %v2423 = vadd.f32 0.0, %v2422
      %v2424 = vpop.f32.mrb[0].mxu0
      %2425 = vmatprep.mubr.f32.mxu0 0.0
      %2426 = vmatmul.mubr.f32.gmra.mrb[0].mxu0 %v2177
      %v2427 = vpop.f32.mrb[0].mxu0
      %v2428 = vadd.f32 0.0, %v2427
      %v2429 = vpop.f32.mrb[0].mxu0
      %2430 = vmatprep.mubr.f32.mxu0 0.0
      %2431 = vmatmul.mubr.f32.gmra.mrb[0].mxu0 %v2180
      %v2432 = vpop.f32.mrb[0].mxu0
      %v2433 = vadd.f32 0.0, %v2432
      %v2434 = vpop.f32.mrb[0].mxu0
      %2435 = vmatprep.mubr.f32.mxu0 0.0
      %2436 = vmatmul.mubr.f32.gmra.mrb[0].mxu0 %v2183
      %v2437 = vpop.f32.mrb[0].mxu0
      %v2438 = vadd.f32 0.0, %v2437
      %v2439 = vpop.f32.mrb[0].mxu0
      %2440 = vmatprep.mubr.f32.mxu0 0.0
      %2441 = vmatmul.mubr.f32.gmra.mrb[0].mxu0 %v2186
      %v2442 = vpop.f32.mrb[0].mxu0
      %v2443 = vadd.f32 0.0, %v2442
      %v2444 = vpop.f32.mrb[0].mxu0
      %2445 = vmatprep.mubr.f32.mxu0 0.0
      %2446 = vmatmul.mubr.f32.gmra.mrb[0].mxu0 %v2189
      %v2447 = vpop.f32.mrb[0].mxu0
      %v2448 = vadd.f32 0.0, %v2447
      %v2449 = vpop.f32.mrb[0].mxu0
      %2450 = vmatprep.mubr.f32.mxu0 0.0
      %2451 = vmatmul.mubr.f32.gmra.mrb[0].mxu0 %v2192
      %v2452 = vpop.f32.mrb[0].mxu0
      %v2453 = vadd.f32 0.0, %v2452
      %v2454 = vpop.f32.mrb[0].mxu0
      %2455 = vmatprep.mubr.f32.mxu0 0.0
      %2456 = vmatmul.mubr.f32.gmra.mrb[0].mxu0 %v2195
      %v2457 = vpop.f32.mrb[0].mxu0
      %v2458 = vadd.f32 0.0, %v2457
      %v2459 = vpop.f32.mrb[0].mxu0
      %2460 = vmatprep.mubr.f32.mxu0 0.0
      %2461 = vmatmul.mubr.f32.gmra.mrb[0].mxu0 %v2198
      %v2462 = vpop.f32.mrb[0].mxu0
      %v2463 = vadd.f32 0.0, %v2462
      %v2464 = vpop.f32.mrb[0].mxu0
      %2465 = vmatprep.mubr.f32.mxu0 0.0
      %2466 = vmatmul.mubr.f32.gmra.mrb[0].mxu0 %v2201
      %v2467 = vpop.f32.mrb[0].mxu0
      %v2468 = vadd.f32 0.0, %v2467
      %v2469 = vpop.f32.mrb[0].mxu0
      %2470 = vmatprep.mubr.f32.mxu0 0.0
      %2471 = vmatmul.mubr.f32.gmra.mrb[0].mxu0 %v2204
      %v2472 = vpop.f32.mrb[0].mxu0
      %v2473 = vadd.f32 0.0, %v2472
      %v2474 = vpop.f32.mrb[0].mxu0
      %2475 = vdwg.mxu0
      %v2476 = vadd.f32 %v1996, %v2273
      %v2477 = vadd.f32 %v1997, %v2278
      %v2478 = vadd.f32 %v1998, %v2283
      %v2479 = vadd.f32 %v1999, %v2288
      %v2480 = vadd.f32 %v2000, %v2293
      %v2481 = vadd.f32 %v2001, %v2298
      %v2482 = vadd.f32 %v2002, %v2303
      %v2483 = vadd.f32 %v2003, %v2308
      %v2484 = vadd.f32 %v2004, %v2313
      %v2485 = vadd.f32 %v2005, %v2318
      %v2486 = vadd.f32 %v2006, %v2323
      %v2487 = vadd.f32 %v2007, %v2328
      %v2488 = vadd.f32 %v2008, %v2333
      %v2489 = vadd.f32 %v2009, %v2338
      %v2490 = vadd.f32 %v2010, %v2343
      %v2491 = vadd.f32 %v2011, %v2348
      %v2492 = vadd.f32 %v2012, %v2353
      %v2493 = vadd.f32 %v2013, %v2358
      %v2494 = vadd.f32 %v2014, %v2363
      %v2495 = vadd.f32 %v2015, %v2368
      %v2496 = vadd.f32 %v2016, %v2373
      %v2497 = vadd.f32 %v2017, %v2378
      %v2498 = vadd.f32 %v2018, %v2383
      %v2499 = vadd.f32 %v2019, %v2388
      %v2500 = vadd.f32 %v2020, %v2393
      %v2501 = vadd.f32 %v2021, %v2398
      %v2502 = vadd.f32 %v2022, %v2403
      %v2503 = vadd.f32 %v2023, %v2408
      %v2504 = vadd.f32 %v2024, %v2413
      %v2505 = vadd.f32 %v2025, %v2418
      %v2506 = vadd.f32 %v2026, %v2423
      %v2507 = vadd.f32 %v2027, %v2428
      %v2508 = vadd.f32 %v2028, %v2433
      %v2509 = vadd.f32 %v2029, %v2438
      %v2510 = vadd.f32 %v2030, %v2443
      %v2511 = vadd.f32 %v2031, %v2448
      %v2512 = vadd.f32 %v2032, %v2453
      %v2513 = vadd.f32 %v2033, %v2458
      %v2514 = vadd.f32 %v2034, %v2463
      %v2515 = vadd.f32 %v2035, %v2468
      %v2516 = vadd.f32 %v2036, %v2473
      %v2517 = vld [vmem:[%s193 + $0x14] sm:$0xff]
      %v2518 = vld [vmem:[%s193 + $0x1c] sm:$0xff]
      %v2519 = vld [vmem:[%s193 + $0x24] sm:$0xff]
      %v2520 = vld [vmem:[%s193 + $0x2c] sm:$0xff]
      %v2521 = vld [vmem:[%s193 + $0x34] sm:$0xff]
      %v2522 = vld [vmem:[%s193 + $0x3c] sm:$0xff]
      %v2523 = vld [vmem:[%s193 + $0x44] sm:$0xff]
      %v2524 = vld [vmem:[%s193 + $0x4c] sm:$0xff]
      %v2525 = vld [vmem:[%s193 + $0x54] sm:$0xff]
      %v2526 = vld [vmem:[%s193 + $0x5c] sm:$0xff]
      %v2527 = vld [vmem:[%s193 + $0x64] sm:$0xff]
      %v2528 = vld [vmem:[%s193 + $0x6c] sm:$0xff]
      %v2529 = vld [vmem:[%s193 + $0x74] sm:$0xff]
      %v2530 = vld [vmem:[%s193 + $0x7c] sm:$0xff]
      %v2531 = vld [vmem:[%s193 + $0x84] sm:$0xff]
      %v2532 = vld [vmem:[%s193 + $0x8c] sm:$0xff]
      %v2533 = vld [vmem:[%s193 + $0x94] sm:$0xff]
      %v2534 = vld [vmem:[%s193 + $0x9c] sm:$0xff]
      %v2535 = vld [vmem:[%s193 + $0xa4] sm:$0xff]
      %v2536 = vld [vmem:[%s193 + $0xac] sm:$0xff]
      %v2537 = vld [vmem:[%s193 + $0xb4] sm:$0xff]
      %v2538 = vld [vmem:[%s193 + $0xbc] sm:$0xff]
      %v2539 = vld [vmem:[%s193 + $0xc4] sm:$0xff]
      %v2540 = vld [vmem:[%s193 + $0xcc] sm:$0xff]
      %v2541 = vld [vmem:[%s193 + $0xd4] sm:$0xff]
      %v2542 = vld [vmem:[%s193 + $0xdc] sm:$0xff]
      %v2543 = vld [vmem:[%s193 + $0xe4] sm:$0xff]
      %v2544 = vld [vmem:[%s193 + $0xec] sm:$0xff]
      %v2545 = vld [vmem:[%s193 + $0xf4] sm:$0xff]
      %v2546 = vld [vmem:[%s193 + $0xfc] sm:$0xff]
      %v2547 = vld [vmem:[%s193 + $0x104] sm:$0xff]
      %v2548 = vld [vmem:[%s193 + $0x10c] sm:$0xff]
      %v2549 = vld [vmem:[%s193 + $0x114] sm:$0xff]
      %v2550 = vld [vmem:[%s193 + $0x11c] sm:$0xff]
      %v2551 = vld [vmem:[%s193 + $0x124] sm:$0xff]
      %v2552 = vld [vmem:[%s193 + $0x12c] sm:$0xff]
      %v2553 = vld [vmem:[%s193 + $0x134] sm:$0xff]
      %v2554 = vld [vmem:[%s193 + $0x13c] sm:$0xff]
      %v2555 = vld [vmem:[%s193 + $0x144] sm:$0xff]
      %v2556 = vld [vmem:[%s193 + $0x14c] sm:$0xff]
      %v2557 = vld [vmem:[%s193 + $0x154] sm:$0xff]
      %s2558 = scalar_lea.vmem %s1, 160
      %v2559 = vld [vmem:[%s2558] sm:$0xff]
      %v2560 = vld [vmem:[%s2558 + $0x8] sm:$0xff]
      %v2561 = vld [vmem:[%s2558 + $0x10] sm:$0xff]
      %v2562 = vld [vmem:[%s2558 + $0x18] sm:$0xff]
      %v2564 = vsel %vm290, %v2517, 0
      %v2567 = vsel %vm290, %v2518, 0
      %v2570 = vsel %vm290, %v2519, 0
      %v2573 = vsel %vm290, %v2520, 0
      %v2576 = vsel %vm290, %v2521, 0
      %v2579 = vsel %vm290, %v2522, 0
      %v2582 = vsel %vm290, %v2523, 0
      %v2585 = vsel %vm290, %v2524, 0
      %v2588 = vsel %vm290, %v2525, 0
      %v2591 = vsel %vm290, %v2526, 0
      %v2594 = vsel %vm290, %v2527, 0
      %v2597 = vsel %vm290, %v2528, 0
      %v2600 = vsel %vm290, %v2529, 0
      %v2603 = vsel %vm290, %v2530, 0
      %v2606 = vsel %vm290, %v2531, 0
      %v2609 = vsel %vm290, %v2532, 0
      %v2612 = vsel %vm290, %v2533, 0
      %v2615 = vsel %vm290, %v2534, 0
      %v2618 = vsel %vm290, %v2535, 0
      %v2621 = vsel %vm290, %v2536, 0
      %v2624 = vsel %vm290, %v2537, 0
      %v2627 = vsel %vm290, %v2538, 0
      %v2630 = vsel %vm290, %v2539, 0
      %v2633 = vsel %vm290, %v2540, 0
      %v2636 = vsel %vm290, %v2541, 0
      %v2639 = vsel %vm290, %v2542, 0
      %v2642 = vsel %vm290, %v2543, 0
      %v2645 = vsel %vm290, %v2544, 0
      %v2648 = vsel %vm290, %v2545, 0
      %v2651 = vsel %vm290, %v2546, 0
      %v2654 = vsel %vm290, %v2547, 0
      %v2657 = vsel %vm290, %v2548, 0
      %v2660 = vsel %vm290, %v2549, 0
      %v2663 = vsel %vm290, %v2550, 0
      %v2666 = vsel %vm290, %v2551, 0
      %v2669 = vsel %vm290, %v2552, 0
      %v2672 = vsel %vm290, %v2553, 0
      %v2675 = vsel %vm290, %v2554, 0
      %v2678 = vsel %vm290, %v2555, 0
      %v2681 = vsel %vm290, %v2556, 0
      %v2684 = vsel %vm290, %v2557, 0
      %2686 = vmatprep.subr.mxu0 0.0
      %2687 = vmatpush1.msra.mxu0 %v2559
      %2688 = vmatprep.subr.mxu0 0.0
      %2689 = vmatpush1.msra.mxu0 %v2560
      %2690 = vmatprep.subr.mxu0 0.0
      %2691 = vmatpush1.msra.mxu0 %v2561
      %2692 = vmatprep.subr.mxu0 0.0
      %2693 = vmatpush1.msra.mxu0 %v2562
      %2694 = vmatprep.subr.mxu0 0.0
      %2695 = vmatpush1.msra.mxu0 0.0
      %2696 = vmatprep.subr.mxu0 0.0
      %2697 = vmatpush1.msra.mxu0 0.0
      %2698 = vmatprep.subr.mxu0 0.0
      %2699 = vmatpush1.msra.mxu0 0.0
      %2700 = vmatprep.subr.mxu0 0.0
      %2701 = vmatpush1.msra.mxu0 0.0
      %2702 = vmatprep.subr.mxu0 0.0
      %2703 = vmatpush1.msra.mxu0 0.0
      %2704 = vmatprep.subr.mxu0 0.0
      %2705 = vmatpush1.msra.mxu0 0.0
      %2706 = vmatprep.subr.mxu0 0.0
      %2707 = vmatpush1.msra.mxu0 0.0
      %2708 = vmatprep.subr.mxu0 0.0
      %2709 = vmatpush1.msra.mxu0 0.0
      %2710 = vmatprep.subr.mxu0 0.0
      %2711 = vmatpush1.msra.mxu0 0.0
      %2712 = vmatprep.subr.mxu0 0.0
      %2713 = vmatpush1.msra.mxu0 0.0
      %2714 = vmatprep.subr.mxu0 0.0
      %2715 = vmatpush1.msra.mxu0 0.0
      %2716 = vmatprep.subr.mxu0 0.0
      %2717 = vmatpush1.msra.mxu0 0.0
      %2718 = vmatprep.subr.mxu0 0.0
      %2719 = vmatpush1.msra.mxu0 0.0
      %2720 = vmatprep.subr.mxu0 0.0
      %2721 = vmatpush1.msra.mxu0 0.0
      %2722 = vmatprep.subr.mxu0 0.0
      %2723 = vmatpush1.msra.mxu0 0.0
      %2724 = vmatprep.subr.mxu0 0.0
      %2725 = vmatpush1.msra.mxu0 0.0
      %2726 = vmatprep.subr.mxu0 0.0
      %2727 = vmatpush1.msra.mxu0 0.0
      %2728 = vmatprep.subr.mxu0 0.0
      %2729 = vmatpush1.msra.mxu0 0.0
      %2730 = vmatprep.subr.mxu0 0.0
      %2731 = vmatpush1.msra.mxu0 0.0
      %2732 = vmatprep.subr.mxu0 0.0
      %2733 = vmatpush1.msra.mxu0 0.0
      %2734 = vmatprep.subr.mxu0 0.0
      %2735 = vmatpush1.msra.mxu0 0.0
      %2736 = vmatprep.subr.mxu0 0.0
      %2737 = vmatpush1.msra.mxu0 0.0
      %2738 = vmatprep.subr.mxu0 0.0
      %2739 = vmatpush1.msra.mxu0 0.0
      %2740 = vmatprep.subr.mxu0 0.0
      %2741 = vmatpush1.msra.mxu0 0.0
      %2742 = vmatprep.subr.mxu0 0.0
      %2743 = vmatpush1.msra.mxu0 0.0
      %2744 = vmatprep.subr.mxu0 0.0
      %2745 = vmatpush1.msra.mxu0 0.0
      %2746 = vmatprep.subr.mxu0 0.0
      %2747 = vmatpush1.msra.mxu0 0.0
      %2748 = vmatprep.subr.mxu0 0.0
      %2749 = vmatpush1.msra.mxu0 0.0
      %2750 = vmatprep.mubr.f32.mxu0 0.0
      %2751 = vmatmul.mubr.f32.gmra.mrb[0].mxu0 %v2564
      %v2752 = vpop.f32.mrb[0].mxu0
      %v2753 = vadd.f32 0.0, %v2752
      %v2754 = vpop.f32.mrb[0].mxu0
      %2755 = vmatprep.mubr.f32.mxu0 0.0
      %2756 = vmatmul.mubr.f32.gmra.mrb[0].mxu0 %v2567
      %v2757 = vpop.f32.mrb[0].mxu0
      %v2758 = vadd.f32 0.0, %v2757
      %v2759 = vpop.f32.mrb[0].mxu0
      %2760 = vmatprep.mubr.f32.mxu0 0.0
      %2761 = vmatmul.mubr.f32.gmra.mrb[0].mxu0 %v2570
      %v2762 = vpop.f32.mrb[0].mxu0
      %v2763 = vadd.f32 0.0, %v2762
      %v2764 = vpop.f32.mrb[0].mxu0
      %2765 = vmatprep.mubr.f32.mxu0 0.0
      %2766 = vmatmul.mubr.f32.gmra.mrb[0].mxu0 %v2573
      %v2767 = vpop.f32.mrb[0].mxu0
      %v2768 = vadd.f32 0.0, %v2767
      %v2769 = vpop.f32.mrb[0].mxu0
      %2770 = vmatprep.mubr.f32.mxu0 0.0
      %2771 = vmatmul.mubr.f32.gmra.mrb[0].mxu0 %v2576
      %v2772 = vpop.f32.mrb[0].mxu0
      %v2773 = vadd.f32 0.0, %v2772
      %v2774 = vpop.f32.mrb[0].mxu0
      %2775 = vmatprep.mubr.f32.mxu0 0.0
      %2776 = vmatmul.mubr.f32.gmra.mrb[0].mxu0 %v2579
      %v2777 = vpop.f32.mrb[0].mxu0
      %v2778 = vadd.f32 0.0, %v2777
      %v2779 = vpop.f32.mrb[0].mxu0
      %2780 = vmatprep.mubr.f32.mxu0 0.0
      %2781 = vmatmul.mubr.f32.gmra.mrb[0].mxu0 %v2582
      %v2782 = vpop.f32.mrb[0].mxu0
      %v2783 = vadd.f32 0.0, %v2782
      %v2784 = vpop.f32.mrb[0].mxu0
      %2785 = vmatprep.mubr.f32.mxu0 0.0
      %2786 = vmatmul.mubr.f32.gmra.mrb[0].mxu0 %v2585
      %v2787 = vpop.f32.mrb[0].mxu0
      %v2788 = vadd.f32 0.0, %v2787
      %v2789 = vpop.f32.mrb[0].mxu0
      %2790 = vmatprep.mubr.f32.mxu0 0.0
      %2791 = vmatmul.mubr.f32.gmra.mrb[0].mxu0 %v2588
      %v2792 = vpop.f32.mrb[0].mxu0
      %v2793 = vadd.f32 0.0, %v2792
      %v2794 = vpop.f32.mrb[0].mxu0
      %2795 = vmatprep.mubr.f32.mxu0 0.0
      %2796 = vmatmul.mubr.f32.gmra.mrb[0].mxu0 %v2591
      %v2797 = vpop.f32.mrb[0].mxu0
      %v2798 = vadd.f32 0.0, %v2797
      %v2799 = vpop.f32.mrb[0].mxu0
      %2800 = vmatprep.mubr.f32.mxu0 0.0
      %2801 = vmatmul.mubr.f32.gmra.mrb[0].mxu0 %v2594
      %v2802 = vpop.f32.mrb[0].mxu0
      %v2803 = vadd.f32 0.0, %v2802
      %v2804 = vpop.f32.mrb[0].mxu0
      %2805 = vmatprep.mubr.f32.mxu0 0.0
      %2806 = vmatmul.mubr.f32.gmra.mrb[0].mxu0 %v2597
      %v2807 = vpop.f32.mrb[0].mxu0
      %v2808 = vadd.f32 0.0, %v2807
      %v2809 = vpop.f32.mrb[0].mxu0
      %2810 = vmatprep.mubr.f32.mxu0 0.0
      %2811 = vmatmul.mubr.f32.gmra.mrb[0].mxu0 %v2600
      %v2812 = vpop.f32.mrb[0].mxu0
      %v2813 = vadd.f32 0.0, %v2812
      %v2814 = vpop.f32.mrb[0].mxu0
      %2815 = vmatprep.mubr.f32.mxu0 0.0
      %2816 = vmatmul.mubr.f32.gmra.mrb[0].mxu0 %v2603
      %v2817 = vpop.f32.mrb[0].mxu0
      %v2818 = vadd.f32 0.0, %v2817
      %v2819 = vpop.f32.mrb[0].mxu0
      %2820 = vmatprep.mubr.f32.mxu0 0.0
      %2821 = vmatmul.mubr.f32.gmra.mrb[0].mxu0 %v2606
      %v2822 = vpop.f32.mrb[0].mxu0
      %v2823 = vadd.f32 0.0, %v2822
      %v2824 = vpop.f32.mrb[0].mxu0
      %2825 = vmatprep.mubr.f32.mxu0 0.0
      %2826 = vmatmul.mubr.f32.gmra.mrb[0].mxu0 %v2609
      %v2827 = vpop.f32.mrb[0].mxu0
      %v2828 = vadd.f32 0.0, %v2827
      %v2829 = vpop.f32.mrb[0].mxu0
      %2830 = vmatprep.mubr.f32.mxu0 0.0
      %2831 = vmatmul.mubr.f32.gmra.mrb[0].mxu0 %v2612
      %v2832 = vpop.f32.mrb[0].mxu0
      %v2833 = vadd.f32 0.0, %v2832
      %v2834 = vpop.f32.mrb[0].mxu0
      %2835 = vmatprep.mubr.f32.mxu0 0.0
      %2836 = vmatmul.mubr.f32.gmra.mrb[0].mxu0 %v2615
      %v2837 = vpop.f32.mrb[0].mxu0
      %v2838 = vadd.f32 0.0, %v2837
      %v2839 = vpop.f32.mrb[0].mxu0
      %2840 = vmatprep.mubr.f32.mxu0 0.0
      %2841 = vmatmul.mubr.f32.gmra.mrb[0].mxu0 %v2618
      %v2842 = vpop.f32.mrb[0].mxu0
      %v2843 = vadd.f32 0.0, %v2842
      %v2844 = vpop.f32.mrb[0].mxu0
      %2845 = vmatprep.mubr.f32.mxu0 0.0
      %2846 = vmatmul.mubr.f32.gmra.mrb[0].mxu0 %v2621
      %v2847 = vpop.f32.mrb[0].mxu0
      %v2848 = vadd.f32 0.0, %v2847
      %v2849 = vpop.f32.mrb[0].mxu0
      %2850 = vmatprep.mubr.f32.mxu0 0.0
      %2851 = vmatmul.mubr.f32.gmra.mrb[0].mxu0 %v2624
      %v2852 = vpop.f32.mrb[0].mxu0
      %v2853 = vadd.f32 0.0, %v2852
      %v2854 = vpop.f32.mrb[0].mxu0
      %2855 = vmatprep.mubr.f32.mxu0 0.0
      %2856 = vmatmul.mubr.f32.gmra.mrb[0].mxu0 %v2627
      %v2857 = vpop.f32.mrb[0].mxu0
      %v2858 = vadd.f32 0.0, %v2857
      %v2859 = vpop.f32.mrb[0].mxu0
      %2860 = vmatprep.mubr.f32.mxu0 0.0
      %2861 = vmatmul.mubr.f32.gmra.mrb[0].mxu0 %v2630
      %v2862 = vpop.f32.mrb[0].mxu0
      %v2863 = vadd.f32 0.0, %v2862
      %v2864 = vpop.f32.mrb[0].mxu0
      %2865 = vmatprep.mubr.f32.mxu0 0.0
      %2866 = vmatmul.mubr.f32.gmra.mrb[0].mxu0 %v2633
      %v2867 = vpop.f32.mrb[0].mxu0
      %v2868 = vadd.f32 0.0, %v2867
      %v2869 = vpop.f32.mrb[0].mxu0
      %2870 = vmatprep.mubr.f32.mxu0 0.0
      %2871 = vmatmul.mubr.f32.gmra.mrb[0].mxu0 %v2636
      %v2872 = vpop.f32.mrb[0].mxu0
      %v2873 = vadd.f32 0.0, %v2872
      %v2874 = vpop.f32.mrb[0].mxu0
      %2875 = vmatprep.mubr.f32.mxu0 0.0
      %2876 = vmatmul.mubr.f32.gmra.mrb[0].mxu0 %v2639
      %v2877 = vpop.f32.mrb[0].mxu0
      %v2878 = vadd.f32 0.0, %v2877
      %v2879 = vpop.f32.mrb[0].mxu0
      %2880 = vmatprep.mubr.f32.mxu0 0.0
      %2881 = vmatmul.mubr.f32.gmra.mrb[0].mxu0 %v2642
      %v2882 = vpop.f32.mrb[0].mxu0
      %v2883 = vadd.f32 0.0, %v2882
      %v2884 = vpop.f32.mrb[0].mxu0
      %2885 = vmatprep.mubr.f32.mxu0 0.0
      %2886 = vmatmul.mubr.f32.gmra.mrb[0].mxu0 %v2645
      %v2887 = vpop.f32.mrb[0].mxu0
      %v2888 = vadd.f32 0.0, %v2887
      %v2889 = vpop.f32.mrb[0].mxu0
      %2890 = vmatprep.mubr.f32.mxu0 0.0
      %2891 = vmatmul.mubr.f32.gmra.mrb[0].mxu0 %v2648
      %v2892 = vpop.f32.mrb[0].mxu0
      %v2893 = vadd.f32 0.0, %v2892
      %v2894 = vpop.f32.mrb[0].mxu0
      %2895 = vmatprep.mubr.f32.mxu0 0.0
      %2896 = vmatmul.mubr.f32.gmra.mrb[0].mxu0 %v2651
      %v2897 = vpop.f32.mrb[0].mxu0
      %v2898 = vadd.f32 0.0, %v2897
      %v2899 = vpop.f32.mrb[0].mxu0
      %2900 = vmatprep.mubr.f32.mxu0 0.0
      %2901 = vmatmul.mubr.f32.gmra.mrb[0].mxu0 %v2654
      %v2902 = vpop.f32.mrb[0].mxu0
      %v2903 = vadd.f32 0.0, %v2902
      %v2904 = vpop.f32.mrb[0].mxu0
      %2905 = vmatprep.mubr.f32.mxu0 0.0
      %2906 = vmatmul.mubr.f32.gmra.mrb[0].mxu0 %v2657
      %v2907 = vpop.f32.mrb[0].mxu0
      %v2908 = vadd.f32 0.0, %v2907
      %v2909 = vpop.f32.mrb[0].mxu0
      %2910 = vmatprep.mubr.f32.mxu0 0.0
      %2911 = vmatmul.mubr.f32.gmra.mrb[0].mxu0 %v2660
      %v2912 = vpop.f32.mrb[0].mxu0
      %v2913 = vadd.f32 0.0, %v2912
      %v2914 = vpop.f32.mrb[0].mxu0
      %2915 = vmatprep.mubr.f32.mxu0 0.0
      %2916 = vmatmul.mubr.f32.gmra.mrb[0].mxu0 %v2663
      %v2917 = vpop.f32.mrb[0].mxu0
      %v2918 = vadd.f32 0.0, %v2917
      %v2919 = vpop.f32.mrb[0].mxu0
      %2920 = vmatprep.mubr.f32.mxu0 0.0
      %2921 = vmatmul.mubr.f32.gmra.mrb[0].mxu0 %v2666
      %v2922 = vpop.f32.mrb[0].mxu0
      %v2923 = vadd.f32 0.0, %v2922
      %v2924 = vpop.f32.mrb[0].mxu0
      %2925 = vmatprep.mubr.f32.mxu0 0.0
      %2926 = vmatmul.mubr.f32.gmra.mrb[0].mxu0 %v2669
      %v2927 = vpop.f32.mrb[0].mxu0
      %v2928 = vadd.f32 0.0, %v2927
      %v2929 = vpop.f32.mrb[0].mxu0
      %2930 = vmatprep.mubr.f32.mxu0 0.0
      %2931 = vmatmul.mubr.f32.gmra.mrb[0].mxu0 %v2672
      %v2932 = vpop.f32.mrb[0].mxu0
      %v2933 = vadd.f32 0.0, %v2932
      %v2934 = vpop.f32.mrb[0].mxu0
      %2935 = vmatprep.mubr.f32.mxu0 0.0
      %2936 = vmatmul.mubr.f32.gmra.mrb[0].mxu0 %v2675
      %v2937 = vpop.f32.mrb[0].mxu0
      %v2938 = vadd.f32 0.0, %v2937
      %v2939 = vpop.f32.mrb[0].mxu0
      %2940 = vmatprep.mubr.f32.mxu0 0.0
      %2941 = vmatmul.mubr.f32.gmra.mrb[0].mxu0 %v2678
      %v2942 = vpop.f32.mrb[0].mxu0
      %v2943 = vadd.f32 0.0, %v2942
      %v2944 = vpop.f32.mrb[0].mxu0
      %2945 = vmatprep.mubr.f32.mxu0 0.0
      %2946 = vmatmul.mubr.f32.gmra.mrb[0].mxu0 %v2681
      %v2947 = vpop.f32.mrb[0].mxu0
      %v2948 = vadd.f32 0.0, %v2947
      %v2949 = vpop.f32.mrb[0].mxu0
      %2950 = vmatprep.mubr.f32.mxu0 0.0
      %2951 = vmatmul.mubr.f32.gmra.mrb[0].mxu0 %v2684
      %v2952 = vpop.f32.mrb[0].mxu0
      %v2953 = vadd.f32 0.0, %v2952
      %v2954 = vpop.f32.mrb[0].mxu0
      %2955 = vdwg.mxu0
      %v2956 = vadd.f32 %v2476, %v2753
      %v2957 = vadd.f32 %v2477, %v2758
      %v2958 = vadd.f32 %v2478, %v2763
      %v2959 = vadd.f32 %v2479, %v2768
      %v2960 = vadd.f32 %v2480, %v2773
      %v2961 = vadd.f32 %v2481, %v2778
      %v2962 = vadd.f32 %v2482, %v2783
      %v2963 = vadd.f32 %v2483, %v2788
      %v2964 = vadd.f32 %v2484, %v2793
      %v2965 = vadd.f32 %v2485, %v2798
      %v2966 = vadd.f32 %v2486, %v2803
      %v2967 = vadd.f32 %v2487, %v2808
      %v2968 = vadd.f32 %v2488, %v2813
      %v2969 = vadd.f32 %v2489, %v2818
      %v2970 = vadd.f32 %v2490, %v2823
      %v2971 = vadd.f32 %v2491, %v2828
      %v2972 = vadd.f32 %v2492, %v2833
      %v2973 = vadd.f32 %v2493, %v2838
      %v2974 = vadd.f32 %v2494, %v2843
      %v2975 = vadd.f32 %v2495, %v2848
      %v2976 = vadd.f32 %v2496, %v2853
      %v2977 = vadd.f32 %v2497, %v2858
      %v2978 = vadd.f32 %v2498, %v2863
      %v2979 = vadd.f32 %v2499, %v2868
      %v2980 = vadd.f32 %v2500, %v2873
      %v2981 = vadd.f32 %v2501, %v2878
      %v2982 = vadd.f32 %v2502, %v2883
      %v2983 = vadd.f32 %v2503, %v2888
      %v2984 = vadd.f32 %v2504, %v2893
      %v2985 = vadd.f32 %v2505, %v2898
      %v2986 = vadd.f32 %v2506, %v2903
      %v2987 = vadd.f32 %v2507, %v2908
      %v2988 = vadd.f32 %v2508, %v2913
      %v2989 = vadd.f32 %v2509, %v2918
      %v2990 = vadd.f32 %v2510, %v2923
      %v2991 = vadd.f32 %v2511, %v2928
      %v2992 = vadd.f32 %v2512, %v2933
      %v2993 = vadd.f32 %v2513, %v2938
      %v2994 = vadd.f32 %v2514, %v2943
      %v2995 = vadd.f32 %v2515, %v2948
      %v2996 = vadd.f32 %v2516, %v2953
      %v2997 = vld [vmem:[%s193 + $0x24] sm:$0xff]
      %v2998 = vld [vmem:[%s193 + $0x2c] sm:$0xff]
      %v2999 = vld [vmem:[%s193 + $0x34] sm:$0xff]
      %v3000 = vld [vmem:[%s193 + $0x3c] sm:$0xff]
      %v3001 = vld [vmem:[%s193 + $0x44] sm:$0xff]
      %v3002 = vld [vmem:[%s193 + $0x4c] sm:$0xff]
      %v3003 = vld [vmem:[%s193 + $0x54] sm:$0xff]
      %v3004 = vld [vmem:[%s193 + $0x5c] sm:$0xff]
      %v3005 = vld [vmem:[%s193 + $0x64] sm:$0xff]
      %v3006 = vld [vmem:[%s193 + $0x6c] sm:$0xff]
      %v3007 = vld [vmem:[%s193 + $0x74] sm:$0xff]
      %v3008 = vld [vmem:[%s193 + $0x7c] sm:$0xff]
      %v3009 = vld [vmem:[%s193 + $0x84] sm:$0xff]
      %v3010 = vld [vmem:[%s193 + $0x8c] sm:$0xff]
      %v3011 = vld [vmem:[%s193 + $0x94] sm:$0xff]
      %v3012 = vld [vmem:[%s193 + $0x9c] sm:$0xff]
      %v3013 = vld [vmem:[%s193 + $0xa4] sm:$0xff]
      %v3014 = vld [vmem:[%s193 + $0xac] sm:$0xff]
      %v3015 = vld [vmem:[%s193 + $0xb4] sm:$0xff]
      %v3016 = vld [vmem:[%s193 + $0xbc] sm:$0xff]
      %v3017 = vld [vmem:[%s193 + $0xc4] sm:$0xff]
      %v3018 = vld [vmem:[%s193 + $0xcc] sm:$0xff]
      %v3019 = vld [vmem:[%s193 + $0xd4] sm:$0xff]
      %v3020 = vld [vmem:[%s193 + $0xdc] sm:$0xff]
      %v3021 = vld [vmem:[%s193 + $0xe4] sm:$0xff]
      %v3022 = vld [vmem:[%s193 + $0xec] sm:$0xff]
      %v3023 = vld [vmem:[%s193 + $0xf4] sm:$0xff]
      %v3024 = vld [vmem:[%s193 + $0xfc] sm:$0xff]
      %v3025 = vld [vmem:[%s193 + $0x104] sm:$0xff]
      %v3026 = vld [vmem:[%s193 + $0x10c] sm:$0xff]
      %v3027 = vld [vmem:[%s193 + $0x114] sm:$0xff]
      %v3028 = vld [vmem:[%s193 + $0x11c] sm:$0xff]
      %v3029 = vld [vmem:[%s193 + $0x124] sm:$0xff]
      %v3030 = vld [vmem:[%s193 + $0x12c] sm:$0xff]
      %v3031 = vld [vmem:[%s193 + $0x134] sm:$0xff]
      %v3032 = vld [vmem:[%s193 + $0x13c] sm:$0xff]
      %v3033 = vld [vmem:[%s193 + $0x144] sm:$0xff]
      %v3034 = vld [vmem:[%s193 + $0x14c] sm:$0xff]
      %v3035 = vld [vmem:[%s193 + $0x154] sm:$0xff]
      %v3036 = vld [vmem:[%s193 + $0x15c] sm:$0xff]
      %v3037 = vld [vmem:[%s193 + $0x164] sm:$0xff]
      %s3038 = scalar_lea.vmem %s1, 192
      %v3039 = vld [vmem:[%s3038] sm:$0xff]
      %v3040 = vld [vmem:[%s3038 + $0x8] sm:$0xff]
      %v3041 = vld [vmem:[%s3038 + $0x10] sm:$0xff]
      %v3042 = vld [vmem:[%s3038 + $0x18] sm:$0xff]
      %v3044 = vsel %vm290, %v2997, 0
      %v3047 = vsel %vm290, %v2998, 0
      %v3050 = vsel %vm290, %v2999, 0
      %v3053 = vsel %vm290, %v3000, 0
      %v3056 = vsel %vm290, %v3001, 0
      %v3059 = vsel %vm290, %v3002, 0
      %v3062 = vsel %vm290, %v3003, 0
      %v3065 = vsel %vm290, %v3004, 0
      %v3068 = vsel %vm290, %v3005, 0
      %v3071 = vsel %vm290, %v3006, 0
      %v3074 = vsel %vm290, %v3007, 0
      %v3077 = vsel %vm290, %v3008, 0
      %v3080 = vsel %vm290, %v3009, 0
      %v3083 = vsel %vm290, %v3010, 0
      %v3086 = vsel %vm290, %v3011, 0
      %v3089 = vsel %vm290, %v3012, 0
      %v3092 = vsel %vm290, %v3013, 0
      %v3095 = vsel %vm290, %v3014, 0
      %v3098 = vsel %vm290, %v3015, 0
      %v3101 = vsel %vm290, %v3016, 0
      %v3104 = vsel %vm290, %v3017, 0
      %v3107 = vsel %vm290, %v3018, 0
      %v3110 = vsel %vm290, %v3019, 0
      %v3113 = vsel %vm290, %v3020, 0
      %v3116 = vsel %vm290, %v3021, 0
      %v3119 = vsel %vm290, %v3022, 0
      %v3122 = vsel %vm290, %v3023, 0
      %v3125 = vsel %vm290, %v3024, 0
      %v3128 = vsel %vm290, %v3025, 0
      %v3131 = vsel %vm290, %v3026, 0
      %v3134 = vsel %vm290, %v3027, 0
      %v3137 = vsel %vm290, %v3028, 0
      %v3140 = vsel %vm290, %v3029, 0
      %v3143 = vsel %vm290, %v3030, 0
      %v3146 = vsel %vm290, %v3031, 0
      %v3149 = vsel %vm290, %v3032, 0
      %v3152 = vsel %vm290, %v3033, 0
      %v3155 = vsel %vm290, %v3034, 0
      %v3158 = vsel %vm290, %v3035, 0
      %v3161 = vsel %vm290, %v3036, 0
      %v3164 = vsel %vm290, %v3037, 0
      %3166 = vmatprep.subr.mxu0 0.0
      %3167 = vmatpush1.msra.mxu0 %v3039
      %3168 = vmatprep.subr.mxu0 0.0
      %3169 = vmatpush1.msra.mxu0 %v3040
      %3170 = vmatprep.subr.mxu0 0.0
      %3171 = vmatpush1.msra.mxu0 %v3041
      %3172 = vmatprep.subr.mxu0 0.0
      %3173 = vmatpush1.msra.mxu0 %v3042
      %3174 = vmatprep.subr.mxu0 0.0
      %3175 = vmatpush1.msra.mxu0 0.0
      %3176 = vmatprep.subr.mxu0 0.0
      %3177 = vmatpush1.msra.mxu0 0.0
      %3178 = vmatprep.subr.mxu0 0.0
      %3179 = vmatpush1.msra.mxu0 0.0
      %3180 = vmatprep.subr.mxu0 0.0
      %3181 = vmatpush1.msra.mxu0 0.0
      %3182 = vmatprep.subr.mxu0 0.0
      %3183 = vmatpush1.msra.mxu0 0.0
      %3184 = vmatprep.subr.mxu0 0.0
      %3185 = vmatpush1.msra.mxu0 0.0
      %3186 = vmatprep.subr.mxu0 0.0
      %3187 = vmatpush1.msra.mxu0 0.0
      %3188 = vmatprep.subr.mxu0 0.0
      %3189 = vmatpush1.msra.mxu0 0.0
      %3190 = vmatprep.subr.mxu0 0.0
      %3191 = vmatpush1.msra.mxu0 0.0
      %3192 = vmatprep.subr.mxu0 0.0
      %3193 = vmatpush1.msra.mxu0 0.0
      %3194 = vmatprep.subr.mxu0 0.0
      %3195 = vmatpush1.msra.mxu0 0.0
      %3196 = vmatprep.subr.mxu0 0.0
      %3197 = vmatpush1.msra.mxu0 0.0
      %3198 = vmatprep.subr.mxu0 0.0
      %3199 = vmatpush1.msra.mxu0 0.0
      %3200 = vmatprep.subr.mxu0 0.0
      %3201 = vmatpush1.msra.mxu0 0.0
      %3202 = vmatprep.subr.mxu0 0.0
      %3203 = vmatpush1.msra.mxu0 0.0
      %3204 = vmatprep.subr.mxu0 0.0
      %3205 = vmatpush1.msra.mxu0 0.0
      %3206 = vmatprep.subr.mxu0 0.0
      %3207 = vmatpush1.msra.mxu0 0.0
      %3208 = vmatprep.subr.mxu0 0.0
      %3209 = vmatpush1.msra.mxu0 0.0
      %3210 = vmatprep.subr.mxu0 0.0
      %3211 = vmatpush1.msra.mxu0 0.0
      %3212 = vmatprep.subr.mxu0 0.0
      %3213 = vmatpush1.msra.mxu0 0.0
      %3214 = vmatprep.subr.mxu0 0.0
      %3215 = vmatpush1.msra.mxu0 0.0
      %3216 = vmatprep.subr.mxu0 0.0
      %3217 = vmatpush1.msra.mxu0 0.0
      %3218 = vmatprep.subr.mxu0 0.0
      %3219 = vmatpush1.msra.mxu0 0.0
      %3220 = vmatprep.subr.mxu0 0.0
      %3221 = vmatpush1.msra.mxu0 0.0
      %3222 = vmatprep.subr.mxu0 0.0
      %3223 = vmatpush1.msra.mxu0 0.0
      %3224 = vmatprep.subr.mxu0 0.0
      %3225 = vmatpush1.msra.mxu0 0.0
      %3226 = vmatprep.subr.mxu0 0.0
      %3227 = vmatpush1.msra.mxu0 0.0
      %3228 = vmatprep.subr.mxu0 0.0
      %3229 = vmatpush1.msra.mxu0 0.0
      %3230 = vmatprep.mubr.f32.mxu0 0.0
      %3231 = vmatmul.mubr.f32.gmra.mrb[0].mxu0 %v3044
      %v3232 = vpop.f32.mrb[0].mxu0
      %v3233 = vadd.f32 0.0, %v3232
      %v3234 = vpop.f32.mrb[0].mxu0
      %3235 = vmatprep.mubr.f32.mxu0 0.0
      %3236 = vmatmul.mubr.f32.gmra.mrb[0].mxu0 %v3047
      %v3237 = vpop.f32.mrb[0].mxu0
      %v3238 = vadd.f32 0.0, %v3237
      %v3239 = vpop.f32.mrb[0].mxu0
      %3240 = vmatprep.mubr.f32.mxu0 0.0
      %3241 = vmatmul.mubr.f32.gmra.mrb[0].mxu0 %v3050
      %v3242 = vpop.f32.mrb[0].mxu0
      %v3243 = vadd.f32 0.0, %v3242
      %v3244 = vpop.f32.mrb[0].mxu0
      %3245 = vmatprep.mubr.f32.mxu0 0.0
      %3246 = vmatmul.mubr.f32.gmra.mrb[0].mxu0 %v3053
      %v3247 = vpop.f32.mrb[0].mxu0
      %v3248 = vadd.f32 0.0, %v3247
      %v3249 = vpop.f32.mrb[0].mxu0
      %3250 = vmatprep.mubr.f32.mxu0 0.0
      %3251 = vmatmul.mubr.f32.gmra.mrb[0].mxu0 %v3056
      %v3252 = vpop.f32.mrb[0].mxu0
      %v3253 = vadd.f32 0.0, %v3252
      %v3254 = vpop.f32.mrb[0].mxu0
      %3255 = vmatprep.mubr.f32.mxu0 0.0
      %3256 = vmatmul.mubr.f32.gmra.mrb[0].mxu0 %v3059
      %v3257 = vpop.f32.mrb[0].mxu0
      %v3258 = vadd.f32 0.0, %v3257
      %v3259 = vpop.f32.mrb[0].mxu0
      %3260 = vmatprep.mubr.f32.mxu0 0.0
      %3261 = vmatmul.mubr.f32.gmra.mrb[0].mxu0 %v3062
      %v3262 = vpop.f32.mrb[0].mxu0
      %v3263 = vadd.f32 0.0, %v3262
      %v3264 = vpop.f32.mrb[0].mxu0
      %3265 = vmatprep.mubr.f32.mxu0 0.0
      %3266 = vmatmul.mubr.f32.gmra.mrb[0].mxu0 %v3065
      %v3267 = vpop.f32.mrb[0].mxu0
      %v3268 = vadd.f32 0.0, %v3267
      %v3269 = vpop.f32.mrb[0].mxu0
      %3270 = vmatprep.mubr.f32.mxu0 0.0
      %3271 = vmatmul.mubr.f32.gmra.mrb[0].mxu0 %v3068
      %v3272 = vpop.f32.mrb[0].mxu0
      %v3273 = vadd.f32 0.0, %v3272
      %v3274 = vpop.f32.mrb[0].mxu0
      %3275 = vmatprep.mubr.f32.mxu0 0.0
      %3276 = vmatmul.mubr.f32.gmra.mrb[0].mxu0 %v3071
      %v3277 = vpop.f32.mrb[0].mxu0
      %v3278 = vadd.f32 0.0, %v3277
      %v3279 = vpop.f32.mrb[0].mxu0
      %3280 = vmatprep.mubr.f32.mxu0 0.0
      %3281 = vmatmul.mubr.f32.gmra.mrb[0].mxu0 %v3074
      %v3282 = vpop.f32.mrb[0].mxu0
      %v3283 = vadd.f32 0.0, %v3282
      %v3284 = vpop.f32.mrb[0].mxu0
      %3285 = vmatprep.mubr.f32.mxu0 0.0
      %3286 = vmatmul.mubr.f32.gmra.mrb[0].mxu0 %v3077
      %v3287 = vpop.f32.mrb[0].mxu0
      %v3288 = vadd.f32 0.0, %v3287
      %v3289 = vpop.f32.mrb[0].mxu0
      %3290 = vmatprep.mubr.f32.mxu0 0.0
      %3291 = vmatmul.mubr.f32.gmra.mrb[0].mxu0 %v3080
      %v3292 = vpop.f32.mrb[0].mxu0
      %v3293 = vadd.f32 0.0, %v3292
      %v3294 = vpop.f32.mrb[0].mxu0
      %3295 = vmatprep.mubr.f32.mxu0 0.0
      %3296 = vmatmul.mubr.f32.gmra.mrb[0].mxu0 %v3083
      %v3297 = vpop.f32.mrb[0].mxu0
      %v3298 = vadd.f32 0.0, %v3297
      %v3299 = vpop.f32.mrb[0].mxu0
      %3300 = vmatprep.mubr.f32.mxu0 0.0
      %3301 = vmatmul.mubr.f32.gmra.mrb[0].mxu0 %v3086
      %v3302 = vpop.f32.mrb[0].mxu0
      %v3303 = vadd.f32 0.0, %v3302
      %v3304 = vpop.f32.mrb[0].mxu0
      %3305 = vmatprep.mubr.f32.mxu0 0.0
      %3306 = vmatmul.mubr.f32.gmra.mrb[0].mxu0 %v3089
      %v3307 = vpop.f32.mrb[0].mxu0
      %v3308 = vadd.f32 0.0, %v3307
      %v3309 = vpop.f32.mrb[0].mxu0
      %3310 = vmatprep.mubr.f32.mxu0 0.0
      %3311 = vmatmul.mubr.f32.gmra.mrb[0].mxu0 %v3092
      %v3312 = vpop.f32.mrb[0].mxu0
      %v3313 = vadd.f32 0.0, %v3312
      %v3314 = vpop.f32.mrb[0].mxu0
      %3315 = vmatprep.mubr.f32.mxu0 0.0
      %3316 = vmatmul.mubr.f32.gmra.mrb[0].mxu0 %v3095
      %v3317 = vpop.f32.mrb[0].mxu0
      %v3318 = vadd.f32 0.0, %v3317
      %v3319 = vpop.f32.mrb[0].mxu0
      %3320 = vmatprep.mubr.f32.mxu0 0.0
      %3321 = vmatmul.mubr.f32.gmra.mrb[0].mxu0 %v3098
      %v3322 = vpop.f32.mrb[0].mxu0
      %v3323 = vadd.f32 0.0, %v3322
      %v3324 = vpop.f32.mrb[0].mxu0
      %3325 = vmatprep.mubr.f32.mxu0 0.0
      %3326 = vmatmul.mubr.f32.gmra.mrb[0].mxu0 %v3101
      %v3327 = vpop.f32.mrb[0].mxu0
      %v3328 = vadd.f32 0.0, %v3327
      %v3329 = vpop.f32.mrb[0].mxu0
      %3330 = vmatprep.mubr.f32.mxu0 0.0
      %3331 = vmatmul.mubr.f32.gmra.mrb[0].mxu0 %v3104
      %v3332 = vpop.f32.mrb[0].mxu0
      %v3333 = vadd.f32 0.0, %v3332
      %v3334 = vpop.f32.mrb[0].mxu0
      %3335 = vmatprep.mubr.f32.mxu0 0.0
      %3336 = vmatmul.mubr.f32.gmra.mrb[0].mxu0 %v3107
      %v3337 = vpop.f32.mrb[0].mxu0
      %v3338 = vadd.f32 0.0, %v3337
      %v3339 = vpop.f32.mrb[0].mxu0
      %3340 = vmatprep.mubr.f32.mxu0 0.0
      %3341 = vmatmul.mubr.f32.gmra.mrb[0].mxu0 %v3110
      %v3342 = vpop.f32.mrb[0].mxu0
      %v3343 = vadd.f32 0.0, %v3342
      %v3344 = vpop.f32.mrb[0].mxu0
      %3345 = vmatprep.mubr.f32.mxu0 0.0
      %3346 = vmatmul.mubr.f32.gmra.mrb[0].mxu0 %v3113
      %v3347 = vpop.f32.mrb[0].mxu0
      %v3348 = vadd.f32 0.0, %v3347
      %v3349 = vpop.f32.mrb[0].mxu0
      %3350 = vmatprep.mubr.f32.mxu0 0.0
      %3351 = vmatmul.mubr.f32.gmra.mrb[0].mxu0 %v3116
      %v3352 = vpop.f32.mrb[0].mxu0
      %v3353 = vadd.f32 0.0, %v3352
      %v3354 = vpop.f32.mrb[0].mxu0
      %3355 = vmatprep.mubr.f32.mxu0 0.0
      %3356 = vmatmul.mubr.f32.gmra.mrb[0].mxu0 %v3119
      %v3357 = vpop.f32.mrb[0].mxu0
      %v3358 = vadd.f32 0.0, %v3357
      %v3359 = vpop.f32.mrb[0].mxu0
      %3360 = vmatprep.mubr.f32.mxu0 0.0
      %3361 = vmatmul.mubr.f32.gmra.mrb[0].mxu0 %v3122
      %v3362 = vpop.f32.mrb[0].mxu0
      %v3363 = vadd.f32 0.0, %v3362
      %v3364 = vpop.f32.mrb[0].mxu0
      %3365 = vmatprep.mubr.f32.mxu0 0.0
      %3366 = vmatmul.mubr.f32.gmra.mrb[0].mxu0 %v3125
      %v3367 = vpop.f32.mrb[0].mxu0
      %v3368 = vadd.f32 0.0, %v3367
      %v3369 = vpop.f32.mrb[0].mxu0
      %3370 = vmatprep.mubr.f32.mxu0 0.0
      %3371 = vmatmul.mubr.f32.gmra.mrb[0].mxu0 %v3128
      %v3372 = vpop.f32.mrb[0].mxu0
      %v3373 = vadd.f32 0.0, %v3372
      %v3374 = vpop.f32.mrb[0].mxu0
      %3375 = vmatprep.mubr.f32.mxu0 0.0
      %3376 = vmatmul.mubr.f32.gmra.mrb[0].mxu0 %v3131
      %v3377 = vpop.f32.mrb[0].mxu0
      %v3378 = vadd.f32 0.0, %v3377
      %v3379 = vpop.f32.mrb[0].mxu0
      %3380 = vmatprep.mubr.f32.mxu0 0.0
      %3381 = vmatmul.mubr.f32.gmra.mrb[0].mxu0 %v3134
      %v3382 = vpop.f32.mrb[0].mxu0
      %v3383 = vadd.f32 0.0, %v3382
      %v3384 = vpop.f32.mrb[0].mxu0
      %3385 = vmatprep.mubr.f32.mxu0 0.0
      %3386 = vmatmul.mubr.f32.gmra.mrb[0].mxu0 %v3137
      %v3387 = vpop.f32.mrb[0].mxu0
      %v3388 = vadd.f32 0.0, %v3387
      %v3389 = vpop.f32.mrb[0].mxu0
      %3390 = vmatprep.mubr.f32.mxu0 0.0
      %3391 = vmatmul.mubr.f32.gmra.mrb[0].mxu0 %v3140
      %v3392 = vpop.f32.mrb[0].mxu0
      %v3393 = vadd.f32 0.0, %v3392
      %v3394 = vpop.f32.mrb[0].mxu0
      %3395 = vmatprep.mubr.f32.mxu0 0.0
      %3396 = vmatmul.mubr.f32.gmra.mrb[0].mxu0 %v3143
      %v3397 = vpop.f32.mrb[0].mxu0
      %v3398 = vadd.f32 0.0, %v3397
      %v3399 = vpop.f32.mrb[0].mxu0
      %3400 = vmatprep.mubr.f32.mxu0 0.0
      %3401 = vmatmul.mubr.f32.gmra.mrb[0].mxu0 %v3146
      %v3402 = vpop.f32.mrb[0].mxu0
      %v3403 = vadd.f32 0.0, %v3402
      %v3404 = vpop.f32.mrb[0].mxu0
      %3405 = vmatprep.mubr.f32.mxu0 0.0
      %3406 = vmatmul.mubr.f32.gmra.mrb[0].mxu0 %v3149
      %v3407 = vpop.f32.mrb[0].mxu0
      %v3408 = vadd.f32 0.0, %v3407
      %v3409 = vpop.f32.mrb[0].mxu0
      %3410 = vmatprep.mubr.f32.mxu0 0.0
      %3411 = vmatmul.mubr.f32.gmra.mrb[0].mxu0 %v3152
      %v3412 = vpop.f32.mrb[0].mxu0
      %v3413 = vadd.f32 0.0, %v3412
      %v3414 = vpop.f32.mrb[0].mxu0
      %3415 = vmatprep.mubr.f32.mxu0 0.0
      %3416 = vmatmul.mubr.f32.gmra.mrb[0].mxu0 %v3155
      %v3417 = vpop.f32.mrb[0].mxu0
      %v3418 = vadd.f32 0.0, %v3417
      %v3419 = vpop.f32.mrb[0].mxu0
      %3420 = vmatprep.mubr.f32.mxu0 0.0
      %3421 = vmatmul.mubr.f32.gmra.mrb[0].mxu0 %v3158
      %v3422 = vpop.f32.mrb[0].mxu0
      %v3423 = vadd.f32 0.0, %v3422
      %v3424 = vpop.f32.mrb[0].mxu0
      %3425 = vmatprep.mubr.f32.mxu0 0.0
      %3426 = vmatmul.mubr.f32.gmra.mrb[0].mxu0 %v3161
      %v3427 = vpop.f32.mrb[0].mxu0
      %v3428 = vadd.f32 0.0, %v3427
      %v3429 = vpop.f32.mrb[0].mxu0
      %3430 = vmatprep.mubr.f32.mxu0 0.0
      %3431 = vmatmul.mubr.f32.gmra.mrb[0].mxu0 %v3164
      %v3432 = vpop.f32.mrb[0].mxu0
      %v3433 = vadd.f32 0.0, %v3432
      %v3434 = vpop.f32.mrb[0].mxu0
      %3435 = vdwg.mxu0
      %v3436 = vadd.f32 %v2956, %v3233
      %v3437 = vadd.f32 %v2957, %v3238
      %v3438 = vadd.f32 %v2958, %v3243
      %v3439 = vadd.f32 %v2959, %v3248
      %v3440 = vadd.f32 %v2960, %v3253
      %v3441 = vadd.f32 %v2961, %v3258
      %v3442 = vadd.f32 %v2962, %v3263
      %v3443 = vadd.f32 %v2963, %v3268
      %v3444 = vadd.f32 %v2964, %v3273
      %v3445 = vadd.f32 %v2965, %v3278
      %v3446 = vadd.f32 %v2966, %v3283
      %v3447 = vadd.f32 %v2967, %v3288
      %v3448 = vadd.f32 %v2968, %v3293
      %v3449 = vadd.f32 %v2969, %v3298
      %v3450 = vadd.f32 %v2970, %v3303
      %v3451 = vadd.f32 %v2971, %v3308
      %v3452 = vadd.f32 %v2972, %v3313
      %v3453 = vadd.f32 %v2973, %v3318
      %v3454 = vadd.f32 %v2974, %v3323
      %v3455 = vadd.f32 %v2975, %v3328
      %v3456 = vadd.f32 %v2976, %v3333
      %v3457 = vadd.f32 %v2977, %v3338
      %v3458 = vadd.f32 %v2978, %v3343
      %v3459 = vadd.f32 %v2979, %v3348
      %v3460 = vadd.f32 %v2980, %v3353
      %v3461 = vadd.f32 %v2981, %v3358
      %v3462 = vadd.f32 %v2982, %v3363
      %v3463 = vadd.f32 %v2983, %v3368
      %v3464 = vadd.f32 %v2984, %v3373
      %v3465 = vadd.f32 %v2985, %v3378
      %v3466 = vadd.f32 %v2986, %v3383
      %v3467 = vadd.f32 %v2987, %v3388
      %v3468 = vadd.f32 %v2988, %v3393
      %v3469 = vadd.f32 %v2989, %v3398
      %v3470 = vadd.f32 %v2990, %v3403
      %v3471 = vadd.f32 %v2991, %v3408
      %v3472 = vadd.f32 %v2992, %v3413
      %v3473 = vadd.f32 %v2993, %v3418
      %v3474 = vadd.f32 %v2994, %v3423
      %v3475 = vadd.f32 %v2995, %v3428
      %v3476 = vadd.f32 %v2996, %v3433
      %v3477 = vld [vmem:[%s193 + $0x25] sm:$0xff]
      %v3478 = vld [vmem:[%s193 + $0x2d] sm:$0xff]
      %v3479 = vld [vmem:[%s193 + $0x35] sm:$0xff]
      %v3480 = vld [vmem:[%s193 + $0x3d] sm:$0xff]
      %v3481 = vld [vmem:[%s193 + $0x45] sm:$0xff]
      %v3482 = vld [vmem:[%s193 + $0x4d] sm:$0xff]
      %v3483 = vld [vmem:[%s193 + $0x55] sm:$0xff]
      %v3484 = vld [vmem:[%s193 + $0x5d] sm:$0xff]
      %v3485 = vld [vmem:[%s193 + $0x65] sm:$0xff]
      %v3486 = vld [vmem:[%s193 + $0x6d] sm:$0xff]
      %v3487 = vld [vmem:[%s193 + $0x75] sm:$0xff]
      %v3488 = vld [vmem:[%s193 + $0x7d] sm:$0xff]
      %v3489 = vld [vmem:[%s193 + $0x85] sm:$0xff]
      %v3490 = vld [vmem:[%s193 + $0x8d] sm:$0xff]
      %v3491 = vld [vmem:[%s193 + $0x95] sm:$0xff]
      %v3492 = vld [vmem:[%s193 + $0x9d] sm:$0xff]
      %v3493 = vld [vmem:[%s193 + $0xa5] sm:$0xff]
      %v3494 = vld [vmem:[%s193 + $0xad] sm:$0xff]
      %v3495 = vld [vmem:[%s193 + $0xb5] sm:$0xff]
      %v3496 = vld [vmem:[%s193 + $0xbd] sm:$0xff]
      %v3497 = vld [vmem:[%s193 + $0xc5] sm:$0xff]
      %v3498 = vld [vmem:[%s193 + $0xcd] sm:$0xff]
      %v3499 = vld [vmem:[%s193 + $0xd5] sm:$0xff]
      %v3500 = vld [vmem:[%s193 + $0xdd] sm:$0xff]
      %v3501 = vld [vmem:[%s193 + $0xe5] sm:$0xff]
      %v3502 = vld [vmem:[%s193 + $0xed] sm:$0xff]
      %v3503 = vld [vmem:[%s193 + $0xf5] sm:$0xff]
      %v3504 = vld [vmem:[%s193 + $0xfd] sm:$0xff]
      %v3505 = vld [vmem:[%s193 + $0x105] sm:$0xff]
      %v3506 = vld [vmem:[%s193 + $0x10d] sm:$0xff]
      %v3507 = vld [vmem:[%s193 + $0x115] sm:$0xff]
      %v3508 = vld [vmem:[%s193 + $0x11d] sm:$0xff]
      %v3509 = vld [vmem:[%s193 + $0x125] sm:$0xff]
      %v3510 = vld [vmem:[%s193 + $0x12d] sm:$0xff]
      %v3511 = vld [vmem:[%s193 + $0x135] sm:$0xff]
      %v3512 = vld [vmem:[%s193 + $0x13d] sm:$0xff]
      %v3513 = vld [vmem:[%s193 + $0x145] sm:$0xff]
      %v3514 = vld [vmem:[%s193 + $0x14d] sm:$0xff]
      %v3515 = vld [vmem:[%s193 + $0x155] sm:$0xff]
      %v3516 = vld [vmem:[%s193 + $0x15d] sm:$0xff]
      %v3517 = vld [vmem:[%s193 + $0x165] sm:$0xff]
      %s3518 = scalar_lea.vmem %s1, 224
      %v3519 = vld [vmem:[%s3518] sm:$0xff]
      %v3520 = vld [vmem:[%s3518 + $0x8] sm:$0xff]
      %v3521 = vld [vmem:[%s3518 + $0x10] sm:$0xff]
      %v3522 = vld [vmem:[%s3518 + $0x18] sm:$0xff]
      %v3524 = vsel %vm290, %v3477, 0
      %v3527 = vsel %vm290, %v3478, 0
      %v3530 = vsel %vm290, %v3479, 0
      %v3533 = vsel %vm290, %v3480, 0
      %v3536 = vsel %vm290, %v3481, 0
      %v3539 = vsel %vm290, %v3482, 0
      %v3542 = vsel %vm290, %v3483, 0
      %v3545 = vsel %vm290, %v3484, 0
      %v3548 = vsel %vm290, %v3485, 0
      %v3551 = vsel %vm290, %v3486, 0
      %v3554 = vsel %vm290, %v3487, 0
      %v3557 = vsel %vm290, %v3488, 0
      %v3560 = vsel %vm290, %v3489, 0
      %v3563 = vsel %vm290, %v3490, 0
      %v3566 = vsel %vm290, %v3491, 0
      %v3569 = vsel %vm290, %v3492, 0
      %v3572 = vsel %vm290, %v3493, 0
      %v3575 = vsel %vm290, %v3494, 0
      %v3578 = vsel %vm290, %v3495, 0
      %v3581 = vsel %vm290, %v3496, 0
      %v3584 = vsel %vm290, %v3497, 0
      %v3587 = vsel %vm290, %v3498, 0
      %v3590 = vsel %vm290, %v3499, 0
      %v3593 = vsel %vm290, %v3500, 0
      %v3596 = vsel %vm290, %v3501, 0
      %v3599 = vsel %vm290, %v3502, 0
      %v3602 = vsel %vm290, %v3503, 0
      %v3605 = vsel %vm290, %v3504, 0
      %v3608 = vsel %vm290, %v3505, 0
      %v3611 = vsel %vm290, %v3506, 0
      %v3614 = vsel %vm290, %v3507, 0
      %v3617 = vsel %vm290, %v3508, 0
      %v3620 = vsel %vm290, %v3509, 0
      %v3623 = vsel %vm290, %v3510, 0
      %v3626 = vsel %vm290, %v3511, 0
      %v3629 = vsel %vm290, %v3512, 0
      %v3632 = vsel %vm290, %v3513, 0
      %v3635 = vsel %vm290, %v3514, 0
      %v3638 = vsel %vm290, %v3515, 0
      %v3641 = vsel %vm290, %v3516, 0
      %v3644 = vsel %vm290, %v3517, 0
      %3646 = vmatprep.subr.mxu0 0.0
      %3647 = vmatpush1.msra.mxu0 %v3519
      %3648 = vmatprep.subr.mxu0 0.0
      %3649 = vmatpush1.msra.mxu0 %v3520
      %3650 = vmatprep.subr.mxu0 0.0
      %3651 = vmatpush1.msra.mxu0 %v3521
      %3652 = vmatprep.subr.mxu0 0.0
      %3653 = vmatpush1.msra.mxu0 %v3522
      %3654 = vmatprep.subr.mxu0 0.0
      %3655 = vmatpush1.msra.mxu0 0.0
      %3656 = vmatprep.subr.mxu0 0.0
      %3657 = vmatpush1.msra.mxu0 0.0
      %3658 = vmatprep.subr.mxu0 0.0
      %3659 = vmatpush1.msra.mxu0 0.0
      %3660 = vmatprep.subr.mxu0 0.0
      %3661 = vmatpush1.msra.mxu0 0.0
      %3662 = vmatprep.subr.mxu0 0.0
      %3663 = vmatpush1.msra.mxu0 0.0
      %3664 = vmatprep.subr.mxu0 0.0
      %3665 = vmatpush1.msra.mxu0 0.0
      %3666 = vmatprep.subr.mxu0 0.0
      %3667 = vmatpush1.msra.mxu0 0.0
      %3668 = vmatprep.subr.mxu0 0.0
      %3669 = vmatpush1.msra.mxu0 0.0
      %3670 = vmatprep.subr.mxu0 0.0
      %3671 = vmatpush1.msra.mxu0 0.0
      %3672 = vmatprep.subr.mxu0 0.0
      %3673 = vmatpush1.msra.mxu0 0.0
      %3674 = vmatprep.subr.mxu0 0.0
      %3675 = vmatpush1.msra.mxu0 0.0
      %3676 = vmatprep.subr.mxu0 0.0
      %3677 = vmatpush1.msra.mxu0 0.0
      %3678 = vmatprep.subr.mxu0 0.0
      %3679 = vmatpush1.msra.mxu0 0.0
      %3680 = vmatprep.subr.mxu0 0.0
      %3681 = vmatpush1.msra.mxu0 0.0
      %3682 = vmatprep.subr.mxu0 0.0
      %3683 = vmatpush1.msra.mxu0 0.0
      %3684 = vmatprep.subr.mxu0 0.0
      %3685 = vmatpush1.msra.mxu0 0.0
      %3686 = vmatprep.subr.mxu0 0.0
      %3687 = vmatpush1.msra.mxu0 0.0
      %3688 = vmatprep.subr.mxu0 0.0
      %3689 = vmatpush1.msra.mxu0 0.0
      %3690 = vmatprep.subr.mxu0 0.0
      %3691 = vmatpush1.msra.mxu0 0.0
      %3692 = vmatprep.subr.mxu0 0.0
      %3693 = vmatpush1.msra.mxu0 0.0
      %3694 = vmatprep.subr.mxu0 0.0
      %3695 = vmatpush1.msra.mxu0 0.0
      %3696 = vmatprep.subr.mxu0 0.0
      %3697 = vmatpush1.msra.mxu0 0.0
      %3698 = vmatprep.subr.mxu0 0.0
      %3699 = vmatpush1.msra.mxu0 0.0
      %3700 = vmatprep.subr.mxu0 0.0
      %3701 = vmatpush1.msra.mxu0 0.0
      %3702 = vmatprep.subr.mxu0 0.0
      %3703 = vmatpush1.msra.mxu0 0.0
      %3704 = vmatprep.subr.mxu0 0.0
      %3705 = vmatpush1.msra.mxu0 0.0
      %3706 = vmatprep.subr.mxu0 0.0
      %3707 = vmatpush1.msra.mxu0 0.0
      %3708 = vmatprep.subr.mxu0 0.0
      %3709 = vmatpush1.msra.mxu0 0.0
      %3710 = vmatprep.mubr.f32.mxu0 0.0
      %3711 = vmatmul.mubr.f32.gmra.mrb[0].mxu0 %v3524
      %v3712 = vpop.f32.mrb[0].mxu0
      %v3713 = vadd.f32 0.0, %v3712
      %v3714 = vpop.f32.mrb[0].mxu0
      %3715 = vmatprep.mubr.f32.mxu0 0.0
      %3716 = vmatmul.mubr.f32.gmra.mrb[0].mxu0 %v3527
      %v3717 = vpop.f32.mrb[0].mxu0
      %v3718 = vadd.f32 0.0, %v3717
      %v3719 = vpop.f32.mrb[0].mxu0
      %3720 = vmatprep.mubr.f32.mxu0 0.0
      %3721 = vmatmul.mubr.f32.gmra.mrb[0].mxu0 %v3530
      %v3722 = vpop.f32.mrb[0].mxu0
      %v3723 = vadd.f32 0.0, %v3722
      %v3724 = vpop.f32.mrb[0].mxu0
      %3725 = vmatprep.mubr.f32.mxu0 0.0
      %3726 = vmatmul.mubr.f32.gmra.mrb[0].mxu0 %v3533
      %v3727 = vpop.f32.mrb[0].mxu0
      %v3728 = vadd.f32 0.0, %v3727
      %v3729 = vpop.f32.mrb[0].mxu0
      %3730 = vmatprep.mubr.f32.mxu0 0.0
      %3731 = vmatmul.mubr.f32.gmra.mrb[0].mxu0 %v3536
      %v3732 = vpop.f32.mrb[0].mxu0
      %v3733 = vadd.f32 0.0, %v3732
      %v3734 = vpop.f32.mrb[0].mxu0
      %3735 = vmatprep.mubr.f32.mxu0 0.0
      %3736 = vmatmul.mubr.f32.gmra.mrb[0].mxu0 %v3539
      %v3737 = vpop.f32.mrb[0].mxu0
      %v3738 = vadd.f32 0.0, %v3737
      %v3739 = vpop.f32.mrb[0].mxu0
      %3740 = vmatprep.mubr.f32.mxu0 0.0
      %3741 = vmatmul.mubr.f32.gmra.mrb[0].mxu0 %v3542
      %v3742 = vpop.f32.mrb[0].mxu0
      %v3743 = vadd.f32 0.0, %v3742
      %v3744 = vpop.f32.mrb[0].mxu0
      %3745 = vmatprep.mubr.f32.mxu0 0.0
      %3746 = vmatmul.mubr.f32.gmra.mrb[0].mxu0 %v3545
      %v3747 = vpop.f32.mrb[0].mxu0
      %v3748 = vadd.f32 0.0, %v3747
      %v3749 = vpop.f32.mrb[0].mxu0
      %3750 = vmatprep.mubr.f32.mxu0 0.0
      %3751 = vmatmul.mubr.f32.gmra.mrb[0].mxu0 %v3548
      %v3752 = vpop.f32.mrb[0].mxu0
      %v3753 = vadd.f32 0.0, %v3752
      %v3754 = vpop.f32.mrb[0].mxu0
      %3755 = vmatprep.mubr.f32.mxu0 0.0
      %3756 = vmatmul.mubr.f32.gmra.mrb[0].mxu0 %v3551
      %v3757 = vpop.f32.mrb[0].mxu0
      %v3758 = vadd.f32 0.0, %v3757
      %v3759 = vpop.f32.mrb[0].mxu0
      %3760 = vmatprep.mubr.f32.mxu0 0.0
      %3761 = vmatmul.mubr.f32.gmra.mrb[0].mxu0 %v3554
      %v3762 = vpop.f32.mrb[0].mxu0
      %v3763 = vadd.f32 0.0, %v3762
      %v3764 = vpop.f32.mrb[0].mxu0
      %3765 = vmatprep.mubr.f32.mxu0 0.0
      %3766 = vmatmul.mubr.f32.gmra.mrb[0].mxu0 %v3557
      %v3767 = vpop.f32.mrb[0].mxu0
      %v3768 = vadd.f32 0.0, %v3767
      %v3769 = vpop.f32.mrb[0].mxu0
      %3770 = vmatprep.mubr.f32.mxu0 0.0
      %3771 = vmatmul.mubr.f32.gmra.mrb[0].mxu0 %v3560
      %v3772 = vpop.f32.mrb[0].mxu0
      %v3773 = vadd.f32 0.0, %v3772
      %v3774 = vpop.f32.mrb[0].mxu0
      %3775 = vmatprep.mubr.f32.mxu0 0.0
      %3776 = vmatmul.mubr.f32.gmra.mrb[0].mxu0 %v3563
      %v3777 = vpop.f32.mrb[0].mxu0
      %v3778 = vadd.f32 0.0, %v3777
      %v3779 = vpop.f32.mrb[0].mxu0
      %3780 = vmatprep.mubr.f32.mxu0 0.0
      %3781 = vmatmul.mubr.f32.gmra.mrb[0].mxu0 %v3566
      %v3782 = vpop.f32.mrb[0].mxu0
      %v3783 = vadd.f32 0.0, %v3782
      %v3784 = vpop.f32.mrb[0].mxu0
      %3785 = vmatprep.mubr.f32.mxu0 0.0
      %3786 = vmatmul.mubr.f32.gmra.mrb[0].mxu0 %v3569
      %v3787 = vpop.f32.mrb[0].mxu0
      %v3788 = vadd.f32 0.0, %v3787
      %v3789 = vpop.f32.mrb[0].mxu0
      %3790 = vmatprep.mubr.f32.mxu0 0.0
      %3791 = vmatmul.mubr.f32.gmra.mrb[0].mxu0 %v3572
      %v3792 = vpop.f32.mrb[0].mxu0
      %v3793 = vadd.f32 0.0, %v3792
      %v3794 = vpop.f32.mrb[0].mxu0
      %3795 = vmatprep.mubr.f32.mxu0 0.0
      %3796 = vmatmul.mubr.f32.gmra.mrb[0].mxu0 %v3575
      %v3797 = vpop.f32.mrb[0].mxu0
      %v3798 = vadd.f32 0.0, %v3797
      %v3799 = vpop.f32.mrb[0].mxu0
      %3800 = vmatprep.mubr.f32.mxu0 0.0
      %3801 = vmatmul.mubr.f32.gmra.mrb[0].mxu0 %v3578
      %v3802 = vpop.f32.mrb[0].mxu0
      %v3803 = vadd.f32 0.0, %v3802
      %v3804 = vpop.f32.mrb[0].mxu0
      %3805 = vmatprep.mubr.f32.mxu0 0.0
      %3806 = vmatmul.mubr.f32.gmra.mrb[0].mxu0 %v3581
      %v3807 = vpop.f32.mrb[0].mxu0
      %v3808 = vadd.f32 0.0, %v3807
      %v3809 = vpop.f32.mrb[0].mxu0
      %3810 = vmatprep.mubr.f32.mxu0 0.0
      %3811 = vmatmul.mubr.f32.gmra.mrb[0].mxu0 %v3584
      %v3812 = vpop.f32.mrb[0].mxu0
      %v3813 = vadd.f32 0.0, %v3812
      %v3814 = vpop.f32.mrb[0].mxu0
      %3815 = vmatprep.mubr.f32.mxu0 0.0
      %3816 = vmatmul.mubr.f32.gmra.mrb[0].mxu0 %v3587
      %v3817 = vpop.f32.mrb[0].mxu0
      %v3818 = vadd.f32 0.0, %v3817
      %v3819 = vpop.f32.mrb[0].mxu0
      %3820 = vmatprep.mubr.f32.mxu0 0.0
      %3821 = vmatmul.mubr.f32.gmra.mrb[0].mxu0 %v3590
      %v3822 = vpop.f32.mrb[0].mxu0
      %v3823 = vadd.f32 0.0, %v3822
      %v3824 = vpop.f32.mrb[0].mxu0
      %3825 = vmatprep.mubr.f32.mxu0 0.0
      %3826 = vmatmul.mubr.f32.gmra.mrb[0].mxu0 %v3593
      %v3827 = vpop.f32.mrb[0].mxu0
      %v3828 = vadd.f32 0.0, %v3827
      %v3829 = vpop.f32.mrb[0].mxu0
      %3830 = vmatprep.mubr.f32.mxu0 0.0
      %3831 = vmatmul.mubr.f32.gmra.mrb[0].mxu0 %v3596
      %v3832 = vpop.f32.mrb[0].mxu0
      %v3833 = vadd.f32 0.0, %v3832
      %v3834 = vpop.f32.mrb[0].mxu0
      %3835 = vmatprep.mubr.f32.mxu0 0.0
      %3836 = vmatmul.mubr.f32.gmra.mrb[0].mxu0 %v3599
      %v3837 = vpop.f32.mrb[0].mxu0
      %v3838 = vadd.f32 0.0, %v3837
      %v3839 = vpop.f32.mrb[0].mxu0
      %3840 = vmatprep.mubr.f32.mxu0 0.0
      %3841 = vmatmul.mubr.f32.gmra.mrb[0].mxu0 %v3602
      %v3842 = vpop.f32.mrb[0].mxu0
      %v3843 = vadd.f32 0.0, %v3842
      %v3844 = vpop.f32.mrb[0].mxu0
      %3845 = vmatprep.mubr.f32.mxu0 0.0
      %3846 = vmatmul.mubr.f32.gmra.mrb[0].mxu0 %v3605
      %v3847 = vpop.f32.mrb[0].mxu0
      %v3848 = vadd.f32 0.0, %v3847
      %v3849 = vpop.f32.mrb[0].mxu0
      %3850 = vmatprep.mubr.f32.mxu0 0.0
      %3851 = vmatmul.mubr.f32.gmra.mrb[0].mxu0 %v3608
      %v3852 = vpop.f32.mrb[0].mxu0
      %v3853 = vadd.f32 0.0, %v3852
      %v3854 = vpop.f32.mrb[0].mxu0
      %3855 = vmatprep.mubr.f32.mxu0 0.0
      %3856 = vmatmul.mubr.f32.gmra.mrb[0].mxu0 %v3611
      %v3857 = vpop.f32.mrb[0].mxu0
      %v3858 = vadd.f32 0.0, %v3857
      %v3859 = vpop.f32.mrb[0].mxu0
      %3860 = vmatprep.mubr.f32.mxu0 0.0
      %3861 = vmatmul.mubr.f32.gmra.mrb[0].mxu0 %v3614
      %v3862 = vpop.f32.mrb[0].mxu0
      %v3863 = vadd.f32 0.0, %v3862
      %v3864 = vpop.f32.mrb[0].mxu0
      %3865 = vmatprep.mubr.f32.mxu0 0.0
      %3866 = vmatmul.mubr.f32.gmra.mrb[0].mxu0 %v3617
      %v3867 = vpop.f32.mrb[0].mxu0
      %v3868 = vadd.f32 0.0, %v3867
      %v3869 = vpop.f32.mrb[0].mxu0
      %3870 = vmatprep.mubr.f32.mxu0 0.0
      %3871 = vmatmul.mubr.f32.gmra.mrb[0].mxu0 %v3620
      %v3872 = vpop.f32.mrb[0].mxu0
      %v3873 = vadd.f32 0.0, %v3872
      %v3874 = vpop.f32.mrb[0].mxu0
      %3875 = vmatprep.mubr.f32.mxu0 0.0
      %3876 = vmatmul.mubr.f32.gmra.mrb[0].mxu0 %v3623
      %v3877 = vpop.f32.mrb[0].mxu0
      %v3878 = vadd.f32 0.0, %v3877
      %v3879 = vpop.f32.mrb[0].mxu0
      %3880 = vmatprep.mubr.f32.mxu0 0.0
      %3881 = vmatmul.mubr.f32.gmra.mrb[0].mxu0 %v3626
      %v3882 = vpop.f32.mrb[0].mxu0
      %v3883 = vadd.f32 0.0, %v3882
      %v3884 = vpop.f32.mrb[0].mxu0
      %3885 = vmatprep.mubr.f32.mxu0 0.0
      %3886 = vmatmul.mubr.f32.gmra.mrb[0].mxu0 %v3629
      %v3887 = vpop.f32.mrb[0].mxu0
      %v3888 = vadd.f32 0.0, %v3887
      %v3889 = vpop.f32.mrb[0].mxu0
      %3890 = vmatprep.mubr.f32.mxu0 0.0
      %3891 = vmatmul.mubr.f32.gmra.mrb[0].mxu0 %v3632
      %v3892 = vpop.f32.mrb[0].mxu0
      %v3893 = vadd.f32 0.0, %v3892
      %v3894 = vpop.f32.mrb[0].mxu0
      %3895 = vmatprep.mubr.f32.mxu0 0.0
      %3896 = vmatmul.mubr.f32.gmra.mrb[0].mxu0 %v3635
      %v3897 = vpop.f32.mrb[0].mxu0
      %v3898 = vadd.f32 0.0, %v3897
      %v3899 = vpop.f32.mrb[0].mxu0
      %3900 = vmatprep.mubr.f32.mxu0 0.0
      %3901 = vmatmul.mubr.f32.gmra.mrb[0].mxu0 %v3638
      %v3902 = vpop.f32.mrb[0].mxu0
      %v3903 = vadd.f32 0.0, %v3902
      %v3904 = vpop.f32.mrb[0].mxu0
      %3905 = vmatprep.mubr.f32.mxu0 0.0
      %3906 = vmatmul.mubr.f32.gmra.mrb[0].mxu0 %v3641
      %v3907 = vpop.f32.mrb[0].mxu0
      %v3908 = vadd.f32 0.0, %v3907
      %v3909 = vpop.f32.mrb[0].mxu0
      %3910 = vmatprep.mubr.f32.mxu0 0.0
      %3911 = vmatmul.mubr.f32.gmra.mrb[0].mxu0 %v3644
      %v3912 = vpop.f32.mrb[0].mxu0
      %v3913 = vadd.f32 0.0, %v3912
      %v3914 = vpop.f32.mrb[0].mxu0
      %3915 = vdwg.mxu0
      %v3916 = vadd.f32 %v3436, %v3713
      %v3917 = vadd.f32 %v3437, %v3718
      %v3918 = vadd.f32 %v3438, %v3723
      %v3919 = vadd.f32 %v3439, %v3728
      %v3920 = vadd.f32 %v3440, %v3733
      %v3921 = vadd.f32 %v3441, %v3738
      %v3922 = vadd.f32 %v3442, %v3743
      %v3923 = vadd.f32 %v3443, %v3748
      %v3924 = vadd.f32 %v3444, %v3753
      %v3925 = vadd.f32 %v3445, %v3758
      %v3926 = vadd.f32 %v3446, %v3763
      %v3927 = vadd.f32 %v3447, %v3768
      %v3928 = vadd.f32 %v3448, %v3773
      %v3929 = vadd.f32 %v3449, %v3778
      %v3930 = vadd.f32 %v3450, %v3783
      %v3931 = vadd.f32 %v3451, %v3788
      %v3932 = vadd.f32 %v3452, %v3793
      %v3933 = vadd.f32 %v3453, %v3798
      %v3934 = vadd.f32 %v3454, %v3803
      %v3935 = vadd.f32 %v3455, %v3808
      %v3936 = vadd.f32 %v3456, %v3813
      %v3937 = vadd.f32 %v3457, %v3818
      %v3938 = vadd.f32 %v3458, %v3823
      %v3939 = vadd.f32 %v3459, %v3828
      %v3940 = vadd.f32 %v3460, %v3833
      %v3941 = vadd.f32 %v3461, %v3838
      %v3942 = vadd.f32 %v3462, %v3843
      %v3943 = vadd.f32 %v3463, %v3848
      %v3944 = vadd.f32 %v3464, %v3853
      %v3945 = vadd.f32 %v3465, %v3858
      %v3946 = vadd.f32 %v3466, %v3863
      %v3947 = vadd.f32 %v3467, %v3868
      %v3948 = vadd.f32 %v3468, %v3873
      %v3949 = vadd.f32 %v3469, %v3878
      %v3950 = vadd.f32 %v3470, %v3883
      %v3951 = vadd.f32 %v3471, %v3888
      %v3952 = vadd.f32 %v3472, %v3893
      %v3953 = vadd.f32 %v3473, %v3898
      %v3954 = vadd.f32 %v3474, %v3903
      %v3955 = vadd.f32 %v3475, %v3908
      %v3956 = vadd.f32 %v3476, %v3913
      %v3957 = vld [vmem:[%s193 + $0x26] sm:$0xff]
      %v3958 = vld [vmem:[%s193 + $0x2e] sm:$0xff]
      %v3959 = vld [vmem:[%s193 + $0x36] sm:$0xff]
      %v3960 = vld [vmem:[%s193 + $0x3e] sm:$0xff]
      %v3961 = vld [vmem:[%s193 + $0x46] sm:$0xff]
      %v3962 = vld [vmem:[%s193 + $0x4e] sm:$0xff]
      %v3963 = vld [vmem:[%s193 + $0x56] sm:$0xff]
      %v3964 = vld [vmem:[%s193 + $0x5e] sm:$0xff]
      %v3965 = vld [vmem:[%s193 + $0x66] sm:$0xff]
      %v3966 = vld [vmem:[%s193 + $0x6e] sm:$0xff]
      %v3967 = vld [vmem:[%s193 + $0x76] sm:$0xff]
      %v3968 = vld [vmem:[%s193 + $0x7e] sm:$0xff]
      %v3969 = vld [vmem:[%s193 + $0x86] sm:$0xff]
      %v3970 = vld [vmem:[%s193 + $0x8e] sm:$0xff]
      %v3971 = vld [vmem:[%s193 + $0x96] sm:$0xff]
      %v3972 = vld [vmem:[%s193 + $0x9e] sm:$0xff]
      %v3973 = vld [vmem:[%s193 + $0xa6] sm:$0xff]
      %v3974 = vld [vmem:[%s193 + $0xae] sm:$0xff]
      %v3975 = vld [vmem:[%s193 + $0xb6] sm:$0xff]
      %v3976 = vld [vmem:[%s193 + $0xbe] sm:$0xff]
      %v3977 = vld [vmem:[%s193 + $0xc6] sm:$0xff]
      %v3978 = vld [vmem:[%s193 + $0xce] sm:$0xff]
      %v3979 = vld [vmem:[%s193 + $0xd6] sm:$0xff]
      %v3980 = vld [vmem:[%s193 + $0xde] sm:$0xff]
      %v3981 = vld [vmem:[%s193 + $0xe6] sm:$0xff]
      %v3982 = vld [vmem:[%s193 + $0xee] sm:$0xff]
      %v3983 = vld [vmem:[%s193 + $0xf6] sm:$0xff]
      %v3984 = vld [vmem:[%s193 + $0xfe] sm:$0xff]
      %v3985 = vld [vmem:[%s193 + $0x106] sm:$0xff]
      %v3986 = vld [vmem:[%s193 + $0x10e] sm:$0xff]
      %v3987 = vld [vmem:[%s193 + $0x116] sm:$0xff]
      %v3988 = vld [vmem:[%s193 + $0x11e] sm:$0xff]
      %v3989 = vld [vmem:[%s193 + $0x126] sm:$0xff]
      %v3990 = vld [vmem:[%s193 + $0x12e] sm:$0xff]
      %v3991 = vld [vmem:[%s193 + $0x136] sm:$0xff]
      %v3992 = vld [vmem:[%s193 + $0x13e] sm:$0xff]
      %v3993 = vld [vmem:[%s193 + $0x146] sm:$0xff]
      %v3994 = vld [vmem:[%s193 + $0x14e] sm:$0xff]
      %v3995 = vld [vmem:[%s193 + $0x156] sm:$0xff]
      %v3996 = vld [vmem:[%s193 + $0x15e] sm:$0xff]
      %v3997 = vld [vmem:[%s193 + $0x166] sm:$0xff]
      %s3998 = scalar_lea.vmem %s1, 256
      %v3999 = vld [vmem:[%s3998] sm:$0xff]
      %v4000 = vld [vmem:[%s3998 + $0x8] sm:$0xff]
      %v4001 = vld [vmem:[%s3998 + $0x10] sm:$0xff]
      %v4002 = vld [vmem:[%s3998 + $0x18] sm:$0xff]
      %v4004 = vsel %vm290, %v3957, 0
      %v4007 = vsel %vm290, %v3958, 0
      %v4010 = vsel %vm290, %v3959, 0
      %v4013 = vsel %vm290, %v3960, 0
      %v4016 = vsel %vm290, %v3961, 0
      %v4019 = vsel %vm290, %v3962, 0
      %v4022 = vsel %vm290, %v3963, 0
      %v4025 = vsel %vm290, %v3964, 0
      %v4028 = vsel %vm290, %v3965, 0
      %v4031 = vsel %vm290, %v3966, 0
      %v4034 = vsel %vm290, %v3967, 0
      %v4037 = vsel %vm290, %v3968, 0
      %v4040 = vsel %vm290, %v3969, 0
      %v4043 = vsel %vm290, %v3970, 0
      %v4046 = vsel %vm290, %v3971, 0
      %v4049 = vsel %vm290, %v3972, 0
      %v4052 = vsel %vm290, %v3973, 0
      %v4055 = vsel %vm290, %v3974, 0
      %v4058 = vsel %vm290, %v3975, 0
      %v4061 = vsel %vm290, %v3976, 0
      %v4064 = vsel %vm290, %v3977, 0
      %v4067 = vsel %vm290, %v3978, 0
      %v4070 = vsel %vm290, %v3979, 0
      %v4073 = vsel %vm290, %v3980, 0
      %v4076 = vsel %vm290, %v3981, 0
      %v4079 = vsel %vm290, %v3982, 0
      %v4082 = vsel %vm290, %v3983, 0
      %v4085 = vsel %vm290, %v3984, 0
      %v4088 = vsel %vm290, %v3985, 0
      %v4091 = vsel %vm290, %v3986, 0
      %v4094 = vsel %vm290, %v3987, 0
      %v4097 = vsel %vm290, %v3988, 0
      %v4100 = vsel %vm290, %v3989, 0
      %v4103 = vsel %vm290, %v3990, 0
      %v4106 = vsel %vm290, %v3991, 0
      %v4109 = vsel %vm290, %v3992, 0
      %v4112 = vsel %vm290, %v3993, 0
      %v4115 = vsel %vm290, %v3994, 0
      %v4118 = vsel %vm290, %v3995, 0
      %v4121 = vsel %vm290, %v3996, 0
      %v4124 = vsel %vm290, %v3997, 0
      %4126 = vmatprep.subr.mxu0 0.0
      %4127 = vmatpush1.msra.mxu0 %v3999
      %4128 = vmatprep.subr.mxu0 0.0
      %4129 = vmatpush1.msra.mxu0 %v4000
      %4130 = vmatprep.subr.mxu0 0.0
      %4131 = vmatpush1.msra.mxu0 %v4001
      %4132 = vmatprep.subr.mxu0 0.0
      %4133 = vmatpush1.msra.mxu0 %v4002
      %4134 = vmatprep.subr.mxu0 0.0
      %4135 = vmatpush1.msra.mxu0 0.0
      %4136 = vmatprep.subr.mxu0 0.0
      %4137 = vmatpush1.msra.mxu0 0.0
      %4138 = vmatprep.subr.mxu0 0.0
      %4139 = vmatpush1.msra.mxu0 0.0
      %4140 = vmatprep.subr.mxu0 0.0
      %4141 = vmatpush1.msra.mxu0 0.0
      %4142 = vmatprep.subr.mxu0 0.0
      %4143 = vmatpush1.msra.mxu0 0.0
      %4144 = vmatprep.subr.mxu0 0.0
      %4145 = vmatpush1.msra.mxu0 0.0
      %4146 = vmatprep.subr.mxu0 0.0
      %4147 = vmatpush1.msra.mxu0 0.0
      %4148 = vmatprep.subr.mxu0 0.0
      %4149 = vmatpush1.msra.mxu0 0.0
      %4150 = vmatprep.subr.mxu0 0.0
      %4151 = vmatpush1.msra.mxu0 0.0
      %4152 = vmatprep.subr.mxu0 0.0
      %4153 = vmatpush1.msra.mxu0 0.0
      %4154 = vmatprep.subr.mxu0 0.0
      %4155 = vmatpush1.msra.mxu0 0.0
      %4156 = vmatprep.subr.mxu0 0.0
      %4157 = vmatpush1.msra.mxu0 0.0
      %4158 = vmatprep.subr.mxu0 0.0
      %4159 = vmatpush1.msra.mxu0 0.0
      %4160 = vmatprep.subr.mxu0 0.0
      %4161 = vmatpush1.msra.mxu0 0.0
      %4162 = vmatprep.subr.mxu0 0.0
      %4163 = vmatpush1.msra.mxu0 0.0
      %4164 = vmatprep.subr.mxu0 0.0
      %4165 = vmatpush1.msra.mxu0 0.0
      %4166 = vmatprep.subr.mxu0 0.0
      %4167 = vmatpush1.msra.mxu0 0.0
      %4168 = vmatprep.subr.mxu0 0.0
      %4169 = vmatpush1.msra.mxu0 0.0
      %4170 = vmatprep.subr.mxu0 0.0
      %4171 = vmatpush1.msra.mxu0 0.0
      %4172 = vmatprep.subr.mxu0 0.0
      %4173 = vmatpush1.msra.mxu0 0.0
      %4174 = vmatprep.subr.mxu0 0.0
      %4175 = vmatpush1.msra.mxu0 0.0
      %4176 = vmatprep.subr.mxu0 0.0
      %4177 = vmatpush1.msra.mxu0 0.0
      %4178 = vmatprep.subr.mxu0 0.0
      %4179 = vmatpush1.msra.mxu0 0.0
      %4180 = vmatprep.subr.mxu0 0.0
      %4181 = vmatpush1.msra.mxu0 0.0
      %4182 = vmatprep.subr.mxu0 0.0
      %4183 = vmatpush1.msra.mxu0 0.0
      %4184 = vmatprep.subr.mxu0 0.0
      %4185 = vmatpush1.msra.mxu0 0.0
      %4186 = vmatprep.subr.mxu0 0.0
      %4187 = vmatpush1.msra.mxu0 0.0
      %4188 = vmatprep.subr.mxu0 0.0
      %4189 = vmatpush1.msra.mxu0 0.0
      %4190 = vmatprep.mubr.f32.mxu0 0.0
      %4191 = vmatmul.mubr.f32.gmra.mrb[0].mxu0 %v4004
      %v4192 = vpop.f32.mrb[0].mxu0
      %v4193 = vadd.f32 0.0, %v4192
      %v4194 = vpop.f32.mrb[0].mxu0
      %4195 = vmatprep.mubr.f32.mxu0 0.0
      %4196 = vmatmul.mubr.f32.gmra.mrb[0].mxu0 %v4007
      %v4197 = vpop.f32.mrb[0].mxu0
      %v4198 = vadd.f32 0.0, %v4197
      %v4199 = vpop.f32.mrb[0].mxu0
      %4200 = vmatprep.mubr.f32.mxu0 0.0
      %4201 = vmatmul.mubr.f32.gmra.mrb[0].mxu0 %v4010
      %v4202 = vpop.f32.mrb[0].mxu0
      %v4203 = vadd.f32 0.0, %v4202
      %v4204 = vpop.f32.mrb[0].mxu0
      %4205 = vmatprep.mubr.f32.mxu0 0.0
      %4206 = vmatmul.mubr.f32.gmra.mrb[0].mxu0 %v4013
      %v4207 = vpop.f32.mrb[0].mxu0
      %v4208 = vadd.f32 0.0, %v4207
      %v4209 = vpop.f32.mrb[0].mxu0
      %4210 = vmatprep.mubr.f32.mxu0 0.0
      %4211 = vmatmul.mubr.f32.gmra.mrb[0].mxu0 %v4016
      %v4212 = vpop.f32.mrb[0].mxu0
      %v4213 = vadd.f32 0.0, %v4212
      %v4214 = vpop.f32.mrb[0].mxu0
      %4215 = vmatprep.mubr.f32.mxu0 0.0
      %4216 = vmatmul.mubr.f32.gmra.mrb[0].mxu0 %v4019
      %v4217 = vpop.f32.mrb[0].mxu0
      %v4218 = vadd.f32 0.0, %v4217
      %v4219 = vpop.f32.mrb[0].mxu0
      %4220 = vmatprep.mubr.f32.mxu0 0.0
      %4221 = vmatmul.mubr.f32.gmra.mrb[0].mxu0 %v4022
      %v4222 = vpop.f32.mrb[0].mxu0
      %v4223 = vadd.f32 0.0, %v4222
      %v4224 = vpop.f32.mrb[0].mxu0
      %4225 = vmatprep.mubr.f32.mxu0 0.0
      %4226 = vmatmul.mubr.f32.gmra.mrb[0].mxu0 %v4025
      %v4227 = vpop.f32.mrb[0].mxu0
      %v4228 = vadd.f32 0.0, %v4227
      %v4229 = vpop.f32.mrb[0].mxu0
      %4230 = vmatprep.mubr.f32.mxu0 0.0
      %4231 = vmatmul.mubr.f32.gmra.mrb[0].mxu0 %v4028
      %v4232 = vpop.f32.mrb[0].mxu0
      %v4233 = vadd.f32 0.0, %v4232
      %v4234 = vpop.f32.mrb[0].mxu0
      %4235 = vmatprep.mubr.f32.mxu0 0.0
      %4236 = vmatmul.mubr.f32.gmra.mrb[0].mxu0 %v4031
      %v4237 = vpop.f32.mrb[0].mxu0
      %v4238 = vadd.f32 0.0, %v4237
      %v4239 = vpop.f32.mrb[0].mxu0
      %4240 = vmatprep.mubr.f32.mxu0 0.0
      %4241 = vmatmul.mubr.f32.gmra.mrb[0].mxu0 %v4034
      %v4242 = vpop.f32.mrb[0].mxu0
      %v4243 = vadd.f32 0.0, %v4242
      %v4244 = vpop.f32.mrb[0].mxu0
      %4245 = vmatprep.mubr.f32.mxu0 0.0
      %4246 = vmatmul.mubr.f32.gmra.mrb[0].mxu0 %v4037
      %v4247 = vpop.f32.mrb[0].mxu0
      %v4248 = vadd.f32 0.0, %v4247
      %v4249 = vpop.f32.mrb[0].mxu0
      %4250 = vmatprep.mubr.f32.mxu0 0.0
      %4251 = vmatmul.mubr.f32.gmra.mrb[0].mxu0 %v4040
      %v4252 = vpop.f32.mrb[0].mxu0
      %v4253 = vadd.f32 0.0, %v4252
      %v4254 = vpop.f32.mrb[0].mxu0
      %4255 = vmatprep.mubr.f32.mxu0 0.0
      %4256 = vmatmul.mubr.f32.gmra.mrb[0].mxu0 %v4043
      %v4257 = vpop.f32.mrb[0].mxu0
      %v4258 = vadd.f32 0.0, %v4257
      %v4259 = vpop.f32.mrb[0].mxu0
      %4260 = vmatprep.mubr.f32.mxu0 0.0
      %4261 = vmatmul.mubr.f32.gmra.mrb[0].mxu0 %v4046
      %v4262 = vpop.f32.mrb[0].mxu0
      %v4263 = vadd.f32 0.0, %v4262
      %v4264 = vpop.f32.mrb[0].mxu0
      %4265 = vmatprep.mubr.f32.mxu0 0.0
      %4266 = vmatmul.mubr.f32.gmra.mrb[0].mxu0 %v4049
      %v4267 = vpop.f32.mrb[0].mxu0
      %v4268 = vadd.f32 0.0, %v4267
      %v4269 = vpop.f32.mrb[0].mxu0
      %4270 = vmatprep.mubr.f32.mxu0 0.0
      %4271 = vmatmul.mubr.f32.gmra.mrb[0].mxu0 %v4052
      %v4272 = vpop.f32.mrb[0].mxu0
      %v4273 = vadd.f32 0.0, %v4272
      %v4274 = vpop.f32.mrb[0].mxu0
      %4275 = vmatprep.mubr.f32.mxu0 0.0
      %4276 = vmatmul.mubr.f32.gmra.mrb[0].mxu0 %v4055
      %v4277 = vpop.f32.mrb[0].mxu0
      %v4278 = vadd.f32 0.0, %v4277
      %v4279 = vpop.f32.mrb[0].mxu0
      %4280 = vmatprep.mubr.f32.mxu0 0.0
      %4281 = vmatmul.mubr.f32.gmra.mrb[0].mxu0 %v4058
      %v4282 = vpop.f32.mrb[0].mxu0
      %v4283 = vadd.f32 0.0, %v4282
      %v4284 = vpop.f32.mrb[0].mxu0
      %4285 = vmatprep.mubr.f32.mxu0 0.0
      %4286 = vmatmul.mubr.f32.gmra.mrb[0].mxu0 %v4061
      %v4287 = vpop.f32.mrb[0].mxu0
      %v4288 = vadd.f32 0.0, %v4287
      %v4289 = vpop.f32.mrb[0].mxu0
      %4290 = vmatprep.mubr.f32.mxu0 0.0
      %4291 = vmatmul.mubr.f32.gmra.mrb[0].mxu0 %v4064
      %v4292 = vpop.f32.mrb[0].mxu0
      %v4293 = vadd.f32 0.0, %v4292
      %v4294 = vpop.f32.mrb[0].mxu0
      %4295 = vmatprep.mubr.f32.mxu0 0.0
      %4296 = vmatmul.mubr.f32.gmra.mrb[0].mxu0 %v4067
      %v4297 = vpop.f32.mrb[0].mxu0
      %v4298 = vadd.f32 0.0, %v4297
      %v4299 = vpop.f32.mrb[0].mxu0
      %4300 = vmatprep.mubr.f32.mxu0 0.0
      %4301 = vmatmul.mubr.f32.gmra.mrb[0].mxu0 %v4070
      %v4302 = vpop.f32.mrb[0].mxu0
      %v4303 = vadd.f32 0.0, %v4302
      %v4304 = vpop.f32.mrb[0].mxu0
      %4305 = vmatprep.mubr.f32.mxu0 0.0
      %4306 = vmatmul.mubr.f32.gmra.mrb[0].mxu0 %v4073
      %v4307 = vpop.f32.mrb[0].mxu0
      %v4308 = vadd.f32 0.0, %v4307
      %v4309 = vpop.f32.mrb[0].mxu0
      %4310 = vmatprep.mubr.f32.mxu0 0.0
      %4311 = vmatmul.mubr.f32.gmra.mrb[0].mxu0 %v4076
      %v4312 = vpop.f32.mrb[0].mxu0
      %v4313 = vadd.f32 0.0, %v4312
      %v4314 = vpop.f32.mrb[0].mxu0
      %4315 = vmatprep.mubr.f32.mxu0 0.0
      %4316 = vmatmul.mubr.f32.gmra.mrb[0].mxu0 %v4079
      %v4317 = vpop.f32.mrb[0].mxu0
      %v4318 = vadd.f32 0.0, %v4317
      %v4319 = vpop.f32.mrb[0].mxu0
      %4320 = vmatprep.mubr.f32.mxu0 0.0
      %4321 = vmatmul.mubr.f32.gmra.mrb[0].mxu0 %v4082
      %v4322 = vpop.f32.mrb[0].mxu0
      %v4323 = vadd.f32 0.0, %v4322
      %v4324 = vpop.f32.mrb[0].mxu0
      %4325 = vmatprep.mubr.f32.mxu0 0.0
      %4326 = vmatmul.mubr.f32.gmra.mrb[0].mxu0 %v4085
      %v4327 = vpop.f32.mrb[0].mxu0
      %v4328 = vadd.f32 0.0, %v4327
      %v4329 = vpop.f32.mrb[0].mxu0
      %4330 = vmatprep.mubr.f32.mxu0 0.0
      %4331 = vmatmul.mubr.f32.gmra.mrb[0].mxu0 %v4088
      %v4332 = vpop.f32.mrb[0].mxu0
      %v4333 = vadd.f32 0.0, %v4332
      %v4334 = vpop.f32.mrb[0].mxu0
      %4335 = vmatprep.mubr.f32.mxu0 0.0
      %4336 = vmatmul.mubr.f32.gmra.mrb[0].mxu0 %v4091
      %v4337 = vpop.f32.mrb[0].mxu0
      %v4338 = vadd.f32 0.0, %v4337
      %v4339 = vpop.f32.mrb[0].mxu0
      %4340 = vmatprep.mubr.f32.mxu0 0.0
      %4341 = vmatmul.mubr.f32.gmra.mrb[0].mxu0 %v4094
      %v4342 = vpop.f32.mrb[0].mxu0
      %v4343 = vadd.f32 0.0, %v4342
      %v4344 = vpop.f32.mrb[0].mxu0
      %4345 = vmatprep.mubr.f32.mxu0 0.0
      %4346 = vmatmul.mubr.f32.gmra.mrb[0].mxu0 %v4097
      %v4347 = vpop.f32.mrb[0].mxu0
      %v4348 = vadd.f32 0.0, %v4347
      %v4349 = vpop.f32.mrb[0].mxu0
      %4350 = vmatprep.mubr.f32.mxu0 0.0
      %4351 = vmatmul.mubr.f32.gmra.mrb[0].mxu0 %v4100
      %v4352 = vpop.f32.mrb[0].mxu0
      %v4353 = vadd.f32 0.0, %v4352
      %v4354 = vpop.f32.mrb[0].mxu0
      %4355 = vmatprep.mubr.f32.mxu0 0.0
      %4356 = vmatmul.mubr.f32.gmra.mrb[0].mxu0 %v4103
      %v4357 = vpop.f32.mrb[0].mxu0
      %v4358 = vadd.f32 0.0, %v4357
      %v4359 = vpop.f32.mrb[0].mxu0
      %4360 = vmatprep.mubr.f32.mxu0 0.0
      %4361 = vmatmul.mubr.f32.gmra.mrb[0].mxu0 %v4106
      %v4362 = vpop.f32.mrb[0].mxu0
      %v4363 = vadd.f32 0.0, %v4362
      %v4364 = vpop.f32.mrb[0].mxu0
      %4365 = vmatprep.mubr.f32.mxu0 0.0
      %4366 = vmatmul.mubr.f32.gmra.mrb[0].mxu0 %v4109
      %v4367 = vpop.f32.mrb[0].mxu0
      %v4368 = vadd.f32 0.0, %v4367
      %v4369 = vpop.f32.mrb[0].mxu0
      %4370 = vmatprep.mubr.f32.mxu0 0.0
      %4371 = vmatmul.mubr.f32.gmra.mrb[0].mxu0 %v4112
      %v4372 = vpop.f32.mrb[0].mxu0
      %v4373 = vadd.f32 0.0, %v4372
      %v4374 = vpop.f32.mrb[0].mxu0
      %4375 = vmatprep.mubr.f32.mxu0 0.0
      %4376 = vmatmul.mubr.f32.gmra.mrb[0].mxu0 %v4115
      %v4377 = vpop.f32.mrb[0].mxu0
      %v4378 = vadd.f32 0.0, %v4377
      %v4379 = vpop.f32.mrb[0].mxu0
      %4380 = vmatprep.mubr.f32.mxu0 0.0
      %4381 = vmatmul.mubr.f32.gmra.mrb[0].mxu0 %v4118
      %v4382 = vpop.f32.mrb[0].mxu0
      %v4383 = vadd.f32 0.0, %v4382
      %v4384 = vpop.f32.mrb[0].mxu0
      %4385 = vmatprep.mubr.f32.mxu0 0.0
      %4386 = vmatmul.mubr.f32.gmra.mrb[0].mxu0 %v4121
      %v4387 = vpop.f32.mrb[0].mxu0
      %v4388 = vadd.f32 0.0, %v4387
      %v4389 = vpop.f32.mrb[0].mxu0
      %4390 = vmatprep.mubr.f32.mxu0 0.0
      %4391 = vmatmul.mubr.f32.gmra.mrb[0].mxu0 %v4124
      %v4392 = vpop.f32.mrb[0].mxu0
      %v4393 = vadd.f32 0.0, %v4392
      %v4394 = vpop.f32.mrb[0].mxu0
      %4395 = vdwg.mxu0
      %v4396 = vadd.f32 %v3916, %v4193
      %v4397 = vadd.f32 %v3917, %v4198
      %v4398 = vadd.f32 %v3918, %v4203
      %v4399 = vadd.f32 %v3919, %v4208
      %v4400 = vadd.f32 %v3920, %v4213
      %v4401 = vadd.f32 %v3921, %v4218
      %v4402 = vadd.f32 %v3922, %v4223
      %v4403 = vadd.f32 %v3923, %v4228
      %v4404 = vadd.f32 %v3924, %v4233
      %v4405 = vadd.f32 %v3925, %v4238
      %v4406 = vadd.f32 %v3926, %v4243
      %v4407 = vadd.f32 %v3927, %v4248
      %v4408 = vadd.f32 %v3928, %v4253
      %v4409 = vadd.f32 %v3929, %v4258
      %v4410 = vadd.f32 %v3930, %v4263
      %v4411 = vadd.f32 %v3931, %v4268
      %v4412 = vadd.f32 %v3932, %v4273
      %v4413 = vadd.f32 %v3933, %v4278
      %v4414 = vadd.f32 %v3934, %v4283
      %v4415 = vadd.f32 %v3935, %v4288
      %v4416 = vadd.f32 %v3936, %v4293
      %v4417 = vadd.f32 %v3937, %v4298
      %v4418 = vadd.f32 %v3938, %v4303
      %v4419 = vadd.f32 %v3939, %v4308
      %v4420 = vadd.f32 %v3940, %v4313
      %v4421 = vadd.f32 %v3941, %v4318
      %v4422 = vadd.f32 %v3942, %v4323
      %v4423 = vadd.f32 %v3943, %v4328
      %v4424 = vadd.f32 %v3944, %v4333
      %v4425 = vadd.f32 %v3945, %v4338
      %v4426 = vadd.f32 %v3946, %v4343
      %v4427 = vadd.f32 %v3947, %v4348
      %v4428 = vadd.f32 %v3948, %v4353
      %v4429 = vadd.f32 %v3949, %v4358
      %v4430 = vadd.f32 %v3950, %v4363
      %v4431 = vadd.f32 %v3951, %v4368
      %v4432 = vadd.f32 %v3952, %v4373
      %v4433 = vadd.f32 %v3953, %v4378
      %v4434 = vadd.f32 %v3954, %v4383
      %v4435 = vadd.f32 %v3955, %v4388
      %v4436 = vadd.f32 %v3956, %v4393
      %v4437 = vld [vmem:[%s2] sm:$0x1]
      %v4439 = vlaneseq
      %v4440 = vshrl.u32 %v4439, 7
      %v4441 = vsub.s32 0, %v4440
      %v4442 = vrot.slane %v4437, %v4441
      %v4444 = vadd.f32 %v4396, %v4442
      %v4445 = vadd.f32 %v4397, %v4442
      %v4446 = vadd.f32 %v4398, %v4442
      %v4447 = vadd.f32 %v4399, %v4442
      %v4448 = vadd.f32 %v4400, %v4442
      %v4449 = vadd.f32 %v4401, %v4442
      %v4450 = vadd.f32 %v4402, %v4442
      %v4451 = vadd.f32 %v4403, %v4442
      %v4452 = vadd.f32 %v4404, %v4442
      %v4453 = vadd.f32 %v4405, %v4442
      %v4454 = vadd.f32 %v4406, %v4442
      %v4455 = vadd.f32 %v4407, %v4442
      %v4456 = vadd.f32 %v4408, %v4442
      %v4457 = vadd.f32 %v4409, %v4442
      %v4458 = vadd.f32 %v4410, %v4442
      %v4459 = vadd.f32 %v4411, %v4442
      %v4460 = vadd.f32 %v4412, %v4442
      %v4461 = vadd.f32 %v4413, %v4442
      %v4462 = vadd.f32 %v4414, %v4442
      %v4463 = vadd.f32 %v4415, %v4442
      %v4464 = vadd.f32 %v4416, %v4442
      %v4465 = vadd.f32 %v4417, %v4442
      %v4466 = vadd.f32 %v4418, %v4442
      %v4467 = vadd.f32 %v4419, %v4442
      %v4468 = vadd.f32 %v4420, %v4442
      %v4469 = vadd.f32 %v4421, %v4442
      %v4470 = vadd.f32 %v4422, %v4442
      %v4471 = vadd.f32 %v4423, %v4442
      %v4472 = vadd.f32 %v4424, %v4442
      %v4473 = vadd.f32 %v4425, %v4442
      %v4474 = vadd.f32 %v4426, %v4442
      %v4475 = vadd.f32 %v4427, %v4442
      %v4476 = vadd.f32 %v4428, %v4442
      %v4477 = vadd.f32 %v4429, %v4442
      %v4478 = vadd.f32 %v4430, %v4442
      %v4479 = vadd.f32 %v4431, %v4442
      %v4480 = vadd.f32 %v4432, %v4442
      %v4481 = vadd.f32 %v4433, %v4442
      %v4482 = vadd.f32 %v4434, %v4442
      %v4483 = vadd.f32 %v4435, %v4442
      %v4484 = vadd.f32 %v4436, %v4442
      %s4485 = sld [smem:[#allocation2]]
      %vm4486 = vcmp.ge.f32.partialorder %v4444, 0.0
      %vm4487 = vcmp.ge.f32.partialorder %v4445, 0.0
      %vm4488 = vcmp.ge.f32.partialorder %v4446, 0.0
      %vm4489 = vcmp.ge.f32.partialorder %v4447, 0.0
      %vm4490 = vcmp.ge.f32.partialorder %v4448, 0.0
      %vm4491 = vcmp.ge.f32.partialorder %v4449, 0.0
      %vm4492 = vcmp.ge.f32.partialorder %v4450, 0.0
      %vm4493 = vcmp.ge.f32.partialorder %v4451, 0.0
      %vm4494 = vcmp.ge.f32.partialorder %v4452, 0.0
      %vm4495 = vcmp.ge.f32.partialorder %v4453, 0.0
      %vm4496 = vcmp.ge.f32.partialorder %v4454, 0.0
      %vm4497 = vcmp.ge.f32.partialorder %v4455, 0.0
      %vm4498 = vcmp.ge.f32.partialorder %v4456, 0.0
      %vm4499 = vcmp.ge.f32.partialorder %v4457, 0.0
      %vm4500 = vcmp.ge.f32.partialorder %v4458, 0.0
      %vm4501 = vcmp.ge.f32.partialorder %v4459, 0.0
      %vm4502 = vcmp.ge.f32.partialorder %v4460, 0.0
      %vm4503 = vcmp.ge.f32.partialorder %v4461, 0.0
      %vm4504 = vcmp.ge.f32.partialorder %v4462, 0.0
      %vm4505 = vcmp.ge.f32.partialorder %v4463, 0.0
      %vm4506 = vcmp.ge.f32.partialorder %v4464, 0.0
      %vm4507 = vcmp.ge.f32.partialorder %v4465, 0.0
      %vm4508 = vcmp.ge.f32.partialorder %v4466, 0.0
      %vm4509 = vcmp.ge.f32.partialorder %v4467, 0.0
      %vm4510 = vcmp.ge.f32.partialorder %v4468, 0.0
      %vm4511 = vcmp.ge.f32.partialorder %v4469, 0.0
      %vm4512 = vcmp.ge.f32.partialorder %v4470, 0.0
      %vm4513 = vcmp.ge.f32.partialorder %v4471, 0.0
      %vm4514 = vcmp.ge.f32.partialorder %v4472, 0.0
      %vm4515 = vcmp.ge.f32.partialorder %v4473, 0.0
      %vm4516 = vcmp.ge.f32.partialorder %v4474, 0.0
      %vm4517 = vcmp.ge.f32.partialorder %v4475, 0.0
      %vm4518 = vcmp.ge.f32.partialorder %v4476, 0.0
      %vm4519 = vcmp.ge.f32.partialorder %v4477, 0.0
      %vm4520 = vcmp.ge.f32.partialorder %v4478, 0.0
      %vm4521 = vcmp.ge.f32.partialorder %v4479, 0.0
      %vm4522 = vcmp.ge.f32.partialorder %v4480, 0.0
      %vm4523 = vcmp.ge.f32.partialorder %v4481, 0.0
      %vm4524 = vcmp.ge.f32.partialorder %v4482, 0.0
      %vm4525 = vcmp.ge.f32.partialorder %v4483, 0.0
      %vm4526 = vcmp.ge.f32.partialorder %v4484, 0.0
      %v4527 = vstv %s4485
      %v4528 = vmul.f32 %v4527, %v4444
      %v4529 = vmul.f32 %v4527, %v4445
      %v4530 = vmul.f32 %v4527, %v4446
      %v4531 = vmul.f32 %v4527, %v4447
      %v4532 = vmul.f32 %v4527, %v4448
      %v4533 = vmul.f32 %v4527, %v4449
      %v4534 = vmul.f32 %v4527, %v4450
      %v4535 = vmul.f32 %v4527, %v4451
      %v4536 = vmul.f32 %v4527, %v4452
      %v4537 = vmul.f32 %v4527, %v4453
      %v4538 = vmul.f32 %v4527, %v4454
      %v4539 = vmul.f32 %v4527, %v4455
      %v4540 = vmul.f32 %v4527, %v4456
      %v4541 = vmul.f32 %v4527, %v4457
      %v4542 = vmul.f32 %v4527, %v4458
      %v4543 = vmul.f32 %v4527, %v4459
      %v4544 = vmul.f32 %v4527, %v4460
      %v4545 = vmul.f32 %v4527, %v4461
      %v4546 = vmul.f32 %v4527, %v4462
      %v4547 = vmul.f32 %v4527, %v4463
      %v4548 = vmul.f32 %v4527, %v4464
      %v4549 = vmul.f32 %v4527, %v4465
      %v4550 = vmul.f32 %v4527, %v4466
      %v4551 = vmul.f32 %v4527, %v4467
      %v4552 = vmul.f32 %v4527, %v4468
      %v4553 = vmul.f32 %v4527, %v4469
      %v4554 = vmul.f32 %v4527, %v4470
      %v4555 = vmul.f32 %v4527, %v4471
      %v4556 = vmul.f32 %v4527, %v4472
      %v4557 = vmul.f32 %v4527, %v4473
      %v4558 = vmul.f32 %v4527, %v4474
      %v4559 = vmul.f32 %v4527, %v4475
      %v4560 = vmul.f32 %v4527, %v4476
      %v4561 = vmul.f32 %v4527, %v4477
      %v4562 = vmul.f32 %v4527, %v4478
      %v4563 = vmul.f32 %v4527, %v4479
      %v4564 = vmul.f32 %v4527, %v4480
      %v4565 = vmul.f32 %v4527, %v4481
      %v4566 = vmul.f32 %v4527, %v4482
      %v4567 = vmul.f32 %v4527, %v4483
      %v4568 = vmul.f32 %v4527, %v4484
      %v4569 = vsel %vm4486, %v4444, %v4528
      %v4570 = vsel %vm4487, %v4445, %v4529
      %v4571 = vsel %vm4488, %v4446, %v4530
      %v4572 = vsel %vm4489, %v4447, %v4531
      %v4573 = vsel %vm4490, %v4448, %v4532
      %v4574 = vsel %vm4491, %v4449, %v4533
      %v4575 = vsel %vm4492, %v4450, %v4534
      %v4576 = vsel %vm4493, %v4451, %v4535
      %v4577 = vsel %vm4494, %v4452, %v4536
      %v4578 = vsel %vm4495, %v4453, %v4537
      %v4579 = vsel %vm4496, %v4454, %v4538
      %v4580 = vsel %vm4497, %v4455, %v4539
      %v4581 = vsel %vm4498, %v4456, %v4540
      %v4582 = vsel %vm4499, %v4457, %v4541
      %v4583 = vsel %vm4500, %v4458, %v4542
      %v4584 = vsel %vm4501, %v4459, %v4543
      %v4585 = vsel %vm4502, %v4460, %v4544
      %v4586 = vsel %vm4503, %v4461, %v4545
      %v4587 = vsel %vm4504, %v4462, %v4546
      %v4588 = vsel %vm4505, %v4463, %v4547
      %v4589 = vsel %vm4506, %v4464, %v4548
      %v4590 = vsel %vm4507, %v4465, %v4549
      %v4591 = vsel %vm4508, %v4466, %v4550
      %v4592 = vsel %vm4509, %v4467, %v4551
      %v4593 = vsel %vm4510, %v4468, %v4552
      %v4594 = vsel %vm4511, %v4469, %v4553
      %v4595 = vsel %vm4512, %v4470, %v4554
      %v4596 = vsel %vm4513, %v4471, %v4555
      %v4597 = vsel %vm4514, %v4472, %v4556
      %v4598 = vsel %vm4515, %v4473, %v4557
      %v4599 = vsel %vm4516, %v4474, %v4558
      %v4600 = vsel %vm4517, %v4475, %v4559
      %v4601 = vsel %vm4518, %v4476, %v4560
      %v4602 = vsel %vm4519, %v4477, %v4561
      %v4603 = vsel %vm4520, %v4478, %v4562
      %v4604 = vsel %vm4521, %v4479, %v4563
      %v4605 = vsel %vm4522, %v4480, %v4564
      %v4606 = vsel %vm4523, %v4481, %v4565
      %v4607 = vsel %vm4524, %v4482, %v4566
      %v4608 = vsel %vm4525, %v4483, %v4567
      %v4609 = vsel %vm4526, %v4484, %v4568
      %4610 = vst.msk [vmem:[%s198] sm:$0xff] %vm290, %v4569
      %4611 = vst.msk [vmem:[%s198 + $0x8] sm:$0xff] %vm290, %v4570
      %4612 = vst.msk [vmem:[%s198 + $0x10] sm:$0xff] %vm290, %v4571
      %4613 = vst.msk [vmem:[%s198 + $0x18] sm:$0xff] %vm290, %v4572
      %4614 = vst.msk [vmem:[%s198 + $0x20] sm:$0xff] %vm290, %v4573
      %4615 = vst.msk [vmem:[%s198 + $0x28] sm:$0xff] %vm290, %v4574
      %4616 = vst.msk [vmem:[%s198 + $0x30] sm:$0xff] %vm290, %v4575
      %4617 = vst.msk [vmem:[%s198 + $0x38] sm:$0xff] %vm290, %v4576
      %4618 = vst.msk [vmem:[%s198 + $0x40] sm:$0xff] %vm290, %v4577
      %4619 = vst.msk [vmem:[%s198 + $0x48] sm:$0xff] %vm290, %v4578
      %4620 = vst.msk [vmem:[%s198 + $0x50] sm:$0xff] %vm290, %v4579
      %4621 = vst.msk [vmem:[%s198 + $0x58] sm:$0xff] %vm290, %v4580
      %4622 = vst.msk [vmem:[%s198 + $0x60] sm:$0xff] %vm290, %v4581
      %4623 = vst.msk [vmem:[%s198 + $0x68] sm:$0xff] %vm290, %v4582
      %4624 = vst.msk [vmem:[%s198 + $0x70] sm:$0xff] %vm290, %v4583
      %4625 = vst.msk [vmem:[%s198 + $0x78] sm:$0xff] %vm290, %v4584
      %4626 = vst.msk [vmem:[%s198 + $0x80] sm:$0xff] %vm290, %v4585
      %4627 = vst.msk [vmem:[%s198 + $0x88] sm:$0xff] %vm290, %v4586
      %4628 = vst.msk [vmem:[%s198 + $0x90] sm:$0xff] %vm290, %v4587
      %4629 = vst.msk [vmem:[%s198 + $0x98] sm:$0xff] %vm290, %v4588
      %4630 = vst.msk [vmem:[%s198 + $0xa0] sm:$0xff] %vm290, %v4589
      %4631 = vst.msk [vmem:[%s198 + $0xa8] sm:$0xff] %vm290, %v4590
      %4632 = vst.msk [vmem:[%s198 + $0xb0] sm:$0xff] %vm290, %v4591
      %4633 = vst.msk [vmem:[%s198 + $0xb8] sm:$0xff] %vm290, %v4592
      %4634 = vst.msk [vmem:[%s198 + $0xc0] sm:$0xff] %vm290, %v4593
      %4635 = vst.msk [vmem:[%s198 + $0xc8] sm:$0xff] %vm290, %v4594
      %4636 = vst.msk [vmem:[%s198 + $0xd0] sm:$0xff] %vm290, %v4595
      %4637 = vst.msk [vmem:[%s198 + $0xd8] sm:$0xff] %vm290, %v4596
      %4638 = vst.msk [vmem:[%s198 + $0xe0] sm:$0xff] %vm290, %v4597
      %4639 = vst.msk [vmem:[%s198 + $0xe8] sm:$0xff] %vm290, %v4598
      %4640 = vst.msk [vmem:[%s198 + $0xf0] sm:$0xff] %vm290, %v4599
      %4641 = vst.msk [vmem:[%s198 + $0xf8] sm:$0xff] %vm290, %v4600
      %4642 = vst.msk [vmem:[%s198 + $0x100] sm:$0xff] %vm290, %v4601
      %4643 = vst.msk [vmem:[%s198 + $0x108] sm:$0xff] %vm290, %v4602
      %4644 = vst.msk [vmem:[%s198 + $0x110] sm:$0xff] %vm290, %v4603
      %4645 = vst.msk [vmem:[%s198 + $0x118] sm:$0xff] %vm290, %v4604
      %4646 = vst.msk [vmem:[%s198 + $0x120] sm:$0xff] %vm290, %v4605
      %4647 = vst.msk [vmem:[%s198 + $0x128] sm:$0xff] %vm290, %v4606
      %4648 = vst.msk [vmem:[%s198 + $0x130] sm:$0xff] %vm290, %v4607
      %4649 = vst.msk [vmem:[%s198 + $0x138] sm:$0xff] %vm290, %v4608
      %4650 = vst.msk [vmem:[%s198 + $0x140] sm:$0xff] %vm290, %v4609
      %p4651 = scmp.lt.s32.totalorder %s16, 1
      %s4652 = scalar_select %p4651, %s16, 1
      %s4653 = smul.addr %s4652, 41
      %s4654 = smul.addr %s4653, 8
      %s4655 = scalar_lea.vmem %s4, %s4654
      // Predicated region
      $region37: #{decoding_block_forward.5} parent=35 // pred_check
        %p4656 = pneg %p123
      $region38: #{decoding_block_forward.5} parent=35 // pred_check_branch
        %4658 = sbr.rel (%p4656) target = $region40
      $region39: #{decoding_block_forward.5} parent=35 // pred_region
        _
      $region40: #{decoding_block_forward.5} parent=35 // pred_fallthru
        _
    $region36: #{decoding_block_forward.5} parent=5 // pred_fallthru
      _
    %p4659 = scmp.le.s32.totalorder 2, %s11
    // Predicated region
    $region41: #{decoding_block_forward.5} parent=5 // pred_check
      %p4660 = pneg %p4659
    $region42: #{decoding_block_forward.5} parent=5 // pred_check_branch
      %4662 = sbr.rel (%p4660) target = $region44
    $region43: #{decoding_block_forward.5} parent=5 // pred_region
      %s4663 = ssub.s32 %s11, 2
      // Predicated region
      $region45: #{decoding_block_forward.5} parent=43 // pred_check
        %p4664 = pneg %p129
      $region46: #{decoding_block_forward.5} parent=43 // pred_check_branch
        %4666 = sbr.rel (%p4664) target = $region48
      $region47: #{decoding_block_forward.5} parent=43 // pred_region
        %p4667 = scmp.lt.s32.totalorder %s17, 1
        %s4668 = scalar_select %p4667, %s17, 1
        %s4669 = smul.addr %s4668, 41
        %s4670 = smul.addr %s4669, 8
        %s4671 = scalar_lea.vmem %s4, %s4670
      $region48: #{decoding_block_forward.5} parent=43 // pred_fallthru
        _
    $region44: #{decoding_block_forward.5} parent=5 // pred_fallthru
      _
  $region6: #{decoding_block_forward.5} parent=0 // loop_footer
    %s15 = sadd.s32 1, %s11
  $region7: #{decoding_block_forward.5} parent=0 // loop_footer_branch
    %10 = sbr.rel target = $region3
  $region8: #{decoding_block_forward.5} parent=0 // loop_exit
    _

</llo_original>
